<compile_context>
chip_gen: v6e
topology: v6e:2x2x1
jax: 0.10.0
libtpu: 0.0.40
codegen_flags: <defaults>
</compile_context>

<pallas_src>
import math
import functools

import jax
import jax.numpy as jnp
from jax import lax
from jax.experimental import pallas as pl
from jax.experimental.pallas import tpu as pltpu

NEG_INF = -1e9                 # NaN-safe stand-in for -inf (fully-masked rows -> uniform attn)
MATMUL_DTYPE = jnp.bfloat16    # MXU-operand dtype for weight matmuls (accumulation stays f32)

_ENC_FIELDS = ("q_w", "q_b", "k_w", "k_b", "v_w", "v_b", "o_w", "o_b",
               "f1_w", "f1_b", "f2_w", "f2_b", "ln1_g", "ln1_b", "ln2_g", "ln2_b")
_DEC_FIELDS = ("sa_q_w", "sa_q_b", "sa_k_w", "sa_k_b", "sa_v_w", "sa_v_b", "sa_o_w", "sa_o_b",
               "ca_q_w", "ca_q_b", "ca_k_w", "ca_k_b", "ca_v_w", "ca_v_b", "ca_o_w", "ca_o_b",
               "f1_w", "f1_b", "f2_w", "f2_b",
               "ln1_g", "ln1_b", "ln2_g", "ln2_b", "ln3_g", "ln3_b")
_FIN_FIELDS = ("enc_n_g", "enc_n_b", "dec_n_g", "dec_n_b", "gen_w", "gen_b")


# ----------------------------------------------------------------------------
# Fused forward kernel (one batch element per grid step; everything VMEM-resident)
# ----------------------------------------------------------------------------

def _fused_forward_kernel(*args, num_enc, num_dec, nhead, E):
    it = iter(args)
    src = next(it)[...]               # [Sp, E]  f32
    tgt = next(it)[...]               # [Tp, E]  f32
    src_am = next(it)[...]            # [Sp, Sp] additive structural mask
    tgt_am = next(it)[...]            # [Tp, Tp] additive structural (causal) mask
    src_kb = next(it)[...]            # [1, Sp]  additive key-padding bias
    tgt_kb = next(it)[...]            # [1, Tp]
    mem_kb = next(it)[...]            # [1, Sp]
    enc = {f: next(it) for f in _ENC_FIELDS}      # stacked over layers [L, ...]
    dec = {f: next(it) for f in _DEC_FIELDS}
    fin = {f: next(it) for f in _FIN_FIELDS}
    out_ref = next(it)                # [Tp, Vpad]

    H = nhead
    Dh = E // H

    # Combined additive attention biases, built once and reused by every layer.
    # Row-stacked per head to match the row-stacked score layout used in mha().
    enc_bias = jnp.concatenate([src_am + src_kb] * H, axis=0)        # [H*Sp, Sp]
    dec_self_bias = jnp.concatenate([tgt_am + tgt_kb] * H, axis=0)   # [H*Tp, Tp]
    dec_cross_bias = mem_kb                                          # [1, Sp] (broadcasts)

    def layer_norm(x, g, b):          # f32 statistics; eps = 1e-5 (PyTorch default)
        mu = jnp.mean(x, axis=-1, keepdims=True)
        var = jnp.mean(jnp.square(x - mu), axis=-1, keepdims=True)
        return (x - mu) * lax.rsqrt(var + 1e-5) * g + b

    def linear(x, w, b):              # bf16 MXU operands, f32 accumulation, f32 bias add
        return jnp.dot(x.astype(w.dtype), w, preferred_element_type=jnp.float32) + b

    def mha(q, k, v, wo, bo, bias):
        # q [Tq,E], k/v [Tk,E] f32; bias broadcastable to [H*Tq, Tk] (additive).
        # Per-head scores are row-stacked so the mask add / max / exp / reciprocal run
        # once per MHA; per-head contexts are lane-concatenated back to [Tq,E] so the
        # output projection is a single [Tq,E] @ [E,E] matmul (K = E, not K = Dh).
        Tq, Tk = q.shape[0], k.shape[0]
        s = jnp.concatenate(
            [lax.dot_general(q[:, h * Dh:(h + 1) * Dh], k[:, h * Dh:(h + 1) * Dh],
                             (((1,), (1,)), ((), ())),
                             preferred_element_type=jnp.float32)
             for h in range(H)], axis=0)                              # [H*Tq, Tk]
        s = s + bias
        s = s - jnp.max(s, axis=-1, keepdims=True)
        p = jnp.exp(s)
        p = p * pl.reciprocal(jnp.sum(p, axis=-1, keepdims=True), approx=True)
        ctx = jnp.concatenate(
            [jnp.dot(p[h * Tq:(h + 1) * Tq, :], v[:, h * Dh:(h + 1) * Dh],
                     preferred_element_type=jnp.float32)
             for h in range(H)], axis=-1)                             # [Tq, E]
        return jnp.dot(ctx.astype(wo.dtype), wo,
                       preferred_element_type=jnp.float32) + bo

    # ------------------------- encoder stack (post-norm, relu) -------------------
    # TODO(synk): beyond a handful of layers, switch these unrolled Python loops to
    # lax.fori_loop over the stacked [L,...] weight refs to bound live ranges.
    x = src
    for l in range(num_enc):
        q = linear(x, enc["q_w"][l], enc["q_b"][l])    # 1/sqrt(Dh) folded into q_w/q_b
        k = linear(x, enc["k_w"][l], enc["k_b"][l])
        v = linear(x, enc["v_w"][l], enc["v_b"][l])
        sa = mha(q, k, v, enc["o_w"][l], enc["o_b"][l], enc_bias)
        x = layer_norm(x + sa, enc["ln1_g"][l], enc["ln1_b"][l])
        h1 = jnp.maximum(linear(x, enc["f1_w"][l], enc["f1_b"][l]), 0.0)
        x = layer_norm(x + linear(h1, enc["f2_w"][l], enc["f2_b"][l]),
                       enc["ln2_g"][l], enc["ln2_b"][l])
    memory = layer_norm(x, fin["enc_n_g"][...], fin["enc_n_b"][...])  # [Sp, E]

    # ------------------------- decoder stack --------------------------------------
    y = tgt
    for l in range(num_dec):
        q = linear(y, dec["sa_q_w"][l], dec["sa_q_b"][l])
        k = linear(y, dec["sa_k_w"][l], dec["sa_k_b"][l])
        v = linear(y, dec["sa_v_w"][l], dec["sa_v_b"][l])
        sa = mha(q, k, v, dec["sa_o_w"][l], dec["sa_o_b"][l], dec_self_bias)
        y = layer_norm(y + sa, dec["ln1_g"][l], dec["ln1_b"][l])
        qc = linear(y, dec["ca_q_w"][l], dec["ca_q_b"][l])
        kc = linear(memory, dec["ca_k_w"][l], dec["ca_k_b"][l])
        vc = linear(memory, dec["ca_v_w"][l], dec["ca_v_b"][l])
        ca = mha(qc, kc, vc, dec["ca_o_w"][l], dec["ca_o_b"][l], dec_cross_bias)
        y = layer_norm(y + ca, dec["ln2_g"][l], dec["ln2_b"][l])
        h1 = jnp.maximum(linear(y, dec["f1_w"][l], dec["f1_b"][l]), 0.0)
        y = layer_norm(y + linear(h1, dec["f2_w"][l], dec["f2_b"][l]),
                       dec["ln3_g"][l], dec["ln3_b"][l])
    y = layer_norm(y, fin["dec_n_g"][...], fin["dec_n_b"][...])

    # ------------------------- generator (lane-dense [Tp, 128] store) -------------
    gw = fin["gen_w"][...]
    out_ref[...] = (jnp.dot(y.astype(gw.dtype), gw, preferred_element_type=jnp.float32)
                    + fin["gen_b"][...]).astype(out_ref.dtype)


# ----------------------------------------------------------------------------
# Wrapper
# ----------------------------------------------------------------------------

def _round_up(x, m):
    return (x + m - 1) // m * m


def _to_additive(mask):
    mask = jnp.asarray(mask)
    if mask.dtype == jnp.bool_:            # PyTorch-style bool mask: True == disallowed
        return jnp.where(mask, NEG_INF, 0.0).astype(jnp.float32)
    return mask.astype(jnp.float32)


def _batched_spec(a):                       # slice the leading batch dim, keep the rest whole
    trail = (0,) * (a.ndim - 1)
    return pl.BlockSpec((None,) + tuple(a.shape[1:]), lambda b: (b,) + trail)


def _shared_spec(a):                        # same full block every grid step (stays resident)
    idx = (0,) * a.ndim
    return pl.BlockSpec(tuple(a.shape), lambda b: idx)


def _rough_cost(B, Sp, Tp, E, FF, Vp, ne, nd, H):
    mm = lambda m, k, n: 2 * m * k * n
    Dh = E // H
    attn = lambda tq, tk: H * (mm(tq, Dh, tk) + mm(tq, tk, Dh)) + mm(tq, E, E)
    enc = ne * (3 * mm(Sp, E, E) + attn(Sp, Sp) + mm(Sp, E, FF) + mm(Sp, FF, E))
    dec = nd * (3 * mm(Tp, E, E) + attn(Tp, Tp)
                + mm(Tp, E, E) + 2 * mm(Sp, E, E) + attn(Tp, Sp)
                + mm(Tp, E, FF) + mm(Tp, FF, E))
    flops = B * (enc + dec + mm(Tp, E, Vp))
    trans = B * (ne * H * Sp * Sp + nd * H * (Tp * Tp + Tp * Sp))
    return int(flops), int(trans)


def forward(params, src, trg, src_mask, tgt_mask,
            src_padding_mask, tgt_padding_mask, memory_key_padding_mask,
            *, emb_size, nhead, tgt_vocab):
    E = emb_size
    B, S = src.shape
    T = trg.shape[1]
    Sp, Tp = _round_up(S, 8), _round_up(T, 8)

    # TokenEmbedding + PositionalEncoding (embedding gathers stay as XLA glue).
    # TODO(synk): dropout layers are identity here (eval-mode semantics).
    # TODO(synk): the CrossEntropyLoss criterion is never used in forward(); omitted.
    src_emb = jnp.take(params["src_emb"], src, axis=0) * math.sqrt(E) + params["pos"][:S][None]
    tgt_emb = jnp.take(params["tgt_emb"], trg, axis=0) * math.sqrt(E) + params["pos"][:T][None]

    # Pad sequence dims to multiples of 8 (sublane tile): all in-kernel activations are
    # tile-aligned; padded keys are masked below and padded query rows are sliced off.
    src_emb = jnp.pad(src_emb, ((0, 0), (0, Sp - S), (0, 0)))
    tgt_emb = jnp.pad(tgt_emb, ((0, 0), (0, Tp - T), (0, 0)))

    # Structural attention masks (accepts bool or additive-float, as nn.Transformer does).
    src_am = jnp.pad(_to_additive(src_mask), ((0, Sp - S), (0, Sp - S)))
    tgt_am = jnp.pad(_to_additive(tgt_mask), ((0, Tp - T), (0, Tp - T)))

    # Key-padding biases as tiny [B,1,L] vectors; the full [B,L,L] masks are built in-kernel.
    def key_bias(pm, L, Lp):
        bias = jnp.where(jnp.asarray(pm, bool), NEG_INF, 0.0).astype(jnp.float32)
        bias = jnp.pad(bias, ((0, 0), (0, Lp - L)), constant_values=NEG_INF)
        return bias.reshape(B, 1, Lp)

    src_kb = key_bias(src_padding_mask, S, Sp)
    tgt_kb = key_bias(tgt_padding_mask, T, Tp)
    mem_kb = key_bias(memory_key_padding_mask, S, Sp)

    inputs = [src_emb, tgt_emb, src_am, tgt_am, src_kb, tgt_kb, mem_kb]
    inputs += [params["enc"][f] for f in _ENC_FIELDS]
    inputs += [params["dec"][f] for f in _DEC_FIELDS]
    inputs += [params["fin"][f] for f in _FIN_FIELDS]

    in_specs = ([_batched_spec(src_emb), _batched_spec(tgt_emb),
                 _shared_spec(src_am), _shared_spec(tgt_am),
                 _batched_spec(src_kb), _batched_spec(tgt_kb), _batched_spec(mem_kb)]
                + [_shared_spec(a) for a in inputs[7:]])

    num_enc = params["enc"]["q_w"].shape[0]
    num_dec = params["dec"]["sa_q_w"].shape[0]
    FF = params["enc"]["f1_w"].shape[2]
    Vpad = params["fin"]["gen_w"].shape[1]

    flops, trans = _rough_cost(B, Sp, Tp, E, FF, Vpad, num_enc, num_dec, nhead)
    bytes_accessed = int(sum(int(a.size) * a.dtype.itemsize for a in inputs)
                         + B * Tp * Vpad * 4)
    # Explicit scoped-VMEM budget sized from actual residency (inputs are double-buffered
    # by the pipeline) with generous headroom; well below every chip's physical VMEM.
    vmem_limit = int(min(100 * 1024 * 1024, max(16 * 1024 * 1024, 4 * bytes_accessed)))

    kern = functools.partial(_fused_forward_kernel, num_enc=num_enc, num_dec=num_dec,
                             nhead=nhead, E=E)

    # TODO(synk): at real transformer sizes, keep stacked weights in pl.ANY (HBM) and
    # double-buffer layer l+1 via pltpu.make_async_copy instead of full VMEM residency.
    logits_pad = pl.pallas_call(
        kern,
        out_shape=jax.ShapeDtypeStruct((B, Tp, Vpad), jnp.float32),
        grid=(B,),                                  # batch-parallel: uses both TCs on v7x
        in_specs=in_specs,
        out_specs=pl.BlockSpec((None, Tp, Vpad), lambda b: (b, 0, 0)),
        compiler_params=pltpu.CompilerParams(
            dimension_semantics=("parallel",),
            vmem_limit_bytes=vmem_limit),
        cost_estimate=pl.CostEstimate(flops=flops, transcendentals=trans,
                                      bytes_accessed=bytes_accessed),
    )(*inputs)

    # Drop padded query rows and padded (zero-weight) vocab columns.
    return logits_pad[:, :T, :tgt_vocab]


# ----------------------------------------------------------------------------
# Parameter construction (deterministic, synthetic; pre-packed for the kernel)
# ----------------------------------------------------------------------------

def _positional_encoding_table(emb_size, maxlen=512):
    den = jnp.exp(-jnp.arange(0, emb_size, 2, dtype=jnp.float32) * math.log(10000.0) / emb_size)
    pos = jnp.arange(0, maxlen, dtype=jnp.float32).reshape(maxlen, 1)
    pe = jnp.zeros((maxlen, emb_size), jnp.float32)
    pe = pe.at[:, 0::2].set(jnp.sin(pos * den))
    pe = pe.at[:, 1::2].set(jnp.cos(pos * den))
    return pe


def init_params(key, num_enc, num_dec, E, nhead, src_vocab, tgt_vocab, FF, tgt_vocab_pad):
    s = 0.05
    keys = iter(jax.random.split(key, 128))
    q_scale = 1.0 / math.sqrt(E // nhead)      # attention scale folded into Q weights/biases

    def nrm(shape):
        return s * jax.random.normal(next(keys), shape, jnp.float32)

    def w(shape):                              # MXU-operand weights stored in bf16
        return nrm(shape).astype(MATMUL_DTYPE)

    def qw(shape):                             # Q projections: 1/sqrt(Dh) pre-folded
        return (nrm(shape) * q_scale).astype(MATMUL_DTYPE)

    def zeros(*shape):
        return jnp.zeros(shape, jnp.float32)

    def ones(*shape):
        return jnp.ones(shape, jnp.float32)

    def enc_layer():
        return {
            "q_w": qw((E, E)), "q_b": zeros(1, E) * q_scale,
            "k_w": w((E, E)), "k_b": zeros(1, E),
            "v_w": w((E, E)), "v_b": zeros(1, E),
            "o_w": w((E, E)), "o_b": zeros(1, E),
            "f1_w": w((E, FF)), "f1_b": zeros(1, FF),
            "f2_w": w((FF, E)), "f2_b": zeros(1, E),
            "ln1_g": ones(1, E), "ln1_b": zeros(1, E),
            "ln2_g": ones(1, E), "ln2_b": zeros(1, E),
        }

    def dec_layer():
        return {
            "sa_q_w": qw((E, E)), "sa_q_b": zeros(1, E) * q_scale,
            "sa_k_w": w((E, E)), "sa_k_b": zeros(1, E),
            "sa_v_w": w((E, E)), "sa_v_b": zeros(1, E),
            "sa_o_w": w((E, E)), "sa_o_b": zeros(1, E),
            "ca_q_w": qw((E, E)), "ca_q_b": zeros(1, E) * q_scale,
            "ca_k_w": w((E, E)), "ca_k_b": zeros(1, E),
            "ca_v_w": w((E, E)), "ca_v_b": zeros(1, E),
            "ca_o_w": w((E, E)), "ca_o_b": zeros(1, E),
            "f1_w": w((E, FF)), "f1_b": zeros(1, FF),
            "f2_w": w((FF, E)), "f2_b": zeros(1, E),
            "ln1_g": ones(1, E), "ln1_b": zeros(1, E),
            "ln2_g": ones(1, E), "ln2_b": zeros(1, E),
            "ln3_g": ones(1, E), "ln3_b": zeros(1, E),
        }

    enc_layers = [enc_layer() for _ in range(num_enc)]
    dec_layers = [dec_layer() for _ in range(num_dec)]
    enc = {f: jnp.stack([lyr[f] for lyr in enc_layers]) for f in _ENC_FIELDS}
    dec = {f: jnp.stack([lyr[f] for lyr in dec_layers]) for f in _DEC_FIELDS}

    # Generator padded to a lane-dense 128-wide output; padded columns are zero and the
    # padded logits are sliced off outside the kernel.
    gen_w = jnp.zeros((E, tgt_vocab_pad), jnp.float32).at[:, :tgt_vocab].set(nrm((E, tgt_vocab)))
    fin = {
        "enc_n_g": ones(1, E), "enc_n_b": zeros(1, E),
        "dec_n_g": ones(1, E), "dec_n_b": zeros(1, E),
        "gen_w": gen_w.astype(MATMUL_DTYPE), "gen_b": zeros(1, tgt_vocab_pad),
    }

    return {
        "src_emb": jax.random.normal(next(keys), (src_vocab, E), jnp.float32),
        "tgt_emb": jax.random.normal(next(keys), (tgt_vocab, E), jnp.float32),
        "pos": _positional_encoding_table(E),
        "enc": enc, "dec": dec, "fin": fin,
    }


# ----------------------------------------------------------------------------
# Demo
# ----------------------------------------------------------------------------

if __name__ == "__main__":
    NUM_ENC, NUM_DEC = 2, 2
    EMB, NHEAD, FF = 32, 4, 64
    SRC_VOCAB, TGT_VOCAB = 40, 36
    TGT_VOCAB_PAD = 128          # lane-dense generator output width
    B, S, T = 2, 8, 6

    key = jax.random.PRNGKey(0)
    k_param, k_src, k_trg = jax.random.split(key, 3)

    params = init_params(k_param, NUM_ENC, NUM_DEC, EMB, NHEAD,
                         SRC_VOCAB, TGT_VOCAB, FF, TGT_VOCAB_PAD)

    src = jax.random.randint(k_src, (B, S), 1, SRC_VOCAB, dtype=jnp.int32)
    trg = jax.random.randint(k_trg, (B, T), 1, TGT_VOCAB, dtype=jnp.int32)

    # src_mask: no masking; tgt_mask: causal (additive float masks, as PyTorch accepts)
    src_mask = jnp.zeros((S, S), jnp.float32)
    tgt_mask = jnp.where(jnp.triu(jnp.ones((T, T), bool), 1), NEG_INF, 0.0).astype(jnp.float32)

    # key-padding masks (bool, True == pad): batch 1 has shorter sequences
    src_lens = jnp.array([S, S - 2])
    tgt_lens = jnp.array([T, T - 1])
    src_padding_mask = jnp.arange(S)[None, :] >= src_lens[:, None]
    tgt_padding_mask = jnp.arange(T)[None, :] >= tgt_lens[:, None]
    memory_key_padding_mask = src_padding_mask

    fwd = jax.jit(functools.partial(forward, emb_size=EMB, nhead=NHEAD, tgt_vocab=TGT_VOCAB))
    logits = fwd(params, src, trg, src_mask, tgt_mask,
                 src_padding_mask, tgt_padding_mask, memory_key_padding_mask)
    logits = jax.block_until_ready(logits)

    assert logits.shape == (B, T, TGT_VOCAB)
    assert bool(jnp.all(jnp.isfinite(logits)))
    print("KERNEL_OK")
</pallas_src>

<mosaic_0001>
module attributes {stable_mosaic.version = 11 : i64} {
  func.func @_fused_forward_kernel(%arg0: i32, %arg1: memref<1x8x32xf32, #tpu.memory_space<vmem>>, %arg2: memref<1x8x32xf32, #tpu.memory_space<vmem>>, %arg3: memref<8x8xf32, #tpu.memory_space<vmem>>, %arg4: memref<8x8xf32, #tpu.memory_space<vmem>>, %arg5: memref<1x1x8xf32, #tpu.memory_space<vmem>>, %arg6: memref<1x1x8xf32, #tpu.memory_space<vmem>>, %arg7: memref<1x1x8xf32, #tpu.memory_space<vmem>>, %arg8: memref<2x32x32xbf16, #tpu.memory_space<vmem>>, %arg9: memref<2x1x32xf32, #tpu.memory_space<vmem>>, %arg10: memref<2x32x32xbf16, #tpu.memory_space<vmem>>, %arg11: memref<2x1x32xf32, #tpu.memory_space<vmem>>, %arg12: memref<2x32x32xbf16, #tpu.memory_space<vmem>>, %arg13: memref<2x1x32xf32, #tpu.memory_space<vmem>>, %arg14: memref<2x32x32xbf16, #tpu.memory_space<vmem>>, %arg15: memref<2x1x32xf32, #tpu.memory_space<vmem>>, %arg16: memref<2x32x64xbf16, #tpu.memory_space<vmem>>, %arg17: memref<2x1x64xf32, #tpu.memory_space<vmem>>, %arg18: memref<2x64x32xbf16, #tpu.memory_space<vmem>>, %arg19: memref<2x1x32xf32, #tpu.memory_space<vmem>>, %arg20: memref<2x1x32xf32, #tpu.memory_space<vmem>>, %arg21: memref<2x1x32xf32, #tpu.memory_space<vmem>>, %arg22: memref<2x1x32xf32, #tpu.memory_space<vmem>>, %arg23: memref<2x1x32xf32, #tpu.memory_space<vmem>>, %arg24: memref<2x32x32xbf16, #tpu.memory_space<vmem>>, %arg25: memref<2x1x32xf32, #tpu.memory_space<vmem>>, %arg26: memref<2x32x32xbf16, #tpu.memory_space<vmem>>, %arg27: memref<2x1x32xf32, #tpu.memory_space<vmem>>, %arg28: memref<2x32x32xbf16, #tpu.memory_space<vmem>>, %arg29: memref<2x1x32xf32, #tpu.memory_space<vmem>>, %arg30: memref<2x32x32xbf16, #tpu.memory_space<vmem>>, %arg31: memref<2x1x32xf32, #tpu.memory_space<vmem>>, %arg32: memref<2x32x32xbf16, #tpu.memory_space<vmem>>, %arg33: memref<2x1x32xf32, #tpu.memory_space<vmem>>, %arg34: memref<2x32x32xbf16, #tpu.memory_space<vmem>>, %arg35: memref<2x1x32xf32, #tpu.memory_space<vmem>>, %arg36: memref<2x32x32xbf16, #tpu.memory_space<vmem>>, %arg37: memref<2x1x32xf32, #tpu.memory_space<vmem>>, %arg38: memref<2x32x32xbf16, #tpu.memory_space<vmem>>, %arg39: memref<2x1x32xf32, #tpu.memory_space<vmem>>, %arg40: memref<2x32x64xbf16, #tpu.memory_space<vmem>>, %arg41: memref<2x1x64xf32, #tpu.memory_space<vmem>>, %arg42: memref<2x64x32xbf16, #tpu.memory_space<vmem>>, %arg43: memref<2x1x32xf32, #tpu.memory_space<vmem>>, %arg44: memref<2x1x32xf32, #tpu.memory_space<vmem>>, %arg45: memref<2x1x32xf32, #tpu.memory_space<vmem>>, %arg46: memref<2x1x32xf32, #tpu.memory_space<vmem>>, %arg47: memref<2x1x32xf32, #tpu.memory_space<vmem>>, %arg48: memref<2x1x32xf32, #tpu.memory_space<vmem>>, %arg49: memref<2x1x32xf32, #tpu.memory_space<vmem>>, %arg50: memref<1x32xf32, #tpu.memory_space<vmem>>, %arg51: memref<1x32xf32, #tpu.memory_space<vmem>>, %arg52: memref<1x32xf32, #tpu.memory_space<vmem>>, %arg53: memref<1x32xf32, #tpu.memory_space<vmem>>, %arg54: memref<32x128xbf16, #tpu.memory_space<vmem>>, %arg55: memref<1x128xf32, #tpu.memory_space<vmem>>, %arg56: memref<1x8x128xf32, #tpu.memory_space<vmem>>) attributes {dimension_semantics = [#tpu.dimension_semantics<parallel>], iteration_bounds = array<i64: 2>, scalar_prefetch = 0 : i64, scratch_operands = 0 : i64, tpu.core_type = #tpu.core_type<tc>, window_params = [{transform_indices = @transform_0, window_bounds = array<i64: 1, 8, 32>}, {transform_indices = @transform_1, window_bounds = array<i64: 1, 8, 32>}, {pipeline_mode = #tpu.pipeline_mode<synchronous>, transform_indices = @transform_2, window_bounds = array<i64: 8, 8>}, {pipeline_mode = #tpu.pipeline_mode<synchronous>, transform_indices = @transform_3, window_bounds = array<i64: 8, 8>}, {transform_indices = @transform_4, window_bounds = array<i64: 1, 1, 8>}, {transform_indices = @transform_5, window_bounds = array<i64: 1, 1, 8>}, {transform_indices = @transform_6, window_bounds = array<i64: 1, 1, 8>}, {pipeline_mode = #tpu.pipeline_mode<synchronous>, transform_indices = @transform_7, window_bounds = array<i64: 2, 32, 32>}, {pipeline_mode = #tpu.pipeline_mode<synchronous>, transform_indices = @transform_8, window_bounds = array<i64: 2, 1, 32>}, {pipeline_mode = #tpu.pipeline_mode<synchronous>, transform_indices = @transform_9, window_bounds = array<i64: 2, 32, 32>}, {pipeline_mode = #tpu.pipeline_mode<synchronous>, transform_indices = @transform_10, window_bounds = array<i64: 2, 1, 32>}, {pipeline_mode = #tpu.pipeline_mode<synchronous>, transform_indices = @transform_11, window_bounds = array<i64: 2, 32, 32>}, {pipeline_mode = #tpu.pipeline_mode<synchronous>, transform_indices = @transform_12, window_bounds = array<i64: 2, 1, 32>}, {pipeline_mode = #tpu.pipeline_mode<synchronous>, transform_indices = @transform_13, window_bounds = array<i64: 2, 32, 32>}, {pipeline_mode = #tpu.pipeline_mode<synchronous>, transform_indices = @transform_14, window_bounds = array<i64: 2, 1, 32>}, {pipeline_mode = #tpu.pipeline_mode<synchronous>, transform_indices = @transform_15, window_bounds = array<i64: 2, 32, 64>}, {pipeline_mode = #tpu.pipeline_mode<synchronous>, transform_indices = @transform_16, window_bounds = array<i64: 2, 1, 64>}, {pipeline_mode = #tpu.pipeline_mode<synchronous>, transform_indices = @transform_17, window_bounds = array<i64: 2, 64, 32>}, {pipeline_mode = #tpu.pipeline_mode<synchronous>, transform_indices = @transform_18, window_bounds = array<i64: 2, 1, 32>}, {pipeline_mode = #tpu.pipeline_mode<synchronous>, transform_indices = @transform_19, window_bounds = array<i64: 2, 1, 32>}, {pipeline_mode = #tpu.pipeline_mode<synchronous>, transform_indices = @transform_20, window_bounds = array<i64: 2, 1, 32>}, {pipeline_mode = #tpu.pipeline_mode<synchronous>, transform_indices = @transform_21, window_bounds = array<i64: 2, 1, 32>}, {pipeline_mode = #tpu.pipeline_mode<synchronous>, transform_indices = @transform_22, window_bounds = array<i64: 2, 1, 32>}, {pipeline_mode = #tpu.pipeline_mode<synchronous>, transform_indices = @transform_23, window_bounds = array<i64: 2, 32, 32>}, {pipeline_mode = #tpu.pipeline_mode<synchronous>, transform_indices = @transform_24, window_bounds = array<i64: 2, 1, 32>}, {pipeline_mode = #tpu.pipeline_mode<synchronous>, transform_indices = @transform_25, window_bounds = array<i64: 2, 32, 32>}, {pipeline_mode = #tpu.pipeline_mode<synchronous>, transform_indices = @transform_26, window_bounds = array<i64: 2, 1, 32>}, {pipeline_mode = #tpu.pipeline_mode<synchronous>, transform_indices = @transform_27, window_bounds = array<i64: 2, 32, 32>}, {pipeline_mode = #tpu.pipeline_mode<synchronous>, transform_indices = @transform_28, window_bounds = array<i64: 2, 1, 32>}, {pipeline_mode = #tpu.pipeline_mode<synchronous>, transform_indices = @transform_29, window_bounds = array<i64: 2, 32, 32>}, {pipeline_mode = #tpu.pipeline_mode<synchronous>, transform_indices = @transform_30, window_bounds = array<i64: 2, 1, 32>}, {pipeline_mode = #tpu.pipeline_mode<synchronous>, transform_indices = @transform_31, window_bounds = array<i64: 2, 32, 32>}, {pipeline_mode = #tpu.pipeline_mode<synchronous>, transform_indices = @transform_32, window_bounds = array<i64: 2, 1, 32>}, {pipeline_mode = #tpu.pipeline_mode<synchronous>, transform_indices = @transform_33, window_bounds = array<i64: 2, 32, 32>}, {pipeline_mode = #tpu.pipeline_mode<synchronous>, transform_indices = @transform_34, window_bounds = array<i64: 2, 1, 32>}, {pipeline_mode = #tpu.pipeline_mode<synchronous>, transform_indices = @transform_35, window_bounds = array<i64: 2, 32, 32>}, {pipeline_mode = #tpu.pipeline_mode<synchronous>, transform_indices = @transform_36, window_bounds = array<i64: 2, 1, 32>}, {pipeline_mode = #tpu.pipeline_mode<synchronous>, transform_indices = @transform_37, window_bounds = array<i64: 2, 32, 32>}, {pipeline_mode = #tpu.pipeline_mode<synchronous>, transform_indices = @transform_38, window_bounds = array<i64: 2, 1, 32>}, {pipeline_mode = #tpu.pipeline_mode<synchronous>, transform_indices = @transform_39, window_bounds = array<i64: 2, 32, 64>}, {pipeline_mode = #tpu.pipeline_mode<synchronous>, transform_indices = @transform_40, window_bounds = array<i64: 2, 1, 64>}, {pipeline_mode = #tpu.pipeline_mode<synchronous>, transform_indices = @transform_41, window_bounds = array<i64: 2, 64, 32>}, {pipeline_mode = #tpu.pipeline_mode<synchronous>, transform_indices = @transform_42, window_bounds = array<i64: 2, 1, 32>}, {pipeline_mode = #tpu.pipeline_mode<synchronous>, transform_indices = @transform_43, window_bounds = array<i64: 2, 1, 32>}, {pipeline_mode = #tpu.pipeline_mode<synchronous>, transform_indices = @transform_44, window_bounds = array<i64: 2, 1, 32>}, {pipeline_mode = #tpu.pipeline_mode<synchronous>, transform_indices = @transform_45, window_bounds = array<i64: 2, 1, 32>}, {pipeline_mode = #tpu.pipeline_mode<synchronous>, transform_indices = @transform_46, window_bounds = array<i64: 2, 1, 32>}, {pipeline_mode = #tpu.pipeline_mode<synchronous>, transform_indices = @transform_47, window_bounds = array<i64: 2, 1, 32>}, {pipeline_mode = #tpu.pipeline_mode<synchronous>, transform_indices = @transform_48, window_bounds = array<i64: 2, 1, 32>}, {pipeline_mode = #tpu.pipeline_mode<synchronous>, transform_indices = @transform_49, window_bounds = array<i64: 1, 32>}, {pipeline_mode = #tpu.pipeline_mode<synchronous>, transform_indices = @transform_50, window_bounds = array<i64: 1, 32>}, {pipeline_mode = #tpu.pipeline_mode<synchronous>, transform_indices = @transform_51, window_bounds = array<i64: 1, 32>}, {pipeline_mode = #tpu.pipeline_mode<synchronous>, transform_indices = @transform_52, window_bounds = array<i64: 1, 32>}, {pipeline_mode = #tpu.pipeline_mode<synchronous>, transform_indices = @transform_53, window_bounds = array<i64: 32, 128>}, {pipeline_mode = #tpu.pipeline_mode<synchronous>, transform_indices = @transform_54, window_bounds = array<i64: 1, 128>}, {transform_indices = @transform_55, window_bounds = array<i64: 1, 8, 128>}]} {
    %c0 = arith.constant 0 : index
    %c0_0 = arith.constant 0 : index
    %c0_1 = arith.constant 0 : index
    %0 = vector.load %arg1[%c0, %c0_0, %c0_1] : memref<1x8x32xf32, #tpu.memory_space<vmem>>, vector<1x8x32xf32>
    %1 = vector.shape_cast %0 : vector<1x8x32xf32> to vector<8x32xf32>
    %c0_2 = arith.constant 0 : index
    %c0_3 = arith.constant 0 : index
    %c0_4 = arith.constant 0 : index
    %2 = vector.load %arg2[%c0_2, %c0_3, %c0_4] : memref<1x8x32xf32, #tpu.memory_space<vmem>>, vector<1x8x32xf32>
    %3 = vector.shape_cast %2 : vector<1x8x32xf32> to vector<8x32xf32>
    %c0_5 = arith.constant 0 : index
    %c0_6 = arith.constant 0 : index
    %4 = vector.load %arg3[%c0_5, %c0_6] : memref<8x8xf32, #tpu.memory_space<vmem>>, vector<8x8xf32>
    %c0_7 = arith.constant 0 : index
    %c0_8 = arith.constant 0 : index
    %5 = vector.load %arg4[%c0_7, %c0_8] : memref<8x8xf32, #tpu.memory_space<vmem>>, vector<8x8xf32>
    %c0_9 = arith.constant 0 : index
    %c0_10 = arith.constant 0 : index
    %c0_11 = arith.constant 0 : index
    %6 = vector.load %arg5[%c0_9, %c0_10, %c0_11] : memref<1x1x8xf32, #tpu.memory_space<vmem>>, vector<1x1x8xf32>
    %7 = vector.shape_cast %6 : vector<1x1x8xf32> to vector<1x8xf32>
    %c0_12 = arith.constant 0 : index
    %c0_13 = arith.constant 0 : index
    %c0_14 = arith.constant 0 : index
    %8 = vector.load %arg6[%c0_12, %c0_13, %c0_14] : memref<1x1x8xf32, #tpu.memory_space<vmem>>, vector<1x1x8xf32>
    %9 = vector.shape_cast %8 : vector<1x1x8xf32> to vector<1x8xf32>
    %c0_15 = arith.constant 0 : index
    %c0_16 = arith.constant 0 : index
    %c0_17 = arith.constant 0 : index
    %10 = vector.load %arg7[%c0_15, %c0_16, %c0_17] : memref<1x1x8xf32, #tpu.memory_space<vmem>>, vector<1x1x8xf32>
    %11 = vector.shape_cast %10 : vector<1x1x8xf32> to vector<1x8xf32>
    %12 = vector.broadcast %7 : vector<1x8xf32> to vector<8x8xf32>
    %13 = arith.addf %4, %12 : vector<8x8xf32>
    %14 = tpu.concatenate %13, %13, %13, %13 in 0 : vector<8x8xf32>, vector<8x8xf32>, vector<8x8xf32>, vector<8x8xf32> -> vector<32x8xf32>
    %15 = vector.broadcast %9 : vector<1x8xf32> to vector<8x8xf32>
    %16 = arith.addf %5, %15 : vector<8x8xf32>
    %17 = tpu.concatenate %16, %16, %16, %16 in 0 : vector<8x8xf32>, vector<8x8xf32>, vector<8x8xf32>, vector<8x8xf32> -> vector<32x8xf32>
    %c0_18 = arith.constant 0 : index
    %c0_19 = arith.constant 0 : index
    %c0_20 = arith.constant 0 : index
    %18 = vector.load %arg8[%c0_18, %c0_19, %c0_20] : memref<2x32x32xbf16, #tpu.memory_space<vmem>>, vector<1x32x32xbf16>
    %19 = vector.shape_cast %18 : vector<1x32x32xbf16> to vector<32x32xbf16>
    %c0_21 = arith.constant 0 : index
    %c0_22 = arith.constant 0 : index
    %c0_23 = arith.constant 0 : index
    %20 = vector.load %arg9[%c0_21, %c0_22, %c0_23] : memref<2x1x32xf32, #tpu.memory_space<vmem>>, vector<1x1x32xf32>
    %21 = vector.shape_cast %20 : vector<1x1x32xf32> to vector<1x32xf32>
    %22 = arith.truncf %1 : vector<8x32xf32> to vector<8x32xbf16>
    %cst = arith.constant dense<0.000000e+00> : vector<8x32xf32>
    %23 = tpu.matmul %22, %19, %cst {dimension_numbers = #tpu.dot_dimension_numbers<[1], [0], [0], [1], [0, 0, 1, 1], [], []>} : vector<8x32xbf16>, vector<32x32xbf16>, vector<8x32xf32> -> vector<8x32xf32>
    %24 = vector.broadcast %21 : vector<1x32xf32> to vector<8x32xf32>
    %25 = arith.addf %23, %24 : vector<8x32xf32>
    %c0_24 = arith.constant 0 : index
    %c0_25 = arith.constant 0 : index
    %c0_26 = arith.constant 0 : index
    %26 = vector.load %arg10[%c0_24, %c0_25, %c0_26] : memref<2x32x32xbf16, #tpu.memory_space<vmem>>, vector<1x32x32xbf16>
    %27 = vector.shape_cast %26 : vector<1x32x32xbf16> to vector<32x32xbf16>
    %c0_27 = arith.constant 0 : index
    %c0_28 = arith.constant 0 : index
    %c0_29 = arith.constant 0 : index
    %28 = vector.load %arg11[%c0_27, %c0_28, %c0_29] : memref<2x1x32xf32, #tpu.memory_space<vmem>>, vector<1x1x32xf32>
    %29 = vector.shape_cast %28 : vector<1x1x32xf32> to vector<1x32xf32>
    %30 = arith.truncf %1 : vector<8x32xf32> to vector<8x32xbf16>
    %cst_30 = arith.constant dense<0.000000e+00> : vector<8x32xf32>
    %31 = tpu.matmul %30, %27, %cst_30 {dimension_numbers = #tpu.dot_dimension_numbers<[1], [0], [0], [1], [0, 0, 1, 1], [], []>} : vector<8x32xbf16>, vector<32x32xbf16>, vector<8x32xf32> -> vector<8x32xf32>
    %32 = vector.broadcast %29 : vector<1x32xf32> to vector<8x32xf32>
    %33 = arith.addf %31, %32 : vector<8x32xf32>
    %c0_31 = arith.constant 0 : index
    %c0_32 = arith.constant 0 : index
    %c0_33 = arith.constant 0 : index
    %34 = vector.load %arg12[%c0_31, %c0_32, %c0_33] : memref<2x32x32xbf16, #tpu.memory_space<vmem>>, vector<1x32x32xbf16>
    %35 = vector.shape_cast %34 : vector<1x32x32xbf16> to vector<32x32xbf16>
    %c0_34 = arith.constant 0 : index
    %c0_35 = arith.constant 0 : index
    %c0_36 = arith.constant 0 : index
    %36 = vector.load %arg13[%c0_34, %c0_35, %c0_36] : memref<2x1x32xf32, #tpu.memory_space<vmem>>, vector<1x1x32xf32>
    %37 = vector.shape_cast %36 : vector<1x1x32xf32> to vector<1x32xf32>
    %38 = arith.truncf %1 : vector<8x32xf32> to vector<8x32xbf16>
    %cst_37 = arith.constant dense<0.000000e+00> : vector<8x32xf32>
    %39 = tpu.matmul %38, %35, %cst_37 {dimension_numbers = #tpu.dot_dimension_numbers<[1], [0], [0], [1], [0, 0, 1, 1], [], []>} : vector<8x32xbf16>, vector<32x32xbf16>, vector<8x32xf32> -> vector<8x32xf32>
    %40 = vector.broadcast %37 : vector<1x32xf32> to vector<8x32xf32>
    %41 = arith.addf %39, %40 : vector<8x32xf32>
    %c0_38 = arith.constant 0 : index
    %c0_39 = arith.constant 0 : index
    %c0_40 = arith.constant 0 : index
    %42 = vector.load %arg14[%c0_38, %c0_39, %c0_40] : memref<2x32x32xbf16, #tpu.memory_space<vmem>>, vector<1x32x32xbf16>
    %43 = vector.shape_cast %42 : vector<1x32x32xbf16> to vector<32x32xbf16>
    %c0_41 = arith.constant 0 : index
    %c0_42 = arith.constant 0 : index
    %c0_43 = arith.constant 0 : index
    %44 = vector.load %arg15[%c0_41, %c0_42, %c0_43] : memref<2x1x32xf32, #tpu.memory_space<vmem>>, vector<1x1x32xf32>
    %45 = vector.shape_cast %44 : vector<1x1x32xf32> to vector<1x32xf32>
    %46 = vector.extract_strided_slice %25 {offsets = [0, 0], sizes = [8, 8], strides = [1, 1]} : vector<8x32xf32> to vector<8x8xf32>
    %47 = vector.extract_strided_slice %33 {offsets = [0, 0], sizes = [8, 8], strides = [1, 1]} : vector<8x32xf32> to vector<8x8xf32>
    %cst_44 = arith.constant dense<0.000000e+00> : vector<8x8xf32>
    %48 = tpu.matmul %46, %47, %cst_44 {dimension_numbers = #tpu.dot_dimension_numbers<[1], [1], [0], [0], [0, 0, 1, 0], [], []>} : vector<8x8xf32>, vector<8x8xf32>, vector<8x8xf32> -> vector<8x8xf32>
    %49 = vector.extract_strided_slice %25 {offsets = [0, 8], sizes = [8, 8], strides = [1, 1]} : vector<8x32xf32> to vector<8x8xf32>
    %50 = vector.extract_strided_slice %33 {offsets = [0, 8], sizes = [8, 8], strides = [1, 1]} : vector<8x32xf32> to vector<8x8xf32>
    %cst_45 = arith.constant dense<0.000000e+00> : vector<8x8xf32>
    %51 = tpu.matmul %49, %50, %cst_45 {dimension_numbers = #tpu.dot_dimension_numbers<[1], [1], [0], [0], [0, 0, 1, 0], [], []>} : vector<8x8xf32>, vector<8x8xf32>, vector<8x8xf32> -> vector<8x8xf32>
    %52 = vector.extract_strided_slice %25 {offsets = [0, 16], sizes = [8, 8], strides = [1, 1]} : vector<8x32xf32> to vector<8x8xf32>
    %53 = vector.extract_strided_slice %33 {offsets = [0, 16], sizes = [8, 8], strides = [1, 1]} : vector<8x32xf32> to vector<8x8xf32>
    %cst_46 = arith.constant dense<0.000000e+00> : vector<8x8xf32>
    %54 = tpu.matmul %52, %53, %cst_46 {dimension_numbers = #tpu.dot_dimension_numbers<[1], [1], [0], [0], [0, 0, 1, 0], [], []>} : vector<8x8xf32>, vector<8x8xf32>, vector<8x8xf32> -> vector<8x8xf32>
    %55 = vector.extract_strided_slice %25 {offsets = [0, 24], sizes = [8, 8], strides = [1, 1]} : vector<8x32xf32> to vector<8x8xf32>
    %56 = vector.extract_strided_slice %33 {offsets = [0, 24], sizes = [8, 8], strides = [1, 1]} : vector<8x32xf32> to vector<8x8xf32>
    %cst_47 = arith.constant dense<0.000000e+00> : vector<8x8xf32>
    %57 = tpu.matmul %55, %56, %cst_47 {dimension_numbers = #tpu.dot_dimension_numbers<[1], [1], [0], [0], [0, 0, 1, 0], [], []>} : vector<8x8xf32>, vector<8x8xf32>, vector<8x8xf32> -> vector<8x8xf32>
    %58 = tpu.concatenate %48, %51, %54, %57 in 0 : vector<8x8xf32>, vector<8x8xf32>, vector<8x8xf32>, vector<8x8xf32> -> vector<32x8xf32>
    %59 = arith.addf %58, %14 : vector<32x8xf32>
    %cst_48 = arith.constant dense<0xFF800000> : vector<32xf32>
    %60 = vector.multi_reduction <maximumf>, %59, %cst_48 [1] : vector<32x8xf32> to vector<32xf32>
    %61 = vector.shape_cast %60 : vector<32xf32> to vector<32x1xf32>
    %62 = vector.broadcast %61 : vector<32x1xf32> to vector<32x8xf32>
    %63 = arith.subf %59, %62 : vector<32x8xf32>
    %64 = math.exp %63 : vector<32x8xf32>
    %cst_49 = arith.constant dense<0.000000e+00> : vector<32xf32>
    %65 = vector.multi_reduction <add>, %64, %cst_49 [1] : vector<32x8xf32> to vector<32xf32>
    %66 = vector.shape_cast %65 : vector<32xf32> to vector<32x1xf32>
    %67 = tpu.reciprocal %66 {approx = true} : vector<32x1xf32> -> vector<32x1xf32>
    %68 = vector.broadcast %67 : vector<32x1xf32> to vector<32x8xf32>
    %69 = arith.mulf %64, %68 : vector<32x8xf32>
    %70 = vector.extract_strided_slice %69 {offsets = [0, 0], sizes = [8, 8], strides = [1, 1]} : vector<32x8xf32> to vector<8x8xf32>
    %71 = vector.extract_strided_slice %41 {offsets = [0, 0], sizes = [8, 8], strides = [1, 1]} : vector<8x32xf32> to vector<8x8xf32>
    %cst_50 = arith.constant dense<0.000000e+00> : vector<8x8xf32>
    %72 = tpu.matmul %70, %71, %cst_50 {dimension_numbers = #tpu.dot_dimension_numbers<[1], [0], [0], [1], [0, 0, 1, 1], [], []>} : vector<8x8xf32>, vector<8x8xf32>, vector<8x8xf32> -> vector<8x8xf32>
    %73 = vector.extract_strided_slice %69 {offsets = [8, 0], sizes = [8, 8], strides = [1, 1]} : vector<32x8xf32> to vector<8x8xf32>
    %74 = vector.extract_strided_slice %41 {offsets = [0, 8], sizes = [8, 8], strides = [1, 1]} : vector<8x32xf32> to vector<8x8xf32>
    %cst_51 = arith.constant dense<0.000000e+00> : vector<8x8xf32>
    %75 = tpu.matmul %73, %74, %cst_51 {dimension_numbers = #tpu.dot_dimension_numbers<[1], [0], [0], [1], [0, 0, 1, 1], [], []>} : vector<8x8xf32>, vector<8x8xf32>, vector<8x8xf32> -> vector<8x8xf32>
    %76 = vector.extract_strided_slice %69 {offsets = [16, 0], sizes = [8, 8], strides = [1, 1]} : vector<32x8xf32> to vector<8x8xf32>
    %77 = vector.extract_strided_slice %41 {offsets = [0, 16], sizes = [8, 8], strides = [1, 1]} : vector<8x32xf32> to vector<8x8xf32>
    %cst_52 = arith.constant dense<0.000000e+00> : vector<8x8xf32>
    %78 = tpu.matmul %76, %77, %cst_52 {dimension_numbers = #tpu.dot_dimension_numbers<[1], [0], [0], [1], [0, 0, 1, 1], [], []>} : vector<8x8xf32>, vector<8x8xf32>, vector<8x8xf32> -> vector<8x8xf32>
    %79 = vector.extract_strided_slice %69 {offsets = [24, 0], sizes = [8, 8], strides = [1, 1]} : vector<32x8xf32> to vector<8x8xf32>
    %80 = vector.extract_strided_slice %41 {offsets = [0, 24], sizes = [8, 8], strides = [1, 1]} : vector<8x32xf32> to vector<8x8xf32>
    %cst_53 = arith.constant dense<0.000000e+00> : vector<8x8xf32>
    %81 = tpu.matmul %79, %80, %cst_53 {dimension_numbers = #tpu.dot_dimension_numbers<[1], [0], [0], [1], [0, 0, 1, 1], [], []>} : vector<8x8xf32>, vector<8x8xf32>, vector<8x8xf32> -> vector<8x8xf32>
    %82 = tpu.concatenate %72, %75, %78, %81 in 1 : vector<8x8xf32>, vector<8x8xf32>, vector<8x8xf32>, vector<8x8xf32> -> vector<8x32xf32>
    %83 = arith.truncf %82 : vector<8x32xf32> to vector<8x32xbf16>
    %cst_54 = arith.constant dense<0.000000e+00> : vector<8x32xf32>
    %84 = tpu.matmul %83, %43, %cst_54 {dimension_numbers = #tpu.dot_dimension_numbers<[1], [0], [0], [1], [0, 0, 1, 1], [], []>} : vector<8x32xbf16>, vector<32x32xbf16>, vector<8x32xf32> -> vector<8x32xf32>
    %85 = vector.broadcast %45 : vector<1x32xf32> to vector<8x32xf32>
    %86 = arith.addf %84, %85 : vector<8x32xf32>
    %87 = arith.addf %1, %86 : vector<8x32xf32>
    %c0_55 = arith.constant 0 : index
    %c0_56 = arith.constant 0 : index
    %c0_57 = arith.constant 0 : index
    %88 = vector.load %arg20[%c0_55, %c0_56, %c0_57] : memref<2x1x32xf32, #tpu.memory_space<vmem>>, vector<1x1x32xf32>
    %89 = vector.shape_cast %88 : vector<1x1x32xf32> to vector<1x32xf32>
    %c0_58 = arith.constant 0 : index
    %c0_59 = arith.constant 0 : index
    %c0_60 = arith.constant 0 : index
    %90 = vector.load %arg21[%c0_58, %c0_59, %c0_60] : memref<2x1x32xf32, #tpu.memory_space<vmem>>, vector<1x1x32xf32>
    %91 = vector.shape_cast %90 : vector<1x1x32xf32> to vector<1x32xf32>
    %cst_61 = arith.constant dense<0.000000e+00> : vector<8xf32>
    %92 = vector.multi_reduction <add>, %87, %cst_61 [1] : vector<8x32xf32> to vector<8xf32>
    %93 = vector.shape_cast %92 : vector<8xf32> to vector<8x1xf32>
    %cst_62 = arith.constant 3.200000e+01 : f32
    %94 = vector.broadcast %cst_62 : f32 to vector<8x1xf32>
    %95 = arith.divf %93, %94 : vector<8x1xf32>
    %96 = vector.broadcast %95 : vector<8x1xf32> to vector<8x32xf32>
    %97 = arith.subf %87, %96 : vector<8x32xf32>
    %98 = arith.mulf %97, %97 : vector<8x32xf32>
    %cst_63 = arith.constant dense<0.000000e+00> : vector<8xf32>
    %99 = vector.multi_reduction <add>, %98, %cst_63 [1] : vector<8x32xf32> to vector<8xf32>
    %100 = vector.shape_cast %99 : vector<8xf32> to vector<8x1xf32>
    %cst_64 = arith.constant 3.200000e+01 : f32
    %101 = vector.broadcast %cst_64 : f32 to vector<8x1xf32>
    %102 = arith.divf %100, %101 : vector<8x1xf32>
    %103 = vector.broadcast %95 : vector<8x1xf32> to vector<8x32xf32>
    %104 = arith.subf %87, %103 : vector<8x32xf32>
    %cst_65 = arith.constant 9.99999974E-6 : f32
    %105 = vector.broadcast %cst_65 : f32 to vector<8x1xf32>
    %106 = arith.addf %102, %105 : vector<8x1xf32>
    %107 = math.rsqrt %106 : vector<8x1xf32>
    %108 = vector.broadcast %107 : vector<8x1xf32> to vector<8x32xf32>
    %109 = arith.mulf %104, %108 : vector<8x32xf32>
    %110 = vector.broadcast %89 : vector<1x32xf32> to vector<8x32xf32>
    %111 = arith.mulf %109, %110 : vector<8x32xf32>
    %112 = vector.broadcast %91 : vector<1x32xf32> to vector<8x32xf32>
    %113 = arith.addf %111, %112 : vector<8x32xf32>
    %c0_66 = arith.constant 0 : index
    %c0_67 = arith.constant 0 : index
    %c0_68 = arith.constant 0 : index
    %114 = vector.load %arg16[%c0_66, %c0_67, %c0_68] : memref<2x32x64xbf16, #tpu.memory_space<vmem>>, vector<1x32x64xbf16>
    %115 = vector.shape_cast %114 : vector<1x32x64xbf16> to vector<32x64xbf16>
    %c0_69 = arith.constant 0 : index
    %c0_70 = arith.constant 0 : index
    %c0_71 = arith.constant 0 : index
    %116 = vector.load %arg17[%c0_69, %c0_70, %c0_71] : memref<2x1x64xf32, #tpu.memory_space<vmem>>, vector<1x1x64xf32>
    %117 = vector.shape_cast %116 : vector<1x1x64xf32> to vector<1x64xf32>
    %118 = arith.truncf %113 : vector<8x32xf32> to vector<8x32xbf16>
    %cst_72 = arith.constant dense<0.000000e+00> : vector<8x64xf32>
    %119 = tpu.matmul %118, %115, %cst_72 {dimension_numbers = #tpu.dot_dimension_numbers<[1], [0], [0], [1], [0, 0, 1, 1], [], []>} : vector<8x32xbf16>, vector<32x64xbf16>, vector<8x64xf32> -> vector<8x64xf32>
    %120 = vector.broadcast %117 : vector<1x64xf32> to vector<8x64xf32>
    %121 = arith.addf %119, %120 : vector<8x64xf32>
    %cst_73 = arith.constant 0.000000e+00 : f32
    %122 = vector.broadcast %cst_73 : f32 to vector<8x64xf32>
    %123 = arith.maximumf %121, %122 : vector<8x64xf32>
    %c0_74 = arith.constant 0 : index
    %c0_75 = arith.constant 0 : index
    %c0_76 = arith.constant 0 : index
    %124 = vector.load %arg18[%c0_74, %c0_75, %c0_76] : memref<2x64x32xbf16, #tpu.memory_space<vmem>>, vector<1x64x32xbf16>
    %125 = vector.shape_cast %124 : vector<1x64x32xbf16> to vector<64x32xbf16>
    %c0_77 = arith.constant 0 : index
    %c0_78 = arith.constant 0 : index
    %c0_79 = arith.constant 0 : index
    %126 = vector.load %arg19[%c0_77, %c0_78, %c0_79] : memref<2x1x32xf32, #tpu.memory_space<vmem>>, vector<1x1x32xf32>
    %127 = vector.shape_cast %126 : vector<1x1x32xf32> to vector<1x32xf32>
    %128 = arith.truncf %123 : vector<8x64xf32> to vector<8x64xbf16>
    %cst_80 = arith.constant dense<0.000000e+00> : vector<8x32xf32>
    %129 = tpu.matmul %128, %125, %cst_80 {dimension_numbers = #tpu.dot_dimension_numbers<[1], [0], [0], [1], [0, 0, 1, 1], [], []>} : vector<8x64xbf16>, vector<64x32xbf16>, vector<8x32xf32> -> vector<8x32xf32>
    %130 = vector.broadcast %127 : vector<1x32xf32> to vector<8x32xf32>
    %131 = arith.addf %129, %130 : vector<8x32xf32>
    %132 = arith.addf %113, %131 : vector<8x32xf32>
    %c0_81 = arith.constant 0 : index
    %c0_82 = arith.constant 0 : index
    %c0_83 = arith.constant 0 : index
    %133 = vector.load %arg22[%c0_81, %c0_82, %c0_83] : memref<2x1x32xf32, #tpu.memory_space<vmem>>, vector<1x1x32xf32>
    %134 = vector.shape_cast %133 : vector<1x1x32xf32> to vector<1x32xf32>
    %c0_84 = arith.constant 0 : index
    %c0_85 = arith.constant 0 : index
    %c0_86 = arith.constant 0 : index
    %135 = vector.load %arg23[%c0_84, %c0_85, %c0_86] : memref<2x1x32xf32, #tpu.memory_space<vmem>>, vector<1x1x32xf32>
    %136 = vector.shape_cast %135 : vector<1x1x32xf32> to vector<1x32xf32>
    %cst_87 = arith.constant dense<0.000000e+00> : vector<8xf32>
    %137 = vector.multi_reduction <add>, %132, %cst_87 [1] : vector<8x32xf32> to vector<8xf32>
    %138 = vector.shape_cast %137 : vector<8xf32> to vector<8x1xf32>
    %cst_88 = arith.constant 3.200000e+01 : f32
    %139 = vector.broadcast %cst_88 : f32 to vector<8x1xf32>
    %140 = arith.divf %138, %139 : vector<8x1xf32>
    %141 = vector.broadcast %140 : vector<8x1xf32> to vector<8x32xf32>
    %142 = arith.subf %132, %141 : vector<8x32xf32>
    %143 = arith.mulf %142, %142 : vector<8x32xf32>
    %cst_89 = arith.constant dense<0.000000e+00> : vector<8xf32>
    %144 = vector.multi_reduction <add>, %143, %cst_89 [1] : vector<8x32xf32> to vector<8xf32>
    %145 = vector.shape_cast %144 : vector<8xf32> to vector<8x1xf32>
    %cst_90 = arith.constant 3.200000e+01 : f32
    %146 = vector.broadcast %cst_90 : f32 to vector<8x1xf32>
    %147 = arith.divf %145, %146 : vector<8x1xf32>
    %148 = vector.broadcast %140 : vector<8x1xf32> to vector<8x32xf32>
    %149 = arith.subf %132, %148 : vector<8x32xf32>
    %cst_91 = arith.constant 9.99999974E-6 : f32
    %150 = vector.broadcast %cst_91 : f32 to vector<8x1xf32>
    %151 = arith.addf %147, %150 : vector<8x1xf32>
    %152 = math.rsqrt %151 : vector<8x1xf32>
    %153 = vector.broadcast %152 : vector<8x1xf32> to vector<8x32xf32>
    %154 = arith.mulf %149, %153 : vector<8x32xf32>
    %155 = vector.broadcast %134 : vector<1x32xf32> to vector<8x32xf32>
    %156 = arith.mulf %154, %155 : vector<8x32xf32>
    %157 = vector.broadcast %136 : vector<1x32xf32> to vector<8x32xf32>
    %158 = arith.addf %156, %157 : vector<8x32xf32>
    %c1 = arith.constant 1 : index
    %c0_92 = arith.constant 0 : index
    %c0_93 = arith.constant 0 : index
    %159 = vector.load %arg8[%c1, %c0_92, %c0_93] : memref<2x32x32xbf16, #tpu.memory_space<vmem>>, vector<1x32x32xbf16>
    %160 = vector.shape_cast %159 : vector<1x32x32xbf16> to vector<32x32xbf16>
    %c1_94 = arith.constant 1 : index
    %c0_95 = arith.constant 0 : index
    %c0_96 = arith.constant 0 : index
    %161 = vector.load %arg9[%c1_94, %c0_95, %c0_96] : memref<2x1x32xf32, #tpu.memory_space<vmem>>, vector<1x1x32xf32>
    %162 = vector.shape_cast %161 : vector<1x1x32xf32> to vector<1x32xf32>
    %163 = arith.truncf %158 : vector<8x32xf32> to vector<8x32xbf16>
    %cst_97 = arith.constant dense<0.000000e+00> : vector<8x32xf32>
    %164 = tpu.matmul %163, %160, %cst_97 {dimension_numbers = #tpu.dot_dimension_numbers<[1], [0], [0], [1], [0, 0, 1, 1], [], []>} : vector<8x32xbf16>, vector<32x32xbf16>, vector<8x32xf32> -> vector<8x32xf32>
    %165 = vector.broadcast %162 : vector<1x32xf32> to vector<8x32xf32>
    %166 = arith.addf %164, %165 : vector<8x32xf32>
    %c1_98 = arith.constant 1 : index
    %c0_99 = arith.constant 0 : index
    %c0_100 = arith.constant 0 : index
    %167 = vector.load %arg10[%c1_98, %c0_99, %c0_100] : memref<2x32x32xbf16, #tpu.memory_space<vmem>>, vector<1x32x32xbf16>
    %168 = vector.shape_cast %167 : vector<1x32x32xbf16> to vector<32x32xbf16>
    %c1_101 = arith.constant 1 : index
    %c0_102 = arith.constant 0 : index
    %c0_103 = arith.constant 0 : index
    %169 = vector.load %arg11[%c1_101, %c0_102, %c0_103] : memref<2x1x32xf32, #tpu.memory_space<vmem>>, vector<1x1x32xf32>
    %170 = vector.shape_cast %169 : vector<1x1x32xf32> to vector<1x32xf32>
    %171 = arith.truncf %158 : vector<8x32xf32> to vector<8x32xbf16>
    %cst_104 = arith.constant dense<0.000000e+00> : vector<8x32xf32>
    %172 = tpu.matmul %171, %168, %cst_104 {dimension_numbers = #tpu.dot_dimension_numbers<[1], [0], [0], [1], [0, 0, 1, 1], [], []>} : vector<8x32xbf16>, vector<32x32xbf16>, vector<8x32xf32> -> vector<8x32xf32>
    %173 = vector.broadcast %170 : vector<1x32xf32> to vector<8x32xf32>
    %174 = arith.addf %172, %173 : vector<8x32xf32>
    %c1_105 = arith.constant 1 : index
    %c0_106 = arith.constant 0 : index
    %c0_107 = arith.constant 0 : index
    %175 = vector.load %arg12[%c1_105, %c0_106, %c0_107] : memref<2x32x32xbf16, #tpu.memory_space<vmem>>, vector<1x32x32xbf16>
    %176 = vector.shape_cast %175 : vector<1x32x32xbf16> to vector<32x32xbf16>
    %c1_108 = arith.constant 1 : index
    %c0_109 = arith.constant 0 : index
    %c0_110 = arith.constant 0 : index
    %177 = vector.load %arg13[%c1_108, %c0_109, %c0_110] : memref<2x1x32xf32, #tpu.memory_space<vmem>>, vector<1x1x32xf32>
    %178 = vector.shape_cast %177 : vector<1x1x32xf32> to vector<1x32xf32>
    %179 = arith.truncf %158 : vector<8x32xf32> to vector<8x32xbf16>
    %cst_111 = arith.constant dense<0.000000e+00> : vector<8x32xf32>
    %180 = tpu.matmul %179, %176, %cst_111 {dimension_numbers = #tpu.dot_dimension_numbers<[1], [0], [0], [1], [0, 0, 1, 1], [], []>} : vector<8x32xbf16>, vector<32x32xbf16>, vector<8x32xf32> -> vector<8x32xf32>
    %181 = vector.broadcast %178 : vector<1x32xf32> to vector<8x32xf32>
    %182 = arith.addf %180, %181 : vector<8x32xf32>
    %c1_112 = arith.constant 1 : index
    %c0_113 = arith.constant 0 : index
    %c0_114 = arith.constant 0 : index
    %183 = vector.load %arg14[%c1_112, %c0_113, %c0_114] : memref<2x32x32xbf16, #tpu.memory_space<vmem>>, vector<1x32x32xbf16>
    %184 = vector.shape_cast %183 : vector<1x32x32xbf16> to vector<32x32xbf16>
    %c1_115 = arith.constant 1 : index
    %c0_116 = arith.constant 0 : index
    %c0_117 = arith.constant 0 : index
    %185 = vector.load %arg15[%c1_115, %c0_116, %c0_117] : memref<2x1x32xf32, #tpu.memory_space<vmem>>, vector<1x1x32xf32>
    %186 = vector.shape_cast %185 : vector<1x1x32xf32> to vector<1x32xf32>
    %187 = vector.extract_strided_slice %166 {offsets = [0, 0], sizes = [8, 8], strides = [1, 1]} : vector<8x32xf32> to vector<8x8xf32>
    %188 = vector.extract_strided_slice %174 {offsets = [0, 0], sizes = [8, 8], strides = [1, 1]} : vector<8x32xf32> to vector<8x8xf32>
    %cst_118 = arith.constant dense<0.000000e+00> : vector<8x8xf32>
    %189 = tpu.matmul %187, %188, %cst_118 {dimension_numbers = #tpu.dot_dimension_numbers<[1], [1], [0], [0], [0, 0, 1, 0], [], []>} : vector<8x8xf32>, vector<8x8xf32>, vector<8x8xf32> -> vector<8x8xf32>
    %190 = vector.extract_strided_slice %166 {offsets = [0, 8], sizes = [8, 8], strides = [1, 1]} : vector<8x32xf32> to vector<8x8xf32>
    %191 = vector.extract_strided_slice %174 {offsets = [0, 8], sizes = [8, 8], strides = [1, 1]} : vector<8x32xf32> to vector<8x8xf32>
    %cst_119 = arith.constant dense<0.000000e+00> : vector<8x8xf32>
    %192 = tpu.matmul %190, %191, %cst_119 {dimension_numbers = #tpu.dot_dimension_numbers<[1], [1], [0], [0], [0, 0, 1, 0], [], []>} : vector<8x8xf32>, vector<8x8xf32>, vector<8x8xf32> -> vector<8x8xf32>
    %193 = vector.extract_strided_slice %166 {offsets = [0, 16], sizes = [8, 8], strides = [1, 1]} : vector<8x32xf32> to vector<8x8xf32>
    %194 = vector.extract_strided_slice %174 {offsets = [0, 16], sizes = [8, 8], strides = [1, 1]} : vector<8x32xf32> to vector<8x8xf32>
    %cst_120 = arith.constant dense<0.000000e+00> : vector<8x8xf32>
    %195 = tpu.matmul %193, %194, %cst_120 {dimension_numbers = #tpu.dot_dimension_numbers<[1], [1], [0], [0], [0, 0, 1, 0], [], []>} : vector<8x8xf32>, vector<8x8xf32>, vector<8x8xf32> -> vector<8x8xf32>
    %196 = vector.extract_strided_slice %166 {offsets = [0, 24], sizes = [8, 8], strides = [1, 1]} : vector<8x32xf32> to vector<8x8xf32>
    %197 = vector.extract_strided_slice %174 {offsets = [0, 24], sizes = [8, 8], strides = [1, 1]} : vector<8x32xf32> to vector<8x8xf32>
    %cst_121 = arith.constant dense<0.000000e+00> : vector<8x8xf32>
    %198 = tpu.matmul %196, %197, %cst_121 {dimension_numbers = #tpu.dot_dimension_numbers<[1], [1], [0], [0], [0, 0, 1, 0], [], []>} : vector<8x8xf32>, vector<8x8xf32>, vector<8x8xf32> -> vector<8x8xf32>
    %199 = tpu.concatenate %189, %192, %195, %198 in 0 : vector<8x8xf32>, vector<8x8xf32>, vector<8x8xf32>, vector<8x8xf32> -> vector<32x8xf32>
    %200 = arith.addf %199, %14 : vector<32x8xf32>
    %cst_122 = arith.constant dense<0xFF800000> : vector<32xf32>
    %201 = vector.multi_reduction <maximumf>, %200, %cst_122 [1] : vector<32x8xf32> to vector<32xf32>
    %202 = vector.shape_cast %201 : vector<32xf32> to vector<32x1xf32>
    %203 = vector.broadcast %202 : vector<32x1xf32> to vector<32x8xf32>
    %204 = arith.subf %200, %203 : vector<32x8xf32>
    %205 = math.exp %204 : vector<32x8xf32>
    %cst_123 = arith.constant dense<0.000000e+00> : vector<32xf32>
    %206 = vector.multi_reduction <add>, %205, %cst_123 [1] : vector<32x8xf32> to vector<32xf32>
    %207 = vector.shape_cast %206 : vector<32xf32> to vector<32x1xf32>
    %208 = tpu.reciprocal %207 {approx = true} : vector<32x1xf32> -> vector<32x1xf32>
    %209 = vector.broadcast %208 : vector<32x1xf32> to vector<32x8xf32>
    %210 = arith.mulf %205, %209 : vector<32x8xf32>
    %211 = vector.extract_strided_slice %210 {offsets = [0, 0], sizes = [8, 8], strides = [1, 1]} : vector<32x8xf32> to vector<8x8xf32>
    %212 = vector.extract_strided_slice %182 {offsets = [0, 0], sizes = [8, 8], strides = [1, 1]} : vector<8x32xf32> to vector<8x8xf32>
    %cst_124 = arith.constant dense<0.000000e+00> : vector<8x8xf32>
    %213 = tpu.matmul %211, %212, %cst_124 {dimension_numbers = #tpu.dot_dimension_numbers<[1], [0], [0], [1], [0, 0, 1, 1], [], []>} : vector<8x8xf32>, vector<8x8xf32>, vector<8x8xf32> -> vector<8x8xf32>
    %214 = vector.extract_strided_slice %210 {offsets = [8, 0], sizes = [8, 8], strides = [1, 1]} : vector<32x8xf32> to vector<8x8xf32>
    %215 = vector.extract_strided_slice %182 {offsets = [0, 8], sizes = [8, 8], strides = [1, 1]} : vector<8x32xf32> to vector<8x8xf32>
    %cst_125 = arith.constant dense<0.000000e+00> : vector<8x8xf32>
    %216 = tpu.matmul %214, %215, %cst_125 {dimension_numbers = #tpu.dot_dimension_numbers<[1], [0], [0], [1], [0, 0, 1, 1], [], []>} : vector<8x8xf32>, vector<8x8xf32>, vector<8x8xf32> -> vector<8x8xf32>
    %217 = vector.extract_strided_slice %210 {offsets = [16, 0], sizes = [8, 8], strides = [1, 1]} : vector<32x8xf32> to vector<8x8xf32>
    %218 = vector.extract_strided_slice %182 {offsets = [0, 16], sizes = [8, 8], strides = [1, 1]} : vector<8x32xf32> to vector<8x8xf32>
    %cst_126 = arith.constant dense<0.000000e+00> : vector<8x8xf32>
    %219 = tpu.matmul %217, %218, %cst_126 {dimension_numbers = #tpu.dot_dimension_numbers<[1], [0], [0], [1], [0, 0, 1, 1], [], []>} : vector<8x8xf32>, vector<8x8xf32>, vector<8x8xf32> -> vector<8x8xf32>
    %220 = vector.extract_strided_slice %210 {offsets = [24, 0], sizes = [8, 8], strides = [1, 1]} : vector<32x8xf32> to vector<8x8xf32>
    %221 = vector.extract_strided_slice %182 {offsets = [0, 24], sizes = [8, 8], strides = [1, 1]} : vector<8x32xf32> to vector<8x8xf32>
    %cst_127 = arith.constant dense<0.000000e+00> : vector<8x8xf32>
    %222 = tpu.matmul %220, %221, %cst_127 {dimension_numbers = #tpu.dot_dimension_numbers<[1], [0], [0], [1], [0, 0, 1, 1], [], []>} : vector<8x8xf32>, vector<8x8xf32>, vector<8x8xf32> -> vector<8x8xf32>
    %223 = tpu.concatenate %213, %216, %219, %222 in 1 : vector<8x8xf32>, vector<8x8xf32>, vector<8x8xf32>, vector<8x8xf32> -> vector<8x32xf32>
    %224 = arith.truncf %223 : vector<8x32xf32> to vector<8x32xbf16>
    %cst_128 = arith.constant dense<0.000000e+00> : vector<8x32xf32>
    %225 = tpu.matmul %224, %184, %cst_128 {dimension_numbers = #tpu.dot_dimension_numbers<[1], [0], [0], [1], [0, 0, 1, 1], [], []>} : vector<8x32xbf16>, vector<32x32xbf16>, vector<8x32xf32> -> vector<8x32xf32>
    %226 = vector.broadcast %186 : vector<1x32xf32> to vector<8x32xf32>
    %227 = arith.addf %225, %226 : vector<8x32xf32>
    %228 = arith.addf %158, %227 : vector<8x32xf32>
    %c1_129 = arith.constant 1 : index
    %c0_130 = arith.constant 0 : index
    %c0_131 = arith.constant 0 : index
    %229 = vector.load %arg20[%c1_129, %c0_130, %c0_131] : memref<2x1x32xf32, #tpu.memory_space<vmem>>, vector<1x1x32xf32>
    %230 = vector.shape_cast %229 : vector<1x1x32xf32> to vector<1x32xf32>
    %c1_132 = arith.constant 1 : index
    %c0_133 = arith.constant 0 : index
    %c0_134 = arith.constant 0 : index
    %231 = vector.load %arg21[%c1_132, %c0_133, %c0_134] : memref<2x1x32xf32, #tpu.memory_space<vmem>>, vector<1x1x32xf32>
    %232 = vector.shape_cast %231 : vector<1x1x32xf32> to vector<1x32xf32>
    %cst_135 = arith.constant dense<0.000000e+00> : vector<8xf32>
    %233 = vector.multi_reduction <add>, %228, %cst_135 [1] : vector<8x32xf32> to vector<8xf32>
    %234 = vector.shape_cast %233 : vector<8xf32> to vector<8x1xf32>
    %cst_136 = arith.constant 3.200000e+01 : f32
    %235 = vector.broadcast %cst_136 : f32 to vector<8x1xf32>
    %236 = arith.divf %234, %235 : vector<8x1xf32>
    %237 = vector.broadcast %236 : vector<8x1xf32> to vector<8x32xf32>
    %238 = arith.subf %228, %237 : vector<8x32xf32>
    %239 = arith.mulf %238, %238 : vector<8x32xf32>
    %cst_137 = arith.constant dense<0.000000e+00> : vector<8xf32>
    %240 = vector.multi_reduction <add>, %239, %cst_137 [1] : vector<8x32xf32> to vector<8xf32>
    %241 = vector.shape_cast %240 : vector<8xf32> to vector<8x1xf32>
    %cst_138 = arith.constant 3.200000e+01 : f32
    %242 = vector.broadcast %cst_138 : f32 to vector<8x1xf32>
    %243 = arith.divf %241, %242 : vector<8x1xf32>
    %244 = vector.broadcast %236 : vector<8x1xf32> to vector<8x32xf32>
    %245 = arith.subf %228, %244 : vector<8x32xf32>
    %cst_139 = arith.constant 9.99999974E-6 : f32
    %246 = vector.broadcast %cst_139 : f32 to vector<8x1xf32>
    %247 = arith.addf %243, %246 : vector<8x1xf32>
    %248 = math.rsqrt %247 : vector<8x1xf32>
    %249 = vector.broadcast %248 : vector<8x1xf32> to vector<8x32xf32>
    %250 = arith.mulf %245, %249 : vector<8x32xf32>
    %251 = vector.broadcast %230 : vector<1x32xf32> to vector<8x32xf32>
    %252 = arith.mulf %250, %251 : vector<8x32xf32>
    %253 = vector.broadcast %232 : vector<1x32xf32> to vector<8x32xf32>
    %254 = arith.addf %252, %253 : vector<8x32xf32>
    %c1_140 = arith.constant 1 : index
    %c0_141 = arith.constant 0 : index
    %c0_142 = arith.constant 0 : index
    %255 = vector.load %arg16[%c1_140, %c0_141, %c0_142] : memref<2x32x64xbf16, #tpu.memory_space<vmem>>, vector<1x32x64xbf16>
    %256 = vector.shape_cast %255 : vector<1x32x64xbf16> to vector<32x64xbf16>
    %c1_143 = arith.constant 1 : index
    %c0_144 = arith.constant 0 : index
    %c0_145 = arith.constant 0 : index
    %257 = vector.load %arg17[%c1_143, %c0_144, %c0_145] : memref<2x1x64xf32, #tpu.memory_space<vmem>>, vector<1x1x64xf32>
    %258 = vector.shape_cast %257 : vector<1x1x64xf32> to vector<1x64xf32>
    %259 = arith.truncf %254 : vector<8x32xf32> to vector<8x32xbf16>
    %cst_146 = arith.constant dense<0.000000e+00> : vector<8x64xf32>
    %260 = tpu.matmul %259, %256, %cst_146 {dimension_numbers = #tpu.dot_dimension_numbers<[1], [0], [0], [1], [0, 0, 1, 1], [], []>} : vector<8x32xbf16>, vector<32x64xbf16>, vector<8x64xf32> -> vector<8x64xf32>
    %261 = vector.broadcast %258 : vector<1x64xf32> to vector<8x64xf32>
    %262 = arith.addf %260, %261 : vector<8x64xf32>
    %cst_147 = arith.constant 0.000000e+00 : f32
    %263 = vector.broadcast %cst_147 : f32 to vector<8x64xf32>
    %264 = arith.maximumf %262, %263 : vector<8x64xf32>
    %c1_148 = arith.constant 1 : index
    %c0_149 = arith.constant 0 : index
    %c0_150 = arith.constant 0 : index
    %265 = vector.load %arg18[%c1_148, %c0_149, %c0_150] : memref<2x64x32xbf16, #tpu.memory_space<vmem>>, vector<1x64x32xbf16>
    %266 = vector.shape_cast %265 : vector<1x64x32xbf16> to vector<64x32xbf16>
    %c1_151 = arith.constant 1 : index
    %c0_152 = arith.constant 0 : index
    %c0_153 = arith.constant 0 : index
    %267 = vector.load %arg19[%c1_151, %c0_152, %c0_153] : memref<2x1x32xf32, #tpu.memory_space<vmem>>, vector<1x1x32xf32>
    %268 = vector.shape_cast %267 : vector<1x1x32xf32> to vector<1x32xf32>
    %269 = arith.truncf %264 : vector<8x64xf32> to vector<8x64xbf16>
    %cst_154 = arith.constant dense<0.000000e+00> : vector<8x32xf32>
    %270 = tpu.matmul %269, %266, %cst_154 {dimension_numbers = #tpu.dot_dimension_numbers<[1], [0], [0], [1], [0, 0, 1, 1], [], []>} : vector<8x64xbf16>, vector<64x32xbf16>, vector<8x32xf32> -> vector<8x32xf32>
    %271 = vector.broadcast %268 : vector<1x32xf32> to vector<8x32xf32>
    %272 = arith.addf %270, %271 : vector<8x32xf32>
    %273 = arith.addf %254, %272 : vector<8x32xf32>
    %c1_155 = arith.constant 1 : index
    %c0_156 = arith.constant 0 : index
    %c0_157 = arith.constant 0 : index
    %274 = vector.load %arg22[%c1_155, %c0_156, %c0_157] : memref<2x1x32xf32, #tpu.memory_space<vmem>>, vector<1x1x32xf32>
    %275 = vector.shape_cast %274 : vector<1x1x32xf32> to vector<1x32xf32>
    %c1_158 = arith.constant 1 : index
    %c0_159 = arith.constant 0 : index
    %c0_160 = arith.constant 0 : index
    %276 = vector.load %arg23[%c1_158, %c0_159, %c0_160] : memref<2x1x32xf32, #tpu.memory_space<vmem>>, vector<1x1x32xf32>
    %277 = vector.shape_cast %276 : vector<1x1x32xf32> to vector<1x32xf32>
    %cst_161 = arith.constant dense<0.000000e+00> : vector<8xf32>
    %278 = vector.multi_reduction <add>, %273, %cst_161 [1] : vector<8x32xf32> to vector<8xf32>
    %279 = vector.shape_cast %278 : vector<8xf32> to vector<8x1xf32>
    %cst_162 = arith.constant 3.200000e+01 : f32
    %280 = vector.broadcast %cst_162 : f32 to vector<8x1xf32>
    %281 = arith.divf %279, %280 : vector<8x1xf32>
    %282 = vector.broadcast %281 : vector<8x1xf32> to vector<8x32xf32>
    %283 = arith.subf %273, %282 : vector<8x32xf32>
    %284 = arith.mulf %283, %283 : vector<8x32xf32>
    %cst_163 = arith.constant dense<0.000000e+00> : vector<8xf32>
    %285 = vector.multi_reduction <add>, %284, %cst_163 [1] : vector<8x32xf32> to vector<8xf32>
    %286 = vector.shape_cast %285 : vector<8xf32> to vector<8x1xf32>
    %cst_164 = arith.constant 3.200000e+01 : f32
    %287 = vector.broadcast %cst_164 : f32 to vector<8x1xf32>
    %288 = arith.divf %286, %287 : vector<8x1xf32>
    %289 = vector.broadcast %281 : vector<8x1xf32> to vector<8x32xf32>
    %290 = arith.subf %273, %289 : vector<8x32xf32>
    %cst_165 = arith.constant 9.99999974E-6 : f32
    %291 = vector.broadcast %cst_165 : f32 to vector<8x1xf32>
    %292 = arith.addf %288, %291 : vector<8x1xf32>
    %293 = math.rsqrt %292 : vector<8x1xf32>
    %294 = vector.broadcast %293 : vector<8x1xf32> to vector<8x32xf32>
    %295 = arith.mulf %290, %294 : vector<8x32xf32>
    %296 = vector.broadcast %275 : vector<1x32xf32> to vector<8x32xf32>
    %297 = arith.mulf %295, %296 : vector<8x32xf32>
    %298 = vector.broadcast %277 : vector<1x32xf32> to vector<8x32xf32>
    %299 = arith.addf %297, %298 : vector<8x32xf32>
    %c0_166 = arith.constant 0 : index
    %c0_167 = arith.constant 0 : index
    %300 = vector.load %arg50[%c0_166, %c0_167] : memref<1x32xf32, #tpu.memory_space<vmem>>, vector<1x32xf32>
    %c0_168 = arith.constant 0 : index
    %c0_169 = arith.constant 0 : index
    %301 = vector.load %arg51[%c0_168, %c0_169] : memref<1x32xf32, #tpu.memory_space<vmem>>, vector<1x32xf32>
    %cst_170 = arith.constant dense<0.000000e+00> : vector<8xf32>
    %302 = vector.multi_reduction <add>, %299, %cst_170 [1] : vector<8x32xf32> to vector<8xf32>
    %303 = vector.shape_cast %302 : vector<8xf32> to vector<8x1xf32>
    %cst_171 = arith.constant 3.200000e+01 : f32
    %304 = vector.broadcast %cst_171 : f32 to vector<8x1xf32>
    %305 = arith.divf %303, %304 : vector<8x1xf32>
    %306 = vector.broadcast %305 : vector<8x1xf32> to vector<8x32xf32>
    %307 = arith.subf %299, %306 : vector<8x32xf32>
    %308 = arith.mulf %307, %307 : vector<8x32xf32>
    %cst_172 = arith.constant dense<0.000000e+00> : vector<8xf32>
    %309 = vector.multi_reduction <add>, %308, %cst_172 [1] : vector<8x32xf32> to vector<8xf32>
    %310 = vector.shape_cast %309 : vector<8xf32> to vector<8x1xf32>
    %cst_173 = arith.constant 3.200000e+01 : f32
    %311 = vector.broadcast %cst_173 : f32 to vector<8x1xf32>
    %312 = arith.divf %310, %311 : vector<8x1xf32>
    %313 = vector.broadcast %305 : vector<8x1xf32> to vector<8x32xf32>
    %314 = arith.subf %299, %313 : vector<8x32xf32>
    %cst_174 = arith.constant 9.99999974E-6 : f32
    %315 = vector.broadcast %cst_174 : f32 to vector<8x1xf32>
    %316 = arith.addf %312, %315 : vector<8x1xf32>
    %317 = math.rsqrt %316 : vector<8x1xf32>
    %318 = vector.broadcast %317 : vector<8x1xf32> to vector<8x32xf32>
    %319 = arith.mulf %314, %318 : vector<8x32xf32>
    %320 = vector.broadcast %300 : vector<1x32xf32> to vector<8x32xf32>
    %321 = arith.mulf %319, %320 : vector<8x32xf32>
    %322 = vector.broadcast %301 : vector<1x32xf32> to vector<8x32xf32>
    %323 = arith.addf %321, %322 : vector<8x32xf32>
    %c0_175 = arith.constant 0 : index
    %c0_176 = arith.constant 0 : index
    %c0_177 = arith.constant 0 : index
    %324 = vector.load %arg24[%c0_175, %c0_176, %c0_177] : memref<2x32x32xbf16, #tpu.memory_space<vmem>>, vector<1x32x32xbf16>
    %325 = vector.shape_cast %324 : vector<1x32x32xbf16> to vector<32x32xbf16>
    %c0_178 = arith.constant 0 : index
    %c0_179 = arith.constant 0 : index
    %c0_180 = arith.constant 0 : index
    %326 = vector.load %arg25[%c0_178, %c0_179, %c0_180] : memref<2x1x32xf32, #tpu.memory_space<vmem>>, vector<1x1x32xf32>
    %327 = vector.shape_cast %326 : vector<1x1x32xf32> to vector<1x32xf32>
    %328 = arith.truncf %3 : vector<8x32xf32> to vector<8x32xbf16>
    %cst_181 = arith.constant dense<0.000000e+00> : vector<8x32xf32>
    %329 = tpu.matmul %328, %325, %cst_181 {dimension_numbers = #tpu.dot_dimension_numbers<[1], [0], [0], [1], [0, 0, 1, 1], [], []>} : vector<8x32xbf16>, vector<32x32xbf16>, vector<8x32xf32> -> vector<8x32xf32>
    %330 = vector.broadcast %327 : vector<1x32xf32> to vector<8x32xf32>
    %331 = arith.addf %329, %330 : vector<8x32xf32>
    %c0_182 = arith.constant 0 : index
    %c0_183 = arith.constant 0 : index
    %c0_184 = arith.constant 0 : index
    %332 = vector.load %arg26[%c0_182, %c0_183, %c0_184] : memref<2x32x32xbf16, #tpu.memory_space<vmem>>, vector<1x32x32xbf16>
    %333 = vector.shape_cast %332 : vector<1x32x32xbf16> to vector<32x32xbf16>
    %c0_185 = arith.constant 0 : index
    %c0_186 = arith.constant 0 : index
    %c0_187 = arith.constant 0 : index
    %334 = vector.load %arg27[%c0_185, %c0_186, %c0_187] : memref<2x1x32xf32, #tpu.memory_space<vmem>>, vector<1x1x32xf32>
    %335 = vector.shape_cast %334 : vector<1x1x32xf32> to vector<1x32xf32>
    %336 = arith.truncf %3 : vector<8x32xf32> to vector<8x32xbf16>
    %cst_188 = arith.constant dense<0.000000e+00> : vector<8x32xf32>
    %337 = tpu.matmul %336, %333, %cst_188 {dimension_numbers = #tpu.dot_dimension_numbers<[1], [0], [0], [1], [0, 0, 1, 1], [], []>} : vector<8x32xbf16>, vector<32x32xbf16>, vector<8x32xf32> -> vector<8x32xf32>
    %338 = vector.broadcast %335 : vector<1x32xf32> to vector<8x32xf32>
    %339 = arith.addf %337, %338 : vector<8x32xf32>
    %c0_189 = arith.constant 0 : index
    %c0_190 = arith.constant 0 : index
    %c0_191 = arith.constant 0 : index
    %340 = vector.load %arg28[%c0_189, %c0_190, %c0_191] : memref<2x32x32xbf16, #tpu.memory_space<vmem>>, vector<1x32x32xbf16>
    %341 = vector.shape_cast %340 : vector<1x32x32xbf16> to vector<32x32xbf16>
    %c0_192 = arith.constant 0 : index
    %c0_193 = arith.constant 0 : index
    %c0_194 = arith.constant 0 : index
    %342 = vector.load %arg29[%c0_192, %c0_193, %c0_194] : memref<2x1x32xf32, #tpu.memory_space<vmem>>, vector<1x1x32xf32>
    %343 = vector.shape_cast %342 : vector<1x1x32xf32> to vector<1x32xf32>
    %344 = arith.truncf %3 : vector<8x32xf32> to vector<8x32xbf16>
    %cst_195 = arith.constant dense<0.000000e+00> : vector<8x32xf32>
    %345 = tpu.matmul %344, %341, %cst_195 {dimension_numbers = #tpu.dot_dimension_numbers<[1], [0], [0], [1], [0, 0, 1, 1], [], []>} : vector<8x32xbf16>, vector<32x32xbf16>, vector<8x32xf32> -> vector<8x32xf32>
    %346 = vector.broadcast %343 : vector<1x32xf32> to vector<8x32xf32>
    %347 = arith.addf %345, %346 : vector<8x32xf32>
    %c0_196 = arith.constant 0 : index
    %c0_197 = arith.constant 0 : index
    %c0_198 = arith.constant 0 : index
    %348 = vector.load %arg30[%c0_196, %c0_197, %c0_198] : memref<2x32x32xbf16, #tpu.memory_space<vmem>>, vector<1x32x32xbf16>
    %349 = vector.shape_cast %348 : vector<1x32x32xbf16> to vector<32x32xbf16>
    %c0_199 = arith.constant 0 : index
    %c0_200 = arith.constant 0 : index
    %c0_201 = arith.constant 0 : index
    %350 = vector.load %arg31[%c0_199, %c0_200, %c0_201] : memref<2x1x32xf32, #tpu.memory_space<vmem>>, vector<1x1x32xf32>
    %351 = vector.shape_cast %350 : vector<1x1x32xf32> to vector<1x32xf32>
    %352 = vector.extract_strided_slice %331 {offsets = [0, 0], sizes = [8, 8], strides = [1, 1]} : vector<8x32xf32> to vector<8x8xf32>
    %353 = vector.extract_strided_slice %339 {offsets = [0, 0], sizes = [8, 8], strides = [1, 1]} : vector<8x32xf32> to vector<8x8xf32>
    %cst_202 = arith.constant dense<0.000000e+00> : vector<8x8xf32>
    %354 = tpu.matmul %352, %353, %cst_202 {dimension_numbers = #tpu.dot_dimension_numbers<[1], [1], [0], [0], [0, 0, 1, 0], [], []>} : vector<8x8xf32>, vector<8x8xf32>, vector<8x8xf32> -> vector<8x8xf32>
    %355 = vector.extract_strided_slice %331 {offsets = [0, 8], sizes = [8, 8], strides = [1, 1]} : vector<8x32xf32> to vector<8x8xf32>
    %356 = vector.extract_strided_slice %339 {offsets = [0, 8], sizes = [8, 8], strides = [1, 1]} : vector<8x32xf32> to vector<8x8xf32>
    %cst_203 = arith.constant dense<0.000000e+00> : vector<8x8xf32>
    %357 = tpu.matmul %355, %356, %cst_203 {dimension_numbers = #tpu.dot_dimension_numbers<[1], [1], [0], [0], [0, 0, 1, 0], [], []>} : vector<8x8xf32>, vector<8x8xf32>, vector<8x8xf32> -> vector<8x8xf32>
    %358 = vector.extract_strided_slice %331 {offsets = [0, 16], sizes = [8, 8], strides = [1, 1]} : vector<8x32xf32> to vector<8x8xf32>
    %359 = vector.extract_strided_slice %339 {offsets = [0, 16], sizes = [8, 8], strides = [1, 1]} : vector<8x32xf32> to vector<8x8xf32>
    %cst_204 = arith.constant dense<0.000000e+00> : vector<8x8xf32>
    %360 = tpu.matmul %358, %359, %cst_204 {dimension_numbers = #tpu.dot_dimension_numbers<[1], [1], [0], [0], [0, 0, 1, 0], [], []>} : vector<8x8xf32>, vector<8x8xf32>, vector<8x8xf32> -> vector<8x8xf32>
    %361 = vector.extract_strided_slice %331 {offsets = [0, 24], sizes = [8, 8], strides = [1, 1]} : vector<8x32xf32> to vector<8x8xf32>
    %362 = vector.extract_strided_slice %339 {offsets = [0, 24], sizes = [8, 8], strides = [1, 1]} : vector<8x32xf32> to vector<8x8xf32>
    %cst_205 = arith.constant dense<0.000000e+00> : vector<8x8xf32>
    %363 = tpu.matmul %361, %362, %cst_205 {dimension_numbers = #tpu.dot_dimension_numbers<[1], [1], [0], [0], [0, 0, 1, 0], [], []>} : vector<8x8xf32>, vector<8x8xf32>, vector<8x8xf32> -> vector<8x8xf32>
    %364 = tpu.concatenate %354, %357, %360, %363 in 0 : vector<8x8xf32>, vector<8x8xf32>, vector<8x8xf32>, vector<8x8xf32> -> vector<32x8xf32>
    %365 = arith.addf %364, %17 : vector<32x8xf32>
    %cst_206 = arith.constant dense<0xFF800000> : vector<32xf32>
    %366 = vector.multi_reduction <maximumf>, %365, %cst_206 [1] : vector<32x8xf32> to vector<32xf32>
    %367 = vector.shape_cast %366 : vector<32xf32> to vector<32x1xf32>
    %368 = vector.broadcast %367 : vector<32x1xf32> to vector<32x8xf32>
    %369 = arith.subf %365, %368 : vector<32x8xf32>
    %370 = math.exp %369 : vector<32x8xf32>
    %cst_207 = arith.constant dense<0.000000e+00> : vector<32xf32>
    %371 = vector.multi_reduction <add>, %370, %cst_207 [1] : vector<32x8xf32> to vector<32xf32>
    %372 = vector.shape_cast %371 : vector<32xf32> to vector<32x1xf32>
    %373 = tpu.reciprocal %372 {approx = true} : vector<32x1xf32> -> vector<32x1xf32>
    %374 = vector.broadcast %373 : vector<32x1xf32> to vector<32x8xf32>
    %375 = arith.mulf %370, %374 : vector<32x8xf32>
    %376 = vector.extract_strided_slice %375 {offsets = [0, 0], sizes = [8, 8], strides = [1, 1]} : vector<32x8xf32> to vector<8x8xf32>
    %377 = vector.extract_strided_slice %347 {offsets = [0, 0], sizes = [8, 8], strides = [1, 1]} : vector<8x32xf32> to vector<8x8xf32>
    %cst_208 = arith.constant dense<0.000000e+00> : vector<8x8xf32>
    %378 = tpu.matmul %376, %377, %cst_208 {dimension_numbers = #tpu.dot_dimension_numbers<[1], [0], [0], [1], [0, 0, 1, 1], [], []>} : vector<8x8xf32>, vector<8x8xf32>, vector<8x8xf32> -> vector<8x8xf32>
    %379 = vector.extract_strided_slice %375 {offsets = [8, 0], sizes = [8, 8], strides = [1, 1]} : vector<32x8xf32> to vector<8x8xf32>
    %380 = vector.extract_strided_slice %347 {offsets = [0, 8], sizes = [8, 8], strides = [1, 1]} : vector<8x32xf32> to vector<8x8xf32>
    %cst_209 = arith.constant dense<0.000000e+00> : vector<8x8xf32>
    %381 = tpu.matmul %379, %380, %cst_209 {dimension_numbers = #tpu.dot_dimension_numbers<[1], [0], [0], [1], [0, 0, 1, 1], [], []>} : vector<8x8xf32>, vector<8x8xf32>, vector<8x8xf32> -> vector<8x8xf32>
    %382 = vector.extract_strided_slice %375 {offsets = [16, 0], sizes = [8, 8], strides = [1, 1]} : vector<32x8xf32> to vector<8x8xf32>
    %383 = vector.extract_strided_slice %347 {offsets = [0, 16], sizes = [8, 8], strides = [1, 1]} : vector<8x32xf32> to vector<8x8xf32>
    %cst_210 = arith.constant dense<0.000000e+00> : vector<8x8xf32>
    %384 = tpu.matmul %382, %383, %cst_210 {dimension_numbers = #tpu.dot_dimension_numbers<[1], [0], [0], [1], [0, 0, 1, 1], [], []>} : vector<8x8xf32>, vector<8x8xf32>, vector<8x8xf32> -> vector<8x8xf32>
    %385 = vector.extract_strided_slice %375 {offsets = [24, 0], sizes = [8, 8], strides = [1, 1]} : vector<32x8xf32> to vector<8x8xf32>
    %386 = vector.extract_strided_slice %347 {offsets = [0, 24], sizes = [8, 8], strides = [1, 1]} : vector<8x32xf32> to vector<8x8xf32>
    %cst_211 = arith.constant dense<0.000000e+00> : vector<8x8xf32>
    %387 = tpu.matmul %385, %386, %cst_211 {dimension_numbers = #tpu.dot_dimension_numbers<[1], [0], [0], [1], [0, 0, 1, 1], [], []>} : vector<8x8xf32>, vector<8x8xf32>, vector<8x8xf32> -> vector<8x8xf32>
    %388 = tpu.concatenate %378, %381, %384, %387 in 1 : vector<8x8xf32>, vector<8x8xf32>, vector<8x8xf32>, vector<8x8xf32> -> vector<8x32xf32>
    %389 = arith.truncf %388 : vector<8x32xf32> to vector<8x32xbf16>
    %cst_212 = arith.constant dense<0.000000e+00> : vector<8x32xf32>
    %390 = tpu.matmul %389, %349, %cst_212 {dimension_numbers = #tpu.dot_dimension_numbers<[1], [0], [0], [1], [0, 0, 1, 1], [], []>} : vector<8x32xbf16>, vector<32x32xbf16>, vector<8x32xf32> -> vector<8x32xf32>
    %391 = vector.broadcast %351 : vector<1x32xf32> to vector<8x32xf32>
    %392 = arith.addf %390, %391 : vector<8x32xf32>
    %393 = arith.addf %3, %392 : vector<8x32xf32>
    %c0_213 = arith.constant 0 : index
    %c0_214 = arith.constant 0 : index
    %c0_215 = arith.constant 0 : index
    %394 = vector.load %arg44[%c0_213, %c0_214, %c0_215] : memref<2x1x32xf32, #tpu.memory_space<vmem>>, vector<1x1x32xf32>
    %395 = vector.shape_cast %394 : vector<1x1x32xf32> to vector<1x32xf32>
    %c0_216 = arith.constant 0 : index
    %c0_217 = arith.constant 0 : index
    %c0_218 = arith.constant 0 : index
    %396 = vector.load %arg45[%c0_216, %c0_217, %c0_218] : memref<2x1x32xf32, #tpu.memory_space<vmem>>, vector<1x1x32xf32>
    %397 = vector.shape_cast %396 : vector<1x1x32xf32> to vector<1x32xf32>
    %cst_219 = arith.constant dense<0.000000e+00> : vector<8xf32>
    %398 = vector.multi_reduction <add>, %393, %cst_219 [1] : vector<8x32xf32> to vector<8xf32>
    %399 = vector.shape_cast %398 : vector<8xf32> to vector<8x1xf32>
    %cst_220 = arith.constant 3.200000e+01 : f32
    %400 = vector.broadcast %cst_220 : f32 to vector<8x1xf32>
    %401 = arith.divf %399, %400 : vector<8x1xf32>
    %402 = vector.broadcast %401 : vector<8x1xf32> to vector<8x32xf32>
    %403 = arith.subf %393, %402 : vector<8x32xf32>
    %404 = arith.mulf %403, %403 : vector<8x32xf32>
    %cst_221 = arith.constant dense<0.000000e+00> : vector<8xf32>
    %405 = vector.multi_reduction <add>, %404, %cst_221 [1] : vector<8x32xf32> to vector<8xf32>
    %406 = vector.shape_cast %405 : vector<8xf32> to vector<8x1xf32>
    %cst_222 = arith.constant 3.200000e+01 : f32
    %407 = vector.broadcast %cst_222 : f32 to vector<8x1xf32>
    %408 = arith.divf %406, %407 : vector<8x1xf32>
    %409 = vector.broadcast %401 : vector<8x1xf32> to vector<8x32xf32>
    %410 = arith.subf %393, %409 : vector<8x32xf32>
    %cst_223 = arith.constant 9.99999974E-6 : f32
    %411 = vector.broadcast %cst_223 : f32 to vector<8x1xf32>
    %412 = arith.addf %408, %411 : vector<8x1xf32>
    %413 = math.rsqrt %412 : vector<8x1xf32>
    %414 = vector.broadcast %413 : vector<8x1xf32> to vector<8x32xf32>
    %415 = arith.mulf %410, %414 : vector<8x32xf32>
    %416 = vector.broadcast %395 : vector<1x32xf32> to vector<8x32xf32>
    %417 = arith.mulf %415, %416 : vector<8x32xf32>
    %418 = vector.broadcast %397 : vector<1x32xf32> to vector<8x32xf32>
    %419 = arith.addf %417, %418 : vector<8x32xf32>
    %c0_224 = arith.constant 0 : index
    %c0_225 = arith.constant 0 : index
    %c0_226 = arith.constant 0 : index
    %420 = vector.load %arg32[%c0_224, %c0_225, %c0_226] : memref<2x32x32xbf16, #tpu.memory_space<vmem>>, vector<1x32x32xbf16>
    %421 = vector.shape_cast %420 : vector<1x32x32xbf16> to vector<32x32xbf16>
    %c0_227 = arith.constant 0 : index
    %c0_228 = arith.constant 0 : index
    %c0_229 = arith.constant 0 : index
    %422 = vector.load %arg33[%c0_227, %c0_228, %c0_229] : memref<2x1x32xf32, #tpu.memory_space<vmem>>, vector<1x1x32xf32>
    %423 = vector.shape_cast %422 : vector<1x1x32xf32> to vector<1x32xf32>
    %424 = arith.truncf %419 : vector<8x32xf32> to vector<8x32xbf16>
    %cst_230 = arith.constant dense<0.000000e+00> : vector<8x32xf32>
    %425 = tpu.matmul %424, %421, %cst_230 {dimension_numbers = #tpu.dot_dimension_numbers<[1], [0], [0], [1], [0, 0, 1, 1], [], []>} : vector<8x32xbf16>, vector<32x32xbf16>, vector<8x32xf32> -> vector<8x32xf32>
    %426 = vector.broadcast %423 : vector<1x32xf32> to vector<8x32xf32>
    %427 = arith.addf %425, %426 : vector<8x32xf32>
    %c0_231 = arith.constant 0 : index
    %c0_232 = arith.constant 0 : index
    %c0_233 = arith.constant 0 : index
    %428 = vector.load %arg34[%c0_231, %c0_232, %c0_233] : memref<2x32x32xbf16, #tpu.memory_space<vmem>>, vector<1x32x32xbf16>
    %429 = vector.shape_cast %428 : vector<1x32x32xbf16> to vector<32x32xbf16>
    %c0_234 = arith.constant 0 : index
    %c0_235 = arith.constant 0 : index
    %c0_236 = arith.constant 0 : index
    %430 = vector.load %arg35[%c0_234, %c0_235, %c0_236] : memref<2x1x32xf32, #tpu.memory_space<vmem>>, vector<1x1x32xf32>
    %431 = vector.shape_cast %430 : vector<1x1x32xf32> to vector<1x32xf32>
    %432 = arith.truncf %323 : vector<8x32xf32> to vector<8x32xbf16>
    %cst_237 = arith.constant dense<0.000000e+00> : vector<8x32xf32>
    %433 = tpu.matmul %432, %429, %cst_237 {dimension_numbers = #tpu.dot_dimension_numbers<[1], [0], [0], [1], [0, 0, 1, 1], [], []>} : vector<8x32xbf16>, vector<32x32xbf16>, vector<8x32xf32> -> vector<8x32xf32>
    %434 = vector.broadcast %431 : vector<1x32xf32> to vector<8x32xf32>
    %435 = arith.addf %433, %434 : vector<8x32xf32>
    %c0_238 = arith.constant 0 : index
    %c0_239 = arith.constant 0 : index
    %c0_240 = arith.constant 0 : index
    %436 = vector.load %arg36[%c0_238, %c0_239, %c0_240] : memref<2x32x32xbf16, #tpu.memory_space<vmem>>, vector<1x32x32xbf16>
    %437 = vector.shape_cast %436 : vector<1x32x32xbf16> to vector<32x32xbf16>
    %c0_241 = arith.constant 0 : index
    %c0_242 = arith.constant 0 : index
    %c0_243 = arith.constant 0 : index
    %438 = vector.load %arg37[%c0_241, %c0_242, %c0_243] : memref<2x1x32xf32, #tpu.memory_space<vmem>>, vector<1x1x32xf32>
    %439 = vector.shape_cast %438 : vector<1x1x32xf32> to vector<1x32xf32>
    %440 = arith.truncf %323 : vector<8x32xf32> to vector<8x32xbf16>
    %cst_244 = arith.constant dense<0.000000e+00> : vector<8x32xf32>
    %441 = tpu.matmul %440, %437, %cst_244 {dimension_numbers = #tpu.dot_dimension_numbers<[1], [0], [0], [1], [0, 0, 1, 1], [], []>} : vector<8x32xbf16>, vector<32x32xbf16>, vector<8x32xf32> -> vector<8x32xf32>
    %442 = vector.broadcast %439 : vector<1x32xf32> to vector<8x32xf32>
    %443 = arith.addf %441, %442 : vector<8x32xf32>
    %c0_245 = arith.constant 0 : index
    %c0_246 = arith.constant 0 : index
    %c0_247 = arith.constant 0 : index
    %444 = vector.load %arg38[%c0_245, %c0_246, %c0_247] : memref<2x32x32xbf16, #tpu.memory_space<vmem>>, vector<1x32x32xbf16>
    %445 = vector.shape_cast %444 : vector<1x32x32xbf16> to vector<32x32xbf16>
    %c0_248 = arith.constant 0 : index
    %c0_249 = arith.constant 0 : index
    %c0_250 = arith.constant 0 : index
    %446 = vector.load %arg39[%c0_248, %c0_249, %c0_250] : memref<2x1x32xf32, #tpu.memory_space<vmem>>, vector<1x1x32xf32>
    %447 = vector.shape_cast %446 : vector<1x1x32xf32> to vector<1x32xf32>
    %448 = vector.extract_strided_slice %427 {offsets = [0, 0], sizes = [8, 8], strides = [1, 1]} : vector<8x32xf32> to vector<8x8xf32>
    %449 = vector.extract_strided_slice %435 {offsets = [0, 0], sizes = [8, 8], strides = [1, 1]} : vector<8x32xf32> to vector<8x8xf32>
    %cst_251 = arith.constant dense<0.000000e+00> : vector<8x8xf32>
    %450 = tpu.matmul %448, %449, %cst_251 {dimension_numbers = #tpu.dot_dimension_numbers<[1], [1], [0], [0], [0, 0, 1, 0], [], []>} : vector<8x8xf32>, vector<8x8xf32>, vector<8x8xf32> -> vector<8x8xf32>
    %451 = vector.extract_strided_slice %427 {offsets = [0, 8], sizes = [8, 8], strides = [1, 1]} : vector<8x32xf32> to vector<8x8xf32>
    %452 = vector.extract_strided_slice %435 {offsets = [0, 8], sizes = [8, 8], strides = [1, 1]} : vector<8x32xf32> to vector<8x8xf32>
    %cst_252 = arith.constant dense<0.000000e+00> : vector<8x8xf32>
    %453 = tpu.matmul %451, %452, %cst_252 {dimension_numbers = #tpu.dot_dimension_numbers<[1], [1], [0], [0], [0, 0, 1, 0], [], []>} : vector<8x8xf32>, vector<8x8xf32>, vector<8x8xf32> -> vector<8x8xf32>
    %454 = vector.extract_strided_slice %427 {offsets = [0, 16], sizes = [8, 8], strides = [1, 1]} : vector<8x32xf32> to vector<8x8xf32>
    %455 = vector.extract_strided_slice %435 {offsets = [0, 16], sizes = [8, 8], strides = [1, 1]} : vector<8x32xf32> to vector<8x8xf32>
    %cst_253 = arith.constant dense<0.000000e+00> : vector<8x8xf32>
    %456 = tpu.matmul %454, %455, %cst_253 {dimension_numbers = #tpu.dot_dimension_numbers<[1], [1], [0], [0], [0, 0, 1, 0], [], []>} : vector<8x8xf32>, vector<8x8xf32>, vector<8x8xf32> -> vector<8x8xf32>
    %457 = vector.extract_strided_slice %427 {offsets = [0, 24], sizes = [8, 8], strides = [1, 1]} : vector<8x32xf32> to vector<8x8xf32>
    %458 = vector.extract_strided_slice %435 {offsets = [0, 24], sizes = [8, 8], strides = [1, 1]} : vector<8x32xf32> to vector<8x8xf32>
    %cst_254 = arith.constant dense<0.000000e+00> : vector<8x8xf32>
    %459 = tpu.matmul %457, %458, %cst_254 {dimension_numbers = #tpu.dot_dimension_numbers<[1], [1], [0], [0], [0, 0, 1, 0], [], []>} : vector<8x8xf32>, vector<8x8xf32>, vector<8x8xf32> -> vector<8x8xf32>
    %460 = tpu.concatenate %450, %453, %456, %459 in 0 : vector<8x8xf32>, vector<8x8xf32>, vector<8x8xf32>, vector<8x8xf32> -> vector<32x8xf32>
    %461 = vector.broadcast %11 : vector<1x8xf32> to vector<32x8xf32>
    %462 = arith.addf %460, %461 : vector<32x8xf32>
    %cst_255 = arith.constant dense<0xFF800000> : vector<32xf32>
    %463 = vector.multi_reduction <maximumf>, %462, %cst_255 [1] : vector<32x8xf32> to vector<32xf32>
    %464 = vector.shape_cast %463 : vector<32xf32> to vector<32x1xf32>
    %465 = vector.broadcast %464 : vector<32x1xf32> to vector<32x8xf32>
    %466 = arith.subf %462, %465 : vector<32x8xf32>
    %467 = math.exp %466 : vector<32x8xf32>
    %cst_256 = arith.constant dense<0.000000e+00> : vector<32xf32>
    %468 = vector.multi_reduction <add>, %467, %cst_256 [1] : vector<32x8xf32> to vector<32xf32>
    %469 = vector.shape_cast %468 : vector<32xf32> to vector<32x1xf32>
    %470 = tpu.reciprocal %469 {approx = true} : vector<32x1xf32> -> vector<32x1xf32>
    %471 = vector.broadcast %470 : vector<32x1xf32> to vector<32x8xf32>
    %472 = arith.mulf %467, %471 : vector<32x8xf32>
    %473 = vector.extract_strided_slice %472 {offsets = [0, 0], sizes = [8, 8], strides = [1, 1]} : vector<32x8xf32> to vector<8x8xf32>
    %474 = vector.extract_strided_slice %443 {offsets = [0, 0], sizes = [8, 8], strides = [1, 1]} : vector<8x32xf32> to vector<8x8xf32>
    %cst_257 = arith.constant dense<0.000000e+00> : vector<8x8xf32>
    %475 = tpu.matmul %473, %474, %cst_257 {dimension_numbers = #tpu.dot_dimension_numbers<[1], [0], [0], [1], [0, 0, 1, 1], [], []>} : vector<8x8xf32>, vector<8x8xf32>, vector<8x8xf32> -> vector<8x8xf32>
    %476 = vector.extract_strided_slice %472 {offsets = [8, 0], sizes = [8, 8], strides = [1, 1]} : vector<32x8xf32> to vector<8x8xf32>
    %477 = vector.extract_strided_slice %443 {offsets = [0, 8], sizes = [8, 8], strides = [1, 1]} : vector<8x32xf32> to vector<8x8xf32>
    %cst_258 = arith.constant dense<0.000000e+00> : vector<8x8xf32>
    %478 = tpu.matmul %476, %477, %cst_258 {dimension_numbers = #tpu.dot_dimension_numbers<[1], [0], [0], [1], [0, 0, 1, 1], [], []>} : vector<8x8xf32>, vector<8x8xf32>, vector<8x8xf32> -> vector<8x8xf32>
    %479 = vector.extract_strided_slice %472 {offsets = [16, 0], sizes = [8, 8], strides = [1, 1]} : vector<32x8xf32> to vector<8x8xf32>
    %480 = vector.extract_strided_slice %443 {offsets = [0, 16], sizes = [8, 8], strides = [1, 1]} : vector<8x32xf32> to vector<8x8xf32>
    %cst_259 = arith.constant dense<0.000000e+00> : vector<8x8xf32>
    %481 = tpu.matmul %479, %480, %cst_259 {dimension_numbers = #tpu.dot_dimension_numbers<[1], [0], [0], [1], [0, 0, 1, 1], [], []>} : vector<8x8xf32>, vector<8x8xf32>, vector<8x8xf32> -> vector<8x8xf32>
    %482 = vector.extract_strided_slice %472 {offsets = [24, 0], sizes = [8, 8], strides = [1, 1]} : vector<32x8xf32> to vector<8x8xf32>
    %483 = vector.extract_strided_slice %443 {offsets = [0, 24], sizes = [8, 8], strides = [1, 1]} : vector<8x32xf32> to vector<8x8xf32>
    %cst_260 = arith.constant dense<0.000000e+00> : vector<8x8xf32>
    %484 = tpu.matmul %482, %483, %cst_260 {dimension_numbers = #tpu.dot_dimension_numbers<[1], [0], [0], [1], [0, 0, 1, 1], [], []>} : vector<8x8xf32>, vector<8x8xf32>, vector<8x8xf32> -> vector<8x8xf32>
    %485 = tpu.concatenate %475, %478, %481, %484 in 1 : vector<8x8xf32>, vector<8x8xf32>, vector<8x8xf32>, vector<8x8xf32> -> vector<8x32xf32>
    %486 = arith.truncf %485 : vector<8x32xf32> to vector<8x32xbf16>
    %cst_261 = arith.constant dense<0.000000e+00> : vector<8x32xf32>
    %487 = tpu.matmul %486, %445, %cst_261 {dimension_numbers = #tpu.dot_dimension_numbers<[1], [0], [0], [1], [0, 0, 1, 1], [], []>} : vector<8x32xbf16>, vector<32x32xbf16>, vector<8x32xf32> -> vector<8x32xf32>
    %488 = vector.broadcast %447 : vector<1x32xf32> to vector<8x32xf32>
    %489 = arith.addf %487, %488 : vector<8x32xf32>
    %490 = arith.addf %419, %489 : vector<8x32xf32>
    %c0_262 = arith.constant 0 : index
    %c0_263 = arith.constant 0 : index
    %c0_264 = arith.constant 0 : index
    %491 = vector.load %arg46[%c0_262, %c0_263, %c0_264] : memref<2x1x32xf32, #tpu.memory_space<vmem>>, vector<1x1x32xf32>
    %492 = vector.shape_cast %491 : vector<1x1x32xf32> to vector<1x32xf32>
    %c0_265 = arith.constant 0 : index
    %c0_266 = arith.constant 0 : index
    %c0_267 = arith.constant 0 : index
    %493 = vector.load %arg47[%c0_265, %c0_266, %c0_267] : memref<2x1x32xf32, #tpu.memory_space<vmem>>, vector<1x1x32xf32>
    %494 = vector.shape_cast %493 : vector<1x1x32xf32> to vector<1x32xf32>
    %cst_268 = arith.constant dense<0.000000e+00> : vector<8xf32>
    %495 = vector.multi_reduction <add>, %490, %cst_268 [1] : vector<8x32xf32> to vector<8xf32>
    %496 = vector.shape_cast %495 : vector<8xf32> to vector<8x1xf32>
    %cst_269 = arith.constant 3.200000e+01 : f32
    %497 = vector.broadcast %cst_269 : f32 to vector<8x1xf32>
    %498 = arith.divf %496, %497 : vector<8x1xf32>
    %499 = vector.broadcast %498 : vector<8x1xf32> to vector<8x32xf32>
    %500 = arith.subf %490, %499 : vector<8x32xf32>
    %501 = arith.mulf %500, %500 : vector<8x32xf32>
    %cst_270 = arith.constant dense<0.000000e+00> : vector<8xf32>
    %502 = vector.multi_reduction <add>, %501, %cst_270 [1] : vector<8x32xf32> to vector<8xf32>
    %503 = vector.shape_cast %502 : vector<8xf32> to vector<8x1xf32>
    %cst_271 = arith.constant 3.200000e+01 : f32
    %504 = vector.broadcast %cst_271 : f32 to vector<8x1xf32>
    %505 = arith.divf %503, %504 : vector<8x1xf32>
    %506 = vector.broadcast %498 : vector<8x1xf32> to vector<8x32xf32>
    %507 = arith.subf %490, %506 : vector<8x32xf32>
    %cst_272 = arith.constant 9.99999974E-6 : f32
    %508 = vector.broadcast %cst_272 : f32 to vector<8x1xf32>
    %509 = arith.addf %505, %508 : vector<8x1xf32>
    %510 = math.rsqrt %509 : vector<8x1xf32>
    %511 = vector.broadcast %510 : vector<8x1xf32> to vector<8x32xf32>
    %512 = arith.mulf %507, %511 : vector<8x32xf32>
    %513 = vector.broadcast %492 : vector<1x32xf32> to vector<8x32xf32>
    %514 = arith.mulf %512, %513 : vector<8x32xf32>
    %515 = vector.broadcast %494 : vector<1x32xf32> to vector<8x32xf32>
    %516 = arith.addf %514, %515 : vector<8x32xf32>
    %c0_273 = arith.constant 0 : index
    %c0_274 = arith.constant 0 : index
    %c0_275 = arith.constant 0 : index
    %517 = vector.load %arg40[%c0_273, %c0_274, %c0_275] : memref<2x32x64xbf16, #tpu.memory_space<vmem>>, vector<1x32x64xbf16>
    %518 = vector.shape_cast %517 : vector<1x32x64xbf16> to vector<32x64xbf16>
    %c0_276 = arith.constant 0 : index
    %c0_277 = arith.constant 0 : index
    %c0_278 = arith.constant 0 : index
    %519 = vector.load %arg41[%c0_276, %c0_277, %c0_278] : memref<2x1x64xf32, #tpu.memory_space<vmem>>, vector<1x1x64xf32>
    %520 = vector.shape_cast %519 : vector<1x1x64xf32> to vector<1x64xf32>
    %521 = arith.truncf %516 : vector<8x32xf32> to vector<8x32xbf16>
    %cst_279 = arith.constant dense<0.000000e+00> : vector<8x64xf32>
    %522 = tpu.matmul %521, %518, %cst_279 {dimension_numbers = #tpu.dot_dimension_numbers<[1], [0], [0], [1], [0, 0, 1, 1], [], []>} : vector<8x32xbf16>, vector<32x64xbf16>, vector<8x64xf32> -> vector<8x64xf32>
    %523 = vector.broadcast %520 : vector<1x64xf32> to vector<8x64xf32>
    %524 = arith.addf %522, %523 : vector<8x64xf32>
    %cst_280 = arith.constant 0.000000e+00 : f32
    %525 = vector.broadcast %cst_280 : f32 to vector<8x64xf32>
    %526 = arith.maximumf %524, %525 : vector<8x64xf32>
    %c0_281 = arith.constant 0 : index
    %c0_282 = arith.constant 0 : index
    %c0_283 = arith.constant 0 : index
    %527 = vector.load %arg42[%c0_281, %c0_282, %c0_283] : memref<2x64x32xbf16, #tpu.memory_space<vmem>>, vector<1x64x32xbf16>
    %528 = vector.shape_cast %527 : vector<1x64x32xbf16> to vector<64x32xbf16>
    %c0_284 = arith.constant 0 : index
    %c0_285 = arith.constant 0 : index
    %c0_286 = arith.constant 0 : index
    %529 = vector.load %arg43[%c0_284, %c0_285, %c0_286] : memref<2x1x32xf32, #tpu.memory_space<vmem>>, vector<1x1x32xf32>
    %530 = vector.shape_cast %529 : vector<1x1x32xf32> to vector<1x32xf32>
    %531 = arith.truncf %526 : vector<8x64xf32> to vector<8x64xbf16>
    %cst_287 = arith.constant dense<0.000000e+00> : vector<8x32xf32>
    %532 = tpu.matmul %531, %528, %cst_287 {dimension_numbers = #tpu.dot_dimension_numbers<[1], [0], [0], [1], [0, 0, 1, 1], [], []>} : vector<8x64xbf16>, vector<64x32xbf16>, vector<8x32xf32> -> vector<8x32xf32>
    %533 = vector.broadcast %530 : vector<1x32xf32> to vector<8x32xf32>
    %534 = arith.addf %532, %533 : vector<8x32xf32>
    %535 = arith.addf %516, %534 : vector<8x32xf32>
    %c0_288 = arith.constant 0 : index
    %c0_289 = arith.constant 0 : index
    %c0_290 = arith.constant 0 : index
    %536 = vector.load %arg48[%c0_288, %c0_289, %c0_290] : memref<2x1x32xf32, #tpu.memory_space<vmem>>, vector<1x1x32xf32>
    %537 = vector.shape_cast %536 : vector<1x1x32xf32> to vector<1x32xf32>
    %c0_291 = arith.constant 0 : index
    %c0_292 = arith.constant 0 : index
    %c0_293 = arith.constant 0 : index
    %538 = vector.load %arg49[%c0_291, %c0_292, %c0_293] : memref<2x1x32xf32, #tpu.memory_space<vmem>>, vector<1x1x32xf32>
    %539 = vector.shape_cast %538 : vector<1x1x32xf32> to vector<1x32xf32>
    %cst_294 = arith.constant dense<0.000000e+00> : vector<8xf32>
    %540 = vector.multi_reduction <add>, %535, %cst_294 [1] : vector<8x32xf32> to vector<8xf32>
    %541 = vector.shape_cast %540 : vector<8xf32> to vector<8x1xf32>
    %cst_295 = arith.constant 3.200000e+01 : f32
    %542 = vector.broadcast %cst_295 : f32 to vector<8x1xf32>
    %543 = arith.divf %541, %542 : vector<8x1xf32>
    %544 = vector.broadcast %543 : vector<8x1xf32> to vector<8x32xf32>
    %545 = arith.subf %535, %544 : vector<8x32xf32>
    %546 = arith.mulf %545, %545 : vector<8x32xf32>
    %cst_296 = arith.constant dense<0.000000e+00> : vector<8xf32>
    %547 = vector.multi_reduction <add>, %546, %cst_296 [1] : vector<8x32xf32> to vector<8xf32>
    %548 = vector.shape_cast %547 : vector<8xf32> to vector<8x1xf32>
    %cst_297 = arith.constant 3.200000e+01 : f32
    %549 = vector.broadcast %cst_297 : f32 to vector<8x1xf32>
    %550 = arith.divf %548, %549 : vector<8x1xf32>
    %551 = vector.broadcast %543 : vector<8x1xf32> to vector<8x32xf32>
    %552 = arith.subf %535, %551 : vector<8x32xf32>
    %cst_298 = arith.constant 9.99999974E-6 : f32
    %553 = vector.broadcast %cst_298 : f32 to vector<8x1xf32>
    %554 = arith.addf %550, %553 : vector<8x1xf32>
    %555 = math.rsqrt %554 : vector<8x1xf32>
    %556 = vector.broadcast %555 : vector<8x1xf32> to vector<8x32xf32>
    %557 = arith.mulf %552, %556 : vector<8x32xf32>
    %558 = vector.broadcast %537 : vector<1x32xf32> to vector<8x32xf32>
    %559 = arith.mulf %557, %558 : vector<8x32xf32>
    %560 = vector.broadcast %539 : vector<1x32xf32> to vector<8x32xf32>
    %561 = arith.addf %559, %560 : vector<8x32xf32>
    %c1_299 = arith.constant 1 : index
    %c0_300 = arith.constant 0 : index
    %c0_301 = arith.constant 0 : index
    %562 = vector.load %arg24[%c1_299, %c0_300, %c0_301] : memref<2x32x32xbf16, #tpu.memory_space<vmem>>, vector<1x32x32xbf16>
    %563 = vector.shape_cast %562 : vector<1x32x32xbf16> to vector<32x32xbf16>
    %c1_302 = arith.constant 1 : index
    %c0_303 = arith.constant 0 : index
    %c0_304 = arith.constant 0 : index
    %564 = vector.load %arg25[%c1_302, %c0_303, %c0_304] : memref<2x1x32xf32, #tpu.memory_space<vmem>>, vector<1x1x32xf32>
    %565 = vector.shape_cast %564 : vector<1x1x32xf32> to vector<1x32xf32>
    %566 = arith.truncf %561 : vector<8x32xf32> to vector<8x32xbf16>
    %cst_305 = arith.constant dense<0.000000e+00> : vector<8x32xf32>
    %567 = tpu.matmul %566, %563, %cst_305 {dimension_numbers = #tpu.dot_dimension_numbers<[1], [0], [0], [1], [0, 0, 1, 1], [], []>} : vector<8x32xbf16>, vector<32x32xbf16>, vector<8x32xf32> -> vector<8x32xf32>
    %568 = vector.broadcast %565 : vector<1x32xf32> to vector<8x32xf32>
    %569 = arith.addf %567, %568 : vector<8x32xf32>
    %c1_306 = arith.constant 1 : index
    %c0_307 = arith.constant 0 : index
    %c0_308 = arith.constant 0 : index
    %570 = vector.load %arg26[%c1_306, %c0_307, %c0_308] : memref<2x32x32xbf16, #tpu.memory_space<vmem>>, vector<1x32x32xbf16>
    %571 = vector.shape_cast %570 : vector<1x32x32xbf16> to vector<32x32xbf16>
    %c1_309 = arith.constant 1 : index
    %c0_310 = arith.constant 0 : index
    %c0_311 = arith.constant 0 : index
    %572 = vector.load %arg27[%c1_309, %c0_310, %c0_311] : memref<2x1x32xf32, #tpu.memory_space<vmem>>, vector<1x1x32xf32>
    %573 = vector.shape_cast %572 : vector<1x1x32xf32> to vector<1x32xf32>
    %574 = arith.truncf %561 : vector<8x32xf32> to vector<8x32xbf16>
    %cst_312 = arith.constant dense<0.000000e+00> : vector<8x32xf32>
    %575 = tpu.matmul %574, %571, %cst_312 {dimension_numbers = #tpu.dot_dimension_numbers<[1], [0], [0], [1], [0, 0, 1, 1], [], []>} : vector<8x32xbf16>, vector<32x32xbf16>, vector<8x32xf32> -> vector<8x32xf32>
    %576 = vector.broadcast %573 : vector<1x32xf32> to vector<8x32xf32>
    %577 = arith.addf %575, %576 : vector<8x32xf32>
    %c1_313 = arith.constant 1 : index
    %c0_314 = arith.constant 0 : index
    %c0_315 = arith.constant 0 : index
    %578 = vector.load %arg28[%c1_313, %c0_314, %c0_315] : memref<2x32x32xbf16, #tpu.memory_space<vmem>>, vector<1x32x32xbf16>
    %579 = vector.shape_cast %578 : vector<1x32x32xbf16> to vector<32x32xbf16>
    %c1_316 = arith.constant 1 : index
    %c0_317 = arith.constant 0 : index
    %c0_318 = arith.constant 0 : index
    %580 = vector.load %arg29[%c1_316, %c0_317, %c0_318] : memref<2x1x32xf32, #tpu.memory_space<vmem>>, vector<1x1x32xf32>
    %581 = vector.shape_cast %580 : vector<1x1x32xf32> to vector<1x32xf32>
    %582 = arith.truncf %561 : vector<8x32xf32> to vector<8x32xbf16>
    %cst_319 = arith.constant dense<0.000000e+00> : vector<8x32xf32>
    %583 = tpu.matmul %582, %579, %cst_319 {dimension_numbers = #tpu.dot_dimension_numbers<[1], [0], [0], [1], [0, 0, 1, 1], [], []>} : vector<8x32xbf16>, vector<32x32xbf16>, vector<8x32xf32> -> vector<8x32xf32>
    %584 = vector.broadcast %581 : vector<1x32xf32> to vector<8x32xf32>
    %585 = arith.addf %583, %584 : vector<8x32xf32>
    %c1_320 = arith.constant 1 : index
    %c0_321 = arith.constant 0 : index
    %c0_322 = arith.constant 0 : index
    %586 = vector.load %arg30[%c1_320, %c0_321, %c0_322] : memref<2x32x32xbf16, #tpu.memory_space<vmem>>, vector<1x32x32xbf16>
    %587 = vector.shape_cast %586 : vector<1x32x32xbf16> to vector<32x32xbf16>
    %c1_323 = arith.constant 1 : index
    %c0_324 = arith.constant 0 : index
    %c0_325 = arith.constant 0 : index
    %588 = vector.load %arg31[%c1_323, %c0_324, %c0_325] : memref<2x1x32xf32, #tpu.memory_space<vmem>>, vector<1x1x32xf32>
    %589 = vector.shape_cast %588 : vector<1x1x32xf32> to vector<1x32xf32>
    %590 = vector.extract_strided_slice %569 {offsets = [0, 0], sizes = [8, 8], strides = [1, 1]} : vector<8x32xf32> to vector<8x8xf32>
    %591 = vector.extract_strided_slice %577 {offsets = [0, 0], sizes = [8, 8], strides = [1, 1]} : vector<8x32xf32> to vector<8x8xf32>
    %cst_326 = arith.constant dense<0.000000e+00> : vector<8x8xf32>
    %592 = tpu.matmul %590, %591, %cst_326 {dimension_numbers = #tpu.dot_dimension_numbers<[1], [1], [0], [0], [0, 0, 1, 0], [], []>} : vector<8x8xf32>, vector<8x8xf32>, vector<8x8xf32> -> vector<8x8xf32>
    %593 = vector.extract_strided_slice %569 {offsets = [0, 8], sizes = [8, 8], strides = [1, 1]} : vector<8x32xf32> to vector<8x8xf32>
    %594 = vector.extract_strided_slice %577 {offsets = [0, 8], sizes = [8, 8], strides = [1, 1]} : vector<8x32xf32> to vector<8x8xf32>
    %cst_327 = arith.constant dense<0.000000e+00> : vector<8x8xf32>
    %595 = tpu.matmul %593, %594, %cst_327 {dimension_numbers = #tpu.dot_dimension_numbers<[1], [1], [0], [0], [0, 0, 1, 0], [], []>} : vector<8x8xf32>, vector<8x8xf32>, vector<8x8xf32> -> vector<8x8xf32>
    %596 = vector.extract_strided_slice %569 {offsets = [0, 16], sizes = [8, 8], strides = [1, 1]} : vector<8x32xf32> to vector<8x8xf32>
    %597 = vector.extract_strided_slice %577 {offsets = [0, 16], sizes = [8, 8], strides = [1, 1]} : vector<8x32xf32> to vector<8x8xf32>
    %cst_328 = arith.constant dense<0.000000e+00> : vector<8x8xf32>
    %598 = tpu.matmul %596, %597, %cst_328 {dimension_numbers = #tpu.dot_dimension_numbers<[1], [1], [0], [0], [0, 0, 1, 0], [], []>} : vector<8x8xf32>, vector<8x8xf32>, vector<8x8xf32> -> vector<8x8xf32>
    %599 = vector.extract_strided_slice %569 {offsets = [0, 24], sizes = [8, 8], strides = [1, 1]} : vector<8x32xf32> to vector<8x8xf32>
    %600 = vector.extract_strided_slice %577 {offsets = [0, 24], sizes = [8, 8], strides = [1, 1]} : vector<8x32xf32> to vector<8x8xf32>
    %cst_329 = arith.constant dense<0.000000e+00> : vector<8x8xf32>
    %601 = tpu.matmul %599, %600, %cst_329 {dimension_numbers = #tpu.dot_dimension_numbers<[1], [1], [0], [0], [0, 0, 1, 0], [], []>} : vector<8x8xf32>, vector<8x8xf32>, vector<8x8xf32> -> vector<8x8xf32>
    %602 = tpu.concatenate %592, %595, %598, %601 in 0 : vector<8x8xf32>, vector<8x8xf32>, vector<8x8xf32>, vector<8x8xf32> -> vector<32x8xf32>
    %603 = arith.addf %602, %17 : vector<32x8xf32>
    %cst_330 = arith.constant dense<0xFF800000> : vector<32xf32>
    %604 = vector.multi_reduction <maximumf>, %603, %cst_330 [1] : vector<32x8xf32> to vector<32xf32>
    %605 = vector.shape_cast %604 : vector<32xf32> to vector<32x1xf32>
    %606 = vector.broadcast %605 : vector<32x1xf32> to vector<32x8xf32>
    %607 = arith.subf %603, %606 : vector<32x8xf32>
    %608 = math.exp %607 : vector<32x8xf32>
    %cst_331 = arith.constant dense<0.000000e+00> : vector<32xf32>
    %609 = vector.multi_reduction <add>, %608, %cst_331 [1] : vector<32x8xf32> to vector<32xf32>
    %610 = vector.shape_cast %609 : vector<32xf32> to vector<32x1xf32>
    %611 = tpu.reciprocal %610 {approx = true} : vector<32x1xf32> -> vector<32x1xf32>
    %612 = vector.broadcast %611 : vector<32x1xf32> to vector<32x8xf32>
    %613 = arith.mulf %608, %612 : vector<32x8xf32>
    %614 = vector.extract_strided_slice %613 {offsets = [0, 0], sizes = [8, 8], strides = [1, 1]} : vector<32x8xf32> to vector<8x8xf32>
    %615 = vector.extract_strided_slice %585 {offsets = [0, 0], sizes = [8, 8], strides = [1, 1]} : vector<8x32xf32> to vector<8x8xf32>
    %cst_332 = arith.constant dense<0.000000e+00> : vector<8x8xf32>
    %616 = tpu.matmul %614, %615, %cst_332 {dimension_numbers = #tpu.dot_dimension_numbers<[1], [0], [0], [1], [0, 0, 1, 1], [], []>} : vector<8x8xf32>, vector<8x8xf32>, vector<8x8xf32> -> vector<8x8xf32>
    %617 = vector.extract_strided_slice %613 {offsets = [8, 0], sizes = [8, 8], strides = [1, 1]} : vector<32x8xf32> to vector<8x8xf32>
    %618 = vector.extract_strided_slice %585 {offsets = [0, 8], sizes = [8, 8], strides = [1, 1]} : vector<8x32xf32> to vector<8x8xf32>
    %cst_333 = arith.constant dense<0.000000e+00> : vector<8x8xf32>
    %619 = tpu.matmul %617, %618, %cst_333 {dimension_numbers = #tpu.dot_dimension_numbers<[1], [0], [0], [1], [0, 0, 1, 1], [], []>} : vector<8x8xf32>, vector<8x8xf32>, vector<8x8xf32> -> vector<8x8xf32>
    %620 = vector.extract_strided_slice %613 {offsets = [16, 0], sizes = [8, 8], strides = [1, 1]} : vector<32x8xf32> to vector<8x8xf32>
    %621 = vector.extract_strided_slice %585 {offsets = [0, 16], sizes = [8, 8], strides = [1, 1]} : vector<8x32xf32> to vector<8x8xf32>
    %cst_334 = arith.constant dense<0.000000e+00> : vector<8x8xf32>
    %622 = tpu.matmul %620, %621, %cst_334 {dimension_numbers = #tpu.dot_dimension_numbers<[1], [0], [0], [1], [0, 0, 1, 1], [], []>} : vector<8x8xf32>, vector<8x8xf32>, vector<8x8xf32> -> vector<8x8xf32>
    %623 = vector.extract_strided_slice %613 {offsets = [24, 0], sizes = [8, 8], strides = [1, 1]} : vector<32x8xf32> to vector<8x8xf32>
    %624 = vector.extract_strided_slice %585 {offsets = [0, 24], sizes = [8, 8], strides = [1, 1]} : vector<8x32xf32> to vector<8x8xf32>
    %cst_335 = arith.constant dense<0.000000e+00> : vector<8x8xf32>
    %625 = tpu.matmul %623, %624, %cst_335 {dimension_numbers = #tpu.dot_dimension_numbers<[1], [0], [0], [1], [0, 0, 1, 1], [], []>} : vector<8x8xf32>, vector<8x8xf32>, vector<8x8xf32> -> vector<8x8xf32>
    %626 = tpu.concatenate %616, %619, %622, %625 in 1 : vector<8x8xf32>, vector<8x8xf32>, vector<8x8xf32>, vector<8x8xf32> -> vector<8x32xf32>
    %627 = arith.truncf %626 : vector<8x32xf32> to vector<8x32xbf16>
    %cst_336 = arith.constant dense<0.000000e+00> : vector<8x32xf32>
    %628 = tpu.matmul %627, %587, %cst_336 {dimension_numbers = #tpu.dot_dimension_numbers<[1], [0], [0], [1], [0, 0, 1, 1], [], []>} : vector<8x32xbf16>, vector<32x32xbf16>, vector<8x32xf32> -> vector<8x32xf32>
    %629 = vector.broadcast %589 : vector<1x32xf32> to vector<8x32xf32>
    %630 = arith.addf %628, %629 : vector<8x32xf32>
    %631 = arith.addf %561, %630 : vector<8x32xf32>
    %c1_337 = arith.constant 1 : index
    %c0_338 = arith.constant 0 : index
    %c0_339 = arith.constant 0 : index
    %632 = vector.load %arg44[%c1_337, %c0_338, %c0_339] : memref<2x1x32xf32, #tpu.memory_space<vmem>>, vector<1x1x32xf32>
    %633 = vector.shape_cast %632 : vector<1x1x32xf32> to vector<1x32xf32>
    %c1_340 = arith.constant 1 : index
    %c0_341 = arith.constant 0 : index
    %c0_342 = arith.constant 0 : index
    %634 = vector.load %arg45[%c1_340, %c0_341, %c0_342] : memref<2x1x32xf32, #tpu.memory_space<vmem>>, vector<1x1x32xf32>
    %635 = vector.shape_cast %634 : vector<1x1x32xf32> to vector<1x32xf32>
    %cst_343 = arith.constant dense<0.000000e+00> : vector<8xf32>
    %636 = vector.multi_reduction <add>, %631, %cst_343 [1] : vector<8x32xf32> to vector<8xf32>
    %637 = vector.shape_cast %636 : vector<8xf32> to vector<8x1xf32>
    %cst_344 = arith.constant 3.200000e+01 : f32
    %638 = vector.broadcast %cst_344 : f32 to vector<8x1xf32>
    %639 = arith.divf %637, %638 : vector<8x1xf32>
    %640 = vector.broadcast %639 : vector<8x1xf32> to vector<8x32xf32>
    %641 = arith.subf %631, %640 : vector<8x32xf32>
    %642 = arith.mulf %641, %641 : vector<8x32xf32>
    %cst_345 = arith.constant dense<0.000000e+00> : vector<8xf32>
    %643 = vector.multi_reduction <add>, %642, %cst_345 [1] : vector<8x32xf32> to vector<8xf32>
    %644 = vector.shape_cast %643 : vector<8xf32> to vector<8x1xf32>
    %cst_346 = arith.constant 3.200000e+01 : f32
    %645 = vector.broadcast %cst_346 : f32 to vector<8x1xf32>
    %646 = arith.divf %644, %645 : vector<8x1xf32>
    %647 = vector.broadcast %639 : vector<8x1xf32> to vector<8x32xf32>
    %648 = arith.subf %631, %647 : vector<8x32xf32>
    %cst_347 = arith.constant 9.99999974E-6 : f32
    %649 = vector.broadcast %cst_347 : f32 to vector<8x1xf32>
    %650 = arith.addf %646, %649 : vector<8x1xf32>
    %651 = math.rsqrt %650 : vector<8x1xf32>
    %652 = vector.broadcast %651 : vector<8x1xf32> to vector<8x32xf32>
    %653 = arith.mulf %648, %652 : vector<8x32xf32>
    %654 = vector.broadcast %633 : vector<1x32xf32> to vector<8x32xf32>
    %655 = arith.mulf %653, %654 : vector<8x32xf32>
    %656 = vector.broadcast %635 : vector<1x32xf32> to vector<8x32xf32>
    %657 = arith.addf %655, %656 : vector<8x32xf32>
    %c1_348 = arith.constant 1 : index
    %c0_349 = arith.constant 0 : index
    %c0_350 = arith.constant 0 : index
    %658 = vector.load %arg32[%c1_348, %c0_349, %c0_350] : memref<2x32x32xbf16, #tpu.memory_space<vmem>>, vector<1x32x32xbf16>
    %659 = vector.shape_cast %658 : vector<1x32x32xbf16> to vector<32x32xbf16>
    %c1_351 = arith.constant 1 : index
    %c0_352 = arith.constant 0 : index
    %c0_353 = arith.constant 0 : index
    %660 = vector.load %arg33[%c1_351, %c0_352, %c0_353] : memref<2x1x32xf32, #tpu.memory_space<vmem>>, vector<1x1x32xf32>
    %661 = vector.shape_cast %660 : vector<1x1x32xf32> to vector<1x32xf32>
    %662 = arith.truncf %657 : vector<8x32xf32> to vector<8x32xbf16>
    %cst_354 = arith.constant dense<0.000000e+00> : vector<8x32xf32>
    %663 = tpu.matmul %662, %659, %cst_354 {dimension_numbers = #tpu.dot_dimension_numbers<[1], [0], [0], [1], [0, 0, 1, 1], [], []>} : vector<8x32xbf16>, vector<32x32xbf16>, vector<8x32xf32> -> vector<8x32xf32>
    %664 = vector.broadcast %661 : vector<1x32xf32> to vector<8x32xf32>
    %665 = arith.addf %663, %664 : vector<8x32xf32>
    %c1_355 = arith.constant 1 : index
    %c0_356 = arith.constant 0 : index
    %c0_357 = arith.constant 0 : index
    %666 = vector.load %arg34[%c1_355, %c0_356, %c0_357] : memref<2x32x32xbf16, #tpu.memory_space<vmem>>, vector<1x32x32xbf16>
    %667 = vector.shape_cast %666 : vector<1x32x32xbf16> to vector<32x32xbf16>
    %c1_358 = arith.constant 1 : index
    %c0_359 = arith.constant 0 : index
    %c0_360 = arith.constant 0 : index
    %668 = vector.load %arg35[%c1_358, %c0_359, %c0_360] : memref<2x1x32xf32, #tpu.memory_space<vmem>>, vector<1x1x32xf32>
    %669 = vector.shape_cast %668 : vector<1x1x32xf32> to vector<1x32xf32>
    %670 = arith.truncf %323 : vector<8x32xf32> to vector<8x32xbf16>
    %cst_361 = arith.constant dense<0.000000e+00> : vector<8x32xf32>
    %671 = tpu.matmul %670, %667, %cst_361 {dimension_numbers = #tpu.dot_dimension_numbers<[1], [0], [0], [1], [0, 0, 1, 1], [], []>} : vector<8x32xbf16>, vector<32x32xbf16>, vector<8x32xf32> -> vector<8x32xf32>
    %672 = vector.broadcast %669 : vector<1x32xf32> to vector<8x32xf32>
    %673 = arith.addf %671, %672 : vector<8x32xf32>
    %c1_362 = arith.constant 1 : index
    %c0_363 = arith.constant 0 : index
    %c0_364 = arith.constant 0 : index
    %674 = vector.load %arg36[%c1_362, %c0_363, %c0_364] : memref<2x32x32xbf16, #tpu.memory_space<vmem>>, vector<1x32x32xbf16>
    %675 = vector.shape_cast %674 : vector<1x32x32xbf16> to vector<32x32xbf16>
    %c1_365 = arith.constant 1 : index
    %c0_366 = arith.constant 0 : index
    %c0_367 = arith.constant 0 : index
    %676 = vector.load %arg37[%c1_365, %c0_366, %c0_367] : memref<2x1x32xf32, #tpu.memory_space<vmem>>, vector<1x1x32xf32>
    %677 = vector.shape_cast %676 : vector<1x1x32xf32> to vector<1x32xf32>
    %678 = arith.truncf %323 : vector<8x32xf32> to vector<8x32xbf16>
    %cst_368 = arith.constant dense<0.000000e+00> : vector<8x32xf32>
    %679 = tpu.matmul %678, %675, %cst_368 {dimension_numbers = #tpu.dot_dimension_numbers<[1], [0], [0], [1], [0, 0, 1, 1], [], []>} : vector<8x32xbf16>, vector<32x32xbf16>, vector<8x32xf32> -> vector<8x32xf32>
    %680 = vector.broadcast %677 : vector<1x32xf32> to vector<8x32xf32>
    %681 = arith.addf %679, %680 : vector<8x32xf32>
    %c1_369 = arith.constant 1 : index
    %c0_370 = arith.constant 0 : index
    %c0_371 = arith.constant 0 : index
    %682 = vector.load %arg38[%c1_369, %c0_370, %c0_371] : memref<2x32x32xbf16, #tpu.memory_space<vmem>>, vector<1x32x32xbf16>
    %683 = vector.shape_cast %682 : vector<1x32x32xbf16> to vector<32x32xbf16>
    %c1_372 = arith.constant 1 : index
    %c0_373 = arith.constant 0 : index
    %c0_374 = arith.constant 0 : index
    %684 = vector.load %arg39[%c1_372, %c0_373, %c0_374] : memref<2x1x32xf32, #tpu.memory_space<vmem>>, vector<1x1x32xf32>
    %685 = vector.shape_cast %684 : vector<1x1x32xf32> to vector<1x32xf32>
    %686 = vector.extract_strided_slice %665 {offsets = [0, 0], sizes = [8, 8], strides = [1, 1]} : vector<8x32xf32> to vector<8x8xf32>
    %687 = vector.extract_strided_slice %673 {offsets = [0, 0], sizes = [8, 8], strides = [1, 1]} : vector<8x32xf32> to vector<8x8xf32>
    %cst_375 = arith.constant dense<0.000000e+00> : vector<8x8xf32>
    %688 = tpu.matmul %686, %687, %cst_375 {dimension_numbers = #tpu.dot_dimension_numbers<[1], [1], [0], [0], [0, 0, 1, 0], [], []>} : vector<8x8xf32>, vector<8x8xf32>, vector<8x8xf32> -> vector<8x8xf32>
    %689 = vector.extract_strided_slice %665 {offsets = [0, 8], sizes = [8, 8], strides = [1, 1]} : vector<8x32xf32> to vector<8x8xf32>
    %690 = vector.extract_strided_slice %673 {offsets = [0, 8], sizes = [8, 8], strides = [1, 1]} : vector<8x32xf32> to vector<8x8xf32>
    %cst_376 = arith.constant dense<0.000000e+00> : vector<8x8xf32>
    %691 = tpu.matmul %689, %690, %cst_376 {dimension_numbers = #tpu.dot_dimension_numbers<[1], [1], [0], [0], [0, 0, 1, 0], [], []>} : vector<8x8xf32>, vector<8x8xf32>, vector<8x8xf32> -> vector<8x8xf32>
    %692 = vector.extract_strided_slice %665 {offsets = [0, 16], sizes = [8, 8], strides = [1, 1]} : vector<8x32xf32> to vector<8x8xf32>
    %693 = vector.extract_strided_slice %673 {offsets = [0, 16], sizes = [8, 8], strides = [1, 1]} : vector<8x32xf32> to vector<8x8xf32>
    %cst_377 = arith.constant dense<0.000000e+00> : vector<8x8xf32>
    %694 = tpu.matmul %692, %693, %cst_377 {dimension_numbers = #tpu.dot_dimension_numbers<[1], [1], [0], [0], [0, 0, 1, 0], [], []>} : vector<8x8xf32>, vector<8x8xf32>, vector<8x8xf32> -> vector<8x8xf32>
    %695 = vector.extract_strided_slice %665 {offsets = [0, 24], sizes = [8, 8], strides = [1, 1]} : vector<8x32xf32> to vector<8x8xf32>
    %696 = vector.extract_strided_slice %673 {offsets = [0, 24], sizes = [8, 8], strides = [1, 1]} : vector<8x32xf32> to vector<8x8xf32>
    %cst_378 = arith.constant dense<0.000000e+00> : vector<8x8xf32>
    %697 = tpu.matmul %695, %696, %cst_378 {dimension_numbers = #tpu.dot_dimension_numbers<[1], [1], [0], [0], [0, 0, 1, 0], [], []>} : vector<8x8xf32>, vector<8x8xf32>, vector<8x8xf32> -> vector<8x8xf32>
    %698 = tpu.concatenate %688, %691, %694, %697 in 0 : vector<8x8xf32>, vector<8x8xf32>, vector<8x8xf32>, vector<8x8xf32> -> vector<32x8xf32>
    %699 = vector.broadcast %11 : vector<1x8xf32> to vector<32x8xf32>
    %700 = arith.addf %698, %699 : vector<32x8xf32>
    %cst_379 = arith.constant dense<0xFF800000> : vector<32xf32>
    %701 = vector.multi_reduction <maximumf>, %700, %cst_379 [1] : vector<32x8xf32> to vector<32xf32>
    %702 = vector.shape_cast %701 : vector<32xf32> to vector<32x1xf32>
    %703 = vector.broadcast %702 : vector<32x1xf32> to vector<32x8xf32>
    %704 = arith.subf %700, %703 : vector<32x8xf32>
    %705 = math.exp %704 : vector<32x8xf32>
    %cst_380 = arith.constant dense<0.000000e+00> : vector<32xf32>
    %706 = vector.multi_reduction <add>, %705, %cst_380 [1] : vector<32x8xf32> to vector<32xf32>
    %707 = vector.shape_cast %706 : vector<32xf32> to vector<32x1xf32>
    %708 = tpu.reciprocal %707 {approx = true} : vector<32x1xf32> -> vector<32x1xf32>
    %709 = vector.broadcast %708 : vector<32x1xf32> to vector<32x8xf32>
    %710 = arith.mulf %705, %709 : vector<32x8xf32>
    %711 = vector.extract_strided_slice %710 {offsets = [0, 0], sizes = [8, 8], strides = [1, 1]} : vector<32x8xf32> to vector<8x8xf32>
    %712 = vector.extract_strided_slice %681 {offsets = [0, 0], sizes = [8, 8], strides = [1, 1]} : vector<8x32xf32> to vector<8x8xf32>
    %cst_381 = arith.constant dense<0.000000e+00> : vector<8x8xf32>
    %713 = tpu.matmul %711, %712, %cst_381 {dimension_numbers = #tpu.dot_dimension_numbers<[1], [0], [0], [1], [0, 0, 1, 1], [], []>} : vector<8x8xf32>, vector<8x8xf32>, vector<8x8xf32> -> vector<8x8xf32>
    %714 = vector.extract_strided_slice %710 {offsets = [8, 0], sizes = [8, 8], strides = [1, 1]} : vector<32x8xf32> to vector<8x8xf32>
    %715 = vector.extract_strided_slice %681 {offsets = [0, 8], sizes = [8, 8], strides = [1, 1]} : vector<8x32xf32> to vector<8x8xf32>
    %cst_382 = arith.constant dense<0.000000e+00> : vector<8x8xf32>
    %716 = tpu.matmul %714, %715, %cst_382 {dimension_numbers = #tpu.dot_dimension_numbers<[1], [0], [0], [1], [0, 0, 1, 1], [], []>} : vector<8x8xf32>, vector<8x8xf32>, vector<8x8xf32> -> vector<8x8xf32>
    %717 = vector.extract_strided_slice %710 {offsets = [16, 0], sizes = [8, 8], strides = [1, 1]} : vector<32x8xf32> to vector<8x8xf32>
    %718 = vector.extract_strided_slice %681 {offsets = [0, 16], sizes = [8, 8], strides = [1, 1]} : vector<8x32xf32> to vector<8x8xf32>
    %cst_383 = arith.constant dense<0.000000e+00> : vector<8x8xf32>
    %719 = tpu.matmul %717, %718, %cst_383 {dimension_numbers = #tpu.dot_dimension_numbers<[1], [0], [0], [1], [0, 0, 1, 1], [], []>} : vector<8x8xf32>, vector<8x8xf32>, vector<8x8xf32> -> vector<8x8xf32>
    %720 = vector.extract_strided_slice %710 {offsets = [24, 0], sizes = [8, 8], strides = [1, 1]} : vector<32x8xf32> to vector<8x8xf32>
    %721 = vector.extract_strided_slice %681 {offsets = [0, 24], sizes = [8, 8], strides = [1, 1]} : vector<8x32xf32> to vector<8x8xf32>
    %cst_384 = arith.constant dense<0.000000e+00> : vector<8x8xf32>
    %722 = tpu.matmul %720, %721, %cst_384 {dimension_numbers = #tpu.dot_dimension_numbers<[1], [0], [0], [1], [0, 0, 1, 1], [], []>} : vector<8x8xf32>, vector<8x8xf32>, vector<8x8xf32> -> vector<8x8xf32>
    %723 = tpu.concatenate %713, %716, %719, %722 in 1 : vector<8x8xf32>, vector<8x8xf32>, vector<8x8xf32>, vector<8x8xf32> -> vector<8x32xf32>
    %724 = arith.truncf %723 : vector<8x32xf32> to vector<8x32xbf16>
    %cst_385 = arith.constant dense<0.000000e+00> : vector<8x32xf32>
    %725 = tpu.matmul %724, %683, %cst_385 {dimension_numbers = #tpu.dot_dimension_numbers<[1], [0], [0], [1], [0, 0, 1, 1], [], []>} : vector<8x32xbf16>, vector<32x32xbf16>, vector<8x32xf32> -> vector<8x32xf32>
    %726 = vector.broadcast %685 : vector<1x32xf32> to vector<8x32xf32>
    %727 = arith.addf %725, %726 : vector<8x32xf32>
    %728 = arith.addf %657, %727 : vector<8x32xf32>
    %c1_386 = arith.constant 1 : index
    %c0_387 = arith.constant 0 : index
    %c0_388 = arith.constant 0 : index
    %729 = vector.load %arg46[%c1_386, %c0_387, %c0_388] : memref<2x1x32xf32, #tpu.memory_space<vmem>>, vector<1x1x32xf32>
    %730 = vector.shape_cast %729 : vector<1x1x32xf32> to vector<1x32xf32>
    %c1_389 = arith.constant 1 : index
    %c0_390 = arith.constant 0 : index
    %c0_391 = arith.constant 0 : index
    %731 = vector.load %arg47[%c1_389, %c0_390, %c0_391] : memref<2x1x32xf32, #tpu.memory_space<vmem>>, vector<1x1x32xf32>
    %732 = vector.shape_cast %731 : vector<1x1x32xf32> to vector<1x32xf32>
    %cst_392 = arith.constant dense<0.000000e+00> : vector<8xf32>
    %733 = vector.multi_reduction <add>, %728, %cst_392 [1] : vector<8x32xf32> to vector<8xf32>
    %734 = vector.shape_cast %733 : vector<8xf32> to vector<8x1xf32>
    %cst_393 = arith.constant 3.200000e+01 : f32
    %735 = vector.broadcast %cst_393 : f32 to vector<8x1xf32>
    %736 = arith.divf %734, %735 : vector<8x1xf32>
    %737 = vector.broadcast %736 : vector<8x1xf32> to vector<8x32xf32>
    %738 = arith.subf %728, %737 : vector<8x32xf32>
    %739 = arith.mulf %738, %738 : vector<8x32xf32>
    %cst_394 = arith.constant dense<0.000000e+00> : vector<8xf32>
    %740 = vector.multi_reduction <add>, %739, %cst_394 [1] : vector<8x32xf32> to vector<8xf32>
    %741 = vector.shape_cast %740 : vector<8xf32> to vector<8x1xf32>
    %cst_395 = arith.constant 3.200000e+01 : f32
    %742 = vector.broadcast %cst_395 : f32 to vector<8x1xf32>
    %743 = arith.divf %741, %742 : vector<8x1xf32>
    %744 = vector.broadcast %736 : vector<8x1xf32> to vector<8x32xf32>
    %745 = arith.subf %728, %744 : vector<8x32xf32>
    %cst_396 = arith.constant 9.99999974E-6 : f32
    %746 = vector.broadcast %cst_396 : f32 to vector<8x1xf32>
    %747 = arith.addf %743, %746 : vector<8x1xf32>
    %748 = math.rsqrt %747 : vector<8x1xf32>
    %749 = vector.broadcast %748 : vector<8x1xf32> to vector<8x32xf32>
    %750 = arith.mulf %745, %749 : vector<8x32xf32>
    %751 = vector.broadcast %730 : vector<1x32xf32> to vector<8x32xf32>
    %752 = arith.mulf %750, %751 : vector<8x32xf32>
    %753 = vector.broadcast %732 : vector<1x32xf32> to vector<8x32xf32>
    %754 = arith.addf %752, %753 : vector<8x32xf32>
    %c1_397 = arith.constant 1 : index
    %c0_398 = arith.constant 0 : index
    %c0_399 = arith.constant 0 : index
    %755 = vector.load %arg40[%c1_397, %c0_398, %c0_399] : memref<2x32x64xbf16, #tpu.memory_space<vmem>>, vector<1x32x64xbf16>
    %756 = vector.shape_cast %755 : vector<1x32x64xbf16> to vector<32x64xbf16>
    %c1_400 = arith.constant 1 : index
    %c0_401 = arith.constant 0 : index
    %c0_402 = arith.constant 0 : index
    %757 = vector.load %arg41[%c1_400, %c0_401, %c0_402] : memref<2x1x64xf32, #tpu.memory_space<vmem>>, vector<1x1x64xf32>
    %758 = vector.shape_cast %757 : vector<1x1x64xf32> to vector<1x64xf32>
    %759 = arith.truncf %754 : vector<8x32xf32> to vector<8x32xbf16>
    %cst_403 = arith.constant dense<0.000000e+00> : vector<8x64xf32>
    %760 = tpu.matmul %759, %756, %cst_403 {dimension_numbers = #tpu.dot_dimension_numbers<[1], [0], [0], [1], [0, 0, 1, 1], [], []>} : vector<8x32xbf16>, vector<32x64xbf16>, vector<8x64xf32> -> vector<8x64xf32>
    %761 = vector.broadcast %758 : vector<1x64xf32> to vector<8x64xf32>
    %762 = arith.addf %760, %761 : vector<8x64xf32>
    %cst_404 = arith.constant 0.000000e+00 : f32
    %763 = vector.broadcast %cst_404 : f32 to vector<8x64xf32>
    %764 = arith.maximumf %762, %763 : vector<8x64xf32>
    %c1_405 = arith.constant 1 : index
    %c0_406 = arith.constant 0 : index
    %c0_407 = arith.constant 0 : index
    %765 = vector.load %arg42[%c1_405, %c0_406, %c0_407] : memref<2x64x32xbf16, #tpu.memory_space<vmem>>, vector<1x64x32xbf16>
    %766 = vector.shape_cast %765 : vector<1x64x32xbf16> to vector<64x32xbf16>
    %c1_408 = arith.constant 1 : index
    %c0_409 = arith.constant 0 : index
    %c0_410 = arith.constant 0 : index
    %767 = vector.load %arg43[%c1_408, %c0_409, %c0_410] : memref<2x1x32xf32, #tpu.memory_space<vmem>>, vector<1x1x32xf32>
    %768 = vector.shape_cast %767 : vector<1x1x32xf32> to vector<1x32xf32>
    %769 = arith.truncf %764 : vector<8x64xf32> to vector<8x64xbf16>
    %cst_411 = arith.constant dense<0.000000e+00> : vector<8x32xf32>
    %770 = tpu.matmul %769, %766, %cst_411 {dimension_numbers = #tpu.dot_dimension_numbers<[1], [0], [0], [1], [0, 0, 1, 1], [], []>} : vector<8x64xbf16>, vector<64x32xbf16>, vector<8x32xf32> -> vector<8x32xf32>
    %771 = vector.broadcast %768 : vector<1x32xf32> to vector<8x32xf32>
    %772 = arith.addf %770, %771 : vector<8x32xf32>
    %773 = arith.addf %754, %772 : vector<8x32xf32>
    %c1_412 = arith.constant 1 : index
    %c0_413 = arith.constant 0 : index
    %c0_414 = arith.constant 0 : index
    %774 = vector.load %arg48[%c1_412, %c0_413, %c0_414] : memref<2x1x32xf32, #tpu.memory_space<vmem>>, vector<1x1x32xf32>
    %775 = vector.shape_cast %774 : vector<1x1x32xf32> to vector<1x32xf32>
    %c1_415 = arith.constant 1 : index
    %c0_416 = arith.constant 0 : index
    %c0_417 = arith.constant 0 : index
    %776 = vector.load %arg49[%c1_415, %c0_416, %c0_417] : memref<2x1x32xf32, #tpu.memory_space<vmem>>, vector<1x1x32xf32>
    %777 = vector.shape_cast %776 : vector<1x1x32xf32> to vector<1x32xf32>
    %cst_418 = arith.constant dense<0.000000e+00> : vector<8xf32>
    %778 = vector.multi_reduction <add>, %773, %cst_418 [1] : vector<8x32xf32> to vector<8xf32>
    %779 = vector.shape_cast %778 : vector<8xf32> to vector<8x1xf32>
    %cst_419 = arith.constant 3.200000e+01 : f32
    %780 = vector.broadcast %cst_419 : f32 to vector<8x1xf32>
    %781 = arith.divf %779, %780 : vector<8x1xf32>
    %782 = vector.broadcast %781 : vector<8x1xf32> to vector<8x32xf32>
    %783 = arith.subf %773, %782 : vector<8x32xf32>
    %784 = arith.mulf %783, %783 : vector<8x32xf32>
    %cst_420 = arith.constant dense<0.000000e+00> : vector<8xf32>
    %785 = vector.multi_reduction <add>, %784, %cst_420 [1] : vector<8x32xf32> to vector<8xf32>
    %786 = vector.shape_cast %785 : vector<8xf32> to vector<8x1xf32>
    %cst_421 = arith.constant 3.200000e+01 : f32
    %787 = vector.broadcast %cst_421 : f32 to vector<8x1xf32>
    %788 = arith.divf %786, %787 : vector<8x1xf32>
    %789 = vector.broadcast %781 : vector<8x1xf32> to vector<8x32xf32>
    %790 = arith.subf %773, %789 : vector<8x32xf32>
    %cst_422 = arith.constant 9.99999974E-6 : f32
    %791 = vector.broadcast %cst_422 : f32 to vector<8x1xf32>
    %792 = arith.addf %788, %791 : vector<8x1xf32>
    %793 = math.rsqrt %792 : vector<8x1xf32>
    %794 = vector.broadcast %793 : vector<8x1xf32> to vector<8x32xf32>
    %795 = arith.mulf %790, %794 : vector<8x32xf32>
    %796 = vector.broadcast %775 : vector<1x32xf32> to vector<8x32xf32>
    %797 = arith.mulf %795, %796 : vector<8x32xf32>
    %798 = vector.broadcast %777 : vector<1x32xf32> to vector<8x32xf32>
    %799 = arith.addf %797, %798 : vector<8x32xf32>
    %c0_423 = arith.constant 0 : index
    %c0_424 = arith.constant 0 : index
    %800 = vector.load %arg52[%c0_423, %c0_424] : memref<1x32xf32, #tpu.memory_space<vmem>>, vector<1x32xf32>
    %c0_425 = arith.constant 0 : index
    %c0_426 = arith.constant 0 : index
    %801 = vector.load %arg53[%c0_425, %c0_426] : memref<1x32xf32, #tpu.memory_space<vmem>>, vector<1x32xf32>
    %cst_427 = arith.constant dense<0.000000e+00> : vector<8xf32>
    %802 = vector.multi_reduction <add>, %799, %cst_427 [1] : vector<8x32xf32> to vector<8xf32>
    %803 = vector.shape_cast %802 : vector<8xf32> to vector<8x1xf32>
    %cst_428 = arith.constant 3.200000e+01 : f32
    %804 = vector.broadcast %cst_428 : f32 to vector<8x1xf32>
    %805 = arith.divf %803, %804 : vector<8x1xf32>
    %806 = vector.broadcast %805 : vector<8x1xf32> to vector<8x32xf32>
    %807 = arith.subf %799, %806 : vector<8x32xf32>
    %808 = arith.mulf %807, %807 : vector<8x32xf32>
    %cst_429 = arith.constant dense<0.000000e+00> : vector<8xf32>
    %809 = vector.multi_reduction <add>, %808, %cst_429 [1] : vector<8x32xf32> to vector<8xf32>
    %810 = vector.shape_cast %809 : vector<8xf32> to vector<8x1xf32>
    %cst_430 = arith.constant 3.200000e+01 : f32
    %811 = vector.broadcast %cst_430 : f32 to vector<8x1xf32>
    %812 = arith.divf %810, %811 : vector<8x1xf32>
    %813 = vector.broadcast %805 : vector<8x1xf32> to vector<8x32xf32>
    %814 = arith.subf %799, %813 : vector<8x32xf32>
    %cst_431 = arith.constant 9.99999974E-6 : f32
    %815 = vector.broadcast %cst_431 : f32 to vector<8x1xf32>
    %816 = arith.addf %812, %815 : vector<8x1xf32>
    %817 = math.rsqrt %816 : vector<8x1xf32>
    %818 = vector.broadcast %817 : vector<8x1xf32> to vector<8x32xf32>
    %819 = arith.mulf %814, %818 : vector<8x32xf32>
    %820 = vector.broadcast %800 : vector<1x32xf32> to vector<8x32xf32>
    %821 = arith.mulf %819, %820 : vector<8x32xf32>
    %822 = vector.broadcast %801 : vector<1x32xf32> to vector<8x32xf32>
    %823 = arith.addf %821, %822 : vector<8x32xf32>
    %c0_432 = arith.constant 0 : index
    %c0_433 = arith.constant 0 : index
    %824 = vector.load %arg54[%c0_432, %c0_433] : memref<32x128xbf16, #tpu.memory_space<vmem>>, vector<32x128xbf16>
    %825 = arith.truncf %823 : vector<8x32xf32> to vector<8x32xbf16>
    %cst_434 = arith.constant dense<0.000000e+00> : vector<8x128xf32>
    %826 = tpu.matmul %825, %824, %cst_434 {dimension_numbers = #tpu.dot_dimension_numbers<[1], [0], [0], [1], [0, 0, 1, 1], [], []>} : vector<8x32xbf16>, vector<32x128xbf16>, vector<8x128xf32> -> vector<8x128xf32>
    %c0_435 = arith.constant 0 : index
    %c0_436 = arith.constant 0 : index
    %827 = vector.load %arg55[%c0_435, %c0_436] : memref<1x128xf32, #tpu.memory_space<vmem>>, vector<1x128xf32>
    %828 = vector.broadcast %827 : vector<1x128xf32> to vector<8x128xf32>
    %829 = arith.addf %826, %828 : vector<8x128xf32>
    %c0_437 = arith.constant 0 : index
    %c0_438 = arith.constant 0 : index
    %c0_439 = arith.constant 0 : index
    %830 = vector.load %arg56[%c0_437, %c0_438, %c0_439] : memref<1x8x128xf32, #tpu.memory_space<vmem>>, vector<1x8x128xf32>
    %831 = vector.shape_cast %830 : vector<1x8x128xf32> to vector<8x128xf32>
    %832 = vector.shape_cast %829 : vector<8x128xf32> to vector<1x8x128xf32>
    tpu.vector_store %arg56[%c0_437, %c0_438, %c0_439], %832 {strides = array<i32>} : memref<1x8x128xf32, #tpu.memory_space<vmem>>, vector<1x8x128xf32>,
    return
  }
  func.func @transform_0(%arg0: i32) -> (i32, i32, i32) {
    %c0_i32 = arith.constant 0 : i32
    %c0_i32_0 = arith.constant 0 : i32
    %c0_i32_1 = arith.constant 0 : i32
    return %arg0, %c0_i32, %c0_i32_0 : i32, i32, i32
  }
  func.func @transform_1(%arg0: i32) -> (i32, i32, i32) {
    %c0_i32 = arith.constant 0 : i32
    %c0_i32_0 = arith.constant 0 : i32
    %c0_i32_1 = arith.constant 0 : i32
    return %arg0, %c0_i32, %c0_i32_0 : i32, i32, i32
  }
  func.func @transform_2(%arg0: i32) -> (i32, i32) {
    %c0_i32 = arith.constant 0 : i32
    %c0_i32_0 = arith.constant 0 : i32
    %c0_i32_1 = arith.constant 0 : i32
    return %c0_i32, %c0_i32_0 : i32, i32
  }
  func.func @transform_3(%arg0: i32) -> (i32, i32) {
    %c0_i32 = arith.constant 0 : i32
    %c0_i32_0 = arith.constant 0 : i32
    %c0_i32_1 = arith.constant 0 : i32
    return %c0_i32, %c0_i32_0 : i32, i32
  }
  func.func @transform_4(%arg0: i32) -> (i32, i32, i32) {
    %c0_i32 = arith.constant 0 : i32
    %c0_i32_0 = arith.constant 0 : i32
    %c0_i32_1 = arith.constant 0 : i32
    return %arg0, %c0_i32, %c0_i32_0 : i32, i32, i32
  }
  func.func @transform_5(%arg0: i32) -> (i32, i32, i32) {
    %c0_i32 = arith.constant 0 : i32
    %c0_i32_0 = arith.constant 0 : i32
    %c0_i32_1 = arith.constant 0 : i32
    return %arg0, %c0_i32, %c0_i32_0 : i32, i32, i32
  }
  func.func @transform_6(%arg0: i32) -> (i32, i32, i32) {
    %c0_i32 = arith.constant 0 : i32
    %c0_i32_0 = arith.constant 0 : i32
    %c0_i32_1 = arith.constant 0 : i32
    return %arg0, %c0_i32, %c0_i32_0 : i32, i32, i32
  }
  func.func @transform_7(%arg0: i32) -> (i32, i32, i32) {
    %c0_i32 = arith.constant 0 : i32
    %c0_i32_0 = arith.constant 0 : i32
    %c0_i32_1 = arith.constant 0 : i32
    %c0_i32_2 = arith.constant 0 : i32
    return %c0_i32, %c0_i32_0, %c0_i32_1 : i32, i32, i32
  }
  func.func @transform_8(%arg0: i32) -> (i32, i32, i32) {
    %c0_i32 = arith.constant 0 : i32
    %c0_i32_0 = arith.constant 0 : i32
    %c0_i32_1 = arith.constant 0 : i32
    %c0_i32_2 = arith.constant 0 : i32
    return %c0_i32, %c0_i32_0, %c0_i32_1 : i32, i32, i32
  }
  func.func @transform_9(%arg0: i32) -> (i32, i32, i32) {
    %c0_i32 = arith.constant 0 : i32
    %c0_i32_0 = arith.constant 0 : i32
    %c0_i32_1 = arith.constant 0 : i32
    %c0_i32_2 = arith.constant 0 : i32
    return %c0_i32, %c0_i32_0, %c0_i32_1 : i32, i32, i32
  }
  func.func @transform_10(%arg0: i32) -> (i32, i32, i32) {
    %c0_i32 = arith.constant 0 : i32
    %c0_i32_0 = arith.constant 0 : i32
    %c0_i32_1 = arith.constant 0 : i32
    %c0_i32_2 = arith.constant 0 : i32
    return %c0_i32, %c0_i32_0, %c0_i32_1 : i32, i32, i32
  }
  func.func @transform_11(%arg0: i32) -> (i32, i32, i32) {
    %c0_i32 = arith.constant 0 : i32
    %c0_i32_0 = arith.constant 0 : i32
    %c0_i32_1 = arith.constant 0 : i32
    %c0_i32_2 = arith.constant 0 : i32
    return %c0_i32, %c0_i32_0, %c0_i32_1 : i32, i32, i32
  }
  func.func @transform_12(%arg0: i32) -> (i32, i32, i32) {
    %c0_i32 = arith.constant 0 : i32
    %c0_i32_0 = arith.constant 0 : i32
    %c0_i32_1 = arith.constant 0 : i32
    %c0_i32_2 = arith.constant 0 : i32
    return %c0_i32, %c0_i32_0, %c0_i32_1 : i32, i32, i32
  }
  func.func @transform_13(%arg0: i32) -> (i32, i32, i32) {
    %c0_i32 = arith.constant 0 : i32
    %c0_i32_0 = arith.constant 0 : i32
    %c0_i32_1 = arith.constant 0 : i32
    %c0_i32_2 = arith.constant 0 : i32
    return %c0_i32, %c0_i32_0, %c0_i32_1 : i32, i32, i32
  }
  func.func @transform_14(%arg0: i32) -> (i32, i32, i32) {
    %c0_i32 = arith.constant 0 : i32
    %c0_i32_0 = arith.constant 0 : i32
    %c0_i32_1 = arith.constant 0 : i32
    %c0_i32_2 = arith.constant 0 : i32
    return %c0_i32, %c0_i32_0, %c0_i32_1 : i32, i32, i32
  }
  func.func @transform_15(%arg0: i32) -> (i32, i32, i32) {
    %c0_i32 = arith.constant 0 : i32
    %c0_i32_0 = arith.constant 0 : i32
    %c0_i32_1 = arith.constant 0 : i32
    %c0_i32_2 = arith.constant 0 : i32
    return %c0_i32, %c0_i32_0, %c0_i32_1 : i32, i32, i32
  }
  func.func @transform_16(%arg0: i32) -> (i32, i32, i32) {
    %c0_i32 = arith.constant 0 : i32
    %c0_i32_0 = arith.constant 0 : i32
    %c0_i32_1 = arith.constant 0 : i32
    %c0_i32_2 = arith.constant 0 : i32
    return %c0_i32, %c0_i32_0, %c0_i32_1 : i32, i32, i32
  }
  func.func @transform_17(%arg0: i32) -> (i32, i32, i32) {
    %c0_i32 = arith.constant 0 : i32
    %c0_i32_0 = arith.constant 0 : i32
    %c0_i32_1 = arith.constant 0 : i32
    %c0_i32_2 = arith.constant 0 : i32
    return %c0_i32, %c0_i32_0, %c0_i32_1 : i32, i32, i32
  }
  func.func @transform_18(%arg0: i32) -> (i32, i32, i32) {
    %c0_i32 = arith.constant 0 : i32
    %c0_i32_0 = arith.constant 0 : i32
    %c0_i32_1 = arith.constant 0 : i32
    %c0_i32_2 = arith.constant 0 : i32
    return %c0_i32, %c0_i32_0, %c0_i32_1 : i32, i32, i32
  }
  func.func @transform_19(%arg0: i32) -> (i32, i32, i32) {
    %c0_i32 = arith.constant 0 : i32
    %c0_i32_0 = arith.constant 0 : i32
    %c0_i32_1 = arith.constant 0 : i32
    %c0_i32_2 = arith.constant 0 : i32
    return %c0_i32, %c0_i32_0, %c0_i32_1 : i32, i32, i32
  }
  func.func @transform_20(%arg0: i32) -> (i32, i32, i32) {
    %c0_i32 = arith.constant 0 : i32
    %c0_i32_0 = arith.constant 0 : i32
    %c0_i32_1 = arith.constant 0 : i32
    %c0_i32_2 = arith.constant 0 : i32
    return %c0_i32, %c0_i32_0, %c0_i32_1 : i32, i32, i32
  }
  func.func @transform_21(%arg0: i32) -> (i32, i32, i32) {
    %c0_i32 = arith.constant 0 : i32
    %c0_i32_0 = arith.constant 0 : i32
    %c0_i32_1 = arith.constant 0 : i32
    %c0_i32_2 = arith.constant 0 : i32
    return %c0_i32, %c0_i32_0, %c0_i32_1 : i32, i32, i32
  }
  func.func @transform_22(%arg0: i32) -> (i32, i32, i32) {
    %c0_i32 = arith.constant 0 : i32
    %c0_i32_0 = arith.constant 0 : i32
    %c0_i32_1 = arith.constant 0 : i32
    %c0_i32_2 = arith.constant 0 : i32
    return %c0_i32, %c0_i32_0, %c0_i32_1 : i32, i32, i32
  }
  func.func @transform_23(%arg0: i32) -> (i32, i32, i32) {
    %c0_i32 = arith.constant 0 : i32
    %c0_i32_0 = arith.constant 0 : i32
    %c0_i32_1 = arith.constant 0 : i32
    %c0_i32_2 = arith.constant 0 : i32
    return %c0_i32, %c0_i32_0, %c0_i32_1 : i32, i32, i32
  }
  func.func @transform_24(%arg0: i32) -> (i32, i32, i32) {
    %c0_i32 = arith.constant 0 : i32
    %c0_i32_0 = arith.constant 0 : i32
    %c0_i32_1 = arith.constant 0 : i32
    %c0_i32_2 = arith.constant 0 : i32
    return %c0_i32, %c0_i32_0, %c0_i32_1 : i32, i32, i32
  }
  func.func @transform_25(%arg0: i32) -> (i32, i32, i32) {
    %c0_i32 = arith.constant 0 : i32
    %c0_i32_0 = arith.constant 0 : i32
    %c0_i32_1 = arith.constant 0 : i32
    %c0_i32_2 = arith.constant 0 : i32
    return %c0_i32, %c0_i32_0, %c0_i32_1 : i32, i32, i32
  }
  func.func @transform_26(%arg0: i32) -> (i32, i32, i32) {
    %c0_i32 = arith.constant 0 : i32
    %c0_i32_0 = arith.constant 0 : i32
    %c0_i32_1 = arith.constant 0 : i32
    %c0_i32_2 = arith.constant 0 : i32
    return %c0_i32, %c0_i32_0, %c0_i32_1 : i32, i32, i32
  }
  func.func @transform_27(%arg0: i32) -> (i32, i32, i32) {
    %c0_i32 = arith.constant 0 : i32
    %c0_i32_0 = arith.constant 0 : i32
    %c0_i32_1 = arith.constant 0 : i32
    %c0_i32_2 = arith.constant 0 : i32
    return %c0_i32, %c0_i32_0, %c0_i32_1 : i32, i32, i32
  }
  func.func @transform_28(%arg0: i32) -> (i32, i32, i32) {
    %c0_i32 = arith.constant 0 : i32
    %c0_i32_0 = arith.constant 0 : i32
    %c0_i32_1 = arith.constant 0 : i32
    %c0_i32_2 = arith.constant 0 : i32
    return %c0_i32, %c0_i32_0, %c0_i32_1 : i32, i32, i32
  }
  func.func @transform_29(%arg0: i32) -> (i32, i32, i32) {
    %c0_i32 = arith.constant 0 : i32
    %c0_i32_0 = arith.constant 0 : i32
    %c0_i32_1 = arith.constant 0 : i32
    %c0_i32_2 = arith.constant 0 : i32
    return %c0_i32, %c0_i32_0, %c0_i32_1 : i32, i32, i32
  }
  func.func @transform_30(%arg0: i32) -> (i32, i32, i32) {
    %c0_i32 = arith.constant 0 : i32
    %c0_i32_0 = arith.constant 0 : i32
    %c0_i32_1 = arith.constant 0 : i32
    %c0_i32_2 = arith.constant 0 : i32
    return %c0_i32, %c0_i32_0, %c0_i32_1 : i32, i32, i32
  }
  func.func @transform_31(%arg0: i32) -> (i32, i32, i32) {
    %c0_i32 = arith.constant 0 : i32
    %c0_i32_0 = arith.constant 0 : i32
    %c0_i32_1 = arith.constant 0 : i32
    %c0_i32_2 = arith.constant 0 : i32
    return %c0_i32, %c0_i32_0, %c0_i32_1 : i32, i32, i32
  }
  func.func @transform_32(%arg0: i32) -> (i32, i32, i32) {
    %c0_i32 = arith.constant 0 : i32
    %c0_i32_0 = arith.constant 0 : i32
    %c0_i32_1 = arith.constant 0 : i32
    %c0_i32_2 = arith.constant 0 : i32
    return %c0_i32, %c0_i32_0, %c0_i32_1 : i32, i32, i32
  }
  func.func @transform_33(%arg0: i32) -> (i32, i32, i32) {
    %c0_i32 = arith.constant 0 : i32
    %c0_i32_0 = arith.constant 0 : i32
    %c0_i32_1 = arith.constant 0 : i32
    %c0_i32_2 = arith.constant 0 : i32
    return %c0_i32, %c0_i32_0, %c0_i32_1 : i32, i32, i32
  }
  func.func @transform_34(%arg0: i32) -> (i32, i32, i32) {
    %c0_i32 = arith.constant 0 : i32
    %c0_i32_0 = arith.constant 0 : i32
    %c0_i32_1 = arith.constant 0 : i32
    %c0_i32_2 = arith.constant 0 : i32
    return %c0_i32, %c0_i32_0, %c0_i32_1 : i32, i32, i32
  }
  func.func @transform_35(%arg0: i32) -> (i32, i32, i32) {
    %c0_i32 = arith.constant 0 : i32
    %c0_i32_0 = arith.constant 0 : i32
    %c0_i32_1 = arith.constant 0 : i32
    %c0_i32_2 = arith.constant 0 : i32
    return %c0_i32, %c0_i32_0, %c0_i32_1 : i32, i32, i32
  }
  func.func @transform_36(%arg0: i32) -> (i32, i32, i32) {
    %c0_i32 = arith.constant 0 : i32
    %c0_i32_0 = arith.constant 0 : i32
    %c0_i32_1 = arith.constant 0 : i32
    %c0_i32_2 = arith.constant 0 : i32
    return %c0_i32, %c0_i32_0, %c0_i32_1 : i32, i32, i32
  }
  func.func @transform_37(%arg0: i32) -> (i32, i32, i32) {
    %c0_i32 = arith.constant 0 : i32
    %c0_i32_0 = arith.constant 0 : i32
    %c0_i32_1 = arith.constant 0 : i32
    %c0_i32_2 = arith.constant 0 : i32
    return %c0_i32, %c0_i32_0, %c0_i32_1 : i32, i32, i32
  }
  func.func @transform_38(%arg0: i32) -> (i32, i32, i32) {
    %c0_i32 = arith.constant 0 : i32
    %c0_i32_0 = arith.constant 0 : i32
    %c0_i32_1 = arith.constant 0 : i32
    %c0_i32_2 = arith.constant 0 : i32
    return %c0_i32, %c0_i32_0, %c0_i32_1 : i32, i32, i32
  }
  func.func @transform_39(%arg0: i32) -> (i32, i32, i32) {
    %c0_i32 = arith.constant 0 : i32
    %c0_i32_0 = arith.constant 0 : i32
    %c0_i32_1 = arith.constant 0 : i32
    %c0_i32_2 = arith.constant 0 : i32
    return %c0_i32, %c0_i32_0, %c0_i32_1 : i32, i32, i32
  }
  func.func @transform_40(%arg0: i32) -> (i32, i32, i32) {
    %c0_i32 = arith.constant 0 : i32
    %c0_i32_0 = arith.constant 0 : i32
    %c0_i32_1 = arith.constant 0 : i32
    %c0_i32_2 = arith.constant 0 : i32
    return %c0_i32, %c0_i32_0, %c0_i32_1 : i32, i32, i32
  }
  func.func @transform_41(%arg0: i32) -> (i32, i32, i32) {
    %c0_i32 = arith.constant 0 : i32
    %c0_i32_0 = arith.constant 0 : i32
    %c0_i32_1 = arith.constant 0 : i32
    %c0_i32_2 = arith.constant 0 : i32
    return %c0_i32, %c0_i32_0, %c0_i32_1 : i32, i32, i32
  }
  func.func @transform_42(%arg0: i32) -> (i32, i32, i32) {
    %c0_i32 = arith.constant 0 : i32
    %c0_i32_0 = arith.constant 0 : i32
    %c0_i32_1 = arith.constant 0 : i32
    %c0_i32_2 = arith.constant 0 : i32
    return %c0_i32, %c0_i32_0, %c0_i32_1 : i32, i32, i32
  }
  func.func @transform_43(%arg0: i32) -> (i32, i32, i32) {
    %c0_i32 = arith.constant 0 : i32
    %c0_i32_0 = arith.constant 0 : i32
    %c0_i32_1 = arith.constant 0 : i32
    %c0_i32_2 = arith.constant 0 : i32
    return %c0_i32, %c0_i32_0, %c0_i32_1 : i32, i32, i32
  }
  func.func @transform_44(%arg0: i32) -> (i32, i32, i32) {
    %c0_i32 = arith.constant 0 : i32
    %c0_i32_0 = arith.constant 0 : i32
    %c0_i32_1 = arith.constant 0 : i32
    %c0_i32_2 = arith.constant 0 : i32
    return %c0_i32, %c0_i32_0, %c0_i32_1 : i32, i32, i32
  }
  func.func @transform_45(%arg0: i32) -> (i32, i32, i32) {
    %c0_i32 = arith.constant 0 : i32
    %c0_i32_0 = arith.constant 0 : i32
    %c0_i32_1 = arith.constant 0 : i32
    %c0_i32_2 = arith.constant 0 : i32
    return %c0_i32, %c0_i32_0, %c0_i32_1 : i32, i32, i32
  }
  func.func @transform_46(%arg0: i32) -> (i32, i32, i32) {
    %c0_i32 = arith.constant 0 : i32
    %c0_i32_0 = arith.constant 0 : i32
    %c0_i32_1 = arith.constant 0 : i32
    %c0_i32_2 = arith.constant 0 : i32
    return %c0_i32, %c0_i32_0, %c0_i32_1 : i32, i32, i32
  }
  func.func @transform_47(%arg0: i32) -> (i32, i32, i32) {
    %c0_i32 = arith.constant 0 : i32
    %c0_i32_0 = arith.constant 0 : i32
    %c0_i32_1 = arith.constant 0 : i32
    %c0_i32_2 = arith.constant 0 : i32
    return %c0_i32, %c0_i32_0, %c0_i32_1 : i32, i32, i32
  }
  func.func @transform_48(%arg0: i32) -> (i32, i32, i32) {
    %c0_i32 = arith.constant 0 : i32
    %c0_i32_0 = arith.constant 0 : i32
    %c0_i32_1 = arith.constant 0 : i32
    %c0_i32_2 = arith.constant 0 : i32
    return %c0_i32, %c0_i32_0, %c0_i32_1 : i32, i32, i32
  }
  func.func @transform_49(%arg0: i32) -> (i32, i32) {
    %c0_i32 = arith.constant 0 : i32
    %c0_i32_0 = arith.constant 0 : i32
    %c0_i32_1 = arith.constant 0 : i32
    return %c0_i32, %c0_i32_0 : i32, i32
  }
  func.func @transform_50(%arg0: i32) -> (i32, i32) {
    %c0_i32 = arith.constant 0 : i32
    %c0_i32_0 = arith.constant 0 : i32
    %c0_i32_1 = arith.constant 0 : i32
    return %c0_i32, %c0_i32_0 : i32, i32
  }
  func.func @transform_51(%arg0: i32) -> (i32, i32) {
    %c0_i32 = arith.constant 0 : i32
    %c0_i32_0 = arith.constant 0 : i32
    %c0_i32_1 = arith.constant 0 : i32
    return %c0_i32, %c0_i32_0 : i32, i32
  }
  func.func @transform_52(%arg0: i32) -> (i32, i32) {
    %c0_i32 = arith.constant 0 : i32
    %c0_i32_0 = arith.constant 0 : i32
    %c0_i32_1 = arith.constant 0 : i32
    return %c0_i32, %c0_i32_0 : i32, i32
  }
  func.func @transform_53(%arg0: i32) -> (i32, i32) {
    %c0_i32 = arith.constant 0 : i32
    %c0_i32_0 = arith.constant 0 : i32
    %c0_i32_1 = arith.constant 0 : i32
    return %c0_i32, %c0_i32_0 : i32, i32
  }
  func.func @transform_54(%arg0: i32) -> (i32, i32) {
    %c0_i32 = arith.constant 0 : i32
    %c0_i32_0 = arith.constant 0 : i32
    %c0_i32_1 = arith.constant 0 : i32
    return %c0_i32, %c0_i32_0 : i32, i32
  }
  func.func @transform_55(%arg0: i32) -> (i32, i32, i32) {
    %c0_i32 = arith.constant 0 : i32
    %c0_i32_0 = arith.constant 0 : i32
    %c0_i32_1 = arith.constant 0 : i32
    return %arg0, %c0_i32, %c0_i32_0 : i32, i32, i32
  }
}

</mosaic_0001>

<llo_original>
// kernel: forward.1
$region0: #{forward.1}
  #allocation0 [shape = 'u32[]', space=smem, size = 0x4, offset = 0x4, fixed_abs, tag = 'smem constant byte address 0x4 - core index']
  #allocation1 [shape = 'u32[144,128]{1,0:T(1,128)}', space=vmem, size = 0x12000, scoped, tag = 'internal scratch']
  %s0 = inlined_call_operand.smem [shape: u32[56], index: -1, kind: input, shape index: {}]
  %s1 = sld [smem:[%s0]]
  %s2 = scalar_lea.smem %s0, 1
  %s3 = sld [smem:[%s2]]
  %s4 = scalar_lea.smem %s0, 2
  %s5 = sld [smem:[%s4]]
  %s6 = scalar_lea.smem %s0, 3
  %s7 = sld [smem:[%s6]]
  %s8 = scalar_lea.smem %s0, 4
  %s9 = sld [smem:[%s8]]
  %s10 = scalar_lea.smem %s0, 5
  %s11 = sld [smem:[%s10]]
  %s12 = scalar_lea.smem %s0, 6
  %s13 = sld [smem:[%s12]]
  %s14 = scalar_lea.smem %s0, 7
  %s15 = sld [smem:[%s14]]
  %s16 = scalar_lea.smem %s0, 8
  %s17 = sld [smem:[%s16]]
  %s18 = scalar_lea.smem %s0, 9
  %s19 = sld [smem:[%s18]]
  %s20 = scalar_lea.smem %s0, 10
  %s21 = sld [smem:[%s20]]
  %s22 = scalar_lea.smem %s0, 11
  %s23 = sld [smem:[%s22]]
  %s24 = scalar_lea.smem %s0, 12
  %s25 = sld [smem:[%s24]]
  %s26 = scalar_lea.smem %s0, 13
  %s27 = sld [smem:[%s26]]
  %s28 = scalar_lea.smem %s0, 14
  %s29 = sld [smem:[%s28]]
  %s30 = scalar_lea.smem %s0, 15
  %s31 = sld [smem:[%s30]]
  %s32 = scalar_lea.smem %s0, 16
  %s33 = sld [smem:[%s32]]
  %s34 = scalar_lea.smem %s0, 17
  %s35 = sld [smem:[%s34]]
  %s36 = scalar_lea.smem %s0, 18
  %s37 = sld [smem:[%s36]]
  %s38 = scalar_lea.smem %s0, 19
  %s39 = sld [smem:[%s38]]
  %s40 = scalar_lea.smem %s0, 20
  %s41 = sld [smem:[%s40]]
  %s42 = scalar_lea.smem %s0, 21
  %s43 = sld [smem:[%s42]]
  %s44 = scalar_lea.smem %s0, 22
  %s45 = sld [smem:[%s44]]
  %s46 = scalar_lea.smem %s0, 23
  %s47 = sld [smem:[%s46]]
  %s48 = scalar_lea.smem %s0, 24
  %s49 = sld [smem:[%s48]]
  %s50 = scalar_lea.smem %s0, 25
  %s51 = sld [smem:[%s50]]
  %s52 = scalar_lea.smem %s0, 26
  %s53 = sld [smem:[%s52]]
  %s54 = scalar_lea.smem %s0, 27
  %s55 = sld [smem:[%s54]]
  %s56 = scalar_lea.smem %s0, 28
  %s57 = sld [smem:[%s56]]
  %s58 = scalar_lea.smem %s0, 29
  %s59 = sld [smem:[%s58]]
  %s60 = scalar_lea.smem %s0, 30
  %s61 = sld [smem:[%s60]]
  %s62 = scalar_lea.smem %s0, 31
  %s63 = sld [smem:[%s62]]
  %s64 = scalar_lea.smem %s0, 32
  %s65 = sld [smem:[%s64]]
  %s66 = scalar_lea.smem %s0, 33
  %s67 = sld [smem:[%s66]]
  %s68 = scalar_lea.smem %s0, 34
  %s69 = sld [smem:[%s68]]
  %s70 = scalar_lea.smem %s0, 35
  %s71 = sld [smem:[%s70]]
  %s72 = scalar_lea.smem %s0, 36
  %s73 = sld [smem:[%s72]]
  %s74 = scalar_lea.smem %s0, 37
  %s75 = sld [smem:[%s74]]
  %s76 = scalar_lea.smem %s0, 38
  %s77 = sld [smem:[%s76]]
  %s78 = scalar_lea.smem %s0, 39
  %s79 = sld [smem:[%s78]]
  %s80 = scalar_lea.smem %s0, 40
  %s81 = sld [smem:[%s80]]
  %s82 = scalar_lea.smem %s0, 41
  %s83 = sld [smem:[%s82]]
  %s84 = scalar_lea.smem %s0, 42
  %s85 = sld [smem:[%s84]]
  %s86 = scalar_lea.smem %s0, 43
  %s87 = sld [smem:[%s86]]
  %s88 = scalar_lea.smem %s0, 44
  %s89 = sld [smem:[%s88]]
  %s90 = scalar_lea.smem %s0, 45
  %s91 = sld [smem:[%s90]]
  %s92 = scalar_lea.smem %s0, 46
  %s93 = sld [smem:[%s92]]
  %s94 = scalar_lea.smem %s0, 47
  %s95 = sld [smem:[%s94]]
  %s96 = scalar_lea.smem %s0, 48
  %s97 = sld [smem:[%s96]]
  %s98 = scalar_lea.smem %s0, 49
  %s99 = sld [smem:[%s98]]
  %s100 = scalar_lea.smem %s0, 50
  %s101 = sld [smem:[%s100]]
  %s102 = scalar_lea.smem %s0, 51
  %s103 = sld [smem:[%s102]]
  %s104 = scalar_lea.smem %s0, 52
  %s105 = sld [smem:[%s104]]
  %s106 = scalar_lea.smem %s0, 53
  %s107 = sld [smem:[%s106]]
  %s108 = scalar_lea.smem %s0, 54
  %s109 = sld [smem:[%s108]]
  %s110 = scalar_lea.smem %s0, 55
  %s111 = sld [smem:[%s110]]
  %s112 = sld [smem:[#allocation0]]
  $region293: #{forward.1} parent=0
    _
  %s114 = ssub.s32 1, %s112
  %s115 = scalar_select 0, %s114, %s112
  $region1: #{forward.1} parent=0
    #allocation2 [shape = 'u8[1024]{0}', space=vmem, size = 0x400, scoped, tag = 'input window, operand 43, single buffered']
    #allocation3 [shape = 's32[2]{0}', space=sflag, size = 0x8, scoped, tag = 'scoped memory for forward.1']
    #allocation4 [shape = 'u8[1024]{0}', space=vmem, size = 0x400, scoped, tag = 'input window, operand 44, single buffered']
    #allocation5 [shape = 's32[1]{0}', space=sflag, size = 0x4, scoped, tag = 'scoped memory for forward.1']
    #allocation6 [shape = 'u8[1024]{0}', space=vmem, size = 0x400, scoped, tag = 'input window, operand 45, single buffered']
    #allocation7 [shape = 'u8[1024]{0}', space=vmem, size = 0x400, scoped, tag = 'input window, operand 46, single buffered']
    #allocation8 [shape = 's32[1]{0}', space=sflag, size = 0x4, scoped, tag = 'scoped memory for forward.1']
    #allocation9 [shape = 'u8[1024]{0}', space=vmem, size = 0x400, scoped, tag = 'input window, operand 47, single buffered']
    #allocation10 [shape = 'u8[1024]{0}', space=vmem, size = 0x400, scoped, tag = 'input window, operand 48, single buffered']
    #allocation11 [shape = 's32[1]{0}', space=sflag, size = 0x4, scoped, tag = 'scoped memory for forward.1']
    #allocation12 [shape = 'u8[512]{0}', space=vmem, size = 0x400, scoped, tag = 'input window, operand 50, single buffered']
    #allocation13 [shape = 'u8[512]{0}', space=vmem, size = 0x400, scoped, tag = 'input window, operand 51, single buffered']
    #allocation14 [shape = 's32[1]{0}', space=sflag, size = 0x4, scoped, tag = 'scoped memory for forward.1']
    #allocation15 [shape = 'u8[512]{0}', space=vmem, size = 0x400, scoped, tag = 'input window, operand 52, single buffered']
    #allocation16 [shape = 'u8[512]{0}', space=vmem, size = 0x400, scoped, tag = 'input window, operand 54, single buffered']
    #allocation17 [shape = 's32[1]{0}', space=sflag, size = 0x4, scoped, tag = 'scoped memory for forward.1']
    %116 = vsyncpa [#allocation3], 0
    %117 = vsyncpa [#allocation5], 0
    %118 = vsyncpa [#allocation8], 0
    %119 = vsyncpa [#allocation11], 0
    %120 = vsyncpa [#allocation14], 0
    %121 = vsyncpa [#allocation17], 0
    loop: start=0, step=1, limit=4
    $region2: #{forward.1} parent=1 // loop_pre_header
      _
    $region3: #{forward.1} parent=1 // loop_header
      %s123 = sphi 0, %s127
      %p124 = scmp.ge.s32.totalorder %s123, 4
      %s133 = sphi 0, %s135
      %s136 = sphi 0, %s133
      %s137 = sphi 0, %s136
      %s153 = sphi 0, %s137
      %s159 = sphi 0, %s161
      %s162 = sphi 0, %s159
      %s163 = sphi 0, %s162
      %s179 = sphi 0, %s163
      %s183 = sphi 0, %s183
      %s185 = sphi 0, %s183
      %s186 = sphi 0, %s185
      %s200 = sphi 0, %s186
      %s204 = sphi 0, %s204
      %s206 = sphi 0, %s204
      %s207 = sphi 0, %s206
      %s221 = sphi 0, %s207
      %s227 = sphi 0, %s229
      %s230 = sphi 0, %s227
      %s231 = sphi 0, %s230
      %s247 = sphi 0, %s231
      %s253 = sphi 0, %s255
      %s256 = sphi 0, %s253
      %s257 = sphi 0, %s256
      %s273 = sphi 0, %s257
      %s279 = sphi 0, %s281
      %s282 = sphi 0, %s279
      %s283 = sphi 0, %s282
      %s299 = sphi 0, %s283
      %s303 = sphi 0, %s303
      %s305 = sphi 0, %s303
      %s306 = sphi 0, %s305
      %s320 = sphi 0, %s306
      %s324 = sphi 0, %s324
      %s326 = sphi 0, %s324
      %s327 = sphi 0, %s326
      %s341 = sphi 0, %s327
      %s345 = sphi 0, %s345
      %s347 = sphi 0, %s345
      %s348 = sphi 0, %s347
      %s362 = sphi 0, %s348
      %s366 = sphi 0, %s366
      %s368 = sphi 0, %s366
      %s369 = sphi 0, %s368
      %s383 = sphi 0, %s369
      %s387 = sphi 0, %s387
      %s389 = sphi 0, %s387
      %s390 = sphi 0, %s389
      %s404 = sphi 0, %s390
      %s408 = sphi 0, %s408
      %s410 = sphi 0, %s408
      %s411 = sphi 0, %s410
      %s425 = sphi 0, %s411
      %s429 = sphi 0, %s429
      %s431 = sphi 0, %s429
      %s432 = sphi 0, %s431
      %s446 = sphi 0, %s432
      %s450 = sphi 0, %s450
      %s452 = sphi 0, %s450
      %s453 = sphi 0, %s452
      %s467 = sphi 0, %s453
      %s471 = sphi 0, %s471
      %s473 = sphi 0, %s471
      %s474 = sphi 0, %s473
      %s488 = sphi 0, %s474
      %s492 = sphi 0, %s492
      %s494 = sphi 0, %s492
      %s495 = sphi 0, %s494
      %s509 = sphi 0, %s495
      %s513 = sphi 0, %s513
      %s515 = sphi 0, %s513
      %s516 = sphi 0, %s515
      %s530 = sphi 0, %s516
      %s534 = sphi 0, %s534
      %s536 = sphi 0, %s534
      %s537 = sphi 0, %s536
      %s551 = sphi 0, %s537
      %s555 = sphi 0, %s555
      %s557 = sphi 0, %s555
      %s558 = sphi 0, %s557
      %s572 = sphi 0, %s558
      %s576 = sphi 0, %s576
      %s578 = sphi 0, %s576
      %s579 = sphi 0, %s578
      %s593 = sphi 0, %s579
      %s597 = sphi 0, %s597
      %s599 = sphi 0, %s597
      %s600 = sphi 0, %s599
      %s614 = sphi 0, %s600
      %s618 = sphi 0, %s618
      %s620 = sphi 0, %s618
      %s621 = sphi 0, %s620
      %s635 = sphi 0, %s621
      %s639 = sphi 0, %s639
      %s641 = sphi 0, %s639
      %s642 = sphi 0, %s641
      %s656 = sphi 0, %s642
      %s660 = sphi 0, %s660
      %s662 = sphi 0, %s660
      %s663 = sphi 0, %s662
      %s677 = sphi 0, %s663
      %s681 = sphi 0, %s681
      %s683 = sphi 0, %s681
      %s684 = sphi 0, %s683
      %s698 = sphi 0, %s684
      %s702 = sphi 0, %s702
      %s704 = sphi 0, %s702
      %s705 = sphi 0, %s704
      %s719 = sphi 0, %s705
      %s723 = sphi 0, %s723
      %s725 = sphi 0, %s723
      %s726 = sphi 0, %s725
      %s740 = sphi 0, %s726
      %s744 = sphi 0, %s744
      %s746 = sphi 0, %s744
      %s747 = sphi 0, %s746
      %s761 = sphi 0, %s747
      %s765 = sphi 0, %s765
      %s767 = sphi 0, %s765
      %s768 = sphi 0, %s767
      %s782 = sphi 0, %s768
      %s786 = sphi 0, %s786
      %s788 = sphi 0, %s786
      %s789 = sphi 0, %s788
      %s803 = sphi 0, %s789
      %s807 = sphi 0, %s807
      %s809 = sphi 0, %s807
      %s810 = sphi 0, %s809
      %s824 = sphi 0, %s810
      %s828 = sphi 0, %s828
      %s830 = sphi 0, %s828
      %s831 = sphi 0, %s830
      %s845 = sphi 0, %s831
      %s849 = sphi 0, %s849
      %s851 = sphi 0, %s849
      %s852 = sphi 0, %s851
      %s866 = sphi 0, %s852
      %s870 = sphi 0, %s870
      %s872 = sphi 0, %s870
      %s873 = sphi 0, %s872
      %s887 = sphi 0, %s873
      %s891 = sphi 0, %s891
      %s893 = sphi 0, %s891
      %s894 = sphi 0, %s893
      %s908 = sphi 0, %s894
      %s912 = sphi 0, %s912
      %s914 = sphi 0, %s912
      %s915 = sphi 0, %s914
      %s929 = sphi 0, %s915
      %s933 = sphi 0, %s933
      %s935 = sphi 0, %s933
      %s936 = sphi 0, %s935
      %s950 = sphi 0, %s936
      %s954 = sphi 0, %s954
      %s956 = sphi 0, %s954
      %s957 = sphi 0, %s956
      %s971 = sphi 0, %s957
      %s975 = sphi 0, %s975
      %s977 = sphi 0, %s975
      %s978 = sphi 0, %s977
      %s992 = sphi 0, %s978
      %s996 = sphi 0, %s996
      %s998 = sphi 0, %s996
      %s999 = sphi 0, %s998
      %s1013 = sphi 0, %s999
      %s1017 = sphi 0, %s1017
      %s1019 = sphi 0, %s1017
      %s1020 = sphi 0, %s1019
      %s1034 = sphi 0, %s1020
      %s1038 = sphi 0, %s1038
      %s1040 = sphi 0, %s1038
      %s1041 = sphi 0, %s1040
      %s1055 = sphi 0, %s1041
      %s1059 = sphi 0, %s1059
      %s1061 = sphi 0, %s1059
      %s1062 = sphi 0, %s1061
      %s1076 = sphi 0, %s1062
      %s1080 = sphi 0, %s1080
      %s1082 = sphi 0, %s1080
      %s1083 = sphi 0, %s1082
      %s1097 = sphi 0, %s1083
      %s1101 = sphi 0, %s1101
      %s1103 = sphi 0, %s1101
      %s1104 = sphi 0, %s1103
      %s1118 = sphi 0, %s1104
      %s1122 = sphi 0, %s1122
      %s1124 = sphi 0, %s1122
      %s1125 = sphi 0, %s1124
      %s1139 = sphi 0, %s1125
      %s1143 = sphi 0, %s1143
      %s1145 = sphi 0, %s1143
      %s1146 = sphi 0, %s1145
      %s1160 = sphi 0, %s1146
      %s1164 = sphi 0, %s1164
      %s1166 = sphi 0, %s1164
      %s1167 = sphi 0, %s1166
      %s1181 = sphi 0, %s1167
      %s1185 = sphi 0, %s1185
      %s1187 = sphi 0, %s1185
      %s1188 = sphi 0, %s1187
      %s1202 = sphi 0, %s1188
      %s1206 = sphi 0, %s1206
      %s1208 = sphi 0, %s1206
      %s1209 = sphi 0, %s1208
      %s1223 = sphi 0, %s1209
      %s1227 = sphi 0, %s1227
      %s1229 = sphi 0, %s1227
      %s1230 = sphi 0, %s1229
      %s1244 = sphi 0, %s1230
      %s1248 = sphi 0, %s1248
      %s1250 = sphi 0, %s1248
      %s1251 = sphi 0, %s1250
      %s1265 = sphi 0, %s1251
      %s1269 = sphi 0, %s1269
      %s1271 = sphi 0, %s1269
      %s1272 = sphi 0, %s1271
      %s1286 = sphi 0, %s1272
      %s1290 = sphi 0, %s1290
      %s1292 = sphi 0, %s1290
      %s1293 = sphi 0, %s1292
      %s1307 = sphi 0, %s1293
      %s1313 = sphi 0, %s1315
      %s1316 = sphi 0, %s1313
      %s1317 = sphi 0, %s1316
      %s1333 = sphi 0, %s1317
    $region4: #{forward.1} parent=1 // loop_header_branch
      %126 = sbr.rel (%p124) target = $region8
    $region5: #{forward.1} parent=1 // loop_body
      %s128 = ssub.s32 %s123, 1
      %s129 = ssub.s32 %s123, 2
      %s130 = sadd.s32 %s123, 1
      %s131 = ssub.s32 %s123, %s130
      %p132 = scmp.eq.s32.totalorder %s131, 0
      %s134 = sadd.s32 %s133, 1
      %s135 = scalar_select %p132, %s133, %s134
      %p138 = pneg %p132
      %p139 = scmp.eq.s32.totalorder %s123, 1
      %p140 = por %p138, %p139
      %p141 = scmp.ne.s32.totalorder %s133, %s136
      %p142 = scmp.eq.s32.totalorder %s123, 0
      %p143 = por %p141, %p142
      %p144 = scmp.ne.s32.totalorder %s133, %s136
      %p145 = scmp.eq.s32.totalorder %s128, 1
      %p146 = por %p144, %p145
      %p147 = scmp.ne.s32.totalorder %s136, %s137
      %p148 = scmp.eq.s32.totalorder %s128, 0
      %p149 = por %p147, %p148
      %p150 = scmp.ne.s32.totalorder %s136, %s137
      %p151 = scmp.eq.s32.totalorder %s129, 1
      %p152 = por %p150, %p151
      %p154 = scmp.ne.s32.totalorder %s137, %s153
      %p155 = scmp.eq.s32.totalorder %s129, 0
      %p156 = por %p154, %p155
      %s157 = ssub.s32 %s123, %s130
      %p158 = scmp.eq.s32.totalorder %s157, 0
      %s160 = sadd.s32 %s159, 1
      %s161 = scalar_select %p158, %s159, %s160
      %p164 = pneg %p158
      %p165 = scmp.eq.s32.totalorder %s123, 1
      %p166 = por %p164, %p165
      %p167 = scmp.ne.s32.totalorder %s159, %s162
      %p168 = scmp.eq.s32.totalorder %s123, 0
      %p169 = por %p167, %p168
      %p170 = scmp.ne.s32.totalorder %s159, %s162
      %p171 = scmp.eq.s32.totalorder %s128, 1
      %p172 = por %p170, %p171
      %p173 = scmp.ne.s32.totalorder %s162, %s163
      %p174 = scmp.eq.s32.totalorder %s128, 0
      %p175 = por %p173, %p174
      %p176 = scmp.ne.s32.totalorder %s162, %s163
      %p177 = scmp.eq.s32.totalorder %s129, 1
      %p178 = por %p176, %p177
      %p180 = scmp.ne.s32.totalorder %s163, %s179
      %p181 = scmp.eq.s32.totalorder %s129, 0
      %p182 = por %p180, %p181
      %s184 = sadd.s32 %s183, 1
      %p187 = scmp.eq.s32.totalorder %s123, 1
      %p188 = scmp.ne.s32.totalorder %s183, %s185
      %p189 = scmp.eq.s32.totalorder %s123, 0
      %p190 = por %p188, %p189
      %p191 = scmp.ne.s32.totalorder %s183, %s185
      %p192 = scmp.eq.s32.totalorder %s128, 1
      %p193 = por %p191, %p192
      %p194 = scmp.ne.s32.totalorder %s185, %s186
      %p195 = scmp.eq.s32.totalorder %s128, 0
      %p196 = por %p194, %p195
      %p197 = scmp.ne.s32.totalorder %s185, %s186
      %p198 = scmp.eq.s32.totalorder %s129, 1
      %p199 = por %p197, %p198
      %p201 = scmp.ne.s32.totalorder %s186, %s200
      %p202 = scmp.eq.s32.totalorder %s129, 0
      %p203 = por %p201, %p202
      %s205 = sadd.s32 %s204, 1
      %p208 = scmp.eq.s32.totalorder %s123, 1
      %p209 = scmp.ne.s32.totalorder %s204, %s206
      %p210 = scmp.eq.s32.totalorder %s123, 0
      %p211 = por %p209, %p210
      %p212 = scmp.ne.s32.totalorder %s204, %s206
      %p213 = scmp.eq.s32.totalorder %s128, 1
      %p214 = por %p212, %p213
      %p215 = scmp.ne.s32.totalorder %s206, %s207
      %p216 = scmp.eq.s32.totalorder %s128, 0
      %p217 = por %p215, %p216
      %p218 = scmp.ne.s32.totalorder %s206, %s207
      %p219 = scmp.eq.s32.totalorder %s129, 1
      %p220 = por %p218, %p219
      %p222 = scmp.ne.s32.totalorder %s207, %s221
      %p223 = scmp.eq.s32.totalorder %s129, 0
      %p224 = por %p222, %p223
      %s225 = ssub.s32 %s123, %s130
      %p226 = scmp.eq.s32.totalorder %s225, 0
      %s228 = sadd.s32 %s227, 1
      %s229 = scalar_select %p226, %s227, %s228
      %p232 = pneg %p226
      %p233 = scmp.eq.s32.totalorder %s123, 1
      %p234 = por %p232, %p233
      %p235 = scmp.ne.s32.totalorder %s227, %s230
      %p236 = scmp.eq.s32.totalorder %s123, 0
      %p237 = por %p235, %p236
      %p238 = scmp.ne.s32.totalorder %s227, %s230
      %p239 = scmp.eq.s32.totalorder %s128, 1
      %p240 = por %p238, %p239
      %p241 = scmp.ne.s32.totalorder %s230, %s231
      %p242 = scmp.eq.s32.totalorder %s128, 0
      %p243 = por %p241, %p242
      %p244 = scmp.ne.s32.totalorder %s230, %s231
      %p245 = scmp.eq.s32.totalorder %s129, 1
      %p246 = por %p244, %p245
      %p248 = scmp.ne.s32.totalorder %s231, %s247
      %p249 = scmp.eq.s32.totalorder %s129, 0
      %p250 = por %p248, %p249
      %s251 = ssub.s32 %s123, %s130
      %p252 = scmp.eq.s32.totalorder %s251, 0
      %s254 = sadd.s32 %s253, 1
      %s255 = scalar_select %p252, %s253, %s254
      %p258 = pneg %p252
      %p259 = scmp.eq.s32.totalorder %s123, 1
      %p260 = por %p258, %p259
      %p261 = scmp.ne.s32.totalorder %s253, %s256
      %p262 = scmp.eq.s32.totalorder %s123, 0
      %p263 = por %p261, %p262
      %p264 = scmp.ne.s32.totalorder %s253, %s256
      %p265 = scmp.eq.s32.totalorder %s128, 1
      %p266 = por %p264, %p265
      %p267 = scmp.ne.s32.totalorder %s256, %s257
      %p268 = scmp.eq.s32.totalorder %s128, 0
      %p269 = por %p267, %p268
      %p270 = scmp.ne.s32.totalorder %s256, %s257
      %p271 = scmp.eq.s32.totalorder %s129, 1
      %p272 = por %p270, %p271
      %p274 = scmp.ne.s32.totalorder %s257, %s273
      %p275 = scmp.eq.s32.totalorder %s129, 0
      %p276 = por %p274, %p275
      %s277 = ssub.s32 %s123, %s130
      %p278 = scmp.eq.s32.totalorder %s277, 0
      %s280 = sadd.s32 %s279, 1
      %s281 = scalar_select %p278, %s279, %s280
      %p284 = pneg %p278
      %p285 = scmp.eq.s32.totalorder %s123, 1
      %p286 = por %p284, %p285
      %p287 = scmp.ne.s32.totalorder %s279, %s282
      %p288 = scmp.eq.s32.totalorder %s123, 0
      %p289 = por %p287, %p288
      %p290 = scmp.ne.s32.totalorder %s279, %s282
      %p291 = scmp.eq.s32.totalorder %s128, 1
      %p292 = por %p290, %p291
      %p293 = scmp.ne.s32.totalorder %s282, %s283
      %p294 = scmp.eq.s32.totalorder %s128, 0
      %p295 = por %p293, %p294
      %p296 = scmp.ne.s32.totalorder %s282, %s283
      %p297 = scmp.eq.s32.totalorder %s129, 1
      %p298 = por %p296, %p297
      %p300 = scmp.ne.s32.totalorder %s283, %s299
      %p301 = scmp.eq.s32.totalorder %s129, 0
      %p302 = por %p300, %p301
      %s304 = sadd.s32 %s303, 1
      %p307 = scmp.eq.s32.totalorder %s123, 1
      %p308 = scmp.ne.s32.totalorder %s303, %s305
      %p309 = scmp.eq.s32.totalorder %s123, 0
      %p310 = por %p308, %p309
      %p311 = scmp.ne.s32.totalorder %s303, %s305
      %p312 = scmp.eq.s32.totalorder %s128, 1
      %p313 = por %p311, %p312
      %p314 = scmp.ne.s32.totalorder %s305, %s306
      %p315 = scmp.eq.s32.totalorder %s128, 0
      %p316 = por %p314, %p315
      %p317 = scmp.ne.s32.totalorder %s305, %s306
      %p318 = scmp.eq.s32.totalorder %s129, 1
      %p319 = por %p317, %p318
      %p321 = scmp.ne.s32.totalorder %s306, %s320
      %p322 = scmp.eq.s32.totalorder %s129, 0
      %p323 = por %p321, %p322
      %s325 = sadd.s32 %s324, 1
      %p328 = scmp.eq.s32.totalorder %s123, 1
      %p329 = scmp.ne.s32.totalorder %s324, %s326
      %p330 = scmp.eq.s32.totalorder %s123, 0
      %p331 = por %p329, %p330
      %p332 = scmp.ne.s32.totalorder %s324, %s326
      %p333 = scmp.eq.s32.totalorder %s128, 1
      %p334 = por %p332, %p333
      %p335 = scmp.ne.s32.totalorder %s326, %s327
      %p336 = scmp.eq.s32.totalorder %s128, 0
      %p337 = por %p335, %p336
      %p338 = scmp.ne.s32.totalorder %s326, %s327
      %p339 = scmp.eq.s32.totalorder %s129, 1
      %p340 = por %p338, %p339
      %p342 = scmp.ne.s32.totalorder %s327, %s341
      %p343 = scmp.eq.s32.totalorder %s129, 0
      %p344 = por %p342, %p343
      %s346 = sadd.s32 %s345, 1
      %p349 = scmp.eq.s32.totalorder %s123, 1
      %p350 = scmp.ne.s32.totalorder %s345, %s347
      %p351 = scmp.eq.s32.totalorder %s123, 0
      %p352 = por %p350, %p351
      %p353 = scmp.ne.s32.totalorder %s345, %s347
      %p354 = scmp.eq.s32.totalorder %s128, 1
      %p355 = por %p353, %p354
      %p356 = scmp.ne.s32.totalorder %s347, %s348
      %p357 = scmp.eq.s32.totalorder %s128, 0
      %p358 = por %p356, %p357
      %p359 = scmp.ne.s32.totalorder %s347, %s348
      %p360 = scmp.eq.s32.totalorder %s129, 1
      %p361 = por %p359, %p360
      %p363 = scmp.ne.s32.totalorder %s348, %s362
      %p364 = scmp.eq.s32.totalorder %s129, 0
      %p365 = por %p363, %p364
      %s367 = sadd.s32 %s366, 1
      %p370 = scmp.eq.s32.totalorder %s123, 1
      %p371 = scmp.ne.s32.totalorder %s366, %s368
      %p372 = scmp.eq.s32.totalorder %s123, 0
      %p373 = por %p371, %p372
      %p374 = scmp.ne.s32.totalorder %s366, %s368
      %p375 = scmp.eq.s32.totalorder %s128, 1
      %p376 = por %p374, %p375
      %p377 = scmp.ne.s32.totalorder %s368, %s369
      %p378 = scmp.eq.s32.totalorder %s128, 0
      %p379 = por %p377, %p378
      %p380 = scmp.ne.s32.totalorder %s368, %s369
      %p381 = scmp.eq.s32.totalorder %s129, 1
      %p382 = por %p380, %p381
      %p384 = scmp.ne.s32.totalorder %s369, %s383
      %p385 = scmp.eq.s32.totalorder %s129, 0
      %p386 = por %p384, %p385
      %s388 = sadd.s32 %s387, 1
      %p391 = scmp.eq.s32.totalorder %s123, 1
      %p392 = scmp.ne.s32.totalorder %s387, %s389
      %p393 = scmp.eq.s32.totalorder %s123, 0
      %p394 = por %p392, %p393
      %p395 = scmp.ne.s32.totalorder %s387, %s389
      %p396 = scmp.eq.s32.totalorder %s128, 1
      %p397 = por %p395, %p396
      %p398 = scmp.ne.s32.totalorder %s389, %s390
      %p399 = scmp.eq.s32.totalorder %s128, 0
      %p400 = por %p398, %p399
      %p401 = scmp.ne.s32.totalorder %s389, %s390
      %p402 = scmp.eq.s32.totalorder %s129, 1
      %p403 = por %p401, %p402
      %p405 = scmp.ne.s32.totalorder %s390, %s404
      %p406 = scmp.eq.s32.totalorder %s129, 0
      %p407 = por %p405, %p406
      %s409 = sadd.s32 %s408, 1
      %p412 = scmp.eq.s32.totalorder %s123, 1
      %p413 = scmp.ne.s32.totalorder %s408, %s410
      %p414 = scmp.eq.s32.totalorder %s123, 0
      %p415 = por %p413, %p414
      %p416 = scmp.ne.s32.totalorder %s408, %s410
      %p417 = scmp.eq.s32.totalorder %s128, 1
      %p418 = por %p416, %p417
      %p419 = scmp.ne.s32.totalorder %s410, %s411
      %p420 = scmp.eq.s32.totalorder %s128, 0
      %p421 = por %p419, %p420
      %p422 = scmp.ne.s32.totalorder %s410, %s411
      %p423 = scmp.eq.s32.totalorder %s129, 1
      %p424 = por %p422, %p423
      %p426 = scmp.ne.s32.totalorder %s411, %s425
      %p427 = scmp.eq.s32.totalorder %s129, 0
      %p428 = por %p426, %p427
      %s430 = sadd.s32 %s429, 1
      %p433 = scmp.eq.s32.totalorder %s123, 1
      %p434 = scmp.ne.s32.totalorder %s429, %s431
      %p435 = scmp.eq.s32.totalorder %s123, 0
      %p436 = por %p434, %p435
      %p437 = scmp.ne.s32.totalorder %s429, %s431
      %p438 = scmp.eq.s32.totalorder %s128, 1
      %p439 = por %p437, %p438
      %p440 = scmp.ne.s32.totalorder %s431, %s432
      %p441 = scmp.eq.s32.totalorder %s128, 0
      %p442 = por %p440, %p441
      %p443 = scmp.ne.s32.totalorder %s431, %s432
      %p444 = scmp.eq.s32.totalorder %s129, 1
      %p445 = por %p443, %p444
      %p447 = scmp.ne.s32.totalorder %s432, %s446
      %p448 = scmp.eq.s32.totalorder %s129, 0
      %p449 = por %p447, %p448
      %s451 = sadd.s32 %s450, 1
      %p454 = scmp.eq.s32.totalorder %s123, 1
      %p455 = scmp.ne.s32.totalorder %s450, %s452
      %p456 = scmp.eq.s32.totalorder %s123, 0
      %p457 = por %p455, %p456
      %p458 = scmp.ne.s32.totalorder %s450, %s452
      %p459 = scmp.eq.s32.totalorder %s128, 1
      %p460 = por %p458, %p459
      %p461 = scmp.ne.s32.totalorder %s452, %s453
      %p462 = scmp.eq.s32.totalorder %s128, 0
      %p463 = por %p461, %p462
      %p464 = scmp.ne.s32.totalorder %s452, %s453
      %p465 = scmp.eq.s32.totalorder %s129, 1
      %p466 = por %p464, %p465
      %p468 = scmp.ne.s32.totalorder %s453, %s467
      %p469 = scmp.eq.s32.totalorder %s129, 0
      %p470 = por %p468, %p469
      %s472 = sadd.s32 %s471, 1
      %p475 = scmp.eq.s32.totalorder %s123, 1
      %p476 = scmp.ne.s32.totalorder %s471, %s473
      %p477 = scmp.eq.s32.totalorder %s123, 0
      %p478 = por %p476, %p477
      %p479 = scmp.ne.s32.totalorder %s471, %s473
      %p480 = scmp.eq.s32.totalorder %s128, 1
      %p481 = por %p479, %p480
      %p482 = scmp.ne.s32.totalorder %s473, %s474
      %p483 = scmp.eq.s32.totalorder %s128, 0
      %p484 = por %p482, %p483
      %p485 = scmp.ne.s32.totalorder %s473, %s474
      %p486 = scmp.eq.s32.totalorder %s129, 1
      %p487 = por %p485, %p486
      %p489 = scmp.ne.s32.totalorder %s474, %s488
      %p490 = scmp.eq.s32.totalorder %s129, 0
      %p491 = por %p489, %p490
      %s493 = sadd.s32 %s492, 1
      %p496 = scmp.eq.s32.totalorder %s123, 1
      %p497 = scmp.ne.s32.totalorder %s492, %s494
      %p498 = scmp.eq.s32.totalorder %s123, 0
      %p499 = por %p497, %p498
      %p500 = scmp.ne.s32.totalorder %s492, %s494
      %p501 = scmp.eq.s32.totalorder %s128, 1
      %p502 = por %p500, %p501
      %p503 = scmp.ne.s32.totalorder %s494, %s495
      %p504 = scmp.eq.s32.totalorder %s128, 0
      %p505 = por %p503, %p504
      %p506 = scmp.ne.s32.totalorder %s494, %s495
      %p507 = scmp.eq.s32.totalorder %s129, 1
      %p508 = por %p506, %p507
      %p510 = scmp.ne.s32.totalorder %s495, %s509
      %p511 = scmp.eq.s32.totalorder %s129, 0
      %p512 = por %p510, %p511
      %s514 = sadd.s32 %s513, 1
      %p517 = scmp.eq.s32.totalorder %s123, 1
      %p518 = scmp.ne.s32.totalorder %s513, %s515
      %p519 = scmp.eq.s32.totalorder %s123, 0
      %p520 = por %p518, %p519
      %p521 = scmp.ne.s32.totalorder %s513, %s515
      %p522 = scmp.eq.s32.totalorder %s128, 1
      %p523 = por %p521, %p522
      %p524 = scmp.ne.s32.totalorder %s515, %s516
      %p525 = scmp.eq.s32.totalorder %s128, 0
      %p526 = por %p524, %p525
      %p527 = scmp.ne.s32.totalorder %s515, %s516
      %p528 = scmp.eq.s32.totalorder %s129, 1
      %p529 = por %p527, %p528
      %p531 = scmp.ne.s32.totalorder %s516, %s530
      %p532 = scmp.eq.s32.totalorder %s129, 0
      %p533 = por %p531, %p532
      %s535 = sadd.s32 %s534, 1
      %p538 = scmp.eq.s32.totalorder %s123, 1
      %p539 = scmp.ne.s32.totalorder %s534, %s536
      %p540 = scmp.eq.s32.totalorder %s123, 0
      %p541 = por %p539, %p540
      %p542 = scmp.ne.s32.totalorder %s534, %s536
      %p543 = scmp.eq.s32.totalorder %s128, 1
      %p544 = por %p542, %p543
      %p545 = scmp.ne.s32.totalorder %s536, %s537
      %p546 = scmp.eq.s32.totalorder %s128, 0
      %p547 = por %p545, %p546
      %p548 = scmp.ne.s32.totalorder %s536, %s537
      %p549 = scmp.eq.s32.totalorder %s129, 1
      %p550 = por %p548, %p549
      %p552 = scmp.ne.s32.totalorder %s537, %s551
      %p553 = scmp.eq.s32.totalorder %s129, 0
      %p554 = por %p552, %p553
      %s556 = sadd.s32 %s555, 1
      %p559 = scmp.eq.s32.totalorder %s123, 1
      %p560 = scmp.ne.s32.totalorder %s555, %s557
      %p561 = scmp.eq.s32.totalorder %s123, 0
      %p562 = por %p560, %p561
      %p563 = scmp.ne.s32.totalorder %s555, %s557
      %p564 = scmp.eq.s32.totalorder %s128, 1
      %p565 = por %p563, %p564
      %p566 = scmp.ne.s32.totalorder %s557, %s558
      %p567 = scmp.eq.s32.totalorder %s128, 0
      %p568 = por %p566, %p567
      %p569 = scmp.ne.s32.totalorder %s557, %s558
      %p570 = scmp.eq.s32.totalorder %s129, 1
      %p571 = por %p569, %p570
      %p573 = scmp.ne.s32.totalorder %s558, %s572
      %p574 = scmp.eq.s32.totalorder %s129, 0
      %p575 = por %p573, %p574
      %s577 = sadd.s32 %s576, 1
      %p580 = scmp.eq.s32.totalorder %s123, 1
      %p581 = scmp.ne.s32.totalorder %s576, %s578
      %p582 = scmp.eq.s32.totalorder %s123, 0
      %p583 = por %p581, %p582
      %p584 = scmp.ne.s32.totalorder %s576, %s578
      %p585 = scmp.eq.s32.totalorder %s128, 1
      %p586 = por %p584, %p585
      %p587 = scmp.ne.s32.totalorder %s578, %s579
      %p588 = scmp.eq.s32.totalorder %s128, 0
      %p589 = por %p587, %p588
      %p590 = scmp.ne.s32.totalorder %s578, %s579
      %p591 = scmp.eq.s32.totalorder %s129, 1
      %p592 = por %p590, %p591
      %p594 = scmp.ne.s32.totalorder %s579, %s593
      %p595 = scmp.eq.s32.totalorder %s129, 0
      %p596 = por %p594, %p595
      %s598 = sadd.s32 %s597, 1
      %p601 = scmp.eq.s32.totalorder %s123, 1
      %p602 = scmp.ne.s32.totalorder %s597, %s599
      %p603 = scmp.eq.s32.totalorder %s123, 0
      %p604 = por %p602, %p603
      %p605 = scmp.ne.s32.totalorder %s597, %s599
      %p606 = scmp.eq.s32.totalorder %s128, 1
      %p607 = por %p605, %p606
      %p608 = scmp.ne.s32.totalorder %s599, %s600
      %p609 = scmp.eq.s32.totalorder %s128, 0
      %p610 = por %p608, %p609
      %p611 = scmp.ne.s32.totalorder %s599, %s600
      %p612 = scmp.eq.s32.totalorder %s129, 1
      %p613 = por %p611, %p612
      %p615 = scmp.ne.s32.totalorder %s600, %s614
      %p616 = scmp.eq.s32.totalorder %s129, 0
      %p617 = por %p615, %p616
      %s619 = sadd.s32 %s618, 1
      %p622 = scmp.eq.s32.totalorder %s123, 1
      %p623 = scmp.ne.s32.totalorder %s618, %s620
      %p624 = scmp.eq.s32.totalorder %s123, 0
      %p625 = por %p623, %p624
      %p626 = scmp.ne.s32.totalorder %s618, %s620
      %p627 = scmp.eq.s32.totalorder %s128, 1
      %p628 = por %p626, %p627
      %p629 = scmp.ne.s32.totalorder %s620, %s621
      %p630 = scmp.eq.s32.totalorder %s128, 0
      %p631 = por %p629, %p630
      %p632 = scmp.ne.s32.totalorder %s620, %s621
      %p633 = scmp.eq.s32.totalorder %s129, 1
      %p634 = por %p632, %p633
      %p636 = scmp.ne.s32.totalorder %s621, %s635
      %p637 = scmp.eq.s32.totalorder %s129, 0
      %p638 = por %p636, %p637
      %s640 = sadd.s32 %s639, 1
      %p643 = scmp.eq.s32.totalorder %s123, 1
      %p644 = scmp.ne.s32.totalorder %s639, %s641
      %p645 = scmp.eq.s32.totalorder %s123, 0
      %p646 = por %p644, %p645
      %p647 = scmp.ne.s32.totalorder %s639, %s641
      %p648 = scmp.eq.s32.totalorder %s128, 1
      %p649 = por %p647, %p648
      %p650 = scmp.ne.s32.totalorder %s641, %s642
      %p651 = scmp.eq.s32.totalorder %s128, 0
      %p652 = por %p650, %p651
      %p653 = scmp.ne.s32.totalorder %s641, %s642
      %p654 = scmp.eq.s32.totalorder %s129, 1
      %p655 = por %p653, %p654
      %p657 = scmp.ne.s32.totalorder %s642, %s656
      %p658 = scmp.eq.s32.totalorder %s129, 0
      %p659 = por %p657, %p658
      %s661 = sadd.s32 %s660, 1
      %p664 = scmp.eq.s32.totalorder %s123, 1
      %p665 = scmp.ne.s32.totalorder %s660, %s662
      %p666 = scmp.eq.s32.totalorder %s123, 0
      %p667 = por %p665, %p666
      %p668 = scmp.ne.s32.totalorder %s660, %s662
      %p669 = scmp.eq.s32.totalorder %s128, 1
      %p670 = por %p668, %p669
      %p671 = scmp.ne.s32.totalorder %s662, %s663
      %p672 = scmp.eq.s32.totalorder %s128, 0
      %p673 = por %p671, %p672
      %p674 = scmp.ne.s32.totalorder %s662, %s663
      %p675 = scmp.eq.s32.totalorder %s129, 1
      %p676 = por %p674, %p675
      %p678 = scmp.ne.s32.totalorder %s663, %s677
      %p679 = scmp.eq.s32.totalorder %s129, 0
      %p680 = por %p678, %p679
      %s682 = sadd.s32 %s681, 1
      %p685 = scmp.eq.s32.totalorder %s123, 1
      %p686 = scmp.ne.s32.totalorder %s681, %s683
      %p687 = scmp.eq.s32.totalorder %s123, 0
      %p688 = por %p686, %p687
      %p689 = scmp.ne.s32.totalorder %s681, %s683
      %p690 = scmp.eq.s32.totalorder %s128, 1
      %p691 = por %p689, %p690
      %p692 = scmp.ne.s32.totalorder %s683, %s684
      %p693 = scmp.eq.s32.totalorder %s128, 0
      %p694 = por %p692, %p693
      %p695 = scmp.ne.s32.totalorder %s683, %s684
      %p696 = scmp.eq.s32.totalorder %s129, 1
      %p697 = por %p695, %p696
      %p699 = scmp.ne.s32.totalorder %s684, %s698
      %p700 = scmp.eq.s32.totalorder %s129, 0
      %p701 = por %p699, %p700
      %s703 = sadd.s32 %s702, 1
      %p706 = scmp.eq.s32.totalorder %s123, 1
      %p707 = scmp.ne.s32.totalorder %s702, %s704
      %p708 = scmp.eq.s32.totalorder %s123, 0
      %p709 = por %p707, %p708
      %p710 = scmp.ne.s32.totalorder %s702, %s704
      %p711 = scmp.eq.s32.totalorder %s128, 1
      %p712 = por %p710, %p711
      %p713 = scmp.ne.s32.totalorder %s704, %s705
      %p714 = scmp.eq.s32.totalorder %s128, 0
      %p715 = por %p713, %p714
      %p716 = scmp.ne.s32.totalorder %s704, %s705
      %p717 = scmp.eq.s32.totalorder %s129, 1
      %p718 = por %p716, %p717
      %p720 = scmp.ne.s32.totalorder %s705, %s719
      %p721 = scmp.eq.s32.totalorder %s129, 0
      %p722 = por %p720, %p721
      %s724 = sadd.s32 %s723, 1
      %p727 = scmp.eq.s32.totalorder %s123, 1
      %p728 = scmp.ne.s32.totalorder %s723, %s725
      %p729 = scmp.eq.s32.totalorder %s123, 0
      %p730 = por %p728, %p729
      %p731 = scmp.ne.s32.totalorder %s723, %s725
      %p732 = scmp.eq.s32.totalorder %s128, 1
      %p733 = por %p731, %p732
      %p734 = scmp.ne.s32.totalorder %s725, %s726
      %p735 = scmp.eq.s32.totalorder %s128, 0
      %p736 = por %p734, %p735
      %p737 = scmp.ne.s32.totalorder %s725, %s726
      %p738 = scmp.eq.s32.totalorder %s129, 1
      %p739 = por %p737, %p738
      %p741 = scmp.ne.s32.totalorder %s726, %s740
      %p742 = scmp.eq.s32.totalorder %s129, 0
      %p743 = por %p741, %p742
      %s745 = sadd.s32 %s744, 1
      %p748 = scmp.eq.s32.totalorder %s123, 1
      %p749 = scmp.ne.s32.totalorder %s744, %s746
      %p750 = scmp.eq.s32.totalorder %s123, 0
      %p751 = por %p749, %p750
      %p752 = scmp.ne.s32.totalorder %s744, %s746
      %p753 = scmp.eq.s32.totalorder %s128, 1
      %p754 = por %p752, %p753
      %p755 = scmp.ne.s32.totalorder %s746, %s747
      %p756 = scmp.eq.s32.totalorder %s128, 0
      %p757 = por %p755, %p756
      %p758 = scmp.ne.s32.totalorder %s746, %s747
      %p759 = scmp.eq.s32.totalorder %s129, 1
      %p760 = por %p758, %p759
      %p762 = scmp.ne.s32.totalorder %s747, %s761
      %p763 = scmp.eq.s32.totalorder %s129, 0
      %p764 = por %p762, %p763
      %s766 = sadd.s32 %s765, 1
      %p769 = scmp.eq.s32.totalorder %s123, 1
      %p770 = scmp.ne.s32.totalorder %s765, %s767
      %p771 = scmp.eq.s32.totalorder %s123, 0
      %p772 = por %p770, %p771
      %p773 = scmp.ne.s32.totalorder %s765, %s767
      %p774 = scmp.eq.s32.totalorder %s128, 1
      %p775 = por %p773, %p774
      %p776 = scmp.ne.s32.totalorder %s767, %s768
      %p777 = scmp.eq.s32.totalorder %s128, 0
      %p778 = por %p776, %p777
      %p779 = scmp.ne.s32.totalorder %s767, %s768
      %p780 = scmp.eq.s32.totalorder %s129, 1
      %p781 = por %p779, %p780
      %p783 = scmp.ne.s32.totalorder %s768, %s782
      %p784 = scmp.eq.s32.totalorder %s129, 0
      %p785 = por %p783, %p784
      %s787 = sadd.s32 %s786, 1
      %p790 = scmp.eq.s32.totalorder %s123, 1
      %p791 = scmp.ne.s32.totalorder %s786, %s788
      %p792 = scmp.eq.s32.totalorder %s123, 0
      %p793 = por %p791, %p792
      %p794 = scmp.ne.s32.totalorder %s786, %s788
      %p795 = scmp.eq.s32.totalorder %s128, 1
      %p796 = por %p794, %p795
      %p797 = scmp.ne.s32.totalorder %s788, %s789
      %p798 = scmp.eq.s32.totalorder %s128, 0
      %p799 = por %p797, %p798
      %p800 = scmp.ne.s32.totalorder %s788, %s789
      %p801 = scmp.eq.s32.totalorder %s129, 1
      %p802 = por %p800, %p801
      %p804 = scmp.ne.s32.totalorder %s789, %s803
      %p805 = scmp.eq.s32.totalorder %s129, 0
      %p806 = por %p804, %p805
      %s808 = sadd.s32 %s807, 1
      %p811 = scmp.eq.s32.totalorder %s123, 1
      %p812 = scmp.ne.s32.totalorder %s807, %s809
      %p813 = scmp.eq.s32.totalorder %s123, 0
      %p814 = por %p812, %p813
      %p815 = scmp.ne.s32.totalorder %s807, %s809
      %p816 = scmp.eq.s32.totalorder %s128, 1
      %p817 = por %p815, %p816
      %p818 = scmp.ne.s32.totalorder %s809, %s810
      %p819 = scmp.eq.s32.totalorder %s128, 0
      %p820 = por %p818, %p819
      %p821 = scmp.ne.s32.totalorder %s809, %s810
      %p822 = scmp.eq.s32.totalorder %s129, 1
      %p823 = por %p821, %p822
      %p825 = scmp.ne.s32.totalorder %s810, %s824
      %p826 = scmp.eq.s32.totalorder %s129, 0
      %p827 = por %p825, %p826
      %s829 = sadd.s32 %s828, 1
      %p832 = scmp.eq.s32.totalorder %s123, 1
      %p833 = scmp.ne.s32.totalorder %s828, %s830
      %p834 = scmp.eq.s32.totalorder %s123, 0
      %p835 = por %p833, %p834
      %p836 = scmp.ne.s32.totalorder %s828, %s830
      %p837 = scmp.eq.s32.totalorder %s128, 1
      %p838 = por %p836, %p837
      %p839 = scmp.ne.s32.totalorder %s830, %s831
      %p840 = scmp.eq.s32.totalorder %s128, 0
      %p841 = por %p839, %p840
      %p842 = scmp.ne.s32.totalorder %s830, %s831
      %p843 = scmp.eq.s32.totalorder %s129, 1
      %p844 = por %p842, %p843
      %p846 = scmp.ne.s32.totalorder %s831, %s845
      %p847 = scmp.eq.s32.totalorder %s129, 0
      %p848 = por %p846, %p847
      %s850 = sadd.s32 %s849, 1
      %p853 = scmp.eq.s32.totalorder %s123, 1
      %p854 = scmp.ne.s32.totalorder %s849, %s851
      %p855 = scmp.eq.s32.totalorder %s123, 0
      %p856 = por %p854, %p855
      %p857 = scmp.ne.s32.totalorder %s849, %s851
      %p858 = scmp.eq.s32.totalorder %s128, 1
      %p859 = por %p857, %p858
      %p860 = scmp.ne.s32.totalorder %s851, %s852
      %p861 = scmp.eq.s32.totalorder %s128, 0
      %p862 = por %p860, %p861
      %p863 = scmp.ne.s32.totalorder %s851, %s852
      %p864 = scmp.eq.s32.totalorder %s129, 1
      %p865 = por %p863, %p864
      %p867 = scmp.ne.s32.totalorder %s852, %s866
      %p868 = scmp.eq.s32.totalorder %s129, 0
      %p869 = por %p867, %p868
      %s871 = sadd.s32 %s870, 1
      %p874 = scmp.eq.s32.totalorder %s123, 1
      %p875 = scmp.ne.s32.totalorder %s870, %s872
      %p876 = scmp.eq.s32.totalorder %s123, 0
      %p877 = por %p875, %p876
      %p878 = scmp.ne.s32.totalorder %s870, %s872
      %p879 = scmp.eq.s32.totalorder %s128, 1
      %p880 = por %p878, %p879
      %p881 = scmp.ne.s32.totalorder %s872, %s873
      %p882 = scmp.eq.s32.totalorder %s128, 0
      %p883 = por %p881, %p882
      %p884 = scmp.ne.s32.totalorder %s872, %s873
      %p885 = scmp.eq.s32.totalorder %s129, 1
      %p886 = por %p884, %p885
      %p888 = scmp.ne.s32.totalorder %s873, %s887
      %p889 = scmp.eq.s32.totalorder %s129, 0
      %p890 = por %p888, %p889
      %s892 = sadd.s32 %s891, 1
      %p895 = scmp.eq.s32.totalorder %s123, 1
      %p896 = scmp.ne.s32.totalorder %s891, %s893
      %p897 = scmp.eq.s32.totalorder %s123, 0
      %p898 = por %p896, %p897
      %p899 = scmp.ne.s32.totalorder %s891, %s893
      %p900 = scmp.eq.s32.totalorder %s128, 1
      %p901 = por %p899, %p900
      %p902 = scmp.ne.s32.totalorder %s893, %s894
      %p903 = scmp.eq.s32.totalorder %s128, 0
      %p904 = por %p902, %p903
      %p905 = scmp.ne.s32.totalorder %s893, %s894
      %p906 = scmp.eq.s32.totalorder %s129, 1
      %p907 = por %p905, %p906
      %p909 = scmp.ne.s32.totalorder %s894, %s908
      %p910 = scmp.eq.s32.totalorder %s129, 0
      %p911 = por %p909, %p910
      %s913 = sadd.s32 %s912, 1
      %p916 = scmp.eq.s32.totalorder %s123, 1
      %p917 = scmp.ne.s32.totalorder %s912, %s914
      %p918 = scmp.eq.s32.totalorder %s123, 0
      %p919 = por %p917, %p918
      %p920 = scmp.ne.s32.totalorder %s912, %s914
      %p921 = scmp.eq.s32.totalorder %s128, 1
      %p922 = por %p920, %p921
      %p923 = scmp.ne.s32.totalorder %s914, %s915
      %p924 = scmp.eq.s32.totalorder %s128, 0
      %p925 = por %p923, %p924
      %p926 = scmp.ne.s32.totalorder %s914, %s915
      %p927 = scmp.eq.s32.totalorder %s129, 1
      %p928 = por %p926, %p927
      %p930 = scmp.ne.s32.totalorder %s915, %s929
      %p931 = scmp.eq.s32.totalorder %s129, 0
      %p932 = por %p930, %p931
      %s934 = sadd.s32 %s933, 1
      %p937 = scmp.eq.s32.totalorder %s123, 1
      %p938 = scmp.ne.s32.totalorder %s933, %s935
      %p939 = scmp.eq.s32.totalorder %s123, 0
      %p940 = por %p938, %p939
      %p941 = scmp.ne.s32.totalorder %s933, %s935
      %p942 = scmp.eq.s32.totalorder %s128, 1
      %p943 = por %p941, %p942
      %p944 = scmp.ne.s32.totalorder %s935, %s936
      %p945 = scmp.eq.s32.totalorder %s128, 0
      %p946 = por %p944, %p945
      %p947 = scmp.ne.s32.totalorder %s935, %s936
      %p948 = scmp.eq.s32.totalorder %s129, 1
      %p949 = por %p947, %p948
      %p951 = scmp.ne.s32.totalorder %s936, %s950
      %p952 = scmp.eq.s32.totalorder %s129, 0
      %p953 = por %p951, %p952
      %s955 = sadd.s32 %s954, 1
      %p958 = scmp.eq.s32.totalorder %s123, 1
      %p959 = scmp.ne.s32.totalorder %s954, %s956
      %p960 = scmp.eq.s32.totalorder %s123, 0
      %p961 = por %p959, %p960
      %p962 = scmp.ne.s32.totalorder %s954, %s956
      %p963 = scmp.eq.s32.totalorder %s128, 1
      %p964 = por %p962, %p963
      %p965 = scmp.ne.s32.totalorder %s956, %s957
      %p966 = scmp.eq.s32.totalorder %s128, 0
      %p967 = por %p965, %p966
      %p968 = scmp.ne.s32.totalorder %s956, %s957
      %p969 = scmp.eq.s32.totalorder %s129, 1
      %p970 = por %p968, %p969
      %p972 = scmp.ne.s32.totalorder %s957, %s971
      %p973 = scmp.eq.s32.totalorder %s129, 0
      %p974 = por %p972, %p973
      %s976 = sadd.s32 %s975, 1
      %p979 = scmp.eq.s32.totalorder %s123, 1
      %p980 = scmp.ne.s32.totalorder %s975, %s977
      %p981 = scmp.eq.s32.totalorder %s123, 0
      %p982 = por %p980, %p981
      %p983 = scmp.ne.s32.totalorder %s975, %s977
      %p984 = scmp.eq.s32.totalorder %s128, 1
      %p985 = por %p983, %p984
      %p986 = scmp.ne.s32.totalorder %s977, %s978
      %p987 = scmp.eq.s32.totalorder %s128, 0
      %p988 = por %p986, %p987
      %p989 = scmp.ne.s32.totalorder %s977, %s978
      %p990 = scmp.eq.s32.totalorder %s129, 1
      %p991 = por %p989, %p990
      %p993 = scmp.ne.s32.totalorder %s978, %s992
      %p994 = scmp.eq.s32.totalorder %s129, 0
      %p995 = por %p993, %p994
      %s997 = sadd.s32 %s996, 1
      %p1000 = scmp.eq.s32.totalorder %s123, 1
      %p1001 = scmp.ne.s32.totalorder %s996, %s998
      %p1002 = scmp.eq.s32.totalorder %s123, 0
      %p1003 = por %p1001, %p1002
      %p1004 = scmp.ne.s32.totalorder %s996, %s998
      %p1005 = scmp.eq.s32.totalorder %s128, 1
      %p1006 = por %p1004, %p1005
      %p1007 = scmp.ne.s32.totalorder %s998, %s999
      %p1008 = scmp.eq.s32.totalorder %s128, 0
      %p1009 = por %p1007, %p1008
      %p1010 = scmp.ne.s32.totalorder %s998, %s999
      %p1011 = scmp.eq.s32.totalorder %s129, 1
      %p1012 = por %p1010, %p1011
      %p1014 = scmp.ne.s32.totalorder %s999, %s1013
      %p1015 = scmp.eq.s32.totalorder %s129, 0
      %p1016 = por %p1014, %p1015
      %s1018 = sadd.s32 %s1017, 1
      %p1021 = scmp.eq.s32.totalorder %s123, 1
      %p1022 = scmp.ne.s32.totalorder %s1017, %s1019
      %p1023 = scmp.eq.s32.totalorder %s123, 0
      %p1024 = por %p1022, %p1023
      %p1025 = scmp.ne.s32.totalorder %s1017, %s1019
      %p1026 = scmp.eq.s32.totalorder %s128, 1
      %p1027 = por %p1025, %p1026
      %p1028 = scmp.ne.s32.totalorder %s1019, %s1020
      %p1029 = scmp.eq.s32.totalorder %s128, 0
      %p1030 = por %p1028, %p1029
      %p1031 = scmp.ne.s32.totalorder %s1019, %s1020
      %p1032 = scmp.eq.s32.totalorder %s129, 1
      %p1033 = por %p1031, %p1032
      %p1035 = scmp.ne.s32.totalorder %s1020, %s1034
      %p1036 = scmp.eq.s32.totalorder %s129, 0
      %p1037 = por %p1035, %p1036
      %s1039 = sadd.s32 %s1038, 1
      %p1042 = scmp.eq.s32.totalorder %s123, 1
      %p1043 = scmp.ne.s32.totalorder %s1038, %s1040
      %p1044 = scmp.eq.s32.totalorder %s123, 0
      %p1045 = por %p1043, %p1044
      %p1046 = scmp.ne.s32.totalorder %s1038, %s1040
      %p1047 = scmp.eq.s32.totalorder %s128, 1
      %p1048 = por %p1046, %p1047
      %p1049 = scmp.ne.s32.totalorder %s1040, %s1041
      %p1050 = scmp.eq.s32.totalorder %s128, 0
      %p1051 = por %p1049, %p1050
      %p1052 = scmp.ne.s32.totalorder %s1040, %s1041
      %p1053 = scmp.eq.s32.totalorder %s129, 1
      %p1054 = por %p1052, %p1053
      %p1056 = scmp.ne.s32.totalorder %s1041, %s1055
      %p1057 = scmp.eq.s32.totalorder %s129, 0
      %p1058 = por %p1056, %p1057
      %s1060 = sadd.s32 %s1059, 1
      %p1063 = scmp.eq.s32.totalorder %s123, 1
      %p1064 = scmp.ne.s32.totalorder %s1059, %s1061
      %p1065 = scmp.eq.s32.totalorder %s123, 0
      %p1066 = por %p1064, %p1065
      %p1067 = scmp.ne.s32.totalorder %s1059, %s1061
      %p1068 = scmp.eq.s32.totalorder %s128, 1
      %p1069 = por %p1067, %p1068
      %p1070 = scmp.ne.s32.totalorder %s1061, %s1062
      %p1071 = scmp.eq.s32.totalorder %s128, 0
      %p1072 = por %p1070, %p1071
      %p1073 = scmp.ne.s32.totalorder %s1061, %s1062
      %p1074 = scmp.eq.s32.totalorder %s129, 1
      %p1075 = por %p1073, %p1074
      %p1077 = scmp.ne.s32.totalorder %s1062, %s1076
      %p1078 = scmp.eq.s32.totalorder %s129, 0
      %p1079 = por %p1077, %p1078
      %s1081 = sadd.s32 %s1080, 1
      %p1084 = scmp.eq.s32.totalorder %s123, 1
      %p1085 = scmp.ne.s32.totalorder %s1080, %s1082
      %p1086 = scmp.eq.s32.totalorder %s123, 0
      %p1087 = por %p1085, %p1086
      %p1088 = scmp.ne.s32.totalorder %s1080, %s1082
      %p1089 = scmp.eq.s32.totalorder %s128, 1
      %p1090 = por %p1088, %p1089
      %p1091 = scmp.ne.s32.totalorder %s1082, %s1083
      %p1092 = scmp.eq.s32.totalorder %s128, 0
      %p1093 = por %p1091, %p1092
      %p1094 = scmp.ne.s32.totalorder %s1082, %s1083
      %p1095 = scmp.eq.s32.totalorder %s129, 1
      %p1096 = por %p1094, %p1095
      %p1098 = scmp.ne.s32.totalorder %s1083, %s1097
      %p1099 = scmp.eq.s32.totalorder %s129, 0
      %p1100 = por %p1098, %p1099
      %s1102 = sadd.s32 %s1101, 1
      %p1105 = scmp.eq.s32.totalorder %s123, 1
      %p1106 = scmp.ne.s32.totalorder %s1101, %s1103
      %p1107 = scmp.eq.s32.totalorder %s123, 0
      %p1108 = por %p1106, %p1107
      %p1109 = scmp.ne.s32.totalorder %s1101, %s1103
      %p1110 = scmp.eq.s32.totalorder %s128, 1
      %p1111 = por %p1109, %p1110
      %p1112 = scmp.ne.s32.totalorder %s1103, %s1104
      %p1113 = scmp.eq.s32.totalorder %s128, 0
      %p1114 = por %p1112, %p1113
      %p1115 = scmp.ne.s32.totalorder %s1103, %s1104
      %p1116 = scmp.eq.s32.totalorder %s129, 1
      %p1117 = por %p1115, %p1116
      %p1119 = scmp.ne.s32.totalorder %s1104, %s1118
      %p1120 = scmp.eq.s32.totalorder %s129, 0
      %p1121 = por %p1119, %p1120
      %s1123 = sadd.s32 %s1122, 1
      %p1126 = scmp.eq.s32.totalorder %s123, 1
      %p1127 = scmp.ne.s32.totalorder %s1122, %s1124
      %p1128 = scmp.eq.s32.totalorder %s123, 0
      %p1129 = por %p1127, %p1128
      %p1130 = scmp.ne.s32.totalorder %s1122, %s1124
      %p1131 = scmp.eq.s32.totalorder %s128, 1
      %p1132 = por %p1130, %p1131
      %p1133 = scmp.ne.s32.totalorder %s1124, %s1125
      %p1134 = scmp.eq.s32.totalorder %s128, 0
      %p1135 = por %p1133, %p1134
      %p1136 = scmp.ne.s32.totalorder %s1124, %s1125
      %p1137 = scmp.eq.s32.totalorder %s129, 1
      %p1138 = por %p1136, %p1137
      %p1140 = scmp.ne.s32.totalorder %s1125, %s1139
      %p1141 = scmp.eq.s32.totalorder %s129, 0
      %p1142 = por %p1140, %p1141
      %s1144 = sadd.s32 %s1143, 1
      %p1147 = scmp.eq.s32.totalorder %s123, 1
      %p1148 = scmp.ne.s32.totalorder %s1143, %s1145
      %p1149 = scmp.eq.s32.totalorder %s123, 0
      %p1150 = por %p1148, %p1149
      %p1151 = scmp.ne.s32.totalorder %s1143, %s1145
      %p1152 = scmp.eq.s32.totalorder %s128, 1
      %p1153 = por %p1151, %p1152
      %p1154 = scmp.ne.s32.totalorder %s1145, %s1146
      %p1155 = scmp.eq.s32.totalorder %s128, 0
      %p1156 = por %p1154, %p1155
      %p1157 = scmp.ne.s32.totalorder %s1145, %s1146
      %p1158 = scmp.eq.s32.totalorder %s129, 1
      %p1159 = por %p1157, %p1158
      %p1161 = scmp.ne.s32.totalorder %s1146, %s1160
      %p1162 = scmp.eq.s32.totalorder %s129, 0
      %p1163 = por %p1161, %p1162
      %s1165 = sadd.s32 %s1164, 1
      %p1168 = scmp.eq.s32.totalorder %s123, 1
      %p1169 = scmp.ne.s32.totalorder %s1164, %s1166
      %p1170 = scmp.eq.s32.totalorder %s123, 0
      %p1171 = por %p1169, %p1170
      %p1172 = scmp.ne.s32.totalorder %s1164, %s1166
      %p1173 = scmp.eq.s32.totalorder %s128, 1
      %p1174 = por %p1172, %p1173
      %p1175 = scmp.ne.s32.totalorder %s1166, %s1167
      %p1176 = scmp.eq.s32.totalorder %s128, 0
      %p1177 = por %p1175, %p1176
      %p1178 = scmp.ne.s32.totalorder %s1166, %s1167
      %p1179 = scmp.eq.s32.totalorder %s129, 1
      %p1180 = por %p1178, %p1179
      %p1182 = scmp.ne.s32.totalorder %s1167, %s1181
      %p1183 = scmp.eq.s32.totalorder %s129, 0
      %p1184 = por %p1182, %p1183
      %s1186 = sadd.s32 %s1185, 1
      %p1189 = scmp.eq.s32.totalorder %s123, 1
      %p1190 = scmp.ne.s32.totalorder %s1185, %s1187
      %p1191 = scmp.eq.s32.totalorder %s123, 0
      %p1192 = por %p1190, %p1191
      %p1193 = scmp.ne.s32.totalorder %s1185, %s1187
      %p1194 = scmp.eq.s32.totalorder %s128, 1
      %p1195 = por %p1193, %p1194
      %p1196 = scmp.ne.s32.totalorder %s1187, %s1188
      %p1197 = scmp.eq.s32.totalorder %s128, 0
      %p1198 = por %p1196, %p1197
      %p1199 = scmp.ne.s32.totalorder %s1187, %s1188
      %p1200 = scmp.eq.s32.totalorder %s129, 1
      %p1201 = por %p1199, %p1200
      %p1203 = scmp.ne.s32.totalorder %s1188, %s1202
      %p1204 = scmp.eq.s32.totalorder %s129, 0
      %p1205 = por %p1203, %p1204
      %s1207 = sadd.s32 %s1206, 1
      %p1210 = scmp.eq.s32.totalorder %s123, 1
      %p1211 = scmp.ne.s32.totalorder %s1206, %s1208
      %p1212 = scmp.eq.s32.totalorder %s123, 0
      %p1213 = por %p1211, %p1212
      %p1214 = scmp.ne.s32.totalorder %s1206, %s1208
      %p1215 = scmp.eq.s32.totalorder %s128, 1
      %p1216 = por %p1214, %p1215
      %p1217 = scmp.ne.s32.totalorder %s1208, %s1209
      %p1218 = scmp.eq.s32.totalorder %s128, 0
      %p1219 = por %p1217, %p1218
      %p1220 = scmp.ne.s32.totalorder %s1208, %s1209
      %p1221 = scmp.eq.s32.totalorder %s129, 1
      %p1222 = por %p1220, %p1221
      %p1224 = scmp.ne.s32.totalorder %s1209, %s1223
      %p1225 = scmp.eq.s32.totalorder %s129, 0
      %p1226 = por %p1224, %p1225
      %s1228 = sadd.s32 %s1227, 1
      %p1231 = scmp.eq.s32.totalorder %s123, 1
      %p1232 = scmp.ne.s32.totalorder %s1227, %s1229
      %p1233 = scmp.eq.s32.totalorder %s123, 0
      %p1234 = por %p1232, %p1233
      %p1235 = scmp.ne.s32.totalorder %s1227, %s1229
      %p1236 = scmp.eq.s32.totalorder %s128, 1
      %p1237 = por %p1235, %p1236
      %p1238 = scmp.ne.s32.totalorder %s1229, %s1230
      %p1239 = scmp.eq.s32.totalorder %s128, 0
      %p1240 = por %p1238, %p1239
      %p1241 = scmp.ne.s32.totalorder %s1229, %s1230
      %p1242 = scmp.eq.s32.totalorder %s129, 1
      %p1243 = por %p1241, %p1242
      %p1245 = scmp.ne.s32.totalorder %s1230, %s1244
      %p1246 = scmp.eq.s32.totalorder %s129, 0
      %p1247 = por %p1245, %p1246
      %s1249 = sadd.s32 %s1248, 1
      %p1252 = scmp.eq.s32.totalorder %s123, 1
      %p1253 = scmp.ne.s32.totalorder %s1248, %s1250
      %p1254 = scmp.eq.s32.totalorder %s123, 0
      %p1255 = por %p1253, %p1254
      %p1256 = scmp.ne.s32.totalorder %s1248, %s1250
      %p1257 = scmp.eq.s32.totalorder %s128, 1
      %p1258 = por %p1256, %p1257
      %p1259 = scmp.ne.s32.totalorder %s1250, %s1251
      %p1260 = scmp.eq.s32.totalorder %s128, 0
      %p1261 = por %p1259, %p1260
      %p1262 = scmp.ne.s32.totalorder %s1250, %s1251
      %p1263 = scmp.eq.s32.totalorder %s129, 1
      %p1264 = por %p1262, %p1263
      %p1266 = scmp.ne.s32.totalorder %s1251, %s1265
      %p1267 = scmp.eq.s32.totalorder %s129, 0
      %p1268 = por %p1266, %p1267
      %s1270 = sadd.s32 %s1269, 1
      %p1273 = scmp.eq.s32.totalorder %s123, 1
      %p1274 = scmp.ne.s32.totalorder %s1269, %s1271
      %p1275 = scmp.eq.s32.totalorder %s123, 0
      %p1276 = por %p1274, %p1275
      %p1277 = scmp.ne.s32.totalorder %s1269, %s1271
      %p1278 = scmp.eq.s32.totalorder %s128, 1
      %p1279 = por %p1277, %p1278
      %p1280 = scmp.ne.s32.totalorder %s1271, %s1272
      %p1281 = scmp.eq.s32.totalorder %s128, 0
      %p1282 = por %p1280, %p1281
      %p1283 = scmp.ne.s32.totalorder %s1271, %s1272
      %p1284 = scmp.eq.s32.totalorder %s129, 1
      %p1285 = por %p1283, %p1284
      %p1287 = scmp.ne.s32.totalorder %s1272, %s1286
      %p1288 = scmp.eq.s32.totalorder %s129, 0
      %p1289 = por %p1287, %p1288
      %s1291 = sadd.s32 %s1290, 1
      %p1294 = scmp.eq.s32.totalorder %s123, 1
      %p1295 = scmp.ne.s32.totalorder %s1290, %s1292
      %p1296 = scmp.eq.s32.totalorder %s123, 0
      %p1297 = por %p1295, %p1296
      %p1298 = scmp.ne.s32.totalorder %s1290, %s1292
      %p1299 = scmp.eq.s32.totalorder %s128, 1
      %p1300 = por %p1298, %p1299
      %p1301 = scmp.ne.s32.totalorder %s1292, %s1293
      %p1302 = scmp.eq.s32.totalorder %s128, 0
      %p1303 = por %p1301, %p1302
      %p1304 = scmp.ne.s32.totalorder %s1292, %s1293
      %p1305 = scmp.eq.s32.totalorder %s129, 1
      %p1306 = por %p1304, %p1305
      %p1308 = scmp.ne.s32.totalorder %s1293, %s1307
      %p1309 = scmp.eq.s32.totalorder %s129, 0
      %p1310 = por %p1308, %p1309
      %s1311 = ssub.s32 %s123, %s130
      %p1312 = scmp.eq.s32.totalorder %s1311, 0
      %s1314 = sadd.s32 %s1313, 1
      %s1315 = scalar_select %p1312, %s1313, %s1314
      %p1318 = pneg %p1312
      %p1319 = scmp.eq.s32.totalorder %s123, 1
      %p1320 = por %p1318, %p1319
      %p1321 = scmp.ne.s32.totalorder %s1313, %s1316
      %p1322 = scmp.eq.s32.totalorder %s123, 0
      %p1323 = por %p1321, %p1322
      %p1324 = scmp.ne.s32.totalorder %s1313, %s1316
      %p1325 = scmp.eq.s32.totalorder %s128, 1
      %p1326 = por %p1324, %p1325
      %p1327 = scmp.ne.s32.totalorder %s1316, %s1317
      %p1328 = scmp.eq.s32.totalorder %s128, 0
      %p1329 = por %p1327, %p1328
      %p1330 = scmp.ne.s32.totalorder %s1316, %s1317
      %p1331 = scmp.eq.s32.totalorder %s129, 1
      %p1332 = por %p1330, %p1331
      %p1334 = scmp.ne.s32.totalorder %s1317, %s1333
      %p1335 = scmp.eq.s32.totalorder %s129, 0
      %p1336 = por %p1334, %p1335
      %p1337 = scmp.le.s32.totalorder 1, %s123
      %p1338 = scmp.lt.s32.totalorder %s123, 3
      %p1339 = pnand %p1337, %p1338
      %p1340 = pneg %p1339
      // Predicated region
      $region9: #{forward.1} parent=5 // pred_check
        _
      $region10: #{forward.1} parent=5 // pred_check_branch
        %1342 = sbr.rel (%p1339) target = $region12
      $region11: #{forward.1} parent=5 // pred_region
        %s1343 = ssub.s32 %s123, 1
        // Predicated region
        $region13: #{forward.1} parent=11 // pred_check
          %p1344 = pneg %p196
        $region14: #{forward.1} parent=11 // pred_check_branch
          %1346 = sbr.rel (%p1344) target = $region16
        $region15: #{forward.1} parent=11 // pred_region
          _
        $region16: #{forward.1} parent=11 // pred_fallthru
          _
        // Predicated region
        $region17: #{forward.1} parent=11 // pred_check
          %p1347 = pneg %p217
        $region18: #{forward.1} parent=11 // pred_check_branch
          %1349 = sbr.rel (%p1347) target = $region20
        $region19: #{forward.1} parent=11 // pred_region
          _
        $region20: #{forward.1} parent=11 // pred_fallthru
          _
        // Predicated region
        $region21: #{forward.1} parent=11 // pred_check
          %p1350 = pneg %p316
        $region22: #{forward.1} parent=11 // pred_check_branch
          %1352 = sbr.rel (%p1350) target = $region24
        $region23: #{forward.1} parent=11 // pred_region
          _
        $region24: #{forward.1} parent=11 // pred_fallthru
          _
        // Predicated region
        $region25: #{forward.1} parent=11 // pred_check
          %p1353 = pneg %p337
        $region26: #{forward.1} parent=11 // pred_check_branch
          %1355 = sbr.rel (%p1353) target = $region28
        $region27: #{forward.1} parent=11 // pred_region
          _
        $region28: #{forward.1} parent=11 // pred_fallthru
          _
        // Predicated region
        $region29: #{forward.1} parent=11 // pred_check
          %p1356 = pneg %p358
        $region30: #{forward.1} parent=11 // pred_check_branch
          %1358 = sbr.rel (%p1356) target = $region32
        $region31: #{forward.1} parent=11 // pred_region
          _
        $region32: #{forward.1} parent=11 // pred_fallthru
          _
        // Predicated region
        $region33: #{forward.1} parent=11 // pred_check
          %p1359 = pneg %p379
        $region34: #{forward.1} parent=11 // pred_check_branch
          %1361 = sbr.rel (%p1359) target = $region36
        $region35: #{forward.1} parent=11 // pred_region
          _
        $region36: #{forward.1} parent=11 // pred_fallthru
          _
        // Predicated region
        $region37: #{forward.1} parent=11 // pred_check
          %p1362 = pneg %p400
        $region38: #{forward.1} parent=11 // pred_check_branch
          %1364 = sbr.rel (%p1362) target = $region40
        $region39: #{forward.1} parent=11 // pred_region
          _
        $region40: #{forward.1} parent=11 // pred_fallthru
          _
        // Predicated region
        $region41: #{forward.1} parent=11 // pred_check
          %p1365 = pneg %p421
        $region42: #{forward.1} parent=11 // pred_check_branch
          %1367 = sbr.rel (%p1365) target = $region44
        $region43: #{forward.1} parent=11 // pred_region
          _
        $region44: #{forward.1} parent=11 // pred_fallthru
          _
        // Predicated region
        $region45: #{forward.1} parent=11 // pred_check
          %p1368 = pneg %p442
        $region46: #{forward.1} parent=11 // pred_check_branch
          %1370 = sbr.rel (%p1368) target = $region48
        $region47: #{forward.1} parent=11 // pred_region
          _
        $region48: #{forward.1} parent=11 // pred_fallthru
          _
        // Predicated region
        $region49: #{forward.1} parent=11 // pred_check
          %p1371 = pneg %p463
        $region50: #{forward.1} parent=11 // pred_check_branch
          %1373 = sbr.rel (%p1371) target = $region52
        $region51: #{forward.1} parent=11 // pred_region
          _
        $region52: #{forward.1} parent=11 // pred_fallthru
          _
        // Predicated region
        $region53: #{forward.1} parent=11 // pred_check
          %p1374 = pneg %p484
        $region54: #{forward.1} parent=11 // pred_check_branch
          %1376 = sbr.rel (%p1374) target = $region56
        $region55: #{forward.1} parent=11 // pred_region
          _
        $region56: #{forward.1} parent=11 // pred_fallthru
          _
        // Predicated region
        $region57: #{forward.1} parent=11 // pred_check
          %p1377 = pneg %p505
        $region58: #{forward.1} parent=11 // pred_check_branch
          %1379 = sbr.rel (%p1377) target = $region60
        $region59: #{forward.1} parent=11 // pred_region
          _
        $region60: #{forward.1} parent=11 // pred_fallthru
          _
        // Predicated region
        $region61: #{forward.1} parent=11 // pred_check
          %p1380 = pneg %p526
        $region62: #{forward.1} parent=11 // pred_check_branch
          %1382 = sbr.rel (%p1380) target = $region64
        $region63: #{forward.1} parent=11 // pred_region
          _
        $region64: #{forward.1} parent=11 // pred_fallthru
          _
        // Predicated region
        $region65: #{forward.1} parent=11 // pred_check
          %p1383 = pneg %p547
        $region66: #{forward.1} parent=11 // pred_check_branch
          %1385 = sbr.rel (%p1383) target = $region68
        $region67: #{forward.1} parent=11 // pred_region
          _
        $region68: #{forward.1} parent=11 // pred_fallthru
          _
        // Predicated region
        $region69: #{forward.1} parent=11 // pred_check
          %p1386 = pneg %p568
        $region70: #{forward.1} parent=11 // pred_check_branch
          %1388 = sbr.rel (%p1386) target = $region72
        $region71: #{forward.1} parent=11 // pred_region
          _
        $region72: #{forward.1} parent=11 // pred_fallthru
          _
        // Predicated region
        $region73: #{forward.1} parent=11 // pred_check
          %p1389 = pneg %p589
        $region74: #{forward.1} parent=11 // pred_check_branch
          %1391 = sbr.rel (%p1389) target = $region76
        $region75: #{forward.1} parent=11 // pred_region
          _
        $region76: #{forward.1} parent=11 // pred_fallthru
          _
        // Predicated region
        $region77: #{forward.1} parent=11 // pred_check
          %p1392 = pneg %p610
        $region78: #{forward.1} parent=11 // pred_check_branch
          %1394 = sbr.rel (%p1392) target = $region80
        $region79: #{forward.1} parent=11 // pred_region
          _
        $region80: #{forward.1} parent=11 // pred_fallthru
          _
        // Predicated region
        $region81: #{forward.1} parent=11 // pred_check
          %p1395 = pneg %p631
        $region82: #{forward.1} parent=11 // pred_check_branch
          %1397 = sbr.rel (%p1395) target = $region84
        $region83: #{forward.1} parent=11 // pred_region
          _
        $region84: #{forward.1} parent=11 // pred_fallthru
          _
        // Predicated region
        $region85: #{forward.1} parent=11 // pred_check
          %p1398 = pneg %p652
        $region86: #{forward.1} parent=11 // pred_check_branch
          %1400 = sbr.rel (%p1398) target = $region88
        $region87: #{forward.1} parent=11 // pred_region
          _
        $region88: #{forward.1} parent=11 // pred_fallthru
          _
        // Predicated region
        $region89: #{forward.1} parent=11 // pred_check
          %p1401 = pneg %p673
        $region90: #{forward.1} parent=11 // pred_check_branch
          %1403 = sbr.rel (%p1401) target = $region92
        $region91: #{forward.1} parent=11 // pred_region
          _
        $region92: #{forward.1} parent=11 // pred_fallthru
          _
        // Predicated region
        $region93: #{forward.1} parent=11 // pred_check
          %p1404 = pneg %p694
        $region94: #{forward.1} parent=11 // pred_check_branch
          %1406 = sbr.rel (%p1404) target = $region96
        $region95: #{forward.1} parent=11 // pred_region
          _
        $region96: #{forward.1} parent=11 // pred_fallthru
          _
        // Predicated region
        $region97: #{forward.1} parent=11 // pred_check
          %p1407 = pneg %p715
        $region98: #{forward.1} parent=11 // pred_check_branch
          %1409 = sbr.rel (%p1407) target = $region100
        $region99: #{forward.1} parent=11 // pred_region
          _
        $region100: #{forward.1} parent=11 // pred_fallthru
          _
        // Predicated region
        $region101: #{forward.1} parent=11 // pred_check
          %p1410 = pneg %p736
        $region102: #{forward.1} parent=11 // pred_check_branch
          %1412 = sbr.rel (%p1410) target = $region104
        $region103: #{forward.1} parent=11 // pred_region
          _
        $region104: #{forward.1} parent=11 // pred_fallthru
          _
        // Predicated region
        $region105: #{forward.1} parent=11 // pred_check
          %p1413 = pneg %p757
        $region106: #{forward.1} parent=11 // pred_check_branch
          %1415 = sbr.rel (%p1413) target = $region108
        $region107: #{forward.1} parent=11 // pred_region
          _
        $region108: #{forward.1} parent=11 // pred_fallthru
          _
        // Predicated region
        $region109: #{forward.1} parent=11 // pred_check
          %p1416 = pneg %p778
        $region110: #{forward.1} parent=11 // pred_check_branch
          %1418 = sbr.rel (%p1416) target = $region112
        $region111: #{forward.1} parent=11 // pred_region
          _
        $region112: #{forward.1} parent=11 // pred_fallthru
          _
        // Predicated region
        $region113: #{forward.1} parent=11 // pred_check
          %p1419 = pneg %p799
        $region114: #{forward.1} parent=11 // pred_check_branch
          %1421 = sbr.rel (%p1419) target = $region116
        $region115: #{forward.1} parent=11 // pred_region
          _
        $region116: #{forward.1} parent=11 // pred_fallthru
          _
        // Predicated region
        $region117: #{forward.1} parent=11 // pred_check
          %p1422 = pneg %p820
        $region118: #{forward.1} parent=11 // pred_check_branch
          %1424 = sbr.rel (%p1422) target = $region120
        $region119: #{forward.1} parent=11 // pred_region
          _
        $region120: #{forward.1} parent=11 // pred_fallthru
          _
        // Predicated region
        $region121: #{forward.1} parent=11 // pred_check
          %p1425 = pneg %p841
        $region122: #{forward.1} parent=11 // pred_check_branch
          %1427 = sbr.rel (%p1425) target = $region124
        $region123: #{forward.1} parent=11 // pred_region
          _
        $region124: #{forward.1} parent=11 // pred_fallthru
          _
        // Predicated region
        $region125: #{forward.1} parent=11 // pred_check
          %p1428 = pneg %p862
        $region126: #{forward.1} parent=11 // pred_check_branch
          %1430 = sbr.rel (%p1428) target = $region128
        $region127: #{forward.1} parent=11 // pred_region
          _
        $region128: #{forward.1} parent=11 // pred_fallthru
          _
        // Predicated region
        $region129: #{forward.1} parent=11 // pred_check
          %p1431 = pneg %p883
        $region130: #{forward.1} parent=11 // pred_check_branch
          %1433 = sbr.rel (%p1431) target = $region132
        $region131: #{forward.1} parent=11 // pred_region
          _
        $region132: #{forward.1} parent=11 // pred_fallthru
          _
        // Predicated region
        $region133: #{forward.1} parent=11 // pred_check
          %p1434 = pneg %p904
        $region134: #{forward.1} parent=11 // pred_check_branch
          %1436 = sbr.rel (%p1434) target = $region136
        $region135: #{forward.1} parent=11 // pred_region
          _
        $region136: #{forward.1} parent=11 // pred_fallthru
          _
        // Predicated region
        $region137: #{forward.1} parent=11 // pred_check
          %p1437 = pneg %p925
        $region138: #{forward.1} parent=11 // pred_check_branch
          %1439 = sbr.rel (%p1437) target = $region140
        $region139: #{forward.1} parent=11 // pred_region
          _
        $region140: #{forward.1} parent=11 // pred_fallthru
          _
        // Predicated region
        $region141: #{forward.1} parent=11 // pred_check
          %p1440 = pneg %p946
        $region142: #{forward.1} parent=11 // pred_check_branch
          %1442 = sbr.rel (%p1440) target = $region144
        $region143: #{forward.1} parent=11 // pred_region
          _
        $region144: #{forward.1} parent=11 // pred_fallthru
          _
        // Predicated region
        $region145: #{forward.1} parent=11 // pred_check
          %p1443 = pneg %p967
        $region146: #{forward.1} parent=11 // pred_check_branch
          %1445 = sbr.rel (%p1443) target = $region148
        $region147: #{forward.1} parent=11 // pred_region
          _
        $region148: #{forward.1} parent=11 // pred_fallthru
          _
        // Predicated region
        $region149: #{forward.1} parent=11 // pred_check
          %p1446 = pneg %p988
        $region150: #{forward.1} parent=11 // pred_check_branch
          %1448 = sbr.rel (%p1446) target = $region152
        $region151: #{forward.1} parent=11 // pred_region
          _
        $region152: #{forward.1} parent=11 // pred_fallthru
          _
        // Predicated region
        $region153: #{forward.1} parent=11 // pred_check
          %p1449 = pneg %p1009
        $region154: #{forward.1} parent=11 // pred_check_branch
          %1451 = sbr.rel (%p1449) target = $region156
        $region155: #{forward.1} parent=11 // pred_region
          _
        $region156: #{forward.1} parent=11 // pred_fallthru
          _
        // Predicated region
        $region157: #{forward.1} parent=11 // pred_check
          %p1452 = pneg %p1030
        $region158: #{forward.1} parent=11 // pred_check_branch
          %1454 = sbr.rel (%p1452) target = $region160
        $region159: #{forward.1} parent=11 // pred_region
          _
        $region160: #{forward.1} parent=11 // pred_fallthru
          _
        // Predicated region
        $region161: #{forward.1} parent=11 // pred_check
          %p1455 = pneg %p1051
        $region162: #{forward.1} parent=11 // pred_check_branch
          %1457 = sbr.rel (%p1455) target = $region164
        $region163: #{forward.1} parent=11 // pred_region
          _
        $region164: #{forward.1} parent=11 // pred_fallthru
          _
        // Predicated region
        $region165: #{forward.1} parent=11 // pred_check
          %p1458 = pneg %p1072
        $region166: #{forward.1} parent=11 // pred_check_branch
          %1460 = sbr.rel (%p1458) target = $region168
        $region167: #{forward.1} parent=11 // pred_region
          %s1462 = ssub.s32 32, 32
          %1463 = vsyncadd [#allocation3], %s1462
          %s1464 = sshll.u32 [#allocation2], 4
          %s1465 = int_to_ptr.vmem [resolvable:$true] %s1464
          %1470 = dma.hbm_to_vmem [thread:$0]  %s87, 32, %s1465, [#allocation3], 16, 16, 1
        $region168: #{forward.1} parent=11 // pred_fallthru
          _
        // Predicated region
        $region169: #{forward.1} parent=11 // pred_check
          %p1471 = pneg %p1093
        $region170: #{forward.1} parent=11 // pred_check_branch
          %1473 = sbr.rel (%p1471) target = $region172
        $region171: #{forward.1} parent=11 // pred_region
          %s1475 = ssub.s32 32, 32
          %1476 = vsyncadd [#allocation5], %s1475
          %s1477 = sshll.u32 [#allocation4], 4
          %s1478 = int_to_ptr.vmem [resolvable:$true] %s1477
          %1483 = dma.hbm_to_vmem [thread:$0]  %s89, 32, %s1478, [#allocation5], 16, 16, 1
        $region172: #{forward.1} parent=11 // pred_fallthru
          _
        // Predicated region
        $region173: #{forward.1} parent=11 // pred_check
          %p1484 = pneg %p1114
        $region174: #{forward.1} parent=11 // pred_check_branch
          %1486 = sbr.rel (%p1484) target = $region176
        $region175: #{forward.1} parent=11 // pred_region
          %s1488 = ssub.s32 32, 32
          %1489 = vsyncadd [#allocation5], %s1488
          %s1490 = sshll.u32 [#allocation6], 4
          %s1491 = int_to_ptr.vmem [resolvable:$true] %s1490
          %1496 = dma.hbm_to_vmem [thread:$0]  %s91, 32, %s1491, [#allocation5], 16, 16, 1
        $region176: #{forward.1} parent=11 // pred_fallthru
          _
        // Predicated region
        $region177: #{forward.1} parent=11 // pred_check
          %p1497 = pneg %p1135
        $region178: #{forward.1} parent=11 // pred_check_branch
          %1499 = sbr.rel (%p1497) target = $region180
        $region179: #{forward.1} parent=11 // pred_region
          %s1501 = ssub.s32 32, 32
          %1502 = vsyncadd [#allocation8], %s1501
          %s1503 = sshll.u32 [#allocation7], 4
          %s1504 = int_to_ptr.vmem [resolvable:$true] %s1503
          %1509 = dma.hbm_to_vmem [thread:$0]  %s93, 32, %s1504, [#allocation8], 16, 16, 1
        $region180: #{forward.1} parent=11 // pred_fallthru
          _
        // Predicated region
        $region181: #{forward.1} parent=11 // pred_check
          %p1510 = pneg %p1156
        $region182: #{forward.1} parent=11 // pred_check_branch
          %1512 = sbr.rel (%p1510) target = $region184
        $region183: #{forward.1} parent=11 // pred_region
          %s1514 = ssub.s32 32, 32
          %1515 = vsyncadd [#allocation8], %s1514
          %s1516 = sshll.u32 [#allocation9], 4
          %s1517 = int_to_ptr.vmem [resolvable:$true] %s1516
          %1522 = dma.hbm_to_vmem [thread:$0]  %s95, 32, %s1517, [#allocation8], 16, 16, 1
        $region184: #{forward.1} parent=11 // pred_fallthru
          _
        // Predicated region
        $region185: #{forward.1} parent=11 // pred_check
          %p1523 = pneg %p1177
        $region186: #{forward.1} parent=11 // pred_check_branch
          %1525 = sbr.rel (%p1523) target = $region188
        $region187: #{forward.1} parent=11 // pred_region
          %s1527 = ssub.s32 32, 32
          %1528 = vsyncadd [#allocation11], %s1527
          %s1529 = sshll.u32 [#allocation10], 4
          %s1530 = int_to_ptr.vmem [resolvable:$true] %s1529
          %1535 = dma.hbm_to_vmem [thread:$0]  %s97, 32, %s1530, [#allocation11], 16, 16, 1
        $region188: #{forward.1} parent=11 // pred_fallthru
          _
        // Predicated region
        $region189: #{forward.1} parent=11 // pred_check
          %p1536 = pneg %p1198
        $region190: #{forward.1} parent=11 // pred_check_branch
          %1538 = sbr.rel (%p1536) target = $region192
        $region191: #{forward.1} parent=11 // pred_region
          _
        $region192: #{forward.1} parent=11 // pred_fallthru
          _
        // Predicated region
        $region193: #{forward.1} parent=11 // pred_check
          %p1539 = pneg %p1219
        $region194: #{forward.1} parent=11 // pred_check_branch
          %1541 = sbr.rel (%p1539) target = $region196
        $region195: #{forward.1} parent=11 // pred_region
          %s1543 = ssub.s32 16, 16
          %1544 = vsyncadd [#allocation11], %s1543
          %s1546 = sshll.u32 [#allocation12], 4
          %s1547 = int_to_ptr.vmem [resolvable:$true] %s1546
          %1549 = dma.hbm_to_vmem [thread:$0]  %s101, 16, %s1547, [#allocation11]
        $region196: #{forward.1} parent=11 // pred_fallthru
          _
        // Predicated region
        $region197: #{forward.1} parent=11 // pred_check
          %p1550 = pneg %p1240
        $region198: #{forward.1} parent=11 // pred_check_branch
          %1552 = sbr.rel (%p1550) target = $region200
        $region199: #{forward.1} parent=11 // pred_region
          %s1554 = ssub.s32 16, 16
          %1555 = vsyncadd [#allocation14], %s1554
          %s1557 = sshll.u32 [#allocation13], 4
          %s1558 = int_to_ptr.vmem [resolvable:$true] %s1557
          %1560 = dma.hbm_to_vmem [thread:$0]  %s103, 16, %s1558, [#allocation14]
        $region200: #{forward.1} parent=11 // pred_fallthru
          _
        // Predicated region
        $region201: #{forward.1} parent=11 // pred_check
          %p1561 = pneg %p1261
        $region202: #{forward.1} parent=11 // pred_check_branch
          %1563 = sbr.rel (%p1561) target = $region204
        $region203: #{forward.1} parent=11 // pred_region
          %s1565 = ssub.s32 16, 16
          %1566 = vsyncadd [#allocation14], %s1565
          %s1568 = sshll.u32 [#allocation15], 4
          %s1569 = int_to_ptr.vmem [resolvable:$true] %s1568
          %1571 = dma.hbm_to_vmem [thread:$0]  %s105, 16, %s1569, [#allocation14]
        $region204: #{forward.1} parent=11 // pred_fallthru
          _
        // Predicated region
        $region205: #{forward.1} parent=11 // pred_check
          %p1572 = pneg %p1282
        $region206: #{forward.1} parent=11 // pred_check_branch
          %1574 = sbr.rel (%p1572) target = $region208
        $region207: #{forward.1} parent=11 // pred_region
          _
        $region208: #{forward.1} parent=11 // pred_fallthru
          _
        // Predicated region
        $region209: #{forward.1} parent=11 // pred_check
          %p1575 = pneg %p1303
        $region210: #{forward.1} parent=11 // pred_check_branch
          %1577 = sbr.rel (%p1575) target = $region212
        $region211: #{forward.1} parent=11 // pred_region
          %s1579 = ssub.s32 16, 16
          %1580 = vsyncadd [#allocation17], %s1579
          %s1582 = sshll.u32 [#allocation16], 4
          %s1583 = int_to_ptr.vmem [resolvable:$true] %s1582
          %1585 = dma.hbm_to_vmem [thread:$0]  %s109, 16, %s1583, [#allocation17]
        $region212: #{forward.1} parent=11 // pred_fallthru
          _
      $region12: #{forward.1} parent=5 // pred_fallthru
        _
      %p1586 = scmp.lt.s32.totalorder %s123, 2
      // Predicated region
      $region213: #{forward.1} parent=5 // pred_check
        %p1587 = pneg %p1586
      $region214: #{forward.1} parent=5 // pred_check_branch
        %1589 = sbr.rel (%p1587) target = $region216
      $region215: #{forward.1} parent=5 // pred_region
        // Predicated region
        $region217: #{forward.1} parent=215 // pred_check
          %p1590 = pneg %p143
        $region218: #{forward.1} parent=215 // pred_check_branch
          %1592 = sbr.rel (%p1590) target = $region220
        $region219: #{forward.1} parent=215 // pred_region
          %p1593 = scmp.lt.s32.totalorder %s123, 1
          %s1594 = scalar_select %p1593, %s123, 1
          %s1595 = smul.addr %s1594, 8
          %s1596 = scalar_lea.vmem %s1, %s1595
        $region220: #{forward.1} parent=215 // pred_fallthru
          _
        // Predicated region
        $region221: #{forward.1} parent=215 // pred_check
          %p1597 = pneg %p169
        $region222: #{forward.1} parent=215 // pred_check_branch
          %1599 = sbr.rel (%p1597) target = $region224
        $region223: #{forward.1} parent=215 // pred_region
          %p1600 = scmp.lt.s32.totalorder %s123, 1
          %s1601 = scalar_select %p1600, %s123, 1
          %s1602 = smul.addr %s1601, 8
          %s1603 = scalar_lea.vmem %s3, %s1602
        $region224: #{forward.1} parent=215 // pred_fallthru
          _
        // Predicated region
        $region225: #{forward.1} parent=215 // pred_check
          %p1604 = pneg %p237
        $region226: #{forward.1} parent=215 // pred_check_branch
          %1606 = sbr.rel (%p1604) target = $region228
        $region227: #{forward.1} parent=215 // pred_region
          %p1607 = scmp.lt.s32.totalorder %s123, 1
          %s1608 = scalar_select %p1607, %s123, 1
          %s1609 = scalar_lea.vmem %s9, %s1608
        $region228: #{forward.1} parent=215 // pred_fallthru
          _
        // Predicated region
        $region229: #{forward.1} parent=215 // pred_check
          %p1610 = pneg %p263
        $region230: #{forward.1} parent=215 // pred_check_branch
          %1612 = sbr.rel (%p1610) target = $region232
        $region231: #{forward.1} parent=215 // pred_region
          %p1613 = scmp.lt.s32.totalorder %s123, 1
          %s1614 = scalar_select %p1613, %s123, 1
          %s1615 = scalar_lea.vmem %s11, %s1614
        $region232: #{forward.1} parent=215 // pred_fallthru
          _
        // Predicated region
        $region233: #{forward.1} parent=215 // pred_check
          %p1616 = pneg %p289
        $region234: #{forward.1} parent=215 // pred_check_branch
          %1618 = sbr.rel (%p1616) target = $region236
        $region235: #{forward.1} parent=215 // pred_region
          %p1619 = scmp.lt.s32.totalorder %s123, 1
          %s1620 = scalar_select %p1619, %s123, 1
          %s1621 = scalar_lea.vmem %s13, %s1620
        $region236: #{forward.1} parent=215 // pred_fallthru
          _
      $region216: #{forward.1} parent=5 // pred_fallthru
        _
      %p1622 = scmp.le.s32.totalorder 1, %s123
      %p1623 = scmp.lt.s32.totalorder %s123, 3
      %p1624 = pnand %p1622, %p1623
      %p1625 = pneg %p1624
      // Predicated region
      $region237: #{forward.1} parent=5 // pred_check
        _
      $region238: #{forward.1} parent=5 // pred_check_branch
        %1627 = sbr.rel (%p1624) target = $region240
      $region239: #{forward.1} parent=5 // pred_region
        %s1628 = ssub.s32 %s123, 1
        // Predicated region
        $region241: #{forward.1} parent=239 // pred_check
          %p1629 = pneg %p1072
        $region242: #{forward.1} parent=239 // pred_check_branch
          %1631 = sbr.rel (%p1629) target = $region244
        $region243: #{forward.1} parent=239 // pred_region
          %1632 = dma.done [#allocation3], 32
        $region244: #{forward.1} parent=239 // pred_fallthru
          _
        // Predicated region
        $region245: #{forward.1} parent=239 // pred_check
          %p1633 = pneg %p1093
        $region246: #{forward.1} parent=239 // pred_check_branch
          %1635 = sbr.rel (%p1633) target = $region248
        $region247: #{forward.1} parent=239 // pred_region
          %1636 = dma.done [#allocation5], 32
        $region248: #{forward.1} parent=239 // pred_fallthru
          _
        // Predicated region
        $region249: #{forward.1} parent=239 // pred_check
          %p1637 = pneg %p1114
        $region250: #{forward.1} parent=239 // pred_check_branch
          %1639 = sbr.rel (%p1637) target = $region252
        $region251: #{forward.1} parent=239 // pred_region
          %1640 = dma.done [#allocation5], 32
        $region252: #{forward.1} parent=239 // pred_fallthru
          _
        // Predicated region
        $region253: #{forward.1} parent=239 // pred_check
          %p1641 = pneg %p1135
        $region254: #{forward.1} parent=239 // pred_check_branch
          %1643 = sbr.rel (%p1641) target = $region256
        $region255: #{forward.1} parent=239 // pred_region
          %1644 = dma.done [#allocation8], 32
        $region256: #{forward.1} parent=239 // pred_fallthru
          _
        // Predicated region
        $region257: #{forward.1} parent=239 // pred_check
          %p1645 = pneg %p1156
        $region258: #{forward.1} parent=239 // pred_check_branch
          %1647 = sbr.rel (%p1645) target = $region260
        $region259: #{forward.1} parent=239 // pred_region
          %1648 = dma.done [#allocation8], 32
        $region260: #{forward.1} parent=239 // pred_fallthru
          _
        // Predicated region
        $region261: #{forward.1} parent=239 // pred_check
          %p1649 = pneg %p1177
        $region262: #{forward.1} parent=239 // pred_check_branch
          %1651 = sbr.rel (%p1649) target = $region264
        $region263: #{forward.1} parent=239 // pred_region
          %1652 = dma.done [#allocation11], 32
        $region264: #{forward.1} parent=239 // pred_fallthru
          _
        // Predicated region
        $region265: #{forward.1} parent=239 // pred_check
          %p1653 = pneg %p1219
        $region266: #{forward.1} parent=239 // pred_check_branch
          %1655 = sbr.rel (%p1653) target = $region268
        $region267: #{forward.1} parent=239 // pred_region
          %1656 = dma.done [#allocation11], 16
        $region268: #{forward.1} parent=239 // pred_fallthru
          _
        // Predicated region
        $region269: #{forward.1} parent=239 // pred_check
          %p1657 = pneg %p1240
        $region270: #{forward.1} parent=239 // pred_check_branch
          %1659 = sbr.rel (%p1657) target = $region272
        $region271: #{forward.1} parent=239 // pred_region
          %1660 = dma.done [#allocation14], 16
        $region272: #{forward.1} parent=239 // pred_fallthru
          _
        // Predicated region
        $region273: #{forward.1} parent=239 // pred_check
          %p1661 = pneg %p1261
        $region274: #{forward.1} parent=239 // pred_check_branch
          %1663 = sbr.rel (%p1661) target = $region276
        $region275: #{forward.1} parent=239 // pred_region
          %1664 = dma.done [#allocation14], 16
        $region276: #{forward.1} parent=239 // pred_fallthru
          _
        // Predicated region
        $region277: #{forward.1} parent=239 // pred_check
          %p1665 = pneg %p1303
        $region278: #{forward.1} parent=239 // pred_check_branch
          %1667 = sbr.rel (%p1665) target = $region280
        $region279: #{forward.1} parent=239 // pred_region
          %1668 = dma.done [#allocation17], 16
        $region280: #{forward.1} parent=239 // pred_fallthru
          _
        %p1669 = scmp.lt.s32.totalorder %s128, 1
        %s1670 = scalar_select %p1669, %s128, 1
        %s1671 = smul.addr %s1670, 8
        %s1672 = scalar_lea.vmem %s1, %s1671
        %p1673 = pneg %p149
        %p1674 = pneg %p146
        %p1675 = scmp.lt.s32.totalorder %s128, 1
        %s1676 = scalar_select %p1675, %s128, 1
        %s1677 = smul.addr %s1676, 8
        %s1678 = scalar_lea.vmem %s3, %s1677
        %p1679 = pneg %p175
        %p1680 = pneg %p172
        %p1681 = pneg %p196
        %p1682 = pneg %p193
        %p1683 = pneg %p217
        %p1684 = pneg %p214
        %p1685 = scmp.lt.s32.totalorder %s128, 1
        %s1686 = scalar_select %p1685, %s128, 1
        %s1687 = scalar_lea.vmem %s9, %s1686
        %p1688 = pneg %p243
        %p1689 = pneg %p240
        %p1690 = scmp.lt.s32.totalorder %s128, 1
        %s1691 = scalar_select %p1690, %s128, 1
        %s1692 = scalar_lea.vmem %s11, %s1691
        %p1693 = pneg %p269
        %p1694 = pneg %p266
        %p1695 = scmp.lt.s32.totalorder %s128, 1
        %s1696 = scalar_select %p1695, %s128, 1
        %s1697 = scalar_lea.vmem %s13, %s1696
        %p1698 = pneg %p295
        %p1699 = pneg %p292
        %p1700 = pneg %p316
        %p1701 = pneg %p313
        %p1702 = pneg %p337
        %p1703 = pneg %p334
        %p1704 = pneg %p358
        %p1705 = pneg %p355
        %p1706 = pneg %p379
        %p1707 = pneg %p376
        %p1708 = pneg %p400
        %p1709 = pneg %p397
        %p1710 = pneg %p421
        %p1711 = pneg %p418
        %p1712 = pneg %p442
        %p1713 = pneg %p439
        %p1714 = pneg %p463
        %p1715 = pneg %p460
        %p1716 = pneg %p484
        %p1717 = pneg %p481
        %p1718 = pneg %p505
        %p1719 = pneg %p502
        %p1720 = pneg %p526
        %p1721 = pneg %p523
        %p1722 = pneg %p547
        %p1723 = pneg %p544
        %p1724 = pneg %p568
        %p1725 = pneg %p565
        %p1726 = pneg %p589
        %p1727 = pneg %p586
        %p1728 = pneg %p610
        %p1729 = pneg %p607
        %p1730 = pneg %p631
        %p1731 = pneg %p628
        %p1732 = pneg %p652
        %p1733 = pneg %p649
        %p1734 = pneg %p673
        %p1735 = pneg %p670
        %p1736 = pneg %p694
        %p1737 = pneg %p691
        %p1738 = pneg %p715
        %p1739 = pneg %p712
        %p1740 = pneg %p736
        %p1741 = pneg %p733
        %p1742 = pneg %p757
        %p1743 = pneg %p754
        %p1744 = pneg %p778
        %p1745 = pneg %p775
        %p1746 = pneg %p799
        %p1747 = pneg %p796
        %p1748 = pneg %p820
        %p1749 = pneg %p817
        %p1750 = pneg %p841
        %p1751 = pneg %p838
        %p1752 = pneg %p862
        %p1753 = pneg %p859
        %p1754 = pneg %p883
        %p1755 = pneg %p880
        %p1756 = pneg %p904
        %p1757 = pneg %p901
        %p1758 = pneg %p925
        %p1759 = pneg %p922
        %p1760 = pneg %p946
        %p1761 = pneg %p943
        %p1762 = pneg %p967
        %p1763 = pneg %p964
        %p1764 = pneg %p988
        %p1765 = pneg %p985
        %p1766 = pneg %p1009
        %p1767 = pneg %p1006
        %p1768 = pneg %p1030
        %p1769 = pneg %p1027
        %p1770 = pneg %p1051
        %p1771 = pneg %p1048
        %p1772 = pneg %p1072
        %p1773 = pneg %p1069
        %p1774 = pneg %p1093
        %p1775 = pneg %p1090
        %p1776 = pneg %p1114
        %p1777 = pneg %p1111
        %p1778 = pneg %p1135
        %p1779 = pneg %p1132
        %p1780 = pneg %p1156
        %p1781 = pneg %p1153
        %p1782 = pneg %p1177
        %p1783 = pneg %p1174
        %p1784 = pneg %p1198
        %p1785 = pneg %p1195
        %p1786 = pneg %p1219
        %p1787 = pneg %p1216
        %p1788 = pneg %p1240
        %p1789 = pneg %p1237
        %p1790 = pneg %p1261
        %p1791 = pneg %p1258
        %p1792 = pneg %p1282
        %p1793 = pneg %p1279
        %p1794 = pneg %p1303
        %p1795 = pneg %p1300
        %p1796 = pneg %p1329
        %p1797 = pneg %p1326
        %p1798 = scmp.lt.s32.totalorder %s128, 1
        %s1799 = scalar_select %p1798, %s128, 1
        %s1800 = smul.addr %s1799, 8
        %s1801 = scalar_lea.vmem %s111, %s1800
        %p1802 = scmp.lt.s32.totalorder %s128, 1
        %s1803 = scalar_select %p1802, %s128, 1
        %s1804 = smul.addr %s1803, 8
        %s1805 = scalar_lea.vmem %s1, %s1804
        %p1806 = scmp.lt.s32.totalorder %s128, 1
        %s1807 = scalar_select %p1806, %s128, 1
        %s1808 = smul.addr %s1807, 8
        %s1809 = scalar_lea.vmem %s3, %s1808
        %p1810 = scmp.lt.s32.totalorder %s128, 1
        %s1811 = scalar_select %p1810, %s128, 1
        %s1812 = scalar_lea.vmem %s9, %s1811
        %p1813 = scmp.lt.s32.totalorder %s128, 1
        %s1814 = scalar_select %p1813, %s128, 1
        %s1815 = scalar_lea.vmem %s11, %s1814
        %p1816 = scmp.lt.s32.totalorder %s128, 1
        %s1817 = scalar_select %p1816, %s128, 1
        %s1818 = scalar_lea.vmem %s13, %s1817
        %p1819 = scmp.lt.s32.totalorder %s128, 1
        %s1820 = scalar_select %p1819, %s128, 1
        %s1821 = smul.addr %s1820, 8
        %s1822 = scalar_lea.vmem %s111, %s1821
        %v1824 = vld [vmem:[%s1805] sm:$0xff]
        %v1825 = vld [vmem:[%s1809] sm:$0xff]
        %v1826 = vld [vmem:[%s5] sm:$0xff]
        %v1827 = vld [vmem:[%s7] sm:$0xff]
        %v1828 = vld [vmem:[%s1812] sm:$0x1]
        %v1829 = vld [vmem:[%s1815] sm:$0x1]
        %v1830 = vld [vmem:[%s1818] sm:$0x1]
        %v1832 = vlaneseq
        %v1833 = vshrl.u32 %v1832, 7
        %v1834 = vsub.s32 0, %v1833
        %v1835 = vrot.slane %v1828, %v1834
        %v1837 = vadd.f32 %v1826, %v1835
        %v1839 = vlaneseq
        %v1840 = vshrl.u32 %v1839, 7
        %v1841 = vsub.s32 0, %v1840
        %v1842 = vrot.slane %v1829, %v1841
        %v1844 = vadd.f32 %v1827, %v1842
        %v1845 = vld [vmem:[%s15] sm:$0xf]
        %v1846 = vld [vmem:[%s15 + $0x4] sm:$0xf]
        %v1847 = vld [vmem:[%s15 + $0x8] sm:$0xf]
        %v1848 = vld [vmem:[%s15 + $0xc] sm:$0xf]
        %v1849 = vld [vmem:[%s17] sm:$0x1]
        %v1850 = vpack.c.bf16 %v1824, %v1824
        %v1852 = vlaneseq
        %v1853 = vshrl.u32 %v1852, 7
        %v1854 = vsub.s32 0, %v1853
        %v1855 = vrot.slane %v1849, %v1854
        %v1861 = vunpack.c.l.b16 %v1845
        %v1862 = vunpack.c.l.b16 %v1846
        %v1863 = vunpack.c.l.b16 %v1847
        %v1864 = vunpack.c.l.b16 %v1848
        %v1865 = vpack.c.b16 %v1862, %v1861
        %v1866 = vpack.c.b16 %v1864, %v1863
        %vm1869 = vcmask 261120
        %v1871 = vsel %vm1869, %v1850, 0
        %1873 = vmatprep.subr.bf16.mxu0 0
        %1874 = vmatpush1.bf16.msra.mxu0 0
        %1875 = vmatprep.subr.bf16.mxu0 0
        %1876 = vmatpush1.bf16.msra.mxu0 0
        %1877 = vmatprep.subr.bf16.mxu0 0
        %1878 = vmatpush1.bf16.msra.mxu0 0
        %1879 = vmatprep.subr.bf16.mxu0 0
        %1880 = vmatpush1.bf16.msra.mxu0 0
        %1881 = vmatprep.subr.bf16.mxu0 0
        %1882 = vmatpush1.bf16.msra.mxu0 0
        %1883 = vmatprep.subr.bf16.mxu0 0
        %1884 = vmatpush1.bf16.msra.mxu0 0
        %1885 = vmatprep.subr.bf16.mxu0 0
        %1886 = vmatpush1.bf16.msra.mxu0 %v1866
        %1887 = vmatprep.subr.bf16.mxu0 0
        %1888 = vmatpush1.bf16.msra.mxu0 %v1865
        %1889 = vmatprep.subr.bf16.mxu0 0
        %1890 = vmatpush2.bf16.msra.mxu0 0
        %1891 = vmatprep.subr.bf16.mxu0 0
        %1892 = vmatpush2.bf16.msra.mxu0 0
        %1893 = vmatprep.subr.bf16.mxu0 0
        %1894 = vmatpush2.bf16.msra.mxu0 0
        %1895 = vmatprep.subr.bf16.mxu0 0
        %1896 = vmatpush2.bf16.msra.mxu0 0
        %1897 = vmatprep.subr.bf16.mxu0 0
        %1898 = vmatpush2.bf16.msra.mxu0 0
        %1899 = vmatprep.subr.bf16.mxu0 0
        %1900 = vmatpush2.bf16.msra.mxu0 0
        %1901 = vmatprep.subr.bf16.mxu0 0
        %1902 = vmatpush2.bf16.msra.mxu0 0
        %1903 = vmatprep.subr.bf16.mxu0 0
        %1904 = vmatpush2.bf16.msra.mxu0 0
        %1905 = vmatprep.mubr.bf16.mxu0 0
        %1906 = vmatmul.mubr.bf16.gmra.mxu0 %v1871
        %v1907 = vpop.f32.mrf.mxu0
        %v1908 = vadd.f32 %v1855, %v1907
        %v1909 = vpop.f32.mrf.mxu0
        %v1910 = vpop.f32.mrf.mxu0
        %v1911 = vpop.f32.mrf.mxu0
        %1912 = vdwg.mxu0
        %v1913 = vld [vmem:[%s19] sm:$0xf]
        %v1914 = vld [vmem:[%s19 + $0x4] sm:$0xf]
        %v1915 = vld [vmem:[%s19 + $0x8] sm:$0xf]
        %v1916 = vld [vmem:[%s19 + $0xc] sm:$0xf]
        %v1917 = vld [vmem:[%s21] sm:$0x1]
        %v1919 = vlaneseq
        %v1920 = vshrl.u32 %v1919, 7
        %v1921 = vsub.s32 0, %v1920
        %v1922 = vrot.slane %v1917, %v1921
        %v1928 = vunpack.c.l.b16 %v1913
        %v1929 = vunpack.c.l.b16 %v1914
        %v1930 = vunpack.c.l.b16 %v1915
        %v1931 = vunpack.c.l.b16 %v1916
        %v1932 = vpack.c.b16 %v1929, %v1928
        %v1933 = vpack.c.b16 %v1931, %v1930
        %1936 = vmatprep.subr.bf16.mxu0 0
        %1937 = vmatpush1.bf16.msra.mxu0 0
        %1938 = vmatprep.subr.bf16.mxu0 0
        %1939 = vmatpush1.bf16.msra.mxu0 0
        %1940 = vmatprep.subr.bf16.mxu0 0
        %1941 = vmatpush1.bf16.msra.mxu0 0
        %1942 = vmatprep.subr.bf16.mxu0 0
        %1943 = vmatpush1.bf16.msra.mxu0 0
        %1944 = vmatprep.subr.bf16.mxu0 0
        %1945 = vmatpush1.bf16.msra.mxu0 0
        %1946 = vmatprep.subr.bf16.mxu0 0
        %1947 = vmatpush1.bf16.msra.mxu0 0
        %1948 = vmatprep.subr.bf16.mxu0 0
        %1949 = vmatpush1.bf16.msra.mxu0 %v1933
        %1950 = vmatprep.subr.bf16.mxu0 0
        %1951 = vmatpush1.bf16.msra.mxu0 %v1932
        %1952 = vmatprep.subr.bf16.mxu0 0
        %1953 = vmatpush2.bf16.msra.mxu0 0
        %1954 = vmatprep.subr.bf16.mxu0 0
        %1955 = vmatpush2.bf16.msra.mxu0 0
        %1956 = vmatprep.subr.bf16.mxu0 0
        %1957 = vmatpush2.bf16.msra.mxu0 0
        %1958 = vmatprep.subr.bf16.mxu0 0
        %1959 = vmatpush2.bf16.msra.mxu0 0
        %1960 = vmatprep.subr.bf16.mxu0 0
        %1961 = vmatpush2.bf16.msra.mxu0 0
        %1962 = vmatprep.subr.bf16.mxu0 0
        %1963 = vmatpush2.bf16.msra.mxu0 0
        %1964 = vmatprep.subr.bf16.mxu0 0
        %1965 = vmatpush2.bf16.msra.mxu0 0
        %1966 = vmatprep.subr.bf16.mxu0 0
        %1967 = vmatpush2.bf16.msra.mxu0 0
        %1968 = vmatprep.mubr.bf16.mxu0 0
        %1969 = vmatmul.mubr.bf16.gmra.mxu0 %v1871
        %v1970 = vpop.f32.mrf.mxu0
        %v1971 = vadd.f32 %v1922, %v1970
        %v1972 = vpop.f32.mrf.mxu0
        %v1973 = vpop.f32.mrf.mxu0
        %v1974 = vpop.f32.mrf.mxu0
        %1975 = vdwg.mxu0
        %v1976 = vld [vmem:[%s23] sm:$0xf]
        %v1977 = vld [vmem:[%s23 + $0x4] sm:$0xf]
        %v1978 = vld [vmem:[%s23 + $0x8] sm:$0xf]
        %v1979 = vld [vmem:[%s23 + $0xc] sm:$0xf]
        %v1980 = vld [vmem:[%s25] sm:$0x1]
        %v1982 = vlaneseq
        %v1983 = vshrl.u32 %v1982, 7
        %v1984 = vsub.s32 0, %v1983
        %v1985 = vrot.slane %v1980, %v1984
        %v1991 = vunpack.c.l.b16 %v1976
        %v1992 = vunpack.c.l.b16 %v1977
        %v1993 = vunpack.c.l.b16 %v1978
        %v1994 = vunpack.c.l.b16 %v1979
        %v1995 = vpack.c.b16 %v1992, %v1991
        %v1996 = vpack.c.b16 %v1994, %v1993
        %1999 = vmatprep.subr.bf16.mxu0 0
        %2000 = vmatpush1.bf16.msra.mxu0 0
        %2001 = vmatprep.subr.bf16.mxu0 0
        %2002 = vmatpush1.bf16.msra.mxu0 0
        %2003 = vmatprep.subr.bf16.mxu0 0
        %2004 = vmatpush1.bf16.msra.mxu0 0
        %2005 = vmatprep.subr.bf16.mxu0 0
        %2006 = vmatpush1.bf16.msra.mxu0 0
        %2007 = vmatprep.subr.bf16.mxu0 0
        %2008 = vmatpush1.bf16.msra.mxu0 0
        %2009 = vmatprep.subr.bf16.mxu0 0
        %2010 = vmatpush1.bf16.msra.mxu0 0
        %2011 = vmatprep.subr.bf16.mxu0 0
        %2012 = vmatpush1.bf16.msra.mxu0 %v1996
        %2013 = vmatprep.subr.bf16.mxu0 0
        %2014 = vmatpush1.bf16.msra.mxu0 %v1995
        %2015 = vmatprep.subr.bf16.mxu0 0
        %2016 = vmatpush2.bf16.msra.mxu0 0
        %2017 = vmatprep.subr.bf16.mxu0 0
        %2018 = vmatpush2.bf16.msra.mxu0 0
        %2019 = vmatprep.subr.bf16.mxu0 0
        %2020 = vmatpush2.bf16.msra.mxu0 0
        %2021 = vmatprep.subr.bf16.mxu0 0
        %2022 = vmatpush2.bf16.msra.mxu0 0
        %2023 = vmatprep.subr.bf16.mxu0 0
        %2024 = vmatpush2.bf16.msra.mxu0 0
        %2025 = vmatprep.subr.bf16.mxu0 0
        %2026 = vmatpush2.bf16.msra.mxu0 0
        %2027 = vmatprep.subr.bf16.mxu0 0
        %2028 = vmatpush2.bf16.msra.mxu0 0
        %2029 = vmatprep.subr.bf16.mxu0 0
        %2030 = vmatpush2.bf16.msra.mxu0 0
        %2031 = vmatprep.mubr.bf16.mxu0 0
        %2032 = vmatmul.mubr.bf16.gmra.mxu0 %v1871
        %v2033 = vpop.f32.mrf.mxu0
        %v2034 = vadd.f32 %v1985, %v2033
        %v2035 = vpop.f32.mrf.mxu0
        %v2036 = vpop.f32.mrf.mxu0
        %v2037 = vpop.f32.mrf.mxu0
        %2038 = vdwg.mxu0
        %v2039 = vld [vmem:[%s27] sm:$0xf]
        %v2040 = vld [vmem:[%s27 + $0x4] sm:$0xf]
        %v2041 = vld [vmem:[%s27 + $0x8] sm:$0xf]
        %v2042 = vld [vmem:[%s27 + $0xc] sm:$0xf]
        %v2043 = vld [vmem:[%s29] sm:$0x1]
        %vm2044 = vcmask 64512
        %v2046 = vsel %vm2044, %v1908, 0
        %v2049 = vsel %vm2044, %v1971, 0
        %2051 = vmatprep.subr.mxu0 0.0
        %2052 = vmatpush1.xpose.msra.mxu0 0.0
        %2053 = vmatprep.subr.mxu0 0.0
        %2054 = vmatpush1.xpose.msra.mxu0 0.0
        %2055 = vmatprep.subr.mxu0 0.0
        %2056 = vmatpush1.xpose.msra.mxu0 0.0
        %2057 = vmatprep.subr.mxu0 0.0
        %2058 = vmatpush1.xpose.msra.mxu0 0.0
        %2059 = vmatprep.subr.mxu0 0.0
        %2060 = vmatpush1.xpose.msra.mxu0 0.0
        %2061 = vmatprep.subr.mxu0 0.0
        %2062 = vmatpush1.xpose.msra.mxu0 0.0
        %2063 = vmatprep.subr.mxu0 0.0
        %2064 = vmatpush1.xpose.msra.mxu0 0.0
        %2065 = vmatprep.subr.mxu0 0.0
        %2066 = vmatpush1.xpose.msra.mxu0 0.0
        %2067 = vmatprep.subr.mxu0 0.0
        %2068 = vmatpush1.xpose.msra.mxu0 0.0
        %2069 = vmatprep.subr.mxu0 0.0
        %2070 = vmatpush1.xpose.msra.mxu0 0.0
        %2071 = vmatprep.subr.mxu0 0.0
        %2072 = vmatpush1.xpose.msra.mxu0 0.0
        %2073 = vmatprep.subr.mxu0 0.0
        %2074 = vmatpush1.xpose.msra.mxu0 0.0
        %2075 = vmatprep.subr.mxu0 0.0
        %2076 = vmatpush1.xpose.msra.mxu0 0.0
        %2077 = vmatprep.subr.mxu0 0.0
        %2078 = vmatpush1.xpose.msra.mxu0 0.0
        %2079 = vmatprep.subr.mxu0 0.0
        %2080 = vmatpush1.xpose.msra.mxu0 0.0
        %2081 = vmatprep.subr.mxu0 0.0
        %2082 = vmatpush1.xpose.msra.mxu0 %v2049
        %2083 = vmatprep.subr.mxu0 0.0
        %2084 = vmatpush2.xpose.msra.mxu0 0.0
        %2085 = vmatprep.subr.mxu0 0.0
        %2086 = vmatpush2.xpose.msra.mxu0 0.0
        %2087 = vmatprep.subr.mxu0 0.0
        %2088 = vmatpush2.xpose.msra.mxu0 0.0
        %2089 = vmatprep.subr.mxu0 0.0
        %2090 = vmatpush2.xpose.msra.mxu0 0.0
        %2091 = vmatprep.subr.mxu0 0.0
        %2092 = vmatpush2.xpose.msra.mxu0 0.0
        %2093 = vmatprep.subr.mxu0 0.0
        %2094 = vmatpush2.xpose.msra.mxu0 0.0
        %2095 = vmatprep.subr.mxu0 0.0
        %2096 = vmatpush2.xpose.msra.mxu0 0.0
        %2097 = vmatprep.subr.mxu0 0.0
        %2098 = vmatpush2.xpose.msra.mxu0 0.0
        %2099 = vmatprep.subr.mxu0 0.0
        %2100 = vmatpush2.xpose.msra.mxu0 0.0
        %2101 = vmatprep.subr.mxu0 0.0
        %2102 = vmatpush2.xpose.msra.mxu0 0.0
        %2103 = vmatprep.subr.mxu0 0.0
        %2104 = vmatpush2.xpose.msra.mxu0 0.0
        %2105 = vmatprep.subr.mxu0 0.0
        %2106 = vmatpush2.xpose.msra.mxu0 0.0
        %2107 = vmatprep.subr.mxu0 0.0
        %2108 = vmatpush2.xpose.msra.mxu0 0.0
        %2109 = vmatprep.subr.mxu0 0.0
        %2110 = vmatpush2.xpose.msra.mxu0 0.0
        %2111 = vmatprep.subr.mxu0 0.0
        %2112 = vmatpush2.xpose.msra.mxu0 0.0
        %2113 = vmatprep.subr.mxu0 0.0
        %2114 = vmatpush2.xpose.msra.mxu0 0.0
        %2115 = vmatprep.mubr.f32.mxu0 0.0
        %2116 = vmatmul.mubr.f32.gmra.mxu0 %v2046
        %v2117 = vpop.f32.mrf.mxu0
        %v2118 = vadd.f32 0.0, %v2117
        %v2119 = vpop.f32.mrf.mxu0
        %2120 = vdwg.mxu0
        %2121 = vrot.lane.b32.xlu0 %v1908, 120
        %v2122 = vpop.permute.xlu0 %2121
        %2123 = vrot.lane.b32.xlu0 %v1971, 120
        %v2124 = vpop.permute.xlu0 %2123
        %v2125 = vsel %vm2044, %v2122, 0
        %v2127 = vsel %vm2044, %v2124, 0
        %2129 = vmatprep.subr.mxu0 0.0
        %2130 = vmatpush1.xpose.msra.mxu0 0.0
        %2131 = vmatprep.subr.mxu0 0.0
        %2132 = vmatpush1.xpose.msra.mxu0 0.0
        %2133 = vmatprep.subr.mxu0 0.0
        %2134 = vmatpush1.xpose.msra.mxu0 0.0
        %2135 = vmatprep.subr.mxu0 0.0
        %2136 = vmatpush1.xpose.msra.mxu0 0.0
        %2137 = vmatprep.subr.mxu0 0.0
        %2138 = vmatpush1.xpose.msra.mxu0 0.0
        %2139 = vmatprep.subr.mxu0 0.0
        %2140 = vmatpush1.xpose.msra.mxu0 0.0
        %2141 = vmatprep.subr.mxu0 0.0
        %2142 = vmatpush1.xpose.msra.mxu0 0.0
        %2143 = vmatprep.subr.mxu0 0.0
        %2144 = vmatpush1.xpose.msra.mxu0 0.0
        %2145 = vmatprep.subr.mxu0 0.0
        %2146 = vmatpush1.xpose.msra.mxu0 0.0
        %2147 = vmatprep.subr.mxu0 0.0
        %2148 = vmatpush1.xpose.msra.mxu0 0.0
        %2149 = vmatprep.subr.mxu0 0.0
        %2150 = vmatpush1.xpose.msra.mxu0 0.0
        %2151 = vmatprep.subr.mxu0 0.0
        %2152 = vmatpush1.xpose.msra.mxu0 0.0
        %2153 = vmatprep.subr.mxu0 0.0
        %2154 = vmatpush1.xpose.msra.mxu0 0.0
        %2155 = vmatprep.subr.mxu0 0.0
        %2156 = vmatpush1.xpose.msra.mxu0 0.0
        %2157 = vmatprep.subr.mxu0 0.0
        %2158 = vmatpush1.xpose.msra.mxu0 0.0
        %2159 = vmatprep.subr.mxu0 0.0
        %2160 = vmatpush1.xpose.msra.mxu0 %v2127
        %2161 = vmatprep.subr.mxu0 0.0
        %2162 = vmatpush2.xpose.msra.mxu0 0.0
        %2163 = vmatprep.subr.mxu0 0.0
        %2164 = vmatpush2.xpose.msra.mxu0 0.0
        %2165 = vmatprep.subr.mxu0 0.0
        %2166 = vmatpush2.xpose.msra.mxu0 0.0
        %2167 = vmatprep.subr.mxu0 0.0
        %2168 = vmatpush2.xpose.msra.mxu0 0.0
        %2169 = vmatprep.subr.mxu0 0.0
        %2170 = vmatpush2.xpose.msra.mxu0 0.0
        %2171 = vmatprep.subr.mxu0 0.0
        %2172 = vmatpush2.xpose.msra.mxu0 0.0
        %2173 = vmatprep.subr.mxu0 0.0
        %2174 = vmatpush2.xpose.msra.mxu0 0.0
        %2175 = vmatprep.subr.mxu0 0.0
        %2176 = vmatpush2.xpose.msra.mxu0 0.0
        %2177 = vmatprep.subr.mxu0 0.0
        %2178 = vmatpush2.xpose.msra.mxu0 0.0
        %2179 = vmatprep.subr.mxu0 0.0
        %2180 = vmatpush2.xpose.msra.mxu0 0.0
        %2181 = vmatprep.subr.mxu0 0.0
        %2182 = vmatpush2.xpose.msra.mxu0 0.0
        %2183 = vmatprep.subr.mxu0 0.0
        %2184 = vmatpush2.xpose.msra.mxu0 0.0
        %2185 = vmatprep.subr.mxu0 0.0
        %2186 = vmatpush2.xpose.msra.mxu0 0.0
        %2187 = vmatprep.subr.mxu0 0.0
        %2188 = vmatpush2.xpose.msra.mxu0 0.0
        %2189 = vmatprep.subr.mxu0 0.0
        %2190 = vmatpush2.xpose.msra.mxu0 0.0
        %2191 = vmatprep.subr.mxu0 0.0
        %2192 = vmatpush2.xpose.msra.mxu0 0.0
        %2193 = vmatprep.mubr.f32.mxu0 0.0
        %2194 = vmatmul.mubr.f32.gmra.mxu0 %v2125
        %v2195 = vpop.f32.mrf.mxu0
        %v2196 = vadd.f32 0.0, %v2195
        %v2197 = vpop.f32.mrf.mxu0
        %2198 = vdwg.mxu0
        %2199 = vrot.lane.b32.xlu0 %v1908, 112
        %v2200 = vpop.permute.xlu0 %2199
        %2201 = vrot.lane.b32.xlu0 %v1971, 112
        %v2202 = vpop.permute.xlu0 %2201
        %v2203 = vsel %vm2044, %v2200, 0
        %v2205 = vsel %vm2044, %v2202, 0
        %2207 = vmatprep.subr.mxu0 0.0
        %2208 = vmatpush1.xpose.msra.mxu0 0.0
        %2209 = vmatprep.subr.mxu0 0.0
        %2210 = vmatpush1.xpose.msra.mxu0 0.0
        %2211 = vmatprep.subr.mxu0 0.0
        %2212 = vmatpush1.xpose.msra.mxu0 0.0
        %2213 = vmatprep.subr.mxu0 0.0
        %2214 = vmatpush1.xpose.msra.mxu0 0.0
        %2215 = vmatprep.subr.mxu0 0.0
        %2216 = vmatpush1.xpose.msra.mxu0 0.0
        %2217 = vmatprep.subr.mxu0 0.0
        %2218 = vmatpush1.xpose.msra.mxu0 0.0
        %2219 = vmatprep.subr.mxu0 0.0
        %2220 = vmatpush1.xpose.msra.mxu0 0.0
        %2221 = vmatprep.subr.mxu0 0.0
        %2222 = vmatpush1.xpose.msra.mxu0 0.0
        %2223 = vmatprep.subr.mxu0 0.0
        %2224 = vmatpush1.xpose.msra.mxu0 0.0
        %2225 = vmatprep.subr.mxu0 0.0
        %2226 = vmatpush1.xpose.msra.mxu0 0.0
        %2227 = vmatprep.subr.mxu0 0.0
        %2228 = vmatpush1.xpose.msra.mxu0 0.0
        %2229 = vmatprep.subr.mxu0 0.0
        %2230 = vmatpush1.xpose.msra.mxu0 0.0
        %2231 = vmatprep.subr.mxu0 0.0
        %2232 = vmatpush1.xpose.msra.mxu0 0.0
        %2233 = vmatprep.subr.mxu0 0.0
        %2234 = vmatpush1.xpose.msra.mxu0 0.0
        %2235 = vmatprep.subr.mxu0 0.0
        %2236 = vmatpush1.xpose.msra.mxu0 0.0
        %2237 = vmatprep.subr.mxu0 0.0
        %2238 = vmatpush1.xpose.msra.mxu0 %v2205
        %2239 = vmatprep.subr.mxu0 0.0
        %2240 = vmatpush2.xpose.msra.mxu0 0.0
        %2241 = vmatprep.subr.mxu0 0.0
        %2242 = vmatpush2.xpose.msra.mxu0 0.0
        %2243 = vmatprep.subr.mxu0 0.0
        %2244 = vmatpush2.xpose.msra.mxu0 0.0
        %2245 = vmatprep.subr.mxu0 0.0
        %2246 = vmatpush2.xpose.msra.mxu0 0.0
        %2247 = vmatprep.subr.mxu0 0.0
        %2248 = vmatpush2.xpose.msra.mxu0 0.0
        %2249 = vmatprep.subr.mxu0 0.0
        %2250 = vmatpush2.xpose.msra.mxu0 0.0
        %2251 = vmatprep.subr.mxu0 0.0
        %2252 = vmatpush2.xpose.msra.mxu0 0.0
        %2253 = vmatprep.subr.mxu0 0.0
        %2254 = vmatpush2.xpose.msra.mxu0 0.0
        %2255 = vmatprep.subr.mxu0 0.0
        %2256 = vmatpush2.xpose.msra.mxu0 0.0
        %2257 = vmatprep.subr.mxu0 0.0
        %2258 = vmatpush2.xpose.msra.mxu0 0.0
        %2259 = vmatprep.subr.mxu0 0.0
        %2260 = vmatpush2.xpose.msra.mxu0 0.0
        %2261 = vmatprep.subr.mxu0 0.0
        %2262 = vmatpush2.xpose.msra.mxu0 0.0
        %2263 = vmatprep.subr.mxu0 0.0
        %2264 = vmatpush2.xpose.msra.mxu0 0.0
        %2265 = vmatprep.subr.mxu0 0.0
        %2266 = vmatpush2.xpose.msra.mxu0 0.0
        %2267 = vmatprep.subr.mxu0 0.0
        %2268 = vmatpush2.xpose.msra.mxu0 0.0
        %2269 = vmatprep.subr.mxu0 0.0
        %2270 = vmatpush2.xpose.msra.mxu0 0.0
        %2271 = vmatprep.mubr.f32.mxu0 0.0
        %2272 = vmatmul.mubr.f32.gmra.mxu0 %v2203
        %v2273 = vpop.f32.mrf.mxu0
        %v2274 = vadd.f32 0.0, %v2273
        %v2275 = vpop.f32.mrf.mxu0
        %2276 = vdwg.mxu0
        %2277 = vrot.lane.b32.xlu0 %v1908, 104
        %v2278 = vpop.permute.xlu0 %2277
        %2279 = vrot.lane.b32.xlu0 %v1971, 104
        %v2280 = vpop.permute.xlu0 %2279
        %v2281 = vsel %vm2044, %v2278, 0
        %v2283 = vsel %vm2044, %v2280, 0
        %2285 = vmatprep.subr.mxu0 0.0
        %2286 = vmatpush1.xpose.msra.mxu0 0.0
        %2287 = vmatprep.subr.mxu0 0.0
        %2288 = vmatpush1.xpose.msra.mxu0 0.0
        %2289 = vmatprep.subr.mxu0 0.0
        %2290 = vmatpush1.xpose.msra.mxu0 0.0
        %2291 = vmatprep.subr.mxu0 0.0
        %2292 = vmatpush1.xpose.msra.mxu0 0.0
        %2293 = vmatprep.subr.mxu0 0.0
        %2294 = vmatpush1.xpose.msra.mxu0 0.0
        %2295 = vmatprep.subr.mxu0 0.0
        %2296 = vmatpush1.xpose.msra.mxu0 0.0
        %2297 = vmatprep.subr.mxu0 0.0
        %2298 = vmatpush1.xpose.msra.mxu0 0.0
        %2299 = vmatprep.subr.mxu0 0.0
        %2300 = vmatpush1.xpose.msra.mxu0 0.0
        %2301 = vmatprep.subr.mxu0 0.0
        %2302 = vmatpush1.xpose.msra.mxu0 0.0
        %2303 = vmatprep.subr.mxu0 0.0
        %2304 = vmatpush1.xpose.msra.mxu0 0.0
        %2305 = vmatprep.subr.mxu0 0.0
        %2306 = vmatpush1.xpose.msra.mxu0 0.0
        %2307 = vmatprep.subr.mxu0 0.0
        %2308 = vmatpush1.xpose.msra.mxu0 0.0
        %2309 = vmatprep.subr.mxu0 0.0
        %2310 = vmatpush1.xpose.msra.mxu0 0.0
        %2311 = vmatprep.subr.mxu0 0.0
        %2312 = vmatpush1.xpose.msra.mxu0 0.0
        %2313 = vmatprep.subr.mxu0 0.0
        %2314 = vmatpush1.xpose.msra.mxu0 0.0
        %2315 = vmatprep.subr.mxu0 0.0
        %2316 = vmatpush1.xpose.msra.mxu0 %v2283
        %2317 = vmatprep.subr.mxu0 0.0
        %2318 = vmatpush2.xpose.msra.mxu0 0.0
        %2319 = vmatprep.subr.mxu0 0.0
        %2320 = vmatpush2.xpose.msra.mxu0 0.0
        %2321 = vmatprep.subr.mxu0 0.0
        %2322 = vmatpush2.xpose.msra.mxu0 0.0
        %2323 = vmatprep.subr.mxu0 0.0
        %2324 = vmatpush2.xpose.msra.mxu0 0.0
        %2325 = vmatprep.subr.mxu0 0.0
        %2326 = vmatpush2.xpose.msra.mxu0 0.0
        %2327 = vmatprep.subr.mxu0 0.0
        %2328 = vmatpush2.xpose.msra.mxu0 0.0
        %2329 = vmatprep.subr.mxu0 0.0
        %2330 = vmatpush2.xpose.msra.mxu0 0.0
        %2331 = vmatprep.subr.mxu0 0.0
        %2332 = vmatpush2.xpose.msra.mxu0 0.0
        %2333 = vmatprep.subr.mxu0 0.0
        %2334 = vmatpush2.xpose.msra.mxu0 0.0
        %2335 = vmatprep.subr.mxu0 0.0
        %2336 = vmatpush2.xpose.msra.mxu0 0.0
        %2337 = vmatprep.subr.mxu0 0.0
        %2338 = vmatpush2.xpose.msra.mxu0 0.0
        %2339 = vmatprep.subr.mxu0 0.0
        %2340 = vmatpush2.xpose.msra.mxu0 0.0
        %2341 = vmatprep.subr.mxu0 0.0
        %2342 = vmatpush2.xpose.msra.mxu0 0.0
        %2343 = vmatprep.subr.mxu0 0.0
        %2344 = vmatpush2.xpose.msra.mxu0 0.0
        %2345 = vmatprep.subr.mxu0 0.0
        %2346 = vmatpush2.xpose.msra.mxu0 0.0
        %2347 = vmatprep.subr.mxu0 0.0
        %2348 = vmatpush2.xpose.msra.mxu0 0.0
        %2349 = vmatprep.mubr.f32.mxu0 0.0
        %2350 = vmatmul.mubr.f32.gmra.mxu0 %v2281
        %v2351 = vpop.f32.mrf.mxu0
        %v2352 = vadd.f32 0.0, %v2351
        %v2353 = vpop.f32.mrf.mxu0
        %2354 = vdwg.mxu0
        %v2355 = vadd.f32 %v2118, %v1837
        %v2356 = vadd.f32 %v2196, %v1837
        %v2357 = vadd.f32 %v2274, %v1837
        %v2358 = vadd.f32 %v2352, %v1837
        %v2359 = vsel %vm2044, %v2355, -inf
        %2360 = vmax.xlane.f32.xlu0 %v2359
        %v2361 = vpop.xlane.xlu0 %2360
        %v2362 = vsel %vm2044, %v2356, -inf
        %2363 = vmax.xlane.f32.xlu0 %v2362
        %v2364 = vpop.xlane.xlu0 %2363
        %v2365 = vsel %vm2044, %v2357, -inf
        %2366 = vmax.xlane.f32.xlu0 %v2365
        %v2367 = vpop.xlane.xlu0 %2366
        %v2368 = vsel %vm2044, %v2358, -inf
        %2369 = vmax.xlane.f32.xlu0 %v2368
        %v2370 = vpop.xlane.xlu0 %2369
        %v2371 = vsub.f32 %v2355, %v2361
        %v2372 = vsub.f32 %v2356, %v2364
        %v2373 = vsub.f32 %v2357, %v2367
        %v2374 = vsub.f32 %v2358, %v2370
        %v2375 = vmul.f32 %v2371, 1.442695
        %v2376 = vpow.pop %v2375
        %v2377 = vmul.f32 %v2372, 1.442695
        %v2378 = vpow.pop %v2377
        %v2379 = vmul.f32 %v2373, 1.442695
        %v2380 = vpow.pop %v2379
        %v2381 = vmul.f32 %v2374, 1.442695
        %v2382 = vpow.pop %v2381
        %v2383 = vsel %vm2044, %v2376, 0.0
        %2384 = vadd.xlane.f32.xlu0 %v2383
        %v2385 = vpop.xlane.xlu0 %2384
        %v2386 = vsel %vm2044, %v2378, 0.0
        %2387 = vadd.xlane.f32.xlu0 %v2386
        %v2388 = vpop.xlane.xlu0 %2387
        %v2389 = vsel %vm2044, %v2380, 0.0
        %2390 = vadd.xlane.f32.xlu0 %v2389
        %v2391 = vpop.xlane.xlu0 %2390
        %v2392 = vsel %vm2044, %v2382, 0.0
        %2393 = vadd.xlane.f32.xlu0 %v2392
        %v2394 = vpop.xlane.xlu0 %2393
        %v2395 = vrcp.pop %v2385
        %v2396 = vrcp.pop %v2388
        %v2397 = vrcp.pop %v2391
        %v2398 = vrcp.pop %v2394
        %v2399 = vmul.f32 %v2376, %v2395
        %v2400 = vmul.f32 %v2378, %v2396
        %v2401 = vmul.f32 %v2380, %v2397
        %v2402 = vmul.f32 %v2382, %v2398
        %v2404 = vsel %vm2044, %v2399, 0
        %2406 = vmatprep.subr.mxu0 0.0
        %2407 = vmatpush1.msra.mxu0 0.0
        %2408 = vmatprep.subr.mxu0 0.0
        %2409 = vmatpush1.msra.mxu0 0.0
        %2410 = vmatprep.subr.mxu0 0.0
        %2411 = vmatpush1.msra.mxu0 0.0
        %2412 = vmatprep.subr.mxu0 0.0
        %2413 = vmatpush1.msra.mxu0 0.0
        %2414 = vmatprep.subr.mxu0 0.0
        %2415 = vmatpush1.msra.mxu0 0.0
        %2416 = vmatprep.subr.mxu0 0.0
        %2417 = vmatpush1.msra.mxu0 0.0
        %2418 = vmatprep.subr.mxu0 0.0
        %2419 = vmatpush1.msra.mxu0 0.0
        %2420 = vmatprep.subr.mxu0 0.0
        %2421 = vmatpush1.msra.mxu0 0.0
        %2422 = vmatprep.subr.mxu0 0.0
        %2423 = vmatpush1.msra.mxu0 0.0
        %2424 = vmatprep.subr.mxu0 0.0
        %2425 = vmatpush1.msra.mxu0 0.0
        %2426 = vmatprep.subr.mxu0 0.0
        %2427 = vmatpush1.msra.mxu0 0.0
        %2428 = vmatprep.subr.mxu0 0.0
        %2429 = vmatpush1.msra.mxu0 0.0
        %2430 = vmatprep.subr.mxu0 0.0
        %2431 = vmatpush1.msra.mxu0 0.0
        %2432 = vmatprep.subr.mxu0 0.0
        %2433 = vmatpush1.msra.mxu0 0.0
        %2434 = vmatprep.subr.mxu0 0.0
        %2435 = vmatpush1.msra.mxu0 0.0
        %2436 = vmatprep.subr.mxu0 0.0
        %2437 = vmatpush1.msra.mxu0 %v2034
        %2438 = vmatprep.subr.mxu0 0.0
        %2439 = vmatpush2.msra.mxu0 0.0
        %2440 = vmatprep.subr.mxu0 0.0
        %2441 = vmatpush2.msra.mxu0 0.0
        %2442 = vmatprep.subr.mxu0 0.0
        %2443 = vmatpush2.msra.mxu0 0.0
        %2444 = vmatprep.subr.mxu0 0.0
        %2445 = vmatpush2.msra.mxu0 0.0
        %2446 = vmatprep.subr.mxu0 0.0
        %2447 = vmatpush2.msra.mxu0 0.0
        %2448 = vmatprep.subr.mxu0 0.0
        %2449 = vmatpush2.msra.mxu0 0.0
        %2450 = vmatprep.subr.mxu0 0.0
        %2451 = vmatpush2.msra.mxu0 0.0
        %2452 = vmatprep.subr.mxu0 0.0
        %2453 = vmatpush2.msra.mxu0 0.0
        %2454 = vmatprep.subr.mxu0 0.0
        %2455 = vmatpush2.msra.mxu0 0.0
        %2456 = vmatprep.subr.mxu0 0.0
        %2457 = vmatpush2.msra.mxu0 0.0
        %2458 = vmatprep.subr.mxu0 0.0
        %2459 = vmatpush2.msra.mxu0 0.0
        %2460 = vmatprep.subr.mxu0 0.0
        %2461 = vmatpush2.msra.mxu0 0.0
        %2462 = vmatprep.subr.mxu0 0.0
        %2463 = vmatpush2.msra.mxu0 0.0
        %2464 = vmatprep.subr.mxu0 0.0
        %2465 = vmatpush2.msra.mxu0 0.0
        %2466 = vmatprep.subr.mxu0 0.0
        %2467 = vmatpush2.msra.mxu0 0.0
        %2468 = vmatprep.subr.mxu0 0.0
        %2469 = vmatpush2.msra.mxu0 0.0
        %2470 = vmatprep.mubr.f32.mxu0 0.0
        %2471 = vmatmul.mubr.f32.gmra.mxu0 %v2404
        %v2472 = vpop.f32.mrf.mxu0
        %v2473 = vadd.f32 0.0, %v2472
        %v2474 = vpop.f32.mrf.mxu0
        %2475 = vdwg.mxu0
        %2477 = vrot.lane.b32.xlu0 %v2034, 120
        %v2478 = vpop.permute.xlu0 %2477
        %v2481 = vsel %vm2044, %v2400, 0
        %2483 = vmatprep.subr.mxu0 0.0
        %2484 = vmatpush1.msra.mxu0 0.0
        %2485 = vmatprep.subr.mxu0 0.0
        %2486 = vmatpush1.msra.mxu0 0.0
        %2487 = vmatprep.subr.mxu0 0.0
        %2488 = vmatpush1.msra.mxu0 0.0
        %2489 = vmatprep.subr.mxu0 0.0
        %2490 = vmatpush1.msra.mxu0 0.0
        %2491 = vmatprep.subr.mxu0 0.0
        %2492 = vmatpush1.msra.mxu0 0.0
        %2493 = vmatprep.subr.mxu0 0.0
        %2494 = vmatpush1.msra.mxu0 0.0
        %2495 = vmatprep.subr.mxu0 0.0
        %2496 = vmatpush1.msra.mxu0 0.0
        %2497 = vmatprep.subr.mxu0 0.0
        %2498 = vmatpush1.msra.mxu0 0.0
        %2499 = vmatprep.subr.mxu0 0.0
        %2500 = vmatpush1.msra.mxu0 0.0
        %2501 = vmatprep.subr.mxu0 0.0
        %2502 = vmatpush1.msra.mxu0 0.0
        %2503 = vmatprep.subr.mxu0 0.0
        %2504 = vmatpush1.msra.mxu0 0.0
        %2505 = vmatprep.subr.mxu0 0.0
        %2506 = vmatpush1.msra.mxu0 0.0
        %2507 = vmatprep.subr.mxu0 0.0
        %2508 = vmatpush1.msra.mxu0 0.0
        %2509 = vmatprep.subr.mxu0 0.0
        %2510 = vmatpush1.msra.mxu0 0.0
        %2511 = vmatprep.subr.mxu0 0.0
        %2512 = vmatpush1.msra.mxu0 0.0
        %2513 = vmatprep.subr.mxu0 0.0
        %2514 = vmatpush1.msra.mxu0 %v2478
        %2515 = vmatprep.subr.mxu0 0.0
        %2516 = vmatpush2.msra.mxu0 0.0
        %2517 = vmatprep.subr.mxu0 0.0
        %2518 = vmatpush2.msra.mxu0 0.0
        %2519 = vmatprep.subr.mxu0 0.0
        %2520 = vmatpush2.msra.mxu0 0.0
        %2521 = vmatprep.subr.mxu0 0.0
        %2522 = vmatpush2.msra.mxu0 0.0
        %2523 = vmatprep.subr.mxu0 0.0
        %2524 = vmatpush2.msra.mxu0 0.0
        %2525 = vmatprep.subr.mxu0 0.0
        %2526 = vmatpush2.msra.mxu0 0.0
        %2527 = vmatprep.subr.mxu0 0.0
        %2528 = vmatpush2.msra.mxu0 0.0
        %2529 = vmatprep.subr.mxu0 0.0
        %2530 = vmatpush2.msra.mxu0 0.0
        %2531 = vmatprep.subr.mxu0 0.0
        %2532 = vmatpush2.msra.mxu0 0.0
        %2533 = vmatprep.subr.mxu0 0.0
        %2534 = vmatpush2.msra.mxu0 0.0
        %2535 = vmatprep.subr.mxu0 0.0
        %2536 = vmatpush2.msra.mxu0 0.0
        %2537 = vmatprep.subr.mxu0 0.0
        %2538 = vmatpush2.msra.mxu0 0.0
        %2539 = vmatprep.subr.mxu0 0.0
        %2540 = vmatpush2.msra.mxu0 0.0
        %2541 = vmatprep.subr.mxu0 0.0
        %2542 = vmatpush2.msra.mxu0 0.0
        %2543 = vmatprep.subr.mxu0 0.0
        %2544 = vmatpush2.msra.mxu0 0.0
        %2545 = vmatprep.subr.mxu0 0.0
        %2546 = vmatpush2.msra.mxu0 0.0
        %2547 = vmatprep.mubr.f32.mxu0 0.0
        %2548 = vmatmul.mubr.f32.gmra.mxu0 %v2481
        %v2549 = vpop.f32.mrf.mxu0
        %v2550 = vadd.f32 0.0, %v2549
        %v2551 = vpop.f32.mrf.mxu0
        %2552 = vdwg.mxu0
        %2553 = vrot.lane.b32.xlu0 %v2034, 112
        %v2554 = vpop.permute.xlu0 %2553
        %v2557 = vsel %vm2044, %v2401, 0
        %2559 = vmatprep.subr.mxu0 0.0
        %2560 = vmatpush1.msra.mxu0 0.0
        %2561 = vmatprep.subr.mxu0 0.0
        %2562 = vmatpush1.msra.mxu0 0.0
        %2563 = vmatprep.subr.mxu0 0.0
        %2564 = vmatpush1.msra.mxu0 0.0
        %2565 = vmatprep.subr.mxu0 0.0
        %2566 = vmatpush1.msra.mxu0 0.0
        %2567 = vmatprep.subr.mxu0 0.0
        %2568 = vmatpush1.msra.mxu0 0.0
        %2569 = vmatprep.subr.mxu0 0.0
        %2570 = vmatpush1.msra.mxu0 0.0
        %2571 = vmatprep.subr.mxu0 0.0
        %2572 = vmatpush1.msra.mxu0 0.0
        %2573 = vmatprep.subr.mxu0 0.0
        %2574 = vmatpush1.msra.mxu0 0.0
        %2575 = vmatprep.subr.mxu0 0.0
        %2576 = vmatpush1.msra.mxu0 0.0
        %2577 = vmatprep.subr.mxu0 0.0
        %2578 = vmatpush1.msra.mxu0 0.0
        %2579 = vmatprep.subr.mxu0 0.0
        %2580 = vmatpush1.msra.mxu0 0.0
        %2581 = vmatprep.subr.mxu0 0.0
        %2582 = vmatpush1.msra.mxu0 0.0
        %2583 = vmatprep.subr.mxu0 0.0
        %2584 = vmatpush1.msra.mxu0 0.0
        %2585 = vmatprep.subr.mxu0 0.0
        %2586 = vmatpush1.msra.mxu0 0.0
        %2587 = vmatprep.subr.mxu0 0.0
        %2588 = vmatpush1.msra.mxu0 0.0
        %2589 = vmatprep.subr.mxu0 0.0
        %2590 = vmatpush1.msra.mxu0 %v2554
        %2591 = vmatprep.subr.mxu0 0.0
        %2592 = vmatpush2.msra.mxu0 0.0
        %2593 = vmatprep.subr.mxu0 0.0
        %2594 = vmatpush2.msra.mxu0 0.0
        %2595 = vmatprep.subr.mxu0 0.0
        %2596 = vmatpush2.msra.mxu0 0.0
        %2597 = vmatprep.subr.mxu0 0.0
        %2598 = vmatpush2.msra.mxu0 0.0
        %2599 = vmatprep.subr.mxu0 0.0
        %2600 = vmatpush2.msra.mxu0 0.0
        %2601 = vmatprep.subr.mxu0 0.0
        %2602 = vmatpush2.msra.mxu0 0.0
        %2603 = vmatprep.subr.mxu0 0.0
        %2604 = vmatpush2.msra.mxu0 0.0
        %2605 = vmatprep.subr.mxu0 0.0
        %2606 = vmatpush2.msra.mxu0 0.0
        %2607 = vmatprep.subr.mxu0 0.0
        %2608 = vmatpush2.msra.mxu0 0.0
        %2609 = vmatprep.subr.mxu0 0.0
        %2610 = vmatpush2.msra.mxu0 0.0
        %2611 = vmatprep.subr.mxu0 0.0
        %2612 = vmatpush2.msra.mxu0 0.0
        %2613 = vmatprep.subr.mxu0 0.0
        %2614 = vmatpush2.msra.mxu0 0.0
        %2615 = vmatprep.subr.mxu0 0.0
        %2616 = vmatpush2.msra.mxu0 0.0
        %2617 = vmatprep.subr.mxu0 0.0
        %2618 = vmatpush2.msra.mxu0 0.0
        %2619 = vmatprep.subr.mxu0 0.0
        %2620 = vmatpush2.msra.mxu0 0.0
        %2621 = vmatprep.subr.mxu0 0.0
        %2622 = vmatpush2.msra.mxu0 0.0
        %2623 = vmatprep.mubr.f32.mxu0 0.0
        %2624 = vmatmul.mubr.f32.gmra.mxu0 %v2557
        %v2625 = vpop.f32.mrf.mxu0
        %v2626 = vadd.f32 0.0, %v2625
        %v2627 = vpop.f32.mrf.mxu0
        %2628 = vdwg.mxu0
        %2629 = vrot.lane.b32.xlu0 %v2034, 104
        %v2630 = vpop.permute.xlu0 %2629
        %v2633 = vsel %vm2044, %v2402, 0
        %2635 = vmatprep.subr.mxu0 0.0
        %2636 = vmatpush1.msra.mxu0 0.0
        %2637 = vmatprep.subr.mxu0 0.0
        %2638 = vmatpush1.msra.mxu0 0.0
        %2639 = vmatprep.subr.mxu0 0.0
        %2640 = vmatpush1.msra.mxu0 0.0
        %2641 = vmatprep.subr.mxu0 0.0
        %2642 = vmatpush1.msra.mxu0 0.0
        %2643 = vmatprep.subr.mxu0 0.0
        %2644 = vmatpush1.msra.mxu0 0.0
        %2645 = vmatprep.subr.mxu0 0.0
        %2646 = vmatpush1.msra.mxu0 0.0
        %2647 = vmatprep.subr.mxu0 0.0
        %2648 = vmatpush1.msra.mxu0 0.0
        %2649 = vmatprep.subr.mxu0 0.0
        %2650 = vmatpush1.msra.mxu0 0.0
        %2651 = vmatprep.subr.mxu0 0.0
        %2652 = vmatpush1.msra.mxu0 0.0
        %2653 = vmatprep.subr.mxu0 0.0
        %2654 = vmatpush1.msra.mxu0 0.0
        %2655 = vmatprep.subr.mxu0 0.0
        %2656 = vmatpush1.msra.mxu0 0.0
        %2657 = vmatprep.subr.mxu0 0.0
        %2658 = vmatpush1.msra.mxu0 0.0
        %2659 = vmatprep.subr.mxu0 0.0
        %2660 = vmatpush1.msra.mxu0 0.0
        %2661 = vmatprep.subr.mxu0 0.0
        %2662 = vmatpush1.msra.mxu0 0.0
        %2663 = vmatprep.subr.mxu0 0.0
        %2664 = vmatpush1.msra.mxu0 0.0
        %2665 = vmatprep.subr.mxu0 0.0
        %2666 = vmatpush1.msra.mxu0 %v2630
        %2667 = vmatprep.subr.mxu0 0.0
        %2668 = vmatpush2.msra.mxu0 0.0
        %2669 = vmatprep.subr.mxu0 0.0
        %2670 = vmatpush2.msra.mxu0 0.0
        %2671 = vmatprep.subr.mxu0 0.0
        %2672 = vmatpush2.msra.mxu0 0.0
        %2673 = vmatprep.subr.mxu0 0.0
        %2674 = vmatpush2.msra.mxu0 0.0
        %2675 = vmatprep.subr.mxu0 0.0
        %2676 = vmatpush2.msra.mxu0 0.0
        %2677 = vmatprep.subr.mxu0 0.0
        %2678 = vmatpush2.msra.mxu0 0.0
        %2679 = vmatprep.subr.mxu0 0.0
        %2680 = vmatpush2.msra.mxu0 0.0
        %2681 = vmatprep.subr.mxu0 0.0
        %2682 = vmatpush2.msra.mxu0 0.0
        %2683 = vmatprep.subr.mxu0 0.0
        %2684 = vmatpush2.msra.mxu0 0.0
        %2685 = vmatprep.subr.mxu0 0.0
        %2686 = vmatpush2.msra.mxu0 0.0
        %2687 = vmatprep.subr.mxu0 0.0
        %2688 = vmatpush2.msra.mxu0 0.0
        %2689 = vmatprep.subr.mxu0 0.0
        %2690 = vmatpush2.msra.mxu0 0.0
        %2691 = vmatprep.subr.mxu0 0.0
        %2692 = vmatpush2.msra.mxu0 0.0
        %2693 = vmatprep.subr.mxu0 0.0
        %2694 = vmatpush2.msra.mxu0 0.0
        %2695 = vmatprep.subr.mxu0 0.0
        %2696 = vmatpush2.msra.mxu0 0.0
        %2697 = vmatprep.subr.mxu0 0.0
        %2698 = vmatpush2.msra.mxu0 0.0
        %2699 = vmatprep.mubr.f32.mxu0 0.0
        %2700 = vmatmul.mubr.f32.gmra.mxu0 %v2633
        %v2701 = vpop.f32.mrf.mxu0
        %v2702 = vadd.f32 0.0, %v2701
        %v2703 = vpop.f32.mrf.mxu0
        %2704 = vdwg.mxu0
        %2706 = vrot.lane.b32.xlu0 %v2550, 8
        %v2707 = vpop.permute.xlu0 %2706
        %2710 = vrot.lane.b32.xlu0 %v2626, 16
        %v2711 = vpop.permute.xlu0 %2710
        %2714 = vrot.lane.b32.xlu0 %v2702, 24
        %v2715 = vpop.permute.xlu0 %2714
        %v2717 = vsel %vm2044, %v2473, %v2707
        %vm2718 = vcmask 130048
        %v2719 = vsel %vm2718, %v2717, %v2711
        %vm2720 = vcmask 195584
        %v2721 = vsel %vm2720, %v2719, %v2715
        %v2722 = vpack.c.bf16 %v2721, %v2721
        %v2724 = vlaneseq
        %v2725 = vshrl.u32 %v2724, 7
        %v2726 = vsub.s32 0, %v2725
        %v2727 = vrot.slane %v2043, %v2726
        %v2733 = vunpack.c.l.b16 %v2039
        %v2734 = vunpack.c.l.b16 %v2040
        %v2735 = vunpack.c.l.b16 %v2041
        %v2736 = vunpack.c.l.b16 %v2042
        %v2737 = vpack.c.b16 %v2734, %v2733
        %v2738 = vpack.c.b16 %v2736, %v2735
        %v2742 = vsel %vm1869, %v2722, 0
        %2744 = vmatprep.subr.bf16.mxu0 0
        %2745 = vmatpush1.bf16.msra.mxu0 0
        %2746 = vmatprep.subr.bf16.mxu0 0
        %2747 = vmatpush1.bf16.msra.mxu0 0
        %2748 = vmatprep.subr.bf16.mxu0 0
        %2749 = vmatpush1.bf16.msra.mxu0 0
        %2750 = vmatprep.subr.bf16.mxu0 0
        %2751 = vmatpush1.bf16.msra.mxu0 0
        %2752 = vmatprep.subr.bf16.mxu0 0
        %2753 = vmatpush1.bf16.msra.mxu0 0
        %2754 = vmatprep.subr.bf16.mxu0 0
        %2755 = vmatpush1.bf16.msra.mxu0 0
        %2756 = vmatprep.subr.bf16.mxu0 0
        %2757 = vmatpush1.bf16.msra.mxu0 %v2738
        %2758 = vmatprep.subr.bf16.mxu0 0
        %2759 = vmatpush1.bf16.msra.mxu0 %v2737
        %2760 = vmatprep.subr.bf16.mxu0 0
        %2761 = vmatpush2.bf16.msra.mxu0 0
        %2762 = vmatprep.subr.bf16.mxu0 0
        %2763 = vmatpush2.bf16.msra.mxu0 0
        %2764 = vmatprep.subr.bf16.mxu0 0
        %2765 = vmatpush2.bf16.msra.mxu0 0
        %2766 = vmatprep.subr.bf16.mxu0 0
        %2767 = vmatpush2.bf16.msra.mxu0 0
        %2768 = vmatprep.subr.bf16.mxu0 0
        %2769 = vmatpush2.bf16.msra.mxu0 0
        %2770 = vmatprep.subr.bf16.mxu0 0
        %2771 = vmatpush2.bf16.msra.mxu0 0
        %2772 = vmatprep.subr.bf16.mxu0 0
        %2773 = vmatpush2.bf16.msra.mxu0 0
        %2774 = vmatprep.subr.bf16.mxu0 0
        %2775 = vmatpush2.bf16.msra.mxu0 0
        %2776 = vmatprep.mubr.bf16.mxu0 0
        %2777 = vmatmul.mubr.bf16.gmra.mxu0 %v2742
        %v2778 = vpop.f32.mrf.mxu0
        %v2779 = vadd.f32 %v2727, %v2778
        %v2780 = vpop.f32.mrf.mxu0
        %v2781 = vpop.f32.mrf.mxu0
        %v2782 = vpop.f32.mrf.mxu0
        %2783 = vdwg.mxu0
        %v2784 = vadd.f32 %v1824, %v2779
        %v2785 = vld [vmem:[%s39] sm:$0x1]
        %v2786 = vld [vmem:[%s41] sm:$0x1]
        %v2787 = vsel %vm1869, %v2784, 0.0
        %2788 = vadd.xlane.f32.xlu0 %v2787
        %v2789 = vpop.xlane.xlu0 %2788
        %v2790 = vrcp.pop 32.0
        %v2791 = vmul.f32 %v2789, %v2790
        %v2792 = vsub.f32 %v2784, %v2791
        %v2793 = vmul.f32 %v2792, %v2792
        %v2794 = vsel %vm1869, %v2793, 0.0
        %2795 = vadd.xlane.f32.xlu0 %v2794
        %v2796 = vpop.xlane.xlu0 %2795
        %v2797 = vmul.f32 %v2796, %v2790
        %v2798 = vadd.f32 %v2797, 1e-05
        %v2799 = vrsqrt.pop %v2798
        %v2800 = vmul.f32 %v2792, %v2799
        %v2802 = vlaneseq
        %v2803 = vshrl.u32 %v2802, 7
        %v2804 = vsub.s32 0, %v2803
        %v2805 = vrot.slane %v2785, %v2804
        %v2807 = vmul.f32 %v2800, %v2805
        %v2809 = vlaneseq
        %v2810 = vshrl.u32 %v2809, 7
        %v2811 = vsub.s32 0, %v2810
        %v2812 = vrot.slane %v2786, %v2811
        %v2814 = vadd.f32 %v2807, %v2812
        %v2815 = vld [vmem:[%s31] sm:$0xf]
        %v2816 = vld [vmem:[%s31 + $0x4] sm:$0xf]
        %v2817 = vld [vmem:[%s31 + $0x8] sm:$0xf]
        %v2818 = vld [vmem:[%s31 + $0xc] sm:$0xf]
        %v2819 = vld [vmem:[%s33] sm:$0x1]
        %v2820 = vpack.c.bf16 %v2814, %v2814
        %v2822 = vlaneseq
        %v2823 = vshrl.u32 %v2822, 7
        %v2824 = vsub.s32 0, %v2823
        %v2825 = vrot.slane %v2819, %v2824
        %v2831 = vunpack.c.l.b16 %v2815
        %v2832 = vunpack.c.l.b16 %v2816
        %v2833 = vunpack.c.l.b16 %v2817
        %v2834 = vunpack.c.l.b16 %v2818
        %v2835 = vpack.c.b16 %v2832, %v2831
        %v2836 = vpack.c.b16 %v2834, %v2833
        %v2840 = vsel %vm1869, %v2820, 0
        %2842 = vmatprep.subr.bf16.mxu0 0
        %2843 = vmatpush1.bf16.msra.mxu0 0
        %2844 = vmatprep.subr.bf16.mxu0 0
        %2845 = vmatpush1.bf16.msra.mxu0 0
        %2846 = vmatprep.subr.bf16.mxu0 0
        %2847 = vmatpush1.bf16.msra.mxu0 0
        %2848 = vmatprep.subr.bf16.mxu0 0
        %2849 = vmatpush1.bf16.msra.mxu0 0
        %2850 = vmatprep.subr.bf16.mxu0 0
        %2851 = vmatpush1.bf16.msra.mxu0 0
        %2852 = vmatprep.subr.bf16.mxu0 0
        %2853 = vmatpush1.bf16.msra.mxu0 0
        %2854 = vmatprep.subr.bf16.mxu0 0
        %2855 = vmatpush1.bf16.msra.mxu0 %v2836
        %2856 = vmatprep.subr.bf16.mxu0 0
        %2857 = vmatpush1.bf16.msra.mxu0 %v2835
        %2858 = vmatprep.subr.bf16.mxu0 0
        %2859 = vmatpush2.bf16.msra.mxu0 0
        %2860 = vmatprep.subr.bf16.mxu0 0
        %2861 = vmatpush2.bf16.msra.mxu0 0
        %2862 = vmatprep.subr.bf16.mxu0 0
        %2863 = vmatpush2.bf16.msra.mxu0 0
        %2864 = vmatprep.subr.bf16.mxu0 0
        %2865 = vmatpush2.bf16.msra.mxu0 0
        %2866 = vmatprep.subr.bf16.mxu0 0
        %2867 = vmatpush2.bf16.msra.mxu0 0
        %2868 = vmatprep.subr.bf16.mxu0 0
        %2869 = vmatpush2.bf16.msra.mxu0 0
        %2870 = vmatprep.subr.bf16.mxu0 0
        %2871 = vmatpush2.bf16.msra.mxu0 0
        %2872 = vmatprep.subr.bf16.mxu0 0
        %2873 = vmatpush2.bf16.msra.mxu0 0
        %2874 = vmatprep.mubr.bf16.mxu0 0
        %2875 = vmatmul.mubr.bf16.gmra.mxu0 %v2840
        %v2876 = vpop.f32.mrf.mxu0
        %v2877 = vadd.f32 %v2825, %v2876
        %v2878 = vpop.f32.mrf.mxu0
        %v2879 = vpop.f32.mrf.mxu0
        %v2880 = vpop.f32.mrf.mxu0
        %2881 = vdwg.mxu0
        %v2882 = vmax.f32 %v2877, 0.0
        %v2883 = vld [vmem:[%s35] sm:$0xf]
        %v2884 = vld [vmem:[%s35 + $0x4] sm:$0xf]
        %v2885 = vld [vmem:[%s35 + $0x8] sm:$0xf]
        %v2886 = vld [vmem:[%s35 + $0xc] sm:$0xf]
        %v2887 = vld [vmem:[%s35 + $0x10] sm:$0xf]
        %v2888 = vld [vmem:[%s35 + $0x14] sm:$0xf]
        %v2889 = vld [vmem:[%s35 + $0x18] sm:$0xf]
        %v2890 = vld [vmem:[%s35 + $0x1c] sm:$0xf]
        %v2891 = vld [vmem:[%s37] sm:$0x1]
        %v2892 = vpack.c.bf16 %v2882, %v2882
        %v2894 = vlaneseq
        %v2895 = vshrl.u32 %v2894, 7
        %v2896 = vsub.s32 0, %v2895
        %v2897 = vrot.slane %v2891, %v2896
        %v2907 = vunpack.c.l.b16 %v2883
        %v2908 = vunpack.c.l.b16 %v2884
        %v2909 = vunpack.c.l.b16 %v2885
        %v2910 = vunpack.c.l.b16 %v2886
        %v2911 = vunpack.c.l.b16 %v2887
        %v2912 = vunpack.c.l.b16 %v2888
        %v2913 = vunpack.c.l.b16 %v2889
        %v2914 = vunpack.c.l.b16 %v2890
        %v2915 = vpack.c.b16 %v2908, %v2907
        %v2916 = vpack.c.b16 %v2910, %v2909
        %v2917 = vpack.c.b16 %v2912, %v2911
        %v2918 = vpack.c.b16 %v2914, %v2913
        %vm2923 = vcmask 523264
        %v2925 = vsel %vm2923, %v2892, 0
        %2927 = vmatprep.subr.bf16.mxu0 0
        %2928 = vmatpush1.bf16.msra.mxu0 0
        %2929 = vmatprep.subr.bf16.mxu0 0
        %2930 = vmatpush1.bf16.msra.mxu0 0
        %2931 = vmatprep.subr.bf16.mxu0 0
        %2932 = vmatpush1.bf16.msra.mxu0 0
        %2933 = vmatprep.subr.bf16.mxu0 0
        %2934 = vmatpush1.bf16.msra.mxu0 0
        %2935 = vmatprep.subr.bf16.mxu0 0
        %2936 = vmatpush1.bf16.msra.mxu0 %v2918
        %2937 = vmatprep.subr.bf16.mxu0 0
        %2938 = vmatpush1.bf16.msra.mxu0 %v2917
        %2939 = vmatprep.subr.bf16.mxu0 0
        %2940 = vmatpush1.bf16.msra.mxu0 %v2916
        %2941 = vmatprep.subr.bf16.mxu0 0
        %2942 = vmatpush1.bf16.msra.mxu0 %v2915
        %2943 = vmatprep.subr.bf16.mxu0 0
        %2944 = vmatpush2.bf16.msra.mxu0 0
        %2945 = vmatprep.subr.bf16.mxu0 0
        %2946 = vmatpush2.bf16.msra.mxu0 0
        %2947 = vmatprep.subr.bf16.mxu0 0
        %2948 = vmatpush2.bf16.msra.mxu0 0
        %2949 = vmatprep.subr.bf16.mxu0 0
        %2950 = vmatpush2.bf16.msra.mxu0 0
        %2951 = vmatprep.subr.bf16.mxu0 0
        %2952 = vmatpush2.bf16.msra.mxu0 0
        %2953 = vmatprep.subr.bf16.mxu0 0
        %2954 = vmatpush2.bf16.msra.mxu0 0
        %2955 = vmatprep.subr.bf16.mxu0 0
        %2956 = vmatpush2.bf16.msra.mxu0 0
        %2957 = vmatprep.subr.bf16.mxu0 0
        %2958 = vmatpush2.bf16.msra.mxu0 0
        %2959 = vmatprep.mubr.bf16.mxu0 0
        %2960 = vmatmul.mubr.bf16.gmra.mxu0 %v2925
        %v2961 = vpop.f32.mrf.mxu0
        %v2962 = vadd.f32 %v2897, %v2961
        %v2963 = vpop.f32.mrf.mxu0
        %v2964 = vpop.f32.mrf.mxu0
        %v2965 = vpop.f32.mrf.mxu0
        %2966 = vdwg.mxu0
        %v2967 = vadd.f32 %v2814, %v2962
        %v2968 = vld [vmem:[%s43] sm:$0x1]
        %v2969 = vld [vmem:[%s45] sm:$0x1]
        %v2970 = vsel %vm1869, %v2967, 0.0
        %2971 = vadd.xlane.f32.xlu0 %v2970
        %v2972 = vpop.xlane.xlu0 %2971
        %v2973 = vmul.f32 %v2972, %v2790
        %v2974 = vsub.f32 %v2967, %v2973
        %v2975 = vmul.f32 %v2974, %v2974
        %v2976 = vsel %vm1869, %v2975, 0.0
        %2977 = vadd.xlane.f32.xlu0 %v2976
        %v2978 = vpop.xlane.xlu0 %2977
        %v2979 = vmul.f32 %v2978, %v2790
        %v2980 = vadd.f32 %v2979, 1e-05
        %v2981 = vrsqrt.pop %v2980
        %v2982 = vmul.f32 %v2974, %v2981
        %v2984 = vlaneseq
        %v2985 = vshrl.u32 %v2984, 7
        %v2986 = vsub.s32 0, %v2985
        %v2987 = vrot.slane %v2968, %v2986
        %v2989 = vmul.f32 %v2982, %v2987
        %v2991 = vlaneseq
        %v2992 = vshrl.u32 %v2991, 7
        %v2993 = vsub.s32 0, %v2992
        %v2994 = vrot.slane %v2969, %v2993
        %v2996 = vadd.f32 %v2989, %v2994
        %s2997 = scalar_lea.vmem %s15, 16
        %v2998 = vld [vmem:[%s2997] sm:$0xf]
        %v2999 = vld [vmem:[%s2997 + $0x4] sm:$0xf]
        %v3000 = vld [vmem:[%s2997 + $0x8] sm:$0xf]
        %v3001 = vld [vmem:[%s2997 + $0xc] sm:$0xf]
        %s3002 = scalar_lea.vmem %s17, 1
        %v3003 = vld [vmem:[%s3002] sm:$0x1]
        %v3004 = vpack.c.bf16 %v2996, %v2996
        %v3006 = vlaneseq
        %v3007 = vshrl.u32 %v3006, 7
        %v3008 = vsub.s32 0, %v3007
        %v3009 = vrot.slane %v3003, %v3008
        %v3015 = vunpack.c.l.b16 %v2998
        %v3016 = vunpack.c.l.b16 %v2999
        %v3017 = vunpack.c.l.b16 %v3000
        %v3018 = vunpack.c.l.b16 %v3001
        %v3019 = vpack.c.b16 %v3016, %v3015
        %v3020 = vpack.c.b16 %v3018, %v3017
        %v3024 = vsel %vm1869, %v3004, 0
        %3026 = vmatprep.subr.bf16.mxu0 0
        %3027 = vmatpush1.bf16.msra.mxu0 0
        %3028 = vmatprep.subr.bf16.mxu0 0
        %3029 = vmatpush1.bf16.msra.mxu0 0
        %3030 = vmatprep.subr.bf16.mxu0 0
        %3031 = vmatpush1.bf16.msra.mxu0 0
        %3032 = vmatprep.subr.bf16.mxu0 0
        %3033 = vmatpush1.bf16.msra.mxu0 0
        %3034 = vmatprep.subr.bf16.mxu0 0
        %3035 = vmatpush1.bf16.msra.mxu0 0
        %3036 = vmatprep.subr.bf16.mxu0 0
        %3037 = vmatpush1.bf16.msra.mxu0 0
        %3038 = vmatprep.subr.bf16.mxu0 0
        %3039 = vmatpush1.bf16.msra.mxu0 %v3020
        %3040 = vmatprep.subr.bf16.mxu0 0
        %3041 = vmatpush1.bf16.msra.mxu0 %v3019
        %3042 = vmatprep.subr.bf16.mxu0 0
        %3043 = vmatpush2.bf16.msra.mxu0 0
        %3044 = vmatprep.subr.bf16.mxu0 0
        %3045 = vmatpush2.bf16.msra.mxu0 0
        %3046 = vmatprep.subr.bf16.mxu0 0
        %3047 = vmatpush2.bf16.msra.mxu0 0
        %3048 = vmatprep.subr.bf16.mxu0 0
        %3049 = vmatpush2.bf16.msra.mxu0 0
        %3050 = vmatprep.subr.bf16.mxu0 0
        %3051 = vmatpush2.bf16.msra.mxu0 0
        %3052 = vmatprep.subr.bf16.mxu0 0
        %3053 = vmatpush2.bf16.msra.mxu0 0
        %3054 = vmatprep.subr.bf16.mxu0 0
        %3055 = vmatpush2.bf16.msra.mxu0 0
        %3056 = vmatprep.subr.bf16.mxu0 0
        %3057 = vmatpush2.bf16.msra.mxu0 0
        %3058 = vmatprep.mubr.bf16.mxu0 0
        %3059 = vmatmul.mubr.bf16.gmra.mxu0 %v3024
        %v3060 = vpop.f32.mrf.mxu0
        %v3061 = vadd.f32 %v3009, %v3060
        %v3062 = vpop.f32.mrf.mxu0
        %v3063 = vpop.f32.mrf.mxu0
        %v3064 = vpop.f32.mrf.mxu0
        %3065 = vdwg.mxu0
        %s3066 = scalar_lea.vmem %s19, 16
        %v3067 = vld [vmem:[%s3066] sm:$0xf]
        %v3068 = vld [vmem:[%s3066 + $0x4] sm:$0xf]
        %v3069 = vld [vmem:[%s3066 + $0x8] sm:$0xf]
        %v3070 = vld [vmem:[%s3066 + $0xc] sm:$0xf]
        %s3071 = scalar_lea.vmem %s21, 1
        %v3072 = vld [vmem:[%s3071] sm:$0x1]
        %v3074 = vlaneseq
        %v3075 = vshrl.u32 %v3074, 7
        %v3076 = vsub.s32 0, %v3075
        %v3077 = vrot.slane %v3072, %v3076
        %v3083 = vunpack.c.l.b16 %v3067
        %v3084 = vunpack.c.l.b16 %v3068
        %v3085 = vunpack.c.l.b16 %v3069
        %v3086 = vunpack.c.l.b16 %v3070
        %v3087 = vpack.c.b16 %v3084, %v3083
        %v3088 = vpack.c.b16 %v3086, %v3085
        %3091 = vmatprep.subr.bf16.mxu0 0
        %3092 = vmatpush1.bf16.msra.mxu0 0
        %3093 = vmatprep.subr.bf16.mxu0 0
        %3094 = vmatpush1.bf16.msra.mxu0 0
        %3095 = vmatprep.subr.bf16.mxu0 0
        %3096 = vmatpush1.bf16.msra.mxu0 0
        %3097 = vmatprep.subr.bf16.mxu0 0
        %3098 = vmatpush1.bf16.msra.mxu0 0
        %3099 = vmatprep.subr.bf16.mxu0 0
        %3100 = vmatpush1.bf16.msra.mxu0 0
        %3101 = vmatprep.subr.bf16.mxu0 0
        %3102 = vmatpush1.bf16.msra.mxu0 0
        %3103 = vmatprep.subr.bf16.mxu0 0
        %3104 = vmatpush1.bf16.msra.mxu0 %v3088
        %3105 = vmatprep.subr.bf16.mxu0 0
        %3106 = vmatpush1.bf16.msra.mxu0 %v3087
        %3107 = vmatprep.subr.bf16.mxu0 0
        %3108 = vmatpush2.bf16.msra.mxu0 0
        %3109 = vmatprep.subr.bf16.mxu0 0
        %3110 = vmatpush2.bf16.msra.mxu0 0
        %3111 = vmatprep.subr.bf16.mxu0 0
        %3112 = vmatpush2.bf16.msra.mxu0 0
        %3113 = vmatprep.subr.bf16.mxu0 0
        %3114 = vmatpush2.bf16.msra.mxu0 0
        %3115 = vmatprep.subr.bf16.mxu0 0
        %3116 = vmatpush2.bf16.msra.mxu0 0
        %3117 = vmatprep.subr.bf16.mxu0 0
        %3118 = vmatpush2.bf16.msra.mxu0 0
        %3119 = vmatprep.subr.bf16.mxu0 0
        %3120 = vmatpush2.bf16.msra.mxu0 0
        %3121 = vmatprep.subr.bf16.mxu0 0
        %3122 = vmatpush2.bf16.msra.mxu0 0
        %3123 = vmatprep.mubr.bf16.mxu0 0
        %3124 = vmatmul.mubr.bf16.gmra.mxu0 %v3024
        %v3125 = vpop.f32.mrf.mxu0
        %v3126 = vadd.f32 %v3077, %v3125
        %v3127 = vpop.f32.mrf.mxu0
        %v3128 = vpop.f32.mrf.mxu0
        %v3129 = vpop.f32.mrf.mxu0
        %3130 = vdwg.mxu0
        %s3131 = scalar_lea.vmem %s23, 16
        %v3132 = vld [vmem:[%s3131] sm:$0xf]
        %v3133 = vld [vmem:[%s3131 + $0x4] sm:$0xf]
        %v3134 = vld [vmem:[%s3131 + $0x8] sm:$0xf]
        %v3135 = vld [vmem:[%s3131 + $0xc] sm:$0xf]
        %s3136 = scalar_lea.vmem %s25, 1
        %v3137 = vld [vmem:[%s3136] sm:$0x1]
        %v3139 = vlaneseq
        %v3140 = vshrl.u32 %v3139, 7
        %v3141 = vsub.s32 0, %v3140
        %v3142 = vrot.slane %v3137, %v3141
        %v3148 = vunpack.c.l.b16 %v3132
        %v3149 = vunpack.c.l.b16 %v3133
        %v3150 = vunpack.c.l.b16 %v3134
        %v3151 = vunpack.c.l.b16 %v3135
        %v3152 = vpack.c.b16 %v3149, %v3148
        %v3153 = vpack.c.b16 %v3151, %v3150
        %3156 = vmatprep.subr.bf16.mxu0 0
        %3157 = vmatpush1.bf16.msra.mxu0 0
        %3158 = vmatprep.subr.bf16.mxu0 0
        %3159 = vmatpush1.bf16.msra.mxu0 0
        %3160 = vmatprep.subr.bf16.mxu0 0
        %3161 = vmatpush1.bf16.msra.mxu0 0
        %3162 = vmatprep.subr.bf16.mxu0 0
        %3163 = vmatpush1.bf16.msra.mxu0 0
        %3164 = vmatprep.subr.bf16.mxu0 0
        %3165 = vmatpush1.bf16.msra.mxu0 0
        %3166 = vmatprep.subr.bf16.mxu0 0
        %3167 = vmatpush1.bf16.msra.mxu0 0
        %3168 = vmatprep.subr.bf16.mxu0 0
        %3169 = vmatpush1.bf16.msra.mxu0 %v3153
        %3170 = vmatprep.subr.bf16.mxu0 0
        %3171 = vmatpush1.bf16.msra.mxu0 %v3152
        %3172 = vmatprep.subr.bf16.mxu0 0
        %3173 = vmatpush2.bf16.msra.mxu0 0
        %3174 = vmatprep.subr.bf16.mxu0 0
        %3175 = vmatpush2.bf16.msra.mxu0 0
        %3176 = vmatprep.subr.bf16.mxu0 0
        %3177 = vmatpush2.bf16.msra.mxu0 0
        %3178 = vmatprep.subr.bf16.mxu0 0
        %3179 = vmatpush2.bf16.msra.mxu0 0
        %3180 = vmatprep.subr.bf16.mxu0 0
        %3181 = vmatpush2.bf16.msra.mxu0 0
        %3182 = vmatprep.subr.bf16.mxu0 0
        %3183 = vmatpush2.bf16.msra.mxu0 0
        %3184 = vmatprep.subr.bf16.mxu0 0
        %3185 = vmatpush2.bf16.msra.mxu0 0
        %3186 = vmatprep.subr.bf16.mxu0 0
        %3187 = vmatpush2.bf16.msra.mxu0 0
        %3188 = vmatprep.mubr.bf16.mxu0 0
        %3189 = vmatmul.mubr.bf16.gmra.mxu0 %v3024
        %v3190 = vpop.f32.mrf.mxu0
        %v3191 = vadd.f32 %v3142, %v3190
        %v3192 = vpop.f32.mrf.mxu0
        %v3193 = vpop.f32.mrf.mxu0
        %v3194 = vpop.f32.mrf.mxu0
        %3195 = vdwg.mxu0
        %s3196 = scalar_lea.vmem %s27, 16
        %v3197 = vld [vmem:[%s3196] sm:$0xf]
        %v3198 = vld [vmem:[%s3196 + $0x4] sm:$0xf]
        %v3199 = vld [vmem:[%s3196 + $0x8] sm:$0xf]
        %v3200 = vld [vmem:[%s3196 + $0xc] sm:$0xf]
        %s3201 = scalar_lea.vmem %s29, 1
        %v3202 = vld [vmem:[%s3201] sm:$0x1]
        %v3204 = vsel %vm2044, %v3061, 0
        %v3207 = vsel %vm2044, %v3126, 0
        %3209 = vmatprep.subr.mxu0 0.0
        %3210 = vmatpush1.xpose.msra.mxu0 0.0
        %3211 = vmatprep.subr.mxu0 0.0
        %3212 = vmatpush1.xpose.msra.mxu0 0.0
        %3213 = vmatprep.subr.mxu0 0.0
        %3214 = vmatpush1.xpose.msra.mxu0 0.0
        %3215 = vmatprep.subr.mxu0 0.0
        %3216 = vmatpush1.xpose.msra.mxu0 0.0
        %3217 = vmatprep.subr.mxu0 0.0
        %3218 = vmatpush1.xpose.msra.mxu0 0.0
        %3219 = vmatprep.subr.mxu0 0.0
        %3220 = vmatpush1.xpose.msra.mxu0 0.0
        %3221 = vmatprep.subr.mxu0 0.0
        %3222 = vmatpush1.xpose.msra.mxu0 0.0
        %3223 = vmatprep.subr.mxu0 0.0
        %3224 = vmatpush1.xpose.msra.mxu0 0.0
        %3225 = vmatprep.subr.mxu0 0.0
        %3226 = vmatpush1.xpose.msra.mxu0 0.0
        %3227 = vmatprep.subr.mxu0 0.0
        %3228 = vmatpush1.xpose.msra.mxu0 0.0
        %3229 = vmatprep.subr.mxu0 0.0
        %3230 = vmatpush1.xpose.msra.mxu0 0.0
        %3231 = vmatprep.subr.mxu0 0.0
        %3232 = vmatpush1.xpose.msra.mxu0 0.0
        %3233 = vmatprep.subr.mxu0 0.0
        %3234 = vmatpush1.xpose.msra.mxu0 0.0
        %3235 = vmatprep.subr.mxu0 0.0
        %3236 = vmatpush1.xpose.msra.mxu0 0.0
        %3237 = vmatprep.subr.mxu0 0.0
        %3238 = vmatpush1.xpose.msra.mxu0 0.0
        %3239 = vmatprep.subr.mxu0 0.0
        %3240 = vmatpush1.xpose.msra.mxu0 %v3207
        %3241 = vmatprep.subr.mxu0 0.0
        %3242 = vmatpush2.xpose.msra.mxu0 0.0
        %3243 = vmatprep.subr.mxu0 0.0
        %3244 = vmatpush2.xpose.msra.mxu0 0.0
        %3245 = vmatprep.subr.mxu0 0.0
        %3246 = vmatpush2.xpose.msra.mxu0 0.0
        %3247 = vmatprep.subr.mxu0 0.0
        %3248 = vmatpush2.xpose.msra.mxu0 0.0
        %3249 = vmatprep.subr.mxu0 0.0
        %3250 = vmatpush2.xpose.msra.mxu0 0.0
        %3251 = vmatprep.subr.mxu0 0.0
        %3252 = vmatpush2.xpose.msra.mxu0 0.0
        %3253 = vmatprep.subr.mxu0 0.0
        %3254 = vmatpush2.xpose.msra.mxu0 0.0
        %3255 = vmatprep.subr.mxu0 0.0
        %3256 = vmatpush2.xpose.msra.mxu0 0.0
        %3257 = vmatprep.subr.mxu0 0.0
        %3258 = vmatpush2.xpose.msra.mxu0 0.0
        %3259 = vmatprep.subr.mxu0 0.0
        %3260 = vmatpush2.xpose.msra.mxu0 0.0
        %3261 = vmatprep.subr.mxu0 0.0
        %3262 = vmatpush2.xpose.msra.mxu0 0.0
        %3263 = vmatprep.subr.mxu0 0.0
        %3264 = vmatpush2.xpose.msra.mxu0 0.0
        %3265 = vmatprep.subr.mxu0 0.0
        %3266 = vmatpush2.xpose.msra.mxu0 0.0
        %3267 = vmatprep.subr.mxu0 0.0
        %3268 = vmatpush2.xpose.msra.mxu0 0.0
        %3269 = vmatprep.subr.mxu0 0.0
        %3270 = vmatpush2.xpose.msra.mxu0 0.0
        %3271 = vmatprep.subr.mxu0 0.0
        %3272 = vmatpush2.xpose.msra.mxu0 0.0
        %3273 = vmatprep.mubr.f32.mxu0 0.0
        %3274 = vmatmul.mubr.f32.gmra.mxu0 %v3204
        %v3275 = vpop.f32.mrf.mxu0
        %v3276 = vadd.f32 0.0, %v3275
        %v3277 = vpop.f32.mrf.mxu0
        %3278 = vdwg.mxu0
        %3279 = vrot.lane.b32.xlu0 %v3061, 120
        %v3280 = vpop.permute.xlu0 %3279
        %3281 = vrot.lane.b32.xlu0 %v3126, 120
        %v3282 = vpop.permute.xlu0 %3281
        %v3283 = vsel %vm2044, %v3280, 0
        %v3285 = vsel %vm2044, %v3282, 0
        %3287 = vmatprep.subr.mxu0 0.0
        %3288 = vmatpush1.xpose.msra.mxu0 0.0
        %3289 = vmatprep.subr.mxu0 0.0
        %3290 = vmatpush1.xpose.msra.mxu0 0.0
        %3291 = vmatprep.subr.mxu0 0.0
        %3292 = vmatpush1.xpose.msra.mxu0 0.0
        %3293 = vmatprep.subr.mxu0 0.0
        %3294 = vmatpush1.xpose.msra.mxu0 0.0
        %3295 = vmatprep.subr.mxu0 0.0
        %3296 = vmatpush1.xpose.msra.mxu0 0.0
        %3297 = vmatprep.subr.mxu0 0.0
        %3298 = vmatpush1.xpose.msra.mxu0 0.0
        %3299 = vmatprep.subr.mxu0 0.0
        %3300 = vmatpush1.xpose.msra.mxu0 0.0
        %3301 = vmatprep.subr.mxu0 0.0
        %3302 = vmatpush1.xpose.msra.mxu0 0.0
        %3303 = vmatprep.subr.mxu0 0.0
        %3304 = vmatpush1.xpose.msra.mxu0 0.0
        %3305 = vmatprep.subr.mxu0 0.0
        %3306 = vmatpush1.xpose.msra.mxu0 0.0
        %3307 = vmatprep.subr.mxu0 0.0
        %3308 = vmatpush1.xpose.msra.mxu0 0.0
        %3309 = vmatprep.subr.mxu0 0.0
        %3310 = vmatpush1.xpose.msra.mxu0 0.0
        %3311 = vmatprep.subr.mxu0 0.0
        %3312 = vmatpush1.xpose.msra.mxu0 0.0
        %3313 = vmatprep.subr.mxu0 0.0
        %3314 = vmatpush1.xpose.msra.mxu0 0.0
        %3315 = vmatprep.subr.mxu0 0.0
        %3316 = vmatpush1.xpose.msra.mxu0 0.0
        %3317 = vmatprep.subr.mxu0 0.0
        %3318 = vmatpush1.xpose.msra.mxu0 %v3285
        %3319 = vmatprep.subr.mxu0 0.0
        %3320 = vmatpush2.xpose.msra.mxu0 0.0
        %3321 = vmatprep.subr.mxu0 0.0
        %3322 = vmatpush2.xpose.msra.mxu0 0.0
        %3323 = vmatprep.subr.mxu0 0.0
        %3324 = vmatpush2.xpose.msra.mxu0 0.0
        %3325 = vmatprep.subr.mxu0 0.0
        %3326 = vmatpush2.xpose.msra.mxu0 0.0
        %3327 = vmatprep.subr.mxu0 0.0
        %3328 = vmatpush2.xpose.msra.mxu0 0.0
        %3329 = vmatprep.subr.mxu0 0.0
        %3330 = vmatpush2.xpose.msra.mxu0 0.0
        %3331 = vmatprep.subr.mxu0 0.0
        %3332 = vmatpush2.xpose.msra.mxu0 0.0
        %3333 = vmatprep.subr.mxu0 0.0
        %3334 = vmatpush2.xpose.msra.mxu0 0.0
        %3335 = vmatprep.subr.mxu0 0.0
        %3336 = vmatpush2.xpose.msra.mxu0 0.0
        %3337 = vmatprep.subr.mxu0 0.0
        %3338 = vmatpush2.xpose.msra.mxu0 0.0
        %3339 = vmatprep.subr.mxu0 0.0
        %3340 = vmatpush2.xpose.msra.mxu0 0.0
        %3341 = vmatprep.subr.mxu0 0.0
        %3342 = vmatpush2.xpose.msra.mxu0 0.0
        %3343 = vmatprep.subr.mxu0 0.0
        %3344 = vmatpush2.xpose.msra.mxu0 0.0
        %3345 = vmatprep.subr.mxu0 0.0
        %3346 = vmatpush2.xpose.msra.mxu0 0.0
        %3347 = vmatprep.subr.mxu0 0.0
        %3348 = vmatpush2.xpose.msra.mxu0 0.0
        %3349 = vmatprep.subr.mxu0 0.0
        %3350 = vmatpush2.xpose.msra.mxu0 0.0
        %3351 = vmatprep.mubr.f32.mxu0 0.0
        %3352 = vmatmul.mubr.f32.gmra.mxu0 %v3283
        %v3353 = vpop.f32.mrf.mxu0
        %v3354 = vadd.f32 0.0, %v3353
        %v3355 = vpop.f32.mrf.mxu0
        %3356 = vdwg.mxu0
        %3357 = vrot.lane.b32.xlu0 %v3061, 112
        %v3358 = vpop.permute.xlu0 %3357
        %3359 = vrot.lane.b32.xlu0 %v3126, 112
        %v3360 = vpop.permute.xlu0 %3359
        %v3361 = vsel %vm2044, %v3358, 0
        %v3363 = vsel %vm2044, %v3360, 0
        %3365 = vmatprep.subr.mxu0 0.0
        %3366 = vmatpush1.xpose.msra.mxu0 0.0
        %3367 = vmatprep.subr.mxu0 0.0
        %3368 = vmatpush1.xpose.msra.mxu0 0.0
        %3369 = vmatprep.subr.mxu0 0.0
        %3370 = vmatpush1.xpose.msra.mxu0 0.0
        %3371 = vmatprep.subr.mxu0 0.0
        %3372 = vmatpush1.xpose.msra.mxu0 0.0
        %3373 = vmatprep.subr.mxu0 0.0
        %3374 = vmatpush1.xpose.msra.mxu0 0.0
        %3375 = vmatprep.subr.mxu0 0.0
        %3376 = vmatpush1.xpose.msra.mxu0 0.0
        %3377 = vmatprep.subr.mxu0 0.0
        %3378 = vmatpush1.xpose.msra.mxu0 0.0
        %3379 = vmatprep.subr.mxu0 0.0
        %3380 = vmatpush1.xpose.msra.mxu0 0.0
        %3381 = vmatprep.subr.mxu0 0.0
        %3382 = vmatpush1.xpose.msra.mxu0 0.0
        %3383 = vmatprep.subr.mxu0 0.0
        %3384 = vmatpush1.xpose.msra.mxu0 0.0
        %3385 = vmatprep.subr.mxu0 0.0
        %3386 = vmatpush1.xpose.msra.mxu0 0.0
        %3387 = vmatprep.subr.mxu0 0.0
        %3388 = vmatpush1.xpose.msra.mxu0 0.0
        %3389 = vmatprep.subr.mxu0 0.0
        %3390 = vmatpush1.xpose.msra.mxu0 0.0
        %3391 = vmatprep.subr.mxu0 0.0
        %3392 = vmatpush1.xpose.msra.mxu0 0.0
        %3393 = vmatprep.subr.mxu0 0.0
        %3394 = vmatpush1.xpose.msra.mxu0 0.0
        %3395 = vmatprep.subr.mxu0 0.0
        %3396 = vmatpush1.xpose.msra.mxu0 %v3363
        %3397 = vmatprep.subr.mxu0 0.0
        %3398 = vmatpush2.xpose.msra.mxu0 0.0
        %3399 = vmatprep.subr.mxu0 0.0
        %3400 = vmatpush2.xpose.msra.mxu0 0.0
        %3401 = vmatprep.subr.mxu0 0.0
        %3402 = vmatpush2.xpose.msra.mxu0 0.0
        %3403 = vmatprep.subr.mxu0 0.0
        %3404 = vmatpush2.xpose.msra.mxu0 0.0
        %3405 = vmatprep.subr.mxu0 0.0
        %3406 = vmatpush2.xpose.msra.mxu0 0.0
        %3407 = vmatprep.subr.mxu0 0.0
        %3408 = vmatpush2.xpose.msra.mxu0 0.0
        %3409 = vmatprep.subr.mxu0 0.0
        %3410 = vmatpush2.xpose.msra.mxu0 0.0
        %3411 = vmatprep.subr.mxu0 0.0
        %3412 = vmatpush2.xpose.msra.mxu0 0.0
        %3413 = vmatprep.subr.mxu0 0.0
        %3414 = vmatpush2.xpose.msra.mxu0 0.0
        %3415 = vmatprep.subr.mxu0 0.0
        %3416 = vmatpush2.xpose.msra.mxu0 0.0
        %3417 = vmatprep.subr.mxu0 0.0
        %3418 = vmatpush2.xpose.msra.mxu0 0.0
        %3419 = vmatprep.subr.mxu0 0.0
        %3420 = vmatpush2.xpose.msra.mxu0 0.0
        %3421 = vmatprep.subr.mxu0 0.0
        %3422 = vmatpush2.xpose.msra.mxu0 0.0
        %3423 = vmatprep.subr.mxu0 0.0
        %3424 = vmatpush2.xpose.msra.mxu0 0.0
        %3425 = vmatprep.subr.mxu0 0.0
        %3426 = vmatpush2.xpose.msra.mxu0 0.0
        %3427 = vmatprep.subr.mxu0 0.0
        %3428 = vmatpush2.xpose.msra.mxu0 0.0
        %3429 = vmatprep.mubr.f32.mxu0 0.0
        %3430 = vmatmul.mubr.f32.gmra.mxu0 %v3361
        %v3431 = vpop.f32.mrf.mxu0
        %v3432 = vadd.f32 0.0, %v3431
        %v3433 = vpop.f32.mrf.mxu0
        %3434 = vdwg.mxu0
        %3435 = vrot.lane.b32.xlu0 %v3061, 104
        %v3436 = vpop.permute.xlu0 %3435
        %3437 = vrot.lane.b32.xlu0 %v3126, 104
        %v3438 = vpop.permute.xlu0 %3437
        %v3439 = vsel %vm2044, %v3436, 0
        %v3441 = vsel %vm2044, %v3438, 0
        %3443 = vmatprep.subr.mxu0 0.0
        %3444 = vmatpush1.xpose.msra.mxu0 0.0
        %3445 = vmatprep.subr.mxu0 0.0
        %3446 = vmatpush1.xpose.msra.mxu0 0.0
        %3447 = vmatprep.subr.mxu0 0.0
        %3448 = vmatpush1.xpose.msra.mxu0 0.0
        %3449 = vmatprep.subr.mxu0 0.0
        %3450 = vmatpush1.xpose.msra.mxu0 0.0
        %3451 = vmatprep.subr.mxu0 0.0
        %3452 = vmatpush1.xpose.msra.mxu0 0.0
        %3453 = vmatprep.subr.mxu0 0.0
        %3454 = vmatpush1.xpose.msra.mxu0 0.0
        %3455 = vmatprep.subr.mxu0 0.0
        %3456 = vmatpush1.xpose.msra.mxu0 0.0
        %3457 = vmatprep.subr.mxu0 0.0
        %3458 = vmatpush1.xpose.msra.mxu0 0.0
        %3459 = vmatprep.subr.mxu0 0.0
        %3460 = vmatpush1.xpose.msra.mxu0 0.0
        %3461 = vmatprep.subr.mxu0 0.0
        %3462 = vmatpush1.xpose.msra.mxu0 0.0
        %3463 = vmatprep.subr.mxu0 0.0
        %3464 = vmatpush1.xpose.msra.mxu0 0.0
        %3465 = vmatprep.subr.mxu0 0.0
        %3466 = vmatpush1.xpose.msra.mxu0 0.0
        %3467 = vmatprep.subr.mxu0 0.0
        %3468 = vmatpush1.xpose.msra.mxu0 0.0
        %3469 = vmatprep.subr.mxu0 0.0
        %3470 = vmatpush1.xpose.msra.mxu0 0.0
        %3471 = vmatprep.subr.mxu0 0.0
        %3472 = vmatpush1.xpose.msra.mxu0 0.0
        %3473 = vmatprep.subr.mxu0 0.0
        %3474 = vmatpush1.xpose.msra.mxu0 %v3441
        %3475 = vmatprep.subr.mxu0 0.0
        %3476 = vmatpush2.xpose.msra.mxu0 0.0
        %3477 = vmatprep.subr.mxu0 0.0
        %3478 = vmatpush2.xpose.msra.mxu0 0.0
        %3479 = vmatprep.subr.mxu0 0.0
        %3480 = vmatpush2.xpose.msra.mxu0 0.0
        %3481 = vmatprep.subr.mxu0 0.0
        %3482 = vmatpush2.xpose.msra.mxu0 0.0
        %3483 = vmatprep.subr.mxu0 0.0
        %3484 = vmatpush2.xpose.msra.mxu0 0.0
        %3485 = vmatprep.subr.mxu0 0.0
        %3486 = vmatpush2.xpose.msra.mxu0 0.0
        %3487 = vmatprep.subr.mxu0 0.0
        %3488 = vmatpush2.xpose.msra.mxu0 0.0
        %3489 = vmatprep.subr.mxu0 0.0
        %3490 = vmatpush2.xpose.msra.mxu0 0.0
        %3491 = vmatprep.subr.mxu0 0.0
        %3492 = vmatpush2.xpose.msra.mxu0 0.0
        %3493 = vmatprep.subr.mxu0 0.0
        %3494 = vmatpush2.xpose.msra.mxu0 0.0
        %3495 = vmatprep.subr.mxu0 0.0
        %3496 = vmatpush2.xpose.msra.mxu0 0.0
        %3497 = vmatprep.subr.mxu0 0.0
        %3498 = vmatpush2.xpose.msra.mxu0 0.0
        %3499 = vmatprep.subr.mxu0 0.0
        %3500 = vmatpush2.xpose.msra.mxu0 0.0
        %3501 = vmatprep.subr.mxu0 0.0
        %3502 = vmatpush2.xpose.msra.mxu0 0.0
        %3503 = vmatprep.subr.mxu0 0.0
        %3504 = vmatpush2.xpose.msra.mxu0 0.0
        %3505 = vmatprep.subr.mxu0 0.0
        %3506 = vmatpush2.xpose.msra.mxu0 0.0
        %3507 = vmatprep.mubr.f32.mxu0 0.0
        %3508 = vmatmul.mubr.f32.gmra.mxu0 %v3439
        %v3509 = vpop.f32.mrf.mxu0
        %v3510 = vadd.f32 0.0, %v3509
        %v3511 = vpop.f32.mrf.mxu0
        %3512 = vdwg.mxu0
        %v3513 = vadd.f32 %v3276, %v1837
        %v3514 = vadd.f32 %v3354, %v1837
        %v3515 = vadd.f32 %v3432, %v1837
        %v3516 = vadd.f32 %v3510, %v1837
        %v3517 = vsel %vm2044, %v3513, -inf
        %3518 = vmax.xlane.f32.xlu0 %v3517
        %v3519 = vpop.xlane.xlu0 %3518
        %v3520 = vsel %vm2044, %v3514, -inf
        %3521 = vmax.xlane.f32.xlu0 %v3520
        %v3522 = vpop.xlane.xlu0 %3521
        %v3523 = vsel %vm2044, %v3515, -inf
        %3524 = vmax.xlane.f32.xlu0 %v3523
        %v3525 = vpop.xlane.xlu0 %3524
        %v3526 = vsel %vm2044, %v3516, -inf
        %3527 = vmax.xlane.f32.xlu0 %v3526
        %v3528 = vpop.xlane.xlu0 %3527
        %v3529 = vsub.f32 %v3513, %v3519
        %v3530 = vsub.f32 %v3514, %v3522
        %v3531 = vsub.f32 %v3515, %v3525
        %v3532 = vsub.f32 %v3516, %v3528
        %v3533 = vmul.f32 %v3529, 1.442695
        %v3534 = vpow.pop %v3533
        %v3535 = vmul.f32 %v3530, 1.442695
        %v3536 = vpow.pop %v3535
        %v3537 = vmul.f32 %v3531, 1.442695
        %v3538 = vpow.pop %v3537
        %v3539 = vmul.f32 %v3532, 1.442695
        %v3540 = vpow.pop %v3539
        %v3541 = vsel %vm2044, %v3534, 0.0
        %3542 = vadd.xlane.f32.xlu0 %v3541
        %v3543 = vpop.xlane.xlu0 %3542
        %v3544 = vsel %vm2044, %v3536, 0.0
        %3545 = vadd.xlane.f32.xlu0 %v3544
        %v3546 = vpop.xlane.xlu0 %3545
        %v3547 = vsel %vm2044, %v3538, 0.0
        %3548 = vadd.xlane.f32.xlu0 %v3547
        %v3549 = vpop.xlane.xlu0 %3548
        %v3550 = vsel %vm2044, %v3540, 0.0
        %3551 = vadd.xlane.f32.xlu0 %v3550
        %v3552 = vpop.xlane.xlu0 %3551
        %v3553 = vrcp.pop %v3543
        %v3554 = vrcp.pop %v3546
        %v3555 = vrcp.pop %v3549
        %v3556 = vrcp.pop %v3552
        %v3557 = vmul.f32 %v3534, %v3553
        %v3558 = vmul.f32 %v3536, %v3554
        %v3559 = vmul.f32 %v3538, %v3555
        %v3560 = vmul.f32 %v3540, %v3556
        %v3562 = vsel %vm2044, %v3557, 0
        %3564 = vmatprep.subr.mxu0 0.0
        %3565 = vmatpush1.msra.mxu0 0.0
        %3566 = vmatprep.subr.mxu0 0.0
        %3567 = vmatpush1.msra.mxu0 0.0
        %3568 = vmatprep.subr.mxu0 0.0
        %3569 = vmatpush1.msra.mxu0 0.0
        %3570 = vmatprep.subr.mxu0 0.0
        %3571 = vmatpush1.msra.mxu0 0.0
        %3572 = vmatprep.subr.mxu0 0.0
        %3573 = vmatpush1.msra.mxu0 0.0
        %3574 = vmatprep.subr.mxu0 0.0
        %3575 = vmatpush1.msra.mxu0 0.0
        %3576 = vmatprep.subr.mxu0 0.0
        %3577 = vmatpush1.msra.mxu0 0.0
        %3578 = vmatprep.subr.mxu0 0.0
        %3579 = vmatpush1.msra.mxu0 0.0
        %3580 = vmatprep.subr.mxu0 0.0
        %3581 = vmatpush1.msra.mxu0 0.0
        %3582 = vmatprep.subr.mxu0 0.0
        %3583 = vmatpush1.msra.mxu0 0.0
        %3584 = vmatprep.subr.mxu0 0.0
        %3585 = vmatpush1.msra.mxu0 0.0
        %3586 = vmatprep.subr.mxu0 0.0
        %3587 = vmatpush1.msra.mxu0 0.0
        %3588 = vmatprep.subr.mxu0 0.0
        %3589 = vmatpush1.msra.mxu0 0.0
        %3590 = vmatprep.subr.mxu0 0.0
        %3591 = vmatpush1.msra.mxu0 0.0
        %3592 = vmatprep.subr.mxu0 0.0
        %3593 = vmatpush1.msra.mxu0 0.0
        %3594 = vmatprep.subr.mxu0 0.0
        %3595 = vmatpush1.msra.mxu0 %v3191
        %3596 = vmatprep.subr.mxu0 0.0
        %3597 = vmatpush2.msra.mxu0 0.0
        %3598 = vmatprep.subr.mxu0 0.0
        %3599 = vmatpush2.msra.mxu0 0.0
        %3600 = vmatprep.subr.mxu0 0.0
        %3601 = vmatpush2.msra.mxu0 0.0
        %3602 = vmatprep.subr.mxu0 0.0
        %3603 = vmatpush2.msra.mxu0 0.0
        %3604 = vmatprep.subr.mxu0 0.0
        %3605 = vmatpush2.msra.mxu0 0.0
        %3606 = vmatprep.subr.mxu0 0.0
        %3607 = vmatpush2.msra.mxu0 0.0
        %3608 = vmatprep.subr.mxu0 0.0
        %3609 = vmatpush2.msra.mxu0 0.0
        %3610 = vmatprep.subr.mxu0 0.0
        %3611 = vmatpush2.msra.mxu0 0.0
        %3612 = vmatprep.subr.mxu0 0.0
        %3613 = vmatpush2.msra.mxu0 0.0
        %3614 = vmatprep.subr.mxu0 0.0
        %3615 = vmatpush2.msra.mxu0 0.0
        %3616 = vmatprep.subr.mxu0 0.0
        %3617 = vmatpush2.msra.mxu0 0.0
        %3618 = vmatprep.subr.mxu0 0.0
        %3619 = vmatpush2.msra.mxu0 0.0
        %3620 = vmatprep.subr.mxu0 0.0
        %3621 = vmatpush2.msra.mxu0 0.0
        %3622 = vmatprep.subr.mxu0 0.0
        %3623 = vmatpush2.msra.mxu0 0.0
        %3624 = vmatprep.subr.mxu0 0.0
        %3625 = vmatpush2.msra.mxu0 0.0
        %3626 = vmatprep.subr.mxu0 0.0
        %3627 = vmatpush2.msra.mxu0 0.0
        %3628 = vmatprep.mubr.f32.mxu0 0.0
        %3629 = vmatmul.mubr.f32.gmra.mxu0 %v3562
        %v3630 = vpop.f32.mrf.mxu0
        %v3631 = vadd.f32 0.0, %v3630
        %v3632 = vpop.f32.mrf.mxu0
        %3633 = vdwg.mxu0
        %3635 = vrot.lane.b32.xlu0 %v3191, 120
        %v3636 = vpop.permute.xlu0 %3635
        %v3639 = vsel %vm2044, %v3558, 0
        %3641 = vmatprep.subr.mxu0 0.0
        %3642 = vmatpush1.msra.mxu0 0.0
        %3643 = vmatprep.subr.mxu0 0.0
        %3644 = vmatpush1.msra.mxu0 0.0
        %3645 = vmatprep.subr.mxu0 0.0
        %3646 = vmatpush1.msra.mxu0 0.0
        %3647 = vmatprep.subr.mxu0 0.0
        %3648 = vmatpush1.msra.mxu0 0.0
        %3649 = vmatprep.subr.mxu0 0.0
        %3650 = vmatpush1.msra.mxu0 0.0
        %3651 = vmatprep.subr.mxu0 0.0
        %3652 = vmatpush1.msra.mxu0 0.0
        %3653 = vmatprep.subr.mxu0 0.0
        %3654 = vmatpush1.msra.mxu0 0.0
        %3655 = vmatprep.subr.mxu0 0.0
        %3656 = vmatpush1.msra.mxu0 0.0
        %3657 = vmatprep.subr.mxu0 0.0
        %3658 = vmatpush1.msra.mxu0 0.0
        %3659 = vmatprep.subr.mxu0 0.0
        %3660 = vmatpush1.msra.mxu0 0.0
        %3661 = vmatprep.subr.mxu0 0.0
        %3662 = vmatpush1.msra.mxu0 0.0
        %3663 = vmatprep.subr.mxu0 0.0
        %3664 = vmatpush1.msra.mxu0 0.0
        %3665 = vmatprep.subr.mxu0 0.0
        %3666 = vmatpush1.msra.mxu0 0.0
        %3667 = vmatprep.subr.mxu0 0.0
        %3668 = vmatpush1.msra.mxu0 0.0
        %3669 = vmatprep.subr.mxu0 0.0
        %3670 = vmatpush1.msra.mxu0 0.0
        %3671 = vmatprep.subr.mxu0 0.0
        %3672 = vmatpush1.msra.mxu0 %v3636
        %3673 = vmatprep.subr.mxu0 0.0
        %3674 = vmatpush2.msra.mxu0 0.0
        %3675 = vmatprep.subr.mxu0 0.0
        %3676 = vmatpush2.msra.mxu0 0.0
        %3677 = vmatprep.subr.mxu0 0.0
        %3678 = vmatpush2.msra.mxu0 0.0
        %3679 = vmatprep.subr.mxu0 0.0
        %3680 = vmatpush2.msra.mxu0 0.0
        %3681 = vmatprep.subr.mxu0 0.0
        %3682 = vmatpush2.msra.mxu0 0.0
        %3683 = vmatprep.subr.mxu0 0.0
        %3684 = vmatpush2.msra.mxu0 0.0
        %3685 = vmatprep.subr.mxu0 0.0
        %3686 = vmatpush2.msra.mxu0 0.0
        %3687 = vmatprep.subr.mxu0 0.0
        %3688 = vmatpush2.msra.mxu0 0.0
        %3689 = vmatprep.subr.mxu0 0.0
        %3690 = vmatpush2.msra.mxu0 0.0
        %3691 = vmatprep.subr.mxu0 0.0
        %3692 = vmatpush2.msra.mxu0 0.0
        %3693 = vmatprep.subr.mxu0 0.0
        %3694 = vmatpush2.msra.mxu0 0.0
        %3695 = vmatprep.subr.mxu0 0.0
        %3696 = vmatpush2.msra.mxu0 0.0
        %3697 = vmatprep.subr.mxu0 0.0
        %3698 = vmatpush2.msra.mxu0 0.0
        %3699 = vmatprep.subr.mxu0 0.0
        %3700 = vmatpush2.msra.mxu0 0.0
        %3701 = vmatprep.subr.mxu0 0.0
        %3702 = vmatpush2.msra.mxu0 0.0
        %3703 = vmatprep.subr.mxu0 0.0
        %3704 = vmatpush2.msra.mxu0 0.0
        %3705 = vmatprep.mubr.f32.mxu0 0.0
        %3706 = vmatmul.mubr.f32.gmra.mxu0 %v3639
        %v3707 = vpop.f32.mrf.mxu0
        %v3708 = vadd.f32 0.0, %v3707
        %v3709 = vpop.f32.mrf.mxu0
        %3710 = vdwg.mxu0
        %3711 = vrot.lane.b32.xlu0 %v3191, 112
        %v3712 = vpop.permute.xlu0 %3711
        %v3715 = vsel %vm2044, %v3559, 0
        %3717 = vmatprep.subr.mxu0 0.0
        %3718 = vmatpush1.msra.mxu0 0.0
        %3719 = vmatprep.subr.mxu0 0.0
        %3720 = vmatpush1.msra.mxu0 0.0
        %3721 = vmatprep.subr.mxu0 0.0
        %3722 = vmatpush1.msra.mxu0 0.0
        %3723 = vmatprep.subr.mxu0 0.0
        %3724 = vmatpush1.msra.mxu0 0.0
        %3725 = vmatprep.subr.mxu0 0.0
        %3726 = vmatpush1.msra.mxu0 0.0
        %3727 = vmatprep.subr.mxu0 0.0
        %3728 = vmatpush1.msra.mxu0 0.0
        %3729 = vmatprep.subr.mxu0 0.0
        %3730 = vmatpush1.msra.mxu0 0.0
        %3731 = vmatprep.subr.mxu0 0.0
        %3732 = vmatpush1.msra.mxu0 0.0
        %3733 = vmatprep.subr.mxu0 0.0
        %3734 = vmatpush1.msra.mxu0 0.0
        %3735 = vmatprep.subr.mxu0 0.0
        %3736 = vmatpush1.msra.mxu0 0.0
        %3737 = vmatprep.subr.mxu0 0.0
        %3738 = vmatpush1.msra.mxu0 0.0
        %3739 = vmatprep.subr.mxu0 0.0
        %3740 = vmatpush1.msra.mxu0 0.0
        %3741 = vmatprep.subr.mxu0 0.0
        %3742 = vmatpush1.msra.mxu0 0.0
        %3743 = vmatprep.subr.mxu0 0.0
        %3744 = vmatpush1.msra.mxu0 0.0
        %3745 = vmatprep.subr.mxu0 0.0
        %3746 = vmatpush1.msra.mxu0 0.0
        %3747 = vmatprep.subr.mxu0 0.0
        %3748 = vmatpush1.msra.mxu0 %v3712
        %3749 = vmatprep.subr.mxu0 0.0
        %3750 = vmatpush2.msra.mxu0 0.0
        %3751 = vmatprep.subr.mxu0 0.0
        %3752 = vmatpush2.msra.mxu0 0.0
        %3753 = vmatprep.subr.mxu0 0.0
        %3754 = vmatpush2.msra.mxu0 0.0
        %3755 = vmatprep.subr.mxu0 0.0
        %3756 = vmatpush2.msra.mxu0 0.0
        %3757 = vmatprep.subr.mxu0 0.0
        %3758 = vmatpush2.msra.mxu0 0.0
        %3759 = vmatprep.subr.mxu0 0.0
        %3760 = vmatpush2.msra.mxu0 0.0
        %3761 = vmatprep.subr.mxu0 0.0
        %3762 = vmatpush2.msra.mxu0 0.0
        %3763 = vmatprep.subr.mxu0 0.0
        %3764 = vmatpush2.msra.mxu0 0.0
        %3765 = vmatprep.subr.mxu0 0.0
        %3766 = vmatpush2.msra.mxu0 0.0
        %3767 = vmatprep.subr.mxu0 0.0
        %3768 = vmatpush2.msra.mxu0 0.0
        %3769 = vmatprep.subr.mxu0 0.0
        %3770 = vmatpush2.msra.mxu0 0.0
        %3771 = vmatprep.subr.mxu0 0.0
        %3772 = vmatpush2.msra.mxu0 0.0
        %3773 = vmatprep.subr.mxu0 0.0
        %3774 = vmatpush2.msra.mxu0 0.0
        %3775 = vmatprep.subr.mxu0 0.0
        %3776 = vmatpush2.msra.mxu0 0.0
        %3777 = vmatprep.subr.mxu0 0.0
        %3778 = vmatpush2.msra.mxu0 0.0
        %3779 = vmatprep.subr.mxu0 0.0
        %3780 = vmatpush2.msra.mxu0 0.0
        %3781 = vmatprep.mubr.f32.mxu0 0.0
        %3782 = vmatmul.mubr.f32.gmra.mxu0 %v3715
        %v3783 = vpop.f32.mrf.mxu0
        %v3784 = vadd.f32 0.0, %v3783
        %v3785 = vpop.f32.mrf.mxu0
        %3786 = vdwg.mxu0
        %3787 = vrot.lane.b32.xlu0 %v3191, 104
        %v3788 = vpop.permute.xlu0 %3787
        %v3791 = vsel %vm2044, %v3560, 0
        %3793 = vmatprep.subr.mxu0 0.0
        %3794 = vmatpush1.msra.mxu0 0.0
        %3795 = vmatprep.subr.mxu0 0.0
        %3796 = vmatpush1.msra.mxu0 0.0
        %3797 = vmatprep.subr.mxu0 0.0
        %3798 = vmatpush1.msra.mxu0 0.0
        %3799 = vmatprep.subr.mxu0 0.0
        %3800 = vmatpush1.msra.mxu0 0.0
        %3801 = vmatprep.subr.mxu0 0.0
        %3802 = vmatpush1.msra.mxu0 0.0
        %3803 = vmatprep.subr.mxu0 0.0
        %3804 = vmatpush1.msra.mxu0 0.0
        %3805 = vmatprep.subr.mxu0 0.0
        %3806 = vmatpush1.msra.mxu0 0.0
        %3807 = vmatprep.subr.mxu0 0.0
        %3808 = vmatpush1.msra.mxu0 0.0
        %3809 = vmatprep.subr.mxu0 0.0
        %3810 = vmatpush1.msra.mxu0 0.0
        %3811 = vmatprep.subr.mxu0 0.0
        %3812 = vmatpush1.msra.mxu0 0.0
        %3813 = vmatprep.subr.mxu0 0.0
        %3814 = vmatpush1.msra.mxu0 0.0
        %3815 = vmatprep.subr.mxu0 0.0
        %3816 = vmatpush1.msra.mxu0 0.0
        %3817 = vmatprep.subr.mxu0 0.0
        %3818 = vmatpush1.msra.mxu0 0.0
        %3819 = vmatprep.subr.mxu0 0.0
        %3820 = vmatpush1.msra.mxu0 0.0
        %3821 = vmatprep.subr.mxu0 0.0
        %3822 = vmatpush1.msra.mxu0 0.0
        %3823 = vmatprep.subr.mxu0 0.0
        %3824 = vmatpush1.msra.mxu0 %v3788
        %3825 = vmatprep.subr.mxu0 0.0
        %3826 = vmatpush2.msra.mxu0 0.0
        %3827 = vmatprep.subr.mxu0 0.0
        %3828 = vmatpush2.msra.mxu0 0.0
        %3829 = vmatprep.subr.mxu0 0.0
        %3830 = vmatpush2.msra.mxu0 0.0
        %3831 = vmatprep.subr.mxu0 0.0
        %3832 = vmatpush2.msra.mxu0 0.0
        %3833 = vmatprep.subr.mxu0 0.0
        %3834 = vmatpush2.msra.mxu0 0.0
        %3835 = vmatprep.subr.mxu0 0.0
        %3836 = vmatpush2.msra.mxu0 0.0
        %3837 = vmatprep.subr.mxu0 0.0
        %3838 = vmatpush2.msra.mxu0 0.0
        %3839 = vmatprep.subr.mxu0 0.0
        %3840 = vmatpush2.msra.mxu0 0.0
        %3841 = vmatprep.subr.mxu0 0.0
        %3842 = vmatpush2.msra.mxu0 0.0
        %3843 = vmatprep.subr.mxu0 0.0
        %3844 = vmatpush2.msra.mxu0 0.0
        %3845 = vmatprep.subr.mxu0 0.0
        %3846 = vmatpush2.msra.mxu0 0.0
        %3847 = vmatprep.subr.mxu0 0.0
        %3848 = vmatpush2.msra.mxu0 0.0
        %3849 = vmatprep.subr.mxu0 0.0
        %3850 = vmatpush2.msra.mxu0 0.0
        %3851 = vmatprep.subr.mxu0 0.0
        %3852 = vmatpush2.msra.mxu0 0.0
        %3853 = vmatprep.subr.mxu0 0.0
        %3854 = vmatpush2.msra.mxu0 0.0
        %3855 = vmatprep.subr.mxu0 0.0
        %3856 = vmatpush2.msra.mxu0 0.0
        %3857 = vmatprep.mubr.f32.mxu0 0.0
        %3858 = vmatmul.mubr.f32.gmra.mxu0 %v3791
        %v3859 = vpop.f32.mrf.mxu0
        %v3860 = vadd.f32 0.0, %v3859
        %v3861 = vpop.f32.mrf.mxu0
        %3862 = vdwg.mxu0
        %3864 = vrot.lane.b32.xlu0 %v3708, 8
        %v3865 = vpop.permute.xlu0 %3864
        %3868 = vrot.lane.b32.xlu0 %v3784, 16
        %v3869 = vpop.permute.xlu0 %3868
        %3872 = vrot.lane.b32.xlu0 %v3860, 24
        %v3873 = vpop.permute.xlu0 %3872
        %v3875 = vsel %vm2044, %v3631, %v3865
        %v3876 = vsel %vm2718, %v3875, %v3869
        %v3877 = vsel %vm2720, %v3876, %v3873
        %v3878 = vpack.c.bf16 %v3877, %v3877
        %v3880 = vlaneseq
        %v3881 = vshrl.u32 %v3880, 7
        %v3882 = vsub.s32 0, %v3881
        %v3883 = vrot.slane %v3202, %v3882
        %v3889 = vunpack.c.l.b16 %v3197
        %v3890 = vunpack.c.l.b16 %v3198
        %v3891 = vunpack.c.l.b16 %v3199
        %v3892 = vunpack.c.l.b16 %v3200
        %v3893 = vpack.c.b16 %v3890, %v3889
        %v3894 = vpack.c.b16 %v3892, %v3891
        %v3898 = vsel %vm1869, %v3878, 0
        %3900 = vmatprep.subr.bf16.mxu0 0
        %3901 = vmatpush1.bf16.msra.mxu0 0
        %3902 = vmatprep.subr.bf16.mxu0 0
        %3903 = vmatpush1.bf16.msra.mxu0 0
        %3904 = vmatprep.subr.bf16.mxu0 0
        %3905 = vmatpush1.bf16.msra.mxu0 0
        %3906 = vmatprep.subr.bf16.mxu0 0
        %3907 = vmatpush1.bf16.msra.mxu0 0
        %3908 = vmatprep.subr.bf16.mxu0 0
        %3909 = vmatpush1.bf16.msra.mxu0 0
        %3910 = vmatprep.subr.bf16.mxu0 0
        %3911 = vmatpush1.bf16.msra.mxu0 0
        %3912 = vmatprep.subr.bf16.mxu0 0
        %3913 = vmatpush1.bf16.msra.mxu0 %v3894
        %3914 = vmatprep.subr.bf16.mxu0 0
        %3915 = vmatpush1.bf16.msra.mxu0 %v3893
        %3916 = vmatprep.subr.bf16.mxu0 0
        %3917 = vmatpush2.bf16.msra.mxu0 0
        %3918 = vmatprep.subr.bf16.mxu0 0
        %3919 = vmatpush2.bf16.msra.mxu0 0
        %3920 = vmatprep.subr.bf16.mxu0 0
        %3921 = vmatpush2.bf16.msra.mxu0 0
        %3922 = vmatprep.subr.bf16.mxu0 0
        %3923 = vmatpush2.bf16.msra.mxu0 0
        %3924 = vmatprep.subr.bf16.mxu0 0
        %3925 = vmatpush2.bf16.msra.mxu0 0
        %3926 = vmatprep.subr.bf16.mxu0 0
        %3927 = vmatpush2.bf16.msra.mxu0 0
        %3928 = vmatprep.subr.bf16.mxu0 0
        %3929 = vmatpush2.bf16.msra.mxu0 0
        %3930 = vmatprep.subr.bf16.mxu0 0
        %3931 = vmatpush2.bf16.msra.mxu0 0
        %3932 = vmatprep.mubr.bf16.mxu0 0
        %3933 = vmatmul.mubr.bf16.gmra.mxu0 %v3898
        %v3934 = vpop.f32.mrf.mxu0
        %v3935 = vadd.f32 %v3883, %v3934
        %v3936 = vpop.f32.mrf.mxu0
        %v3937 = vpop.f32.mrf.mxu0
        %v3938 = vpop.f32.mrf.mxu0
        %3939 = vdwg.mxu0
        %v3940 = vadd.f32 %v2996, %v3935
        %s3941 = scalar_lea.vmem %s39, 1
        %v3942 = vld [vmem:[%s3941] sm:$0x1]
        %s3943 = scalar_lea.vmem %s41, 1
        %v3944 = vld [vmem:[%s3943] sm:$0x1]
        %v3945 = vsel %vm1869, %v3940, 0.0
        %3946 = vadd.xlane.f32.xlu0 %v3945
        %v3947 = vpop.xlane.xlu0 %3946
        %v3948 = vmul.f32 %v3947, %v2790
        %v3949 = vsub.f32 %v3940, %v3948
        %v3950 = vmul.f32 %v3949, %v3949
        %v3951 = vsel %vm1869, %v3950, 0.0
        %3952 = vadd.xlane.f32.xlu0 %v3951
        %v3953 = vpop.xlane.xlu0 %3952
        %v3954 = vmul.f32 %v3953, %v2790
        %v3955 = vadd.f32 %v3954, 1e-05
        %v3956 = vrsqrt.pop %v3955
        %v3957 = vmul.f32 %v3949, %v3956
        %v3959 = vlaneseq
        %v3960 = vshrl.u32 %v3959, 7
        %v3961 = vsub.s32 0, %v3960
        %v3962 = vrot.slane %v3942, %v3961
        %v3964 = vmul.f32 %v3957, %v3962
        %v3966 = vlaneseq
        %v3967 = vshrl.u32 %v3966, 7
        %v3968 = vsub.s32 0, %v3967
        %v3969 = vrot.slane %v3944, %v3968
        %v3971 = vadd.f32 %v3964, %v3969
        %s3972 = scalar_lea.vmem %s31, 16
        %v3973 = vld [vmem:[%s3972] sm:$0xf]
        %v3974 = vld [vmem:[%s3972 + $0x4] sm:$0xf]
        %v3975 = vld [vmem:[%s3972 + $0x8] sm:$0xf]
        %v3976 = vld [vmem:[%s3972 + $0xc] sm:$0xf]
        %s3977 = scalar_lea.vmem %s33, 1
        %v3978 = vld [vmem:[%s3977] sm:$0x1]
        %v3979 = vpack.c.bf16 %v3971, %v3971
        %v3981 = vlaneseq
        %v3982 = vshrl.u32 %v3981, 7
        %v3983 = vsub.s32 0, %v3982
        %v3984 = vrot.slane %v3978, %v3983
        %v3990 = vunpack.c.l.b16 %v3973
        %v3991 = vunpack.c.l.b16 %v3974
        %v3992 = vunpack.c.l.b16 %v3975
        %v3993 = vunpack.c.l.b16 %v3976
        %v3994 = vpack.c.b16 %v3991, %v3990
        %v3995 = vpack.c.b16 %v3993, %v3992
        %v3999 = vsel %vm1869, %v3979, 0
        %4001 = vmatprep.subr.bf16.mxu0 0
        %4002 = vmatpush1.bf16.msra.mxu0 0
        %4003 = vmatprep.subr.bf16.mxu0 0
        %4004 = vmatpush1.bf16.msra.mxu0 0
        %4005 = vmatprep.subr.bf16.mxu0 0
        %4006 = vmatpush1.bf16.msra.mxu0 0
        %4007 = vmatprep.subr.bf16.mxu0 0
        %4008 = vmatpush1.bf16.msra.mxu0 0
        %4009 = vmatprep.subr.bf16.mxu0 0
        %4010 = vmatpush1.bf16.msra.mxu0 0
        %4011 = vmatprep.subr.bf16.mxu0 0
        %4012 = vmatpush1.bf16.msra.mxu0 0
        %4013 = vmatprep.subr.bf16.mxu0 0
        %4014 = vmatpush1.bf16.msra.mxu0 %v3995
        %4015 = vmatprep.subr.bf16.mxu0 0
        %4016 = vmatpush1.bf16.msra.mxu0 %v3994
        %4017 = vmatprep.subr.bf16.mxu0 0
        %4018 = vmatpush2.bf16.msra.mxu0 0
        %4019 = vmatprep.subr.bf16.mxu0 0
        %4020 = vmatpush2.bf16.msra.mxu0 0
        %4021 = vmatprep.subr.bf16.mxu0 0
        %4022 = vmatpush2.bf16.msra.mxu0 0
        %4023 = vmatprep.subr.bf16.mxu0 0
        %4024 = vmatpush2.bf16.msra.mxu0 0
        %4025 = vmatprep.subr.bf16.mxu0 0
        %4026 = vmatpush2.bf16.msra.mxu0 0
        %4027 = vmatprep.subr.bf16.mxu0 0
        %4028 = vmatpush2.bf16.msra.mxu0 0
        %4029 = vmatprep.subr.bf16.mxu0 0
        %4030 = vmatpush2.bf16.msra.mxu0 0
        %4031 = vmatprep.subr.bf16.mxu0 0
        %4032 = vmatpush2.bf16.msra.mxu0 0
        %4033 = vmatprep.mubr.bf16.mxu0 0
        %4034 = vmatmul.mubr.bf16.gmra.mxu0 %v3999
        %v4035 = vpop.f32.mrf.mxu0
        %v4036 = vadd.f32 %v3984, %v4035
        %v4037 = vpop.f32.mrf.mxu0
        %v4038 = vpop.f32.mrf.mxu0
        %v4039 = vpop.f32.mrf.mxu0
        %4040 = vdwg.mxu0
        %v4041 = vmax.f32 %v4036, 0.0
        %s4042 = scalar_lea.vmem %s35, 32
        %v4043 = vld [vmem:[%s4042] sm:$0xf]
        %v4044 = vld [vmem:[%s4042 + $0x4] sm:$0xf]
        %v4045 = vld [vmem:[%s4042 + $0x8] sm:$0xf]
        %v4046 = vld [vmem:[%s4042 + $0xc] sm:$0xf]
        %v4047 = vld [vmem:[%s4042 + $0x10] sm:$0xf]
        %v4048 = vld [vmem:[%s4042 + $0x14] sm:$0xf]
        %v4049 = vld [vmem:[%s4042 + $0x18] sm:$0xf]
        %v4050 = vld [vmem:[%s4042 + $0x1c] sm:$0xf]
        %s4051 = scalar_lea.vmem %s37, 1
        %v4052 = vld [vmem:[%s4051] sm:$0x1]
        %v4053 = vpack.c.bf16 %v4041, %v4041
        %v4055 = vlaneseq
        %v4056 = vshrl.u32 %v4055, 7
        %v4057 = vsub.s32 0, %v4056
        %v4058 = vrot.slane %v4052, %v4057
        %v4068 = vunpack.c.l.b16 %v4043
        %v4069 = vunpack.c.l.b16 %v4044
        %v4070 = vunpack.c.l.b16 %v4045
        %v4071 = vunpack.c.l.b16 %v4046
        %v4072 = vunpack.c.l.b16 %v4047
        %v4073 = vunpack.c.l.b16 %v4048
        %v4074 = vunpack.c.l.b16 %v4049
        %v4075 = vunpack.c.l.b16 %v4050
        %v4076 = vpack.c.b16 %v4069, %v4068
        %v4077 = vpack.c.b16 %v4071, %v4070
        %v4078 = vpack.c.b16 %v4073, %v4072
        %v4079 = vpack.c.b16 %v4075, %v4074
        %v4085 = vsel %vm2923, %v4053, 0
        %4087 = vmatprep.subr.bf16.mxu0 0
        %4088 = vmatpush1.bf16.msra.mxu0 0
        %4089 = vmatprep.subr.bf16.mxu0 0
        %4090 = vmatpush1.bf16.msra.mxu0 0
        %4091 = vmatprep.subr.bf16.mxu0 0
        %4092 = vmatpush1.bf16.msra.mxu0 0
        %4093 = vmatprep.subr.bf16.mxu0 0
        %4094 = vmatpush1.bf16.msra.mxu0 0
        %4095 = vmatprep.subr.bf16.mxu0 0
        %4096 = vmatpush1.bf16.msra.mxu0 %v4079
        %4097 = vmatprep.subr.bf16.mxu0 0
        %4098 = vmatpush1.bf16.msra.mxu0 %v4078
        %4099 = vmatprep.subr.bf16.mxu0 0
        %4100 = vmatpush1.bf16.msra.mxu0 %v4077
        %4101 = vmatprep.subr.bf16.mxu0 0
        %4102 = vmatpush1.bf16.msra.mxu0 %v4076
        %4103 = vmatprep.subr.bf16.mxu0 0
        %4104 = vmatpush2.bf16.msra.mxu0 0
        %4105 = vmatprep.subr.bf16.mxu0 0
        %4106 = vmatpush2.bf16.msra.mxu0 0
        %4107 = vmatprep.subr.bf16.mxu0 0
        %4108 = vmatpush2.bf16.msra.mxu0 0
        %4109 = vmatprep.subr.bf16.mxu0 0
        %4110 = vmatpush2.bf16.msra.mxu0 0
        %4111 = vmatprep.subr.bf16.mxu0 0
        %4112 = vmatpush2.bf16.msra.mxu0 0
        %4113 = vmatprep.subr.bf16.mxu0 0
        %4114 = vmatpush2.bf16.msra.mxu0 0
        %4115 = vmatprep.subr.bf16.mxu0 0
        %4116 = vmatpush2.bf16.msra.mxu0 0
        %4117 = vmatprep.subr.bf16.mxu0 0
        %4118 = vmatpush2.bf16.msra.mxu0 0
        %4119 = vmatprep.mubr.bf16.mxu0 0
        %4120 = vmatmul.mubr.bf16.gmra.mxu0 %v4085
        %v4121 = vpop.f32.mrf.mxu0
        %v4122 = vadd.f32 %v4058, %v4121
        %v4123 = vpop.f32.mrf.mxu0
        %v4124 = vpop.f32.mrf.mxu0
        %v4125 = vpop.f32.mrf.mxu0
        %4126 = vdwg.mxu0
        %v4127 = vadd.f32 %v3971, %v4122
        %s4128 = scalar_lea.vmem %s43, 1
        %v4129 = vld [vmem:[%s4128] sm:$0x1]
        %s4130 = scalar_lea.vmem %s45, 1
        %v4131 = vld [vmem:[%s4130] sm:$0x1]
        %v4132 = vsel %vm1869, %v4127, 0.0
        %4133 = vadd.xlane.f32.xlu0 %v4132
        %v4134 = vpop.xlane.xlu0 %4133
        %v4135 = vmul.f32 %v4134, %v2790
        %v4136 = vsub.f32 %v4127, %v4135
        %v4137 = vmul.f32 %v4136, %v4136
        %v4138 = vsel %vm1869, %v4137, 0.0
        %4139 = vadd.xlane.f32.xlu0 %v4138
        %v4140 = vpop.xlane.xlu0 %4139
        %v4141 = vmul.f32 %v4140, %v2790
        %v4142 = vadd.f32 %v4141, 1e-05
        %v4143 = vrsqrt.pop %v4142
        %v4144 = vmul.f32 %v4136, %v4143
        %v4146 = vlaneseq
        %v4147 = vshrl.u32 %v4146, 7
        %v4148 = vsub.s32 0, %v4147
        %v4149 = vrot.slane %v4129, %v4148
        %v4151 = vmul.f32 %v4144, %v4149
        %v4153 = vlaneseq
        %v4154 = vshrl.u32 %v4153, 7
        %v4155 = vsub.s32 0, %v4154
        %v4156 = vrot.slane %v4131, %v4155
        %v4158 = vadd.f32 %v4151, %v4156
        %v4159 = vld [vmem:[%s99] sm:$0x1]
        %v4160 = vld [vmem:[#allocation12] sm:$0x1]
        %v4161 = vsel %vm1869, %v4158, 0.0
        %4162 = vadd.xlane.f32.xlu0 %v4161
        %v4163 = vpop.xlane.xlu0 %4162
        %v4164 = vmul.f32 %v4163, %v2790
        %v4165 = vsub.f32 %v4158, %v4164
        %v4166 = vmul.f32 %v4165, %v4165
        %v4167 = vsel %vm1869, %v4166, 0.0
        %4168 = vadd.xlane.f32.xlu0 %v4167
        %v4169 = vpop.xlane.xlu0 %4168
        %v4170 = vmul.f32 %v4169, %v2790
        %v4171 = vadd.f32 %v4170, 1e-05
        %v4172 = vrsqrt.pop %v4171
        %v4173 = vmul.f32 %v4165, %v4172
        %v4175 = vlaneseq
        %v4176 = vshrl.u32 %v4175, 7
        %v4177 = vsub.s32 0, %v4176
        %v4178 = vrot.slane %v4159, %v4177
        %v4180 = vmul.f32 %v4173, %v4178
        %v4182 = vlaneseq
        %v4183 = vshrl.u32 %v4182, 7
        %v4184 = vsub.s32 0, %v4183
        %v4185 = vrot.slane %v4160, %v4184
        %v4187 = vadd.f32 %v4180, %v4185
        %v4188 = vld [vmem:[%s47] sm:$0xf]
        %v4189 = vld [vmem:[%s47 + $0x4] sm:$0xf]
        %v4190 = vld [vmem:[%s47 + $0x8] sm:$0xf]
        %v4191 = vld [vmem:[%s47 + $0xc] sm:$0xf]
        %v4192 = vld [vmem:[%s49] sm:$0x1]
        %v4193 = vpack.c.bf16 %v1825, %v1825
        %v4195 = vlaneseq
        %v4196 = vshrl.u32 %v4195, 7
        %v4197 = vsub.s32 0, %v4196
        %v4198 = vrot.slane %v4192, %v4197
        %v4204 = vunpack.c.l.b16 %v4188
        %v4205 = vunpack.c.l.b16 %v4189
        %v4206 = vunpack.c.l.b16 %v4190
        %v4207 = vunpack.c.l.b16 %v4191
        %v4208 = vpack.c.b16 %v4205, %v4204
        %v4209 = vpack.c.b16 %v4207, %v4206
        %v4213 = vsel %vm1869, %v4193, 0
        %4215 = vmatprep.subr.bf16.mxu0 0
        %4216 = vmatpush1.bf16.msra.mxu0 0
        %4217 = vmatprep.subr.bf16.mxu0 0
        %4218 = vmatpush1.bf16.msra.mxu0 0
        %4219 = vmatprep.subr.bf16.mxu0 0
        %4220 = vmatpush1.bf16.msra.mxu0 0
        %4221 = vmatprep.subr.bf16.mxu0 0
        %4222 = vmatpush1.bf16.msra.mxu0 0
        %4223 = vmatprep.subr.bf16.mxu0 0
        %4224 = vmatpush1.bf16.msra.mxu0 0
        %4225 = vmatprep.subr.bf16.mxu0 0
        %4226 = vmatpush1.bf16.msra.mxu0 0
        %4227 = vmatprep.subr.bf16.mxu0 0
        %4228 = vmatpush1.bf16.msra.mxu0 %v4209
        %4229 = vmatprep.subr.bf16.mxu0 0
        %4230 = vmatpush1.bf16.msra.mxu0 %v4208
        %4231 = vmatprep.subr.bf16.mxu0 0
        %4232 = vmatpush2.bf16.msra.mxu0 0
        %4233 = vmatprep.subr.bf16.mxu0 0
        %4234 = vmatpush2.bf16.msra.mxu0 0
        %4235 = vmatprep.subr.bf16.mxu0 0
        %4236 = vmatpush2.bf16.msra.mxu0 0
        %4237 = vmatprep.subr.bf16.mxu0 0
        %4238 = vmatpush2.bf16.msra.mxu0 0
        %4239 = vmatprep.subr.bf16.mxu0 0
        %4240 = vmatpush2.bf16.msra.mxu0 0
        %4241 = vmatprep.subr.bf16.mxu0 0
        %4242 = vmatpush2.bf16.msra.mxu0 0
        %4243 = vmatprep.subr.bf16.mxu0 0
        %4244 = vmatpush2.bf16.msra.mxu0 0
        %4245 = vmatprep.subr.bf16.mxu0 0
        %4246 = vmatpush2.bf16.msra.mxu0 0
        %4247 = vmatprep.mubr.bf16.mxu0 0
        %4248 = vmatmul.mubr.bf16.gmra.mxu0 %v4213
        %v4249 = vpop.f32.mrf.mxu0
        %v4250 = vadd.f32 %v4198, %v4249
        %v4251 = vpop.f32.mrf.mxu0
        %v4252 = vpop.f32.mrf.mxu0
        %v4253 = vpop.f32.mrf.mxu0
        %4254 = vdwg.mxu0
        %v4255 = vld [vmem:[%s51] sm:$0xf]
        %v4256 = vld [vmem:[%s51 + $0x4] sm:$0xf]
        %v4257 = vld [vmem:[%s51 + $0x8] sm:$0xf]
        %v4258 = vld [vmem:[%s51 + $0xc] sm:$0xf]
        %v4259 = vld [vmem:[%s53] sm:$0x1]
        %v4261 = vlaneseq
        %v4262 = vshrl.u32 %v4261, 7
        %v4263 = vsub.s32 0, %v4262
        %v4264 = vrot.slane %v4259, %v4263
        %v4270 = vunpack.c.l.b16 %v4255
        %v4271 = vunpack.c.l.b16 %v4256
        %v4272 = vunpack.c.l.b16 %v4257
        %v4273 = vunpack.c.l.b16 %v4258
        %v4274 = vpack.c.b16 %v4271, %v4270
        %v4275 = vpack.c.b16 %v4273, %v4272
        %4278 = vmatprep.subr.bf16.mxu0 0
        %4279 = vmatpush1.bf16.msra.mxu0 0
        %4280 = vmatprep.subr.bf16.mxu0 0
        %4281 = vmatpush1.bf16.msra.mxu0 0
        %4282 = vmatprep.subr.bf16.mxu0 0
        %4283 = vmatpush1.bf16.msra.mxu0 0
        %4284 = vmatprep.subr.bf16.mxu0 0
        %4285 = vmatpush1.bf16.msra.mxu0 0
        %4286 = vmatprep.subr.bf16.mxu0 0
        %4287 = vmatpush1.bf16.msra.mxu0 0
        %4288 = vmatprep.subr.bf16.mxu0 0
        %4289 = vmatpush1.bf16.msra.mxu0 0
        %4290 = vmatprep.subr.bf16.mxu0 0
        %4291 = vmatpush1.bf16.msra.mxu0 %v4275
        %4292 = vmatprep.subr.bf16.mxu0 0
        %4293 = vmatpush1.bf16.msra.mxu0 %v4274
        %4294 = vmatprep.subr.bf16.mxu0 0
        %4295 = vmatpush2.bf16.msra.mxu0 0
        %4296 = vmatprep.subr.bf16.mxu0 0
        %4297 = vmatpush2.bf16.msra.mxu0 0
        %4298 = vmatprep.subr.bf16.mxu0 0
        %4299 = vmatpush2.bf16.msra.mxu0 0
        %4300 = vmatprep.subr.bf16.mxu0 0
        %4301 = vmatpush2.bf16.msra.mxu0 0
        %4302 = vmatprep.subr.bf16.mxu0 0
        %4303 = vmatpush2.bf16.msra.mxu0 0
        %4304 = vmatprep.subr.bf16.mxu0 0
        %4305 = vmatpush2.bf16.msra.mxu0 0
        %4306 = vmatprep.subr.bf16.mxu0 0
        %4307 = vmatpush2.bf16.msra.mxu0 0
        %4308 = vmatprep.subr.bf16.mxu0 0
        %4309 = vmatpush2.bf16.msra.mxu0 0
        %4310 = vmatprep.mubr.bf16.mxu0 0
        %4311 = vmatmul.mubr.bf16.gmra.mxu0 %v4213
        %v4312 = vpop.f32.mrf.mxu0
        %v4313 = vadd.f32 %v4264, %v4312
        %v4314 = vpop.f32.mrf.mxu0
        %v4315 = vpop.f32.mrf.mxu0
        %v4316 = vpop.f32.mrf.mxu0
        %4317 = vdwg.mxu0
        %v4318 = vld [vmem:[%s55] sm:$0xf]
        %v4319 = vld [vmem:[%s55 + $0x4] sm:$0xf]
        %v4320 = vld [vmem:[%s55 + $0x8] sm:$0xf]
        %v4321 = vld [vmem:[%s55 + $0xc] sm:$0xf]
        %v4322 = vld [vmem:[%s57] sm:$0x1]
        %v4324 = vlaneseq
        %v4325 = vshrl.u32 %v4324, 7
        %v4326 = vsub.s32 0, %v4325
        %v4327 = vrot.slane %v4322, %v4326
        %v4333 = vunpack.c.l.b16 %v4318
        %v4334 = vunpack.c.l.b16 %v4319
        %v4335 = vunpack.c.l.b16 %v4320
        %v4336 = vunpack.c.l.b16 %v4321
        %v4337 = vpack.c.b16 %v4334, %v4333
        %v4338 = vpack.c.b16 %v4336, %v4335
        %4341 = vmatprep.subr.bf16.mxu0 0
        %4342 = vmatpush1.bf16.msra.mxu0 0
        %4343 = vmatprep.subr.bf16.mxu0 0
        %4344 = vmatpush1.bf16.msra.mxu0 0
        %4345 = vmatprep.subr.bf16.mxu0 0
        %4346 = vmatpush1.bf16.msra.mxu0 0
        %4347 = vmatprep.subr.bf16.mxu0 0
        %4348 = vmatpush1.bf16.msra.mxu0 0
        %4349 = vmatprep.subr.bf16.mxu0 0
        %4350 = vmatpush1.bf16.msra.mxu0 0
        %4351 = vmatprep.subr.bf16.mxu0 0
        %4352 = vmatpush1.bf16.msra.mxu0 0
        %4353 = vmatprep.subr.bf16.mxu0 0
        %4354 = vmatpush1.bf16.msra.mxu0 %v4338
        %4355 = vmatprep.subr.bf16.mxu0 0
        %4356 = vmatpush1.bf16.msra.mxu0 %v4337
        %4357 = vmatprep.subr.bf16.mxu0 0
        %4358 = vmatpush2.bf16.msra.mxu0 0
        %4359 = vmatprep.subr.bf16.mxu0 0
        %4360 = vmatpush2.bf16.msra.mxu0 0
        %4361 = vmatprep.subr.bf16.mxu0 0
        %4362 = vmatpush2.bf16.msra.mxu0 0
        %4363 = vmatprep.subr.bf16.mxu0 0
        %4364 = vmatpush2.bf16.msra.mxu0 0
        %4365 = vmatprep.subr.bf16.mxu0 0
        %4366 = vmatpush2.bf16.msra.mxu0 0
        %4367 = vmatprep.subr.bf16.mxu0 0
        %4368 = vmatpush2.bf16.msra.mxu0 0
        %4369 = vmatprep.subr.bf16.mxu0 0
        %4370 = vmatpush2.bf16.msra.mxu0 0
        %4371 = vmatprep.subr.bf16.mxu0 0
        %4372 = vmatpush2.bf16.msra.mxu0 0
        %4373 = vmatprep.mubr.bf16.mxu0 0
        %4374 = vmatmul.mubr.bf16.gmra.mxu0 %v4213
        %v4375 = vpop.f32.mrf.mxu0
        %v4376 = vadd.f32 %v4327, %v4375
        %v4377 = vpop.f32.mrf.mxu0
        %v4378 = vpop.f32.mrf.mxu0
        %v4379 = vpop.f32.mrf.mxu0
        %4380 = vdwg.mxu0
        %v4381 = vld [vmem:[%s59] sm:$0xf]
        %v4382 = vld [vmem:[%s59 + $0x4] sm:$0xf]
        %v4383 = vld [vmem:[%s59 + $0x8] sm:$0xf]
        %v4384 = vld [vmem:[%s59 + $0xc] sm:$0xf]
        %v4385 = vld [vmem:[%s61] sm:$0x1]
        %v4387 = vsel %vm2044, %v4250, 0
        %v4390 = vsel %vm2044, %v4313, 0
        %4392 = vmatprep.subr.mxu0 0.0
        %4393 = vmatpush1.xpose.msra.mxu0 0.0
        %4394 = vmatprep.subr.mxu0 0.0
        %4395 = vmatpush1.xpose.msra.mxu0 0.0
        %4396 = vmatprep.subr.mxu0 0.0
        %4397 = vmatpush1.xpose.msra.mxu0 0.0
        %4398 = vmatprep.subr.mxu0 0.0
        %4399 = vmatpush1.xpose.msra.mxu0 0.0
        %4400 = vmatprep.subr.mxu0 0.0
        %4401 = vmatpush1.xpose.msra.mxu0 0.0
        %4402 = vmatprep.subr.mxu0 0.0
        %4403 = vmatpush1.xpose.msra.mxu0 0.0
        %4404 = vmatprep.subr.mxu0 0.0
        %4405 = vmatpush1.xpose.msra.mxu0 0.0
        %4406 = vmatprep.subr.mxu0 0.0
        %4407 = vmatpush1.xpose.msra.mxu0 0.0
        %4408 = vmatprep.subr.mxu0 0.0
        %4409 = vmatpush1.xpose.msra.mxu0 0.0
        %4410 = vmatprep.subr.mxu0 0.0
        %4411 = vmatpush1.xpose.msra.mxu0 0.0
        %4412 = vmatprep.subr.mxu0 0.0
        %4413 = vmatpush1.xpose.msra.mxu0 0.0
        %4414 = vmatprep.subr.mxu0 0.0
        %4415 = vmatpush1.xpose.msra.mxu0 0.0
        %4416 = vmatprep.subr.mxu0 0.0
        %4417 = vmatpush1.xpose.msra.mxu0 0.0
        %4418 = vmatprep.subr.mxu0 0.0
        %4419 = vmatpush1.xpose.msra.mxu0 0.0
        %4420 = vmatprep.subr.mxu0 0.0
        %4421 = vmatpush1.xpose.msra.mxu0 0.0
        %4422 = vmatprep.subr.mxu0 0.0
        %4423 = vmatpush1.xpose.msra.mxu0 %v4390
        %4424 = vmatprep.subr.mxu0 0.0
        %4425 = vmatpush2.xpose.msra.mxu0 0.0
        %4426 = vmatprep.subr.mxu0 0.0
        %4427 = vmatpush2.xpose.msra.mxu0 0.0
        %4428 = vmatprep.subr.mxu0 0.0
        %4429 = vmatpush2.xpose.msra.mxu0 0.0
        %4430 = vmatprep.subr.mxu0 0.0
        %4431 = vmatpush2.xpose.msra.mxu0 0.0
        %4432 = vmatprep.subr.mxu0 0.0
        %4433 = vmatpush2.xpose.msra.mxu0 0.0
        %4434 = vmatprep.subr.mxu0 0.0
        %4435 = vmatpush2.xpose.msra.mxu0 0.0
        %4436 = vmatprep.subr.mxu0 0.0
        %4437 = vmatpush2.xpose.msra.mxu0 0.0
        %4438 = vmatprep.subr.mxu0 0.0
        %4439 = vmatpush2.xpose.msra.mxu0 0.0
        %4440 = vmatprep.subr.mxu0 0.0
        %4441 = vmatpush2.xpose.msra.mxu0 0.0
        %4442 = vmatprep.subr.mxu0 0.0
        %4443 = vmatpush2.xpose.msra.mxu0 0.0
        %4444 = vmatprep.subr.mxu0 0.0
        %4445 = vmatpush2.xpose.msra.mxu0 0.0
        %4446 = vmatprep.subr.mxu0 0.0
        %4447 = vmatpush2.xpose.msra.mxu0 0.0
        %4448 = vmatprep.subr.mxu0 0.0
        %4449 = vmatpush2.xpose.msra.mxu0 0.0
        %4450 = vmatprep.subr.mxu0 0.0
        %4451 = vmatpush2.xpose.msra.mxu0 0.0
        %4452 = vmatprep.subr.mxu0 0.0
        %4453 = vmatpush2.xpose.msra.mxu0 0.0
        %4454 = vmatprep.subr.mxu0 0.0
        %4455 = vmatpush2.xpose.msra.mxu0 0.0
        %4456 = vmatprep.mubr.f32.mxu0 0.0
        %4457 = vmatmul.mubr.f32.gmra.mxu0 %v4387
        %v4458 = vpop.f32.mrf.mxu0
        %v4459 = vadd.f32 0.0, %v4458
        %v4460 = vpop.f32.mrf.mxu0
        %4461 = vdwg.mxu0
        %4462 = vrot.lane.b32.xlu0 %v4250, 120
        %v4463 = vpop.permute.xlu0 %4462
        %4464 = vrot.lane.b32.xlu0 %v4313, 120
        %v4465 = vpop.permute.xlu0 %4464
        %v4466 = vsel %vm2044, %v4463, 0
        %v4468 = vsel %vm2044, %v4465, 0
        %4470 = vmatprep.subr.mxu0 0.0
        %4471 = vmatpush1.xpose.msra.mxu0 0.0
        %4472 = vmatprep.subr.mxu0 0.0
        %4473 = vmatpush1.xpose.msra.mxu0 0.0
        %4474 = vmatprep.subr.mxu0 0.0
        %4475 = vmatpush1.xpose.msra.mxu0 0.0
        %4476 = vmatprep.subr.mxu0 0.0
        %4477 = vmatpush1.xpose.msra.mxu0 0.0
        %4478 = vmatprep.subr.mxu0 0.0
        %4479 = vmatpush1.xpose.msra.mxu0 0.0
        %4480 = vmatprep.subr.mxu0 0.0
        %4481 = vmatpush1.xpose.msra.mxu0 0.0
        %4482 = vmatprep.subr.mxu0 0.0
        %4483 = vmatpush1.xpose.msra.mxu0 0.0
        %4484 = vmatprep.subr.mxu0 0.0
        %4485 = vmatpush1.xpose.msra.mxu0 0.0
        %4486 = vmatprep.subr.mxu0 0.0
        %4487 = vmatpush1.xpose.msra.mxu0 0.0
        %4488 = vmatprep.subr.mxu0 0.0
        %4489 = vmatpush1.xpose.msra.mxu0 0.0
        %4490 = vmatprep.subr.mxu0 0.0
        %4491 = vmatpush1.xpose.msra.mxu0 0.0
        %4492 = vmatprep.subr.mxu0 0.0
        %4493 = vmatpush1.xpose.msra.mxu0 0.0
        %4494 = vmatprep.subr.mxu0 0.0
        %4495 = vmatpush1.xpose.msra.mxu0 0.0
        %4496 = vmatprep.subr.mxu0 0.0
        %4497 = vmatpush1.xpose.msra.mxu0 0.0
        %4498 = vmatprep.subr.mxu0 0.0
        %4499 = vmatpush1.xpose.msra.mxu0 0.0
        %4500 = vmatprep.subr.mxu0 0.0
        %4501 = vmatpush1.xpose.msra.mxu0 %v4468
        %4502 = vmatprep.subr.mxu0 0.0
        %4503 = vmatpush2.xpose.msra.mxu0 0.0
        %4504 = vmatprep.subr.mxu0 0.0
        %4505 = vmatpush2.xpose.msra.mxu0 0.0
        %4506 = vmatprep.subr.mxu0 0.0
        %4507 = vmatpush2.xpose.msra.mxu0 0.0
        %4508 = vmatprep.subr.mxu0 0.0
        %4509 = vmatpush2.xpose.msra.mxu0 0.0
        %4510 = vmatprep.subr.mxu0 0.0
        %4511 = vmatpush2.xpose.msra.mxu0 0.0
        %4512 = vmatprep.subr.mxu0 0.0
        %4513 = vmatpush2.xpose.msra.mxu0 0.0
        %4514 = vmatprep.subr.mxu0 0.0
        %4515 = vmatpush2.xpose.msra.mxu0 0.0
        %4516 = vmatprep.subr.mxu0 0.0
        %4517 = vmatpush2.xpose.msra.mxu0 0.0
        %4518 = vmatprep.subr.mxu0 0.0
        %4519 = vmatpush2.xpose.msra.mxu0 0.0
        %4520 = vmatprep.subr.mxu0 0.0
        %4521 = vmatpush2.xpose.msra.mxu0 0.0
        %4522 = vmatprep.subr.mxu0 0.0
        %4523 = vmatpush2.xpose.msra.mxu0 0.0
        %4524 = vmatprep.subr.mxu0 0.0
        %4525 = vmatpush2.xpose.msra.mxu0 0.0
        %4526 = vmatprep.subr.mxu0 0.0
        %4527 = vmatpush2.xpose.msra.mxu0 0.0
        %4528 = vmatprep.subr.mxu0 0.0
        %4529 = vmatpush2.xpose.msra.mxu0 0.0
        %4530 = vmatprep.subr.mxu0 0.0
        %4531 = vmatpush2.xpose.msra.mxu0 0.0
        %4532 = vmatprep.subr.mxu0 0.0
        %4533 = vmatpush2.xpose.msra.mxu0 0.0
        %4534 = vmatprep.mubr.f32.mxu0 0.0
        %4535 = vmatmul.mubr.f32.gmra.mxu0 %v4466
        %v4536 = vpop.f32.mrf.mxu0
        %v4537 = vadd.f32 0.0, %v4536
        %v4538 = vpop.f32.mrf.mxu0
        %4539 = vdwg.mxu0
        %4540 = vrot.lane.b32.xlu0 %v4250, 112
        %v4541 = vpop.permute.xlu0 %4540
        %4542 = vrot.lane.b32.xlu0 %v4313, 112
        %v4543 = vpop.permute.xlu0 %4542
        %v4544 = vsel %vm2044, %v4541, 0
        %v4546 = vsel %vm2044, %v4543, 0
        %4548 = vmatprep.subr.mxu0 0.0
        %4549 = vmatpush1.xpose.msra.mxu0 0.0
        %4550 = vmatprep.subr.mxu0 0.0
        %4551 = vmatpush1.xpose.msra.mxu0 0.0
        %4552 = vmatprep.subr.mxu0 0.0
        %4553 = vmatpush1.xpose.msra.mxu0 0.0
        %4554 = vmatprep.subr.mxu0 0.0
        %4555 = vmatpush1.xpose.msra.mxu0 0.0
        %4556 = vmatprep.subr.mxu0 0.0
        %4557 = vmatpush1.xpose.msra.mxu0 0.0
        %4558 = vmatprep.subr.mxu0 0.0
        %4559 = vmatpush1.xpose.msra.mxu0 0.0
        %4560 = vmatprep.subr.mxu0 0.0
        %4561 = vmatpush1.xpose.msra.mxu0 0.0
        %4562 = vmatprep.subr.mxu0 0.0
        %4563 = vmatpush1.xpose.msra.mxu0 0.0
        %4564 = vmatprep.subr.mxu0 0.0
        %4565 = vmatpush1.xpose.msra.mxu0 0.0
        %4566 = vmatprep.subr.mxu0 0.0
        %4567 = vmatpush1.xpose.msra.mxu0 0.0
        %4568 = vmatprep.subr.mxu0 0.0
        %4569 = vmatpush1.xpose.msra.mxu0 0.0
        %4570 = vmatprep.subr.mxu0 0.0
        %4571 = vmatpush1.xpose.msra.mxu0 0.0
        %4572 = vmatprep.subr.mxu0 0.0
        %4573 = vmatpush1.xpose.msra.mxu0 0.0
        %4574 = vmatprep.subr.mxu0 0.0
        %4575 = vmatpush1.xpose.msra.mxu0 0.0
        %4576 = vmatprep.subr.mxu0 0.0
        %4577 = vmatpush1.xpose.msra.mxu0 0.0
        %4578 = vmatprep.subr.mxu0 0.0
        %4579 = vmatpush1.xpose.msra.mxu0 %v4546
        %4580 = vmatprep.subr.mxu0 0.0
        %4581 = vmatpush2.xpose.msra.mxu0 0.0
        %4582 = vmatprep.subr.mxu0 0.0
        %4583 = vmatpush2.xpose.msra.mxu0 0.0
        %4584 = vmatprep.subr.mxu0 0.0
        %4585 = vmatpush2.xpose.msra.mxu0 0.0
        %4586 = vmatprep.subr.mxu0 0.0
        %4587 = vmatpush2.xpose.msra.mxu0 0.0
        %4588 = vmatprep.subr.mxu0 0.0
        %4589 = vmatpush2.xpose.msra.mxu0 0.0
        %4590 = vmatprep.subr.mxu0 0.0
        %4591 = vmatpush2.xpose.msra.mxu0 0.0
        %4592 = vmatprep.subr.mxu0 0.0
        %4593 = vmatpush2.xpose.msra.mxu0 0.0
        %4594 = vmatprep.subr.mxu0 0.0
        %4595 = vmatpush2.xpose.msra.mxu0 0.0
        %4596 = vmatprep.subr.mxu0 0.0
        %4597 = vmatpush2.xpose.msra.mxu0 0.0
        %4598 = vmatprep.subr.mxu0 0.0
        %4599 = vmatpush2.xpose.msra.mxu0 0.0
        %4600 = vmatprep.subr.mxu0 0.0
        %4601 = vmatpush2.xpose.msra.mxu0 0.0
        %4602 = vmatprep.subr.mxu0 0.0
        %4603 = vmatpush2.xpose.msra.mxu0 0.0
        %4604 = vmatprep.subr.mxu0 0.0
        %4605 = vmatpush2.xpose.msra.mxu0 0.0
        %4606 = vmatprep.subr.mxu0 0.0
        %4607 = vmatpush2.xpose.msra.mxu0 0.0
        %4608 = vmatprep.subr.mxu0 0.0
        %4609 = vmatpush2.xpose.msra.mxu0 0.0
        %4610 = vmatprep.subr.mxu0 0.0
        %4611 = vmatpush2.xpose.msra.mxu0 0.0
        %4612 = vmatprep.mubr.f32.mxu0 0.0
        %4613 = vmatmul.mubr.f32.gmra.mxu0 %v4544
        %v4614 = vpop.f32.mrf.mxu0
        %v4615 = vadd.f32 0.0, %v4614
        %v4616 = vpop.f32.mrf.mxu0
        %4617 = vdwg.mxu0
        %4618 = vrot.lane.b32.xlu0 %v4250, 104
        %v4619 = vpop.permute.xlu0 %4618
        %4620 = vrot.lane.b32.xlu0 %v4313, 104
        %v4621 = vpop.permute.xlu0 %4620
        %v4622 = vsel %vm2044, %v4619, 0
        %v4624 = vsel %vm2044, %v4621, 0
        %4626 = vmatprep.subr.mxu0 0.0
        %4627 = vmatpush1.xpose.msra.mxu0 0.0
        %4628 = vmatprep.subr.mxu0 0.0
        %4629 = vmatpush1.xpose.msra.mxu0 0.0
        %4630 = vmatprep.subr.mxu0 0.0
        %4631 = vmatpush1.xpose.msra.mxu0 0.0
        %4632 = vmatprep.subr.mxu0 0.0
        %4633 = vmatpush1.xpose.msra.mxu0 0.0
        %4634 = vmatprep.subr.mxu0 0.0
        %4635 = vmatpush1.xpose.msra.mxu0 0.0
        %4636 = vmatprep.subr.mxu0 0.0
        %4637 = vmatpush1.xpose.msra.mxu0 0.0
        %4638 = vmatprep.subr.mxu0 0.0
        %4639 = vmatpush1.xpose.msra.mxu0 0.0
        %4640 = vmatprep.subr.mxu0 0.0
        %4641 = vmatpush1.xpose.msra.mxu0 0.0
        %4642 = vmatprep.subr.mxu0 0.0
        %4643 = vmatpush1.xpose.msra.mxu0 0.0
        %4644 = vmatprep.subr.mxu0 0.0
        %4645 = vmatpush1.xpose.msra.mxu0 0.0
        %4646 = vmatprep.subr.mxu0 0.0
        %4647 = vmatpush1.xpose.msra.mxu0 0.0
        %4648 = vmatprep.subr.mxu0 0.0
        %4649 = vmatpush1.xpose.msra.mxu0 0.0
        %4650 = vmatprep.subr.mxu0 0.0
        %4651 = vmatpush1.xpose.msra.mxu0 0.0
        %4652 = vmatprep.subr.mxu0 0.0
        %4653 = vmatpush1.xpose.msra.mxu0 0.0
        %4654 = vmatprep.subr.mxu0 0.0
        %4655 = vmatpush1.xpose.msra.mxu0 0.0
        %4656 = vmatprep.subr.mxu0 0.0
        %4657 = vmatpush1.xpose.msra.mxu0 %v4624
        %4658 = vmatprep.subr.mxu0 0.0
        %4659 = vmatpush2.xpose.msra.mxu0 0.0
        %4660 = vmatprep.subr.mxu0 0.0
        %4661 = vmatpush2.xpose.msra.mxu0 0.0
        %4662 = vmatprep.subr.mxu0 0.0
        %4663 = vmatpush2.xpose.msra.mxu0 0.0
        %4664 = vmatprep.subr.mxu0 0.0
        %4665 = vmatpush2.xpose.msra.mxu0 0.0
        %4666 = vmatprep.subr.mxu0 0.0
        %4667 = vmatpush2.xpose.msra.mxu0 0.0
        %4668 = vmatprep.subr.mxu0 0.0
        %4669 = vmatpush2.xpose.msra.mxu0 0.0
        %4670 = vmatprep.subr.mxu0 0.0
        %4671 = vmatpush2.xpose.msra.mxu0 0.0
        %4672 = vmatprep.subr.mxu0 0.0
        %4673 = vmatpush2.xpose.msra.mxu0 0.0
        %4674 = vmatprep.subr.mxu0 0.0
        %4675 = vmatpush2.xpose.msra.mxu0 0.0
        %4676 = vmatprep.subr.mxu0 0.0
        %4677 = vmatpush2.xpose.msra.mxu0 0.0
        %4678 = vmatprep.subr.mxu0 0.0
        %4679 = vmatpush2.xpose.msra.mxu0 0.0
        %4680 = vmatprep.subr.mxu0 0.0
        %4681 = vmatpush2.xpose.msra.mxu0 0.0
        %4682 = vmatprep.subr.mxu0 0.0
        %4683 = vmatpush2.xpose.msra.mxu0 0.0
        %4684 = vmatprep.subr.mxu0 0.0
        %4685 = vmatpush2.xpose.msra.mxu0 0.0
        %4686 = vmatprep.subr.mxu0 0.0
        %4687 = vmatpush2.xpose.msra.mxu0 0.0
        %4688 = vmatprep.subr.mxu0 0.0
        %4689 = vmatpush2.xpose.msra.mxu0 0.0
        %4690 = vmatprep.mubr.f32.mxu0 0.0
        %4691 = vmatmul.mubr.f32.gmra.mxu0 %v4622
        %v4692 = vpop.f32.mrf.mxu0
        %v4693 = vadd.f32 0.0, %v4692
        %v4694 = vpop.f32.mrf.mxu0
        %4695 = vdwg.mxu0
        %v4696 = vadd.f32 %v4459, %v1844
        %v4697 = vadd.f32 %v4537, %v1844
        %v4698 = vadd.f32 %v4615, %v1844
        %v4699 = vadd.f32 %v4693, %v1844
        %v4700 = vsel %vm2044, %v4696, -inf
        %4701 = vmax.xlane.f32.xlu0 %v4700
        %v4702 = vpop.xlane.xlu0 %4701
        %v4703 = vsel %vm2044, %v4697, -inf
        %4704 = vmax.xlane.f32.xlu0 %v4703
        %v4705 = vpop.xlane.xlu0 %4704
        %v4706 = vsel %vm2044, %v4698, -inf
        %4707 = vmax.xlane.f32.xlu0 %v4706
        %v4708 = vpop.xlane.xlu0 %4707
        %v4709 = vsel %vm2044, %v4699, -inf
        %4710 = vmax.xlane.f32.xlu0 %v4709
        %v4711 = vpop.xlane.xlu0 %4710
        %v4712 = vsub.f32 %v4696, %v4702
        %v4713 = vsub.f32 %v4697, %v4705
        %v4714 = vsub.f32 %v4698, %v4708
        %v4715 = vsub.f32 %v4699, %v4711
        %v4716 = vmul.f32 %v4712, 1.442695
        %v4717 = vpow.pop %v4716
        %v4718 = vmul.f32 %v4713, 1.442695
        %v4719 = vpow.pop %v4718
        %v4720 = vmul.f32 %v4714, 1.442695
        %v4721 = vpow.pop %v4720
        %v4722 = vmul.f32 %v4715, 1.442695
        %v4723 = vpow.pop %v4722
        %v4724 = vsel %vm2044, %v4717, 0.0
        %4725 = vadd.xlane.f32.xlu0 %v4724
        %v4726 = vpop.xlane.xlu0 %4725
        %v4727 = vsel %vm2044, %v4719, 0.0
        %4728 = vadd.xlane.f32.xlu0 %v4727
        %v4729 = vpop.xlane.xlu0 %4728
        %v4730 = vsel %vm2044, %v4721, 0.0
        %4731 = vadd.xlane.f32.xlu0 %v4730
        %v4732 = vpop.xlane.xlu0 %4731
        %v4733 = vsel %vm2044, %v4723, 0.0
        %4734 = vadd.xlane.f32.xlu0 %v4733
        %v4735 = vpop.xlane.xlu0 %4734
        %v4736 = vrcp.pop %v4726
        %v4737 = vrcp.pop %v4729
        %v4738 = vrcp.pop %v4732
        %v4739 = vrcp.pop %v4735
        %v4740 = vmul.f32 %v4717, %v4736
        %v4741 = vmul.f32 %v4719, %v4737
        %v4742 = vmul.f32 %v4721, %v4738
        %v4743 = vmul.f32 %v4723, %v4739
        %v4745 = vsel %vm2044, %v4740, 0
        %4747 = vmatprep.subr.mxu0 0.0
        %4748 = vmatpush1.msra.mxu0 0.0
        %4749 = vmatprep.subr.mxu0 0.0
        %4750 = vmatpush1.msra.mxu0 0.0
        %4751 = vmatprep.subr.mxu0 0.0
        %4752 = vmatpush1.msra.mxu0 0.0
        %4753 = vmatprep.subr.mxu0 0.0
        %4754 = vmatpush1.msra.mxu0 0.0
        %4755 = vmatprep.subr.mxu0 0.0
        %4756 = vmatpush1.msra.mxu0 0.0
        %4757 = vmatprep.subr.mxu0 0.0
        %4758 = vmatpush1.msra.mxu0 0.0
        %4759 = vmatprep.subr.mxu0 0.0
        %4760 = vmatpush1.msra.mxu0 0.0
        %4761 = vmatprep.subr.mxu0 0.0
        %4762 = vmatpush1.msra.mxu0 0.0
        %4763 = vmatprep.subr.mxu0 0.0
        %4764 = vmatpush1.msra.mxu0 0.0
        %4765 = vmatprep.subr.mxu0 0.0
        %4766 = vmatpush1.msra.mxu0 0.0
        %4767 = vmatprep.subr.mxu0 0.0
        %4768 = vmatpush1.msra.mxu0 0.0
        %4769 = vmatprep.subr.mxu0 0.0
        %4770 = vmatpush1.msra.mxu0 0.0
        %4771 = vmatprep.subr.mxu0 0.0
        %4772 = vmatpush1.msra.mxu0 0.0
        %4773 = vmatprep.subr.mxu0 0.0
        %4774 = vmatpush1.msra.mxu0 0.0
        %4775 = vmatprep.subr.mxu0 0.0
        %4776 = vmatpush1.msra.mxu0 0.0
        %4777 = vmatprep.subr.mxu0 0.0
        %4778 = vmatpush1.msra.mxu0 %v4376
        %4779 = vmatprep.subr.mxu0 0.0
        %4780 = vmatpush2.msra.mxu0 0.0
        %4781 = vmatprep.subr.mxu0 0.0
        %4782 = vmatpush2.msra.mxu0 0.0
        %4783 = vmatprep.subr.mxu0 0.0
        %4784 = vmatpush2.msra.mxu0 0.0
        %4785 = vmatprep.subr.mxu0 0.0
        %4786 = vmatpush2.msra.mxu0 0.0
        %4787 = vmatprep.subr.mxu0 0.0
        %4788 = vmatpush2.msra.mxu0 0.0
        %4789 = vmatprep.subr.mxu0 0.0
        %4790 = vmatpush2.msra.mxu0 0.0
        %4791 = vmatprep.subr.mxu0 0.0
        %4792 = vmatpush2.msra.mxu0 0.0
        %4793 = vmatprep.subr.mxu0 0.0
        %4794 = vmatpush2.msra.mxu0 0.0
        %4795 = vmatprep.subr.mxu0 0.0
        %4796 = vmatpush2.msra.mxu0 0.0
        %4797 = vmatprep.subr.mxu0 0.0
        %4798 = vmatpush2.msra.mxu0 0.0
        %4799 = vmatprep.subr.mxu0 0.0
        %4800 = vmatpush2.msra.mxu0 0.0
        %4801 = vmatprep.subr.mxu0 0.0
        %4802 = vmatpush2.msra.mxu0 0.0
        %4803 = vmatprep.subr.mxu0 0.0
        %4804 = vmatpush2.msra.mxu0 0.0
        %4805 = vmatprep.subr.mxu0 0.0
        %4806 = vmatpush2.msra.mxu0 0.0
        %4807 = vmatprep.subr.mxu0 0.0
        %4808 = vmatpush2.msra.mxu0 0.0
        %4809 = vmatprep.subr.mxu0 0.0
        %4810 = vmatpush2.msra.mxu0 0.0
        %4811 = vmatprep.mubr.f32.mxu0 0.0
        %4812 = vmatmul.mubr.f32.gmra.mxu0 %v4745
        %v4813 = vpop.f32.mrf.mxu0
        %v4814 = vadd.f32 0.0, %v4813
        %v4815 = vpop.f32.mrf.mxu0
        %4816 = vdwg.mxu0
        %4818 = vrot.lane.b32.xlu0 %v4376, 120
        %v4819 = vpop.permute.xlu0 %4818
        %v4822 = vsel %vm2044, %v4741, 0
        %4824 = vmatprep.subr.mxu0 0.0
        %4825 = vmatpush1.msra.mxu0 0.0
        %4826 = vmatprep.subr.mxu0 0.0
        %4827 = vmatpush1.msra.mxu0 0.0
        %4828 = vmatprep.subr.mxu0 0.0
        %4829 = vmatpush1.msra.mxu0 0.0
        %4830 = vmatprep.subr.mxu0 0.0
        %4831 = vmatpush1.msra.mxu0 0.0
        %4832 = vmatprep.subr.mxu0 0.0
        %4833 = vmatpush1.msra.mxu0 0.0
        %4834 = vmatprep.subr.mxu0 0.0
        %4835 = vmatpush1.msra.mxu0 0.0
        %4836 = vmatprep.subr.mxu0 0.0
        %4837 = vmatpush1.msra.mxu0 0.0
        %4838 = vmatprep.subr.mxu0 0.0
        %4839 = vmatpush1.msra.mxu0 0.0
        %4840 = vmatprep.subr.mxu0 0.0
        %4841 = vmatpush1.msra.mxu0 0.0
        %4842 = vmatprep.subr.mxu0 0.0
        %4843 = vmatpush1.msra.mxu0 0.0
        %4844 = vmatprep.subr.mxu0 0.0
        %4845 = vmatpush1.msra.mxu0 0.0
        %4846 = vmatprep.subr.mxu0 0.0
        %4847 = vmatpush1.msra.mxu0 0.0
        %4848 = vmatprep.subr.mxu0 0.0
        %4849 = vmatpush1.msra.mxu0 0.0
        %4850 = vmatprep.subr.mxu0 0.0
        %4851 = vmatpush1.msra.mxu0 0.0
        %4852 = vmatprep.subr.mxu0 0.0
        %4853 = vmatpush1.msra.mxu0 0.0
        %4854 = vmatprep.subr.mxu0 0.0
        %4855 = vmatpush1.msra.mxu0 %v4819
        %4856 = vmatprep.subr.mxu0 0.0
        %4857 = vmatpush2.msra.mxu0 0.0
        %4858 = vmatprep.subr.mxu0 0.0
        %4859 = vmatpush2.msra.mxu0 0.0
        %4860 = vmatprep.subr.mxu0 0.0
        %4861 = vmatpush2.msra.mxu0 0.0
        %4862 = vmatprep.subr.mxu0 0.0
        %4863 = vmatpush2.msra.mxu0 0.0
        %4864 = vmatprep.subr.mxu0 0.0
        %4865 = vmatpush2.msra.mxu0 0.0
        %4866 = vmatprep.subr.mxu0 0.0
        %4867 = vmatpush2.msra.mxu0 0.0
        %4868 = vmatprep.subr.mxu0 0.0
        %4869 = vmatpush2.msra.mxu0 0.0
        %4870 = vmatprep.subr.mxu0 0.0
        %4871 = vmatpush2.msra.mxu0 0.0
        %4872 = vmatprep.subr.mxu0 0.0
        %4873 = vmatpush2.msra.mxu0 0.0
        %4874 = vmatprep.subr.mxu0 0.0
        %4875 = vmatpush2.msra.mxu0 0.0
        %4876 = vmatprep.subr.mxu0 0.0
        %4877 = vmatpush2.msra.mxu0 0.0
        %4878 = vmatprep.subr.mxu0 0.0
        %4879 = vmatpush2.msra.mxu0 0.0
        %4880 = vmatprep.subr.mxu0 0.0
        %4881 = vmatpush2.msra.mxu0 0.0
        %4882 = vmatprep.subr.mxu0 0.0
        %4883 = vmatpush2.msra.mxu0 0.0
        %4884 = vmatprep.subr.mxu0 0.0
        %4885 = vmatpush2.msra.mxu0 0.0
        %4886 = vmatprep.subr.mxu0 0.0
        %4887 = vmatpush2.msra.mxu0 0.0
        %4888 = vmatprep.mubr.f32.mxu0 0.0
        %4889 = vmatmul.mubr.f32.gmra.mxu0 %v4822
        %v4890 = vpop.f32.mrf.mxu0
        %v4891 = vadd.f32 0.0, %v4890
        %v4892 = vpop.f32.mrf.mxu0
        %4893 = vdwg.mxu0
        %4894 = vrot.lane.b32.xlu0 %v4376, 112
        %v4895 = vpop.permute.xlu0 %4894
        %v4898 = vsel %vm2044, %v4742, 0
        %4900 = vmatprep.subr.mxu0 0.0
        %4901 = vmatpush1.msra.mxu0 0.0
        %4902 = vmatprep.subr.mxu0 0.0
        %4903 = vmatpush1.msra.mxu0 0.0
        %4904 = vmatprep.subr.mxu0 0.0
        %4905 = vmatpush1.msra.mxu0 0.0
        %4906 = vmatprep.subr.mxu0 0.0
        %4907 = vmatpush1.msra.mxu0 0.0
        %4908 = vmatprep.subr.mxu0 0.0
        %4909 = vmatpush1.msra.mxu0 0.0
        %4910 = vmatprep.subr.mxu0 0.0
        %4911 = vmatpush1.msra.mxu0 0.0
        %4912 = vmatprep.subr.mxu0 0.0
        %4913 = vmatpush1.msra.mxu0 0.0
        %4914 = vmatprep.subr.mxu0 0.0
        %4915 = vmatpush1.msra.mxu0 0.0
        %4916 = vmatprep.subr.mxu0 0.0
        %4917 = vmatpush1.msra.mxu0 0.0
        %4918 = vmatprep.subr.mxu0 0.0
        %4919 = vmatpush1.msra.mxu0 0.0
        %4920 = vmatprep.subr.mxu0 0.0
        %4921 = vmatpush1.msra.mxu0 0.0
        %4922 = vmatprep.subr.mxu0 0.0
        %4923 = vmatpush1.msra.mxu0 0.0
        %4924 = vmatprep.subr.mxu0 0.0
        %4925 = vmatpush1.msra.mxu0 0.0
        %4926 = vmatprep.subr.mxu0 0.0
        %4927 = vmatpush1.msra.mxu0 0.0
        %4928 = vmatprep.subr.mxu0 0.0
        %4929 = vmatpush1.msra.mxu0 0.0
        %4930 = vmatprep.subr.mxu0 0.0
        %4931 = vmatpush1.msra.mxu0 %v4895
        %4932 = vmatprep.subr.mxu0 0.0
        %4933 = vmatpush2.msra.mxu0 0.0
        %4934 = vmatprep.subr.mxu0 0.0
        %4935 = vmatpush2.msra.mxu0 0.0
        %4936 = vmatprep.subr.mxu0 0.0
        %4937 = vmatpush2.msra.mxu0 0.0
        %4938 = vmatprep.subr.mxu0 0.0
        %4939 = vmatpush2.msra.mxu0 0.0
        %4940 = vmatprep.subr.mxu0 0.0
        %4941 = vmatpush2.msra.mxu0 0.0
        %4942 = vmatprep.subr.mxu0 0.0
        %4943 = vmatpush2.msra.mxu0 0.0
        %4944 = vmatprep.subr.mxu0 0.0
        %4945 = vmatpush2.msra.mxu0 0.0
        %4946 = vmatprep.subr.mxu0 0.0
        %4947 = vmatpush2.msra.mxu0 0.0
        %4948 = vmatprep.subr.mxu0 0.0
        %4949 = vmatpush2.msra.mxu0 0.0
        %4950 = vmatprep.subr.mxu0 0.0
        %4951 = vmatpush2.msra.mxu0 0.0
        %4952 = vmatprep.subr.mxu0 0.0
        %4953 = vmatpush2.msra.mxu0 0.0
        %4954 = vmatprep.subr.mxu0 0.0
        %4955 = vmatpush2.msra.mxu0 0.0
        %4956 = vmatprep.subr.mxu0 0.0
        %4957 = vmatpush2.msra.mxu0 0.0
        %4958 = vmatprep.subr.mxu0 0.0
        %4959 = vmatpush2.msra.mxu0 0.0
        %4960 = vmatprep.subr.mxu0 0.0
        %4961 = vmatpush2.msra.mxu0 0.0
        %4962 = vmatprep.subr.mxu0 0.0
        %4963 = vmatpush2.msra.mxu0 0.0
        %4964 = vmatprep.mubr.f32.mxu0 0.0
        %4965 = vmatmul.mubr.f32.gmra.mxu0 %v4898
        %v4966 = vpop.f32.mrf.mxu0
        %v4967 = vadd.f32 0.0, %v4966
        %v4968 = vpop.f32.mrf.mxu0
        %4969 = vdwg.mxu0
        %4970 = vrot.lane.b32.xlu0 %v4376, 104
        %v4971 = vpop.permute.xlu0 %4970
        %v4974 = vsel %vm2044, %v4743, 0
        %4976 = vmatprep.subr.mxu0 0.0
        %4977 = vmatpush1.msra.mxu0 0.0
        %4978 = vmatprep.subr.mxu0 0.0
        %4979 = vmatpush1.msra.mxu0 0.0
        %4980 = vmatprep.subr.mxu0 0.0
        %4981 = vmatpush1.msra.mxu0 0.0
        %4982 = vmatprep.subr.mxu0 0.0
        %4983 = vmatpush1.msra.mxu0 0.0
        %4984 = vmatprep.subr.mxu0 0.0
        %4985 = vmatpush1.msra.mxu0 0.0
        %4986 = vmatprep.subr.mxu0 0.0
        %4987 = vmatpush1.msra.mxu0 0.0
        %4988 = vmatprep.subr.mxu0 0.0
        %4989 = vmatpush1.msra.mxu0 0.0
        %4990 = vmatprep.subr.mxu0 0.0
        %4991 = vmatpush1.msra.mxu0 0.0
        %4992 = vmatprep.subr.mxu0 0.0
        %4993 = vmatpush1.msra.mxu0 0.0
        %4994 = vmatprep.subr.mxu0 0.0
        %4995 = vmatpush1.msra.mxu0 0.0
        %4996 = vmatprep.subr.mxu0 0.0
        %4997 = vmatpush1.msra.mxu0 0.0
        %4998 = vmatprep.subr.mxu0 0.0
        %4999 = vmatpush1.msra.mxu0 0.0
        %5000 = vmatprep.subr.mxu0 0.0
        %5001 = vmatpush1.msra.mxu0 0.0
        %5002 = vmatprep.subr.mxu0 0.0
        %5003 = vmatpush1.msra.mxu0 0.0
        %5004 = vmatprep.subr.mxu0 0.0
        %5005 = vmatpush1.msra.mxu0 0.0
        %5006 = vmatprep.subr.mxu0 0.0
        %5007 = vmatpush1.msra.mxu0 %v4971
        %5008 = vmatprep.subr.mxu0 0.0
        %5009 = vmatpush2.msra.mxu0 0.0
        %5010 = vmatprep.subr.mxu0 0.0
        %5011 = vmatpush2.msra.mxu0 0.0
        %5012 = vmatprep.subr.mxu0 0.0
        %5013 = vmatpush2.msra.mxu0 0.0
        %5014 = vmatprep.subr.mxu0 0.0
        %5015 = vmatpush2.msra.mxu0 0.0
        %5016 = vmatprep.subr.mxu0 0.0
        %5017 = vmatpush2.msra.mxu0 0.0
        %5018 = vmatprep.subr.mxu0 0.0
        %5019 = vmatpush2.msra.mxu0 0.0
        %5020 = vmatprep.subr.mxu0 0.0
        %5021 = vmatpush2.msra.mxu0 0.0
        %5022 = vmatprep.subr.mxu0 0.0
        %5023 = vmatpush2.msra.mxu0 0.0
        %5024 = vmatprep.subr.mxu0 0.0
        %5025 = vmatpush2.msra.mxu0 0.0
        %5026 = vmatprep.subr.mxu0 0.0
        %5027 = vmatpush2.msra.mxu0 0.0
        %5028 = vmatprep.subr.mxu0 0.0
        %5029 = vmatpush2.msra.mxu0 0.0
        %5030 = vmatprep.subr.mxu0 0.0
        %5031 = vmatpush2.msra.mxu0 0.0
        %5032 = vmatprep.subr.mxu0 0.0
        %5033 = vmatpush2.msra.mxu0 0.0
        %5034 = vmatprep.subr.mxu0 0.0
        %5035 = vmatpush2.msra.mxu0 0.0
        %5036 = vmatprep.subr.mxu0 0.0
        %5037 = vmatpush2.msra.mxu0 0.0
        %5038 = vmatprep.subr.mxu0 0.0
        %5039 = vmatpush2.msra.mxu0 0.0
        %5040 = vmatprep.mubr.f32.mxu0 0.0
        %5041 = vmatmul.mubr.f32.gmra.mxu0 %v4974
        %v5042 = vpop.f32.mrf.mxu0
        %v5043 = vadd.f32 0.0, %v5042
        %v5044 = vpop.f32.mrf.mxu0
        %5045 = vdwg.mxu0
        %5047 = vrot.lane.b32.xlu0 %v4891, 8
        %v5048 = vpop.permute.xlu0 %5047
        %5051 = vrot.lane.b32.xlu0 %v4967, 16
        %v5052 = vpop.permute.xlu0 %5051
        %5055 = vrot.lane.b32.xlu0 %v5043, 24
        %v5056 = vpop.permute.xlu0 %5055
        %v5058 = vsel %vm2044, %v4814, %v5048
        %v5059 = vsel %vm2718, %v5058, %v5052
        %v5060 = vsel %vm2720, %v5059, %v5056
        %v5061 = vpack.c.bf16 %v5060, %v5060
        %v5063 = vlaneseq
        %v5064 = vshrl.u32 %v5063, 7
        %v5065 = vsub.s32 0, %v5064
        %v5066 = vrot.slane %v4385, %v5065
        %v5072 = vunpack.c.l.b16 %v4381
        %v5073 = vunpack.c.l.b16 %v4382
        %v5074 = vunpack.c.l.b16 %v4383
        %v5075 = vunpack.c.l.b16 %v4384
        %v5076 = vpack.c.b16 %v5073, %v5072
        %v5077 = vpack.c.b16 %v5075, %v5074
        %v5081 = vsel %vm1869, %v5061, 0
        %5083 = vmatprep.subr.bf16.mxu0 0
        %5084 = vmatpush1.bf16.msra.mxu0 0
        %5085 = vmatprep.subr.bf16.mxu0 0
        %5086 = vmatpush1.bf16.msra.mxu0 0
        %5087 = vmatprep.subr.bf16.mxu0 0
        %5088 = vmatpush1.bf16.msra.mxu0 0
        %5089 = vmatprep.subr.bf16.mxu0 0
        %5090 = vmatpush1.bf16.msra.mxu0 0
        %5091 = vmatprep.subr.bf16.mxu0 0
        %5092 = vmatpush1.bf16.msra.mxu0 0
        %5093 = vmatprep.subr.bf16.mxu0 0
        %5094 = vmatpush1.bf16.msra.mxu0 0
        %5095 = vmatprep.subr.bf16.mxu0 0
        %5096 = vmatpush1.bf16.msra.mxu0 %v5077
        %5097 = vmatprep.subr.bf16.mxu0 0
        %5098 = vmatpush1.bf16.msra.mxu0 %v5076
        %5099 = vmatprep.subr.bf16.mxu0 0
        %5100 = vmatpush2.bf16.msra.mxu0 0
        %5101 = vmatprep.subr.bf16.mxu0 0
        %5102 = vmatpush2.bf16.msra.mxu0 0
        %5103 = vmatprep.subr.bf16.mxu0 0
        %5104 = vmatpush2.bf16.msra.mxu0 0
        %5105 = vmatprep.subr.bf16.mxu0 0
        %5106 = vmatpush2.bf16.msra.mxu0 0
        %5107 = vmatprep.subr.bf16.mxu0 0
        %5108 = vmatpush2.bf16.msra.mxu0 0
        %5109 = vmatprep.subr.bf16.mxu0 0
        %5110 = vmatpush2.bf16.msra.mxu0 0
        %5111 = vmatprep.subr.bf16.mxu0 0
        %5112 = vmatpush2.bf16.msra.mxu0 0
        %5113 = vmatprep.subr.bf16.mxu0 0
        %5114 = vmatpush2.bf16.msra.mxu0 0
        %5115 = vmatprep.mubr.bf16.mxu0 0
        %5116 = vmatmul.mubr.bf16.gmra.mxu0 %v5081
        %v5117 = vpop.f32.mrf.mxu0
        %v5118 = vadd.f32 %v5066, %v5117
        %v5119 = vpop.f32.mrf.mxu0
        %v5120 = vpop.f32.mrf.mxu0
        %v5121 = vpop.f32.mrf.mxu0
        %5122 = vdwg.mxu0
        %v5123 = vadd.f32 %v1825, %v5118
        %v5124 = vld [vmem:[#allocation2] sm:$0x1]
        %v5125 = vld [vmem:[#allocation4] sm:$0x1]
        %v5126 = vsel %vm1869, %v5123, 0.0
        %5127 = vadd.xlane.f32.xlu0 %v5126
        %v5128 = vpop.xlane.xlu0 %5127
        %v5129 = vmul.f32 %v5128, %v2790
        %v5130 = vsub.f32 %v5123, %v5129
        %v5131 = vmul.f32 %v5130, %v5130
        %v5132 = vsel %vm1869, %v5131, 0.0
        %5133 = vadd.xlane.f32.xlu0 %v5132
        %v5134 = vpop.xlane.xlu0 %5133
        %v5135 = vmul.f32 %v5134, %v2790
        %v5136 = vadd.f32 %v5135, 1e-05
        %v5137 = vrsqrt.pop %v5136
        %v5138 = vmul.f32 %v5130, %v5137
        %v5140 = vlaneseq
        %v5141 = vshrl.u32 %v5140, 7
        %v5142 = vsub.s32 0, %v5141
        %v5143 = vrot.slane %v5124, %v5142
        %v5145 = vmul.f32 %v5138, %v5143
        %v5147 = vlaneseq
        %v5148 = vshrl.u32 %v5147, 7
        %v5149 = vsub.s32 0, %v5148
        %v5150 = vrot.slane %v5125, %v5149
        %v5152 = vadd.f32 %v5145, %v5150
        %v5153 = vld [vmem:[%s63] sm:$0xf]
        %v5154 = vld [vmem:[%s63 + $0x4] sm:$0xf]
        %v5155 = vld [vmem:[%s63 + $0x8] sm:$0xf]
        %v5156 = vld [vmem:[%s63 + $0xc] sm:$0xf]
        %v5157 = vld [vmem:[%s65] sm:$0x1]
        %v5158 = vpack.c.bf16 %v5152, %v5152
        %v5160 = vlaneseq
        %v5161 = vshrl.u32 %v5160, 7
        %v5162 = vsub.s32 0, %v5161
        %v5163 = vrot.slane %v5157, %v5162
        %v5169 = vunpack.c.l.b16 %v5153
        %v5170 = vunpack.c.l.b16 %v5154
        %v5171 = vunpack.c.l.b16 %v5155
        %v5172 = vunpack.c.l.b16 %v5156
        %v5173 = vpack.c.b16 %v5170, %v5169
        %v5174 = vpack.c.b16 %v5172, %v5171
        %v5178 = vsel %vm1869, %v5158, 0
        %5180 = vmatprep.subr.bf16.mxu0 0
        %5181 = vmatpush1.bf16.msra.mxu0 0
        %5182 = vmatprep.subr.bf16.mxu0 0
        %5183 = vmatpush1.bf16.msra.mxu0 0
        %5184 = vmatprep.subr.bf16.mxu0 0
        %5185 = vmatpush1.bf16.msra.mxu0 0
        %5186 = vmatprep.subr.bf16.mxu0 0
        %5187 = vmatpush1.bf16.msra.mxu0 0
        %5188 = vmatprep.subr.bf16.mxu0 0
        %5189 = vmatpush1.bf16.msra.mxu0 0
        %5190 = vmatprep.subr.bf16.mxu0 0
        %5191 = vmatpush1.bf16.msra.mxu0 0
        %5192 = vmatprep.subr.bf16.mxu0 0
        %5193 = vmatpush1.bf16.msra.mxu0 %v5174
        %5194 = vmatprep.subr.bf16.mxu0 0
        %5195 = vmatpush1.bf16.msra.mxu0 %v5173
        %5196 = vmatprep.subr.bf16.mxu0 0
        %5197 = vmatpush2.bf16.msra.mxu0 0
        %5198 = vmatprep.subr.bf16.mxu0 0
        %5199 = vmatpush2.bf16.msra.mxu0 0
        %5200 = vmatprep.subr.bf16.mxu0 0
        %5201 = vmatpush2.bf16.msra.mxu0 0
        %5202 = vmatprep.subr.bf16.mxu0 0
        %5203 = vmatpush2.bf16.msra.mxu0 0
        %5204 = vmatprep.subr.bf16.mxu0 0
        %5205 = vmatpush2.bf16.msra.mxu0 0
        %5206 = vmatprep.subr.bf16.mxu0 0
        %5207 = vmatpush2.bf16.msra.mxu0 0
        %5208 = vmatprep.subr.bf16.mxu0 0
        %5209 = vmatpush2.bf16.msra.mxu0 0
        %5210 = vmatprep.subr.bf16.mxu0 0
        %5211 = vmatpush2.bf16.msra.mxu0 0
        %5212 = vmatprep.mubr.bf16.mxu0 0
        %5213 = vmatmul.mubr.bf16.gmra.mxu0 %v5178
        %v5214 = vpop.f32.mrf.mxu0
        %v5215 = vadd.f32 %v5163, %v5214
        %v5216 = vpop.f32.mrf.mxu0
        %v5217 = vpop.f32.mrf.mxu0
        %v5218 = vpop.f32.mrf.mxu0
        %5219 = vdwg.mxu0
        %v5220 = vld [vmem:[%s67] sm:$0xf]
        %v5221 = vld [vmem:[%s67 + $0x4] sm:$0xf]
        %v5222 = vld [vmem:[%s67 + $0x8] sm:$0xf]
        %v5223 = vld [vmem:[%s67 + $0xc] sm:$0xf]
        %v5224 = vld [vmem:[%s69] sm:$0x1]
        %v5225 = vpack.c.bf16 %v4187, %v4187
        %v5227 = vlaneseq
        %v5228 = vshrl.u32 %v5227, 7
        %v5229 = vsub.s32 0, %v5228
        %v5230 = vrot.slane %v5224, %v5229
        %v5236 = vunpack.c.l.b16 %v5220
        %v5237 = vunpack.c.l.b16 %v5221
        %v5238 = vunpack.c.l.b16 %v5222
        %v5239 = vunpack.c.l.b16 %v5223
        %v5240 = vpack.c.b16 %v5237, %v5236
        %v5241 = vpack.c.b16 %v5239, %v5238
        %v5245 = vsel %vm1869, %v5225, 0
        %5247 = vmatprep.subr.bf16.mxu0 0
        %5248 = vmatpush1.bf16.msra.mxu0 0
        %5249 = vmatprep.subr.bf16.mxu0 0
        %5250 = vmatpush1.bf16.msra.mxu0 0
        %5251 = vmatprep.subr.bf16.mxu0 0
        %5252 = vmatpush1.bf16.msra.mxu0 0
        %5253 = vmatprep.subr.bf16.mxu0 0
        %5254 = vmatpush1.bf16.msra.mxu0 0
        %5255 = vmatprep.subr.bf16.mxu0 0
        %5256 = vmatpush1.bf16.msra.mxu0 0
        %5257 = vmatprep.subr.bf16.mxu0 0
        %5258 = vmatpush1.bf16.msra.mxu0 0
        %5259 = vmatprep.subr.bf16.mxu0 0
        %5260 = vmatpush1.bf16.msra.mxu0 %v5241
        %5261 = vmatprep.subr.bf16.mxu0 0
        %5262 = vmatpush1.bf16.msra.mxu0 %v5240
        %5263 = vmatprep.subr.bf16.mxu0 0
        %5264 = vmatpush2.bf16.msra.mxu0 0
        %5265 = vmatprep.subr.bf16.mxu0 0
        %5266 = vmatpush2.bf16.msra.mxu0 0
        %5267 = vmatprep.subr.bf16.mxu0 0
        %5268 = vmatpush2.bf16.msra.mxu0 0
        %5269 = vmatprep.subr.bf16.mxu0 0
        %5270 = vmatpush2.bf16.msra.mxu0 0
        %5271 = vmatprep.subr.bf16.mxu0 0
        %5272 = vmatpush2.bf16.msra.mxu0 0
        %5273 = vmatprep.subr.bf16.mxu0 0
        %5274 = vmatpush2.bf16.msra.mxu0 0
        %5275 = vmatprep.subr.bf16.mxu0 0
        %5276 = vmatpush2.bf16.msra.mxu0 0
        %5277 = vmatprep.subr.bf16.mxu0 0
        %5278 = vmatpush2.bf16.msra.mxu0 0
        %5279 = vmatprep.mubr.bf16.mxu0 0
        %5280 = vmatmul.mubr.bf16.gmra.mxu0 %v5245
        %v5281 = vpop.f32.mrf.mxu0
        %v5282 = vadd.f32 %v5230, %v5281
        %v5283 = vpop.f32.mrf.mxu0
        %v5284 = vpop.f32.mrf.mxu0
        %v5285 = vpop.f32.mrf.mxu0
        %5286 = vdwg.mxu0
        %v5287 = vld [vmem:[%s71] sm:$0xf]
        %v5288 = vld [vmem:[%s71 + $0x4] sm:$0xf]
        %v5289 = vld [vmem:[%s71 + $0x8] sm:$0xf]
        %v5290 = vld [vmem:[%s71 + $0xc] sm:$0xf]
        %v5291 = vld [vmem:[%s73] sm:$0x1]
        %v5293 = vlaneseq
        %v5294 = vshrl.u32 %v5293, 7
        %v5295 = vsub.s32 0, %v5294
        %v5296 = vrot.slane %v5291, %v5295
        %v5302 = vunpack.c.l.b16 %v5287
        %v5303 = vunpack.c.l.b16 %v5288
        %v5304 = vunpack.c.l.b16 %v5289
        %v5305 = vunpack.c.l.b16 %v5290
        %v5306 = vpack.c.b16 %v5303, %v5302
        %v5307 = vpack.c.b16 %v5305, %v5304
        %5310 = vmatprep.subr.bf16.mxu0 0
        %5311 = vmatpush1.bf16.msra.mxu0 0
        %5312 = vmatprep.subr.bf16.mxu0 0
        %5313 = vmatpush1.bf16.msra.mxu0 0
        %5314 = vmatprep.subr.bf16.mxu0 0
        %5315 = vmatpush1.bf16.msra.mxu0 0
        %5316 = vmatprep.subr.bf16.mxu0 0
        %5317 = vmatpush1.bf16.msra.mxu0 0
        %5318 = vmatprep.subr.bf16.mxu0 0
        %5319 = vmatpush1.bf16.msra.mxu0 0
        %5320 = vmatprep.subr.bf16.mxu0 0
        %5321 = vmatpush1.bf16.msra.mxu0 0
        %5322 = vmatprep.subr.bf16.mxu0 0
        %5323 = vmatpush1.bf16.msra.mxu0 %v5307
        %5324 = vmatprep.subr.bf16.mxu0 0
        %5325 = vmatpush1.bf16.msra.mxu0 %v5306
        %5326 = vmatprep.subr.bf16.mxu0 0
        %5327 = vmatpush2.bf16.msra.mxu0 0
        %5328 = vmatprep.subr.bf16.mxu0 0
        %5329 = vmatpush2.bf16.msra.mxu0 0
        %5330 = vmatprep.subr.bf16.mxu0 0
        %5331 = vmatpush2.bf16.msra.mxu0 0
        %5332 = vmatprep.subr.bf16.mxu0 0
        %5333 = vmatpush2.bf16.msra.mxu0 0
        %5334 = vmatprep.subr.bf16.mxu0 0
        %5335 = vmatpush2.bf16.msra.mxu0 0
        %5336 = vmatprep.subr.bf16.mxu0 0
        %5337 = vmatpush2.bf16.msra.mxu0 0
        %5338 = vmatprep.subr.bf16.mxu0 0
        %5339 = vmatpush2.bf16.msra.mxu0 0
        %5340 = vmatprep.subr.bf16.mxu0 0
        %5341 = vmatpush2.bf16.msra.mxu0 0
        %5342 = vmatprep.mubr.bf16.mxu0 0
        %5343 = vmatmul.mubr.bf16.gmra.mxu0 %v5245
        %v5344 = vpop.f32.mrf.mxu0
        %v5345 = vadd.f32 %v5296, %v5344
        %v5346 = vpop.f32.mrf.mxu0
        %v5347 = vpop.f32.mrf.mxu0
        %v5348 = vpop.f32.mrf.mxu0
        %5349 = vdwg.mxu0
        %v5350 = vld [vmem:[%s75] sm:$0xf]
        %v5351 = vld [vmem:[%s75 + $0x4] sm:$0xf]
        %v5352 = vld [vmem:[%s75 + $0x8] sm:$0xf]
        %v5353 = vld [vmem:[%s75 + $0xc] sm:$0xf]
        %v5354 = vld [vmem:[%s77] sm:$0x1]
        %v5356 = vsel %vm2044, %v5215, 0
        %v5359 = vsel %vm2044, %v5282, 0
        %5361 = vmatprep.subr.mxu0 0.0
        %5362 = vmatpush1.xpose.msra.mxu0 0.0
        %5363 = vmatprep.subr.mxu0 0.0
        %5364 = vmatpush1.xpose.msra.mxu0 0.0
        %5365 = vmatprep.subr.mxu0 0.0
        %5366 = vmatpush1.xpose.msra.mxu0 0.0
        %5367 = vmatprep.subr.mxu0 0.0
        %5368 = vmatpush1.xpose.msra.mxu0 0.0
        %5369 = vmatprep.subr.mxu0 0.0
        %5370 = vmatpush1.xpose.msra.mxu0 0.0
        %5371 = vmatprep.subr.mxu0 0.0
        %5372 = vmatpush1.xpose.msra.mxu0 0.0
        %5373 = vmatprep.subr.mxu0 0.0
        %5374 = vmatpush1.xpose.msra.mxu0 0.0
        %5375 = vmatprep.subr.mxu0 0.0
        %5376 = vmatpush1.xpose.msra.mxu0 0.0
        %5377 = vmatprep.subr.mxu0 0.0
        %5378 = vmatpush1.xpose.msra.mxu0 0.0
        %5379 = vmatprep.subr.mxu0 0.0
        %5380 = vmatpush1.xpose.msra.mxu0 0.0
        %5381 = vmatprep.subr.mxu0 0.0
        %5382 = vmatpush1.xpose.msra.mxu0 0.0
        %5383 = vmatprep.subr.mxu0 0.0
        %5384 = vmatpush1.xpose.msra.mxu0 0.0
        %5385 = vmatprep.subr.mxu0 0.0
        %5386 = vmatpush1.xpose.msra.mxu0 0.0
        %5387 = vmatprep.subr.mxu0 0.0
        %5388 = vmatpush1.xpose.msra.mxu0 0.0
        %5389 = vmatprep.subr.mxu0 0.0
        %5390 = vmatpush1.xpose.msra.mxu0 0.0
        %5391 = vmatprep.subr.mxu0 0.0
        %5392 = vmatpush1.xpose.msra.mxu0 %v5359
        %5393 = vmatprep.subr.mxu0 0.0
        %5394 = vmatpush2.xpose.msra.mxu0 0.0
        %5395 = vmatprep.subr.mxu0 0.0
        %5396 = vmatpush2.xpose.msra.mxu0 0.0
        %5397 = vmatprep.subr.mxu0 0.0
        %5398 = vmatpush2.xpose.msra.mxu0 0.0
        %5399 = vmatprep.subr.mxu0 0.0
        %5400 = vmatpush2.xpose.msra.mxu0 0.0
        %5401 = vmatprep.subr.mxu0 0.0
        %5402 = vmatpush2.xpose.msra.mxu0 0.0
        %5403 = vmatprep.subr.mxu0 0.0
        %5404 = vmatpush2.xpose.msra.mxu0 0.0
        %5405 = vmatprep.subr.mxu0 0.0
        %5406 = vmatpush2.xpose.msra.mxu0 0.0
        %5407 = vmatprep.subr.mxu0 0.0
        %5408 = vmatpush2.xpose.msra.mxu0 0.0
        %5409 = vmatprep.subr.mxu0 0.0
        %5410 = vmatpush2.xpose.msra.mxu0 0.0
        %5411 = vmatprep.subr.mxu0 0.0
        %5412 = vmatpush2.xpose.msra.mxu0 0.0
        %5413 = vmatprep.subr.mxu0 0.0
        %5414 = vmatpush2.xpose.msra.mxu0 0.0
        %5415 = vmatprep.subr.mxu0 0.0
        %5416 = vmatpush2.xpose.msra.mxu0 0.0
        %5417 = vmatprep.subr.mxu0 0.0
        %5418 = vmatpush2.xpose.msra.mxu0 0.0
        %5419 = vmatprep.subr.mxu0 0.0
        %5420 = vmatpush2.xpose.msra.mxu0 0.0
        %5421 = vmatprep.subr.mxu0 0.0
        %5422 = vmatpush2.xpose.msra.mxu0 0.0
        %5423 = vmatprep.subr.mxu0 0.0
        %5424 = vmatpush2.xpose.msra.mxu0 0.0
        %5425 = vmatprep.mubr.f32.mxu0 0.0
        %5426 = vmatmul.mubr.f32.gmra.mxu0 %v5356
        %v5427 = vpop.f32.mrf.mxu0
        %v5428 = vadd.f32 0.0, %v5427
        %v5429 = vpop.f32.mrf.mxu0
        %5430 = vdwg.mxu0
        %5431 = vrot.lane.b32.xlu0 %v5215, 120
        %v5432 = vpop.permute.xlu0 %5431
        %5433 = vrot.lane.b32.xlu0 %v5282, 120
        %v5434 = vpop.permute.xlu0 %5433
        %v5435 = vsel %vm2044, %v5432, 0
        %v5437 = vsel %vm2044, %v5434, 0
        %5439 = vmatprep.subr.mxu0 0.0
        %5440 = vmatpush1.xpose.msra.mxu0 0.0
        %5441 = vmatprep.subr.mxu0 0.0
        %5442 = vmatpush1.xpose.msra.mxu0 0.0
        %5443 = vmatprep.subr.mxu0 0.0
        %5444 = vmatpush1.xpose.msra.mxu0 0.0
        %5445 = vmatprep.subr.mxu0 0.0
        %5446 = vmatpush1.xpose.msra.mxu0 0.0
        %5447 = vmatprep.subr.mxu0 0.0
        %5448 = vmatpush1.xpose.msra.mxu0 0.0
        %5449 = vmatprep.subr.mxu0 0.0
        %5450 = vmatpush1.xpose.msra.mxu0 0.0
        %5451 = vmatprep.subr.mxu0 0.0
        %5452 = vmatpush1.xpose.msra.mxu0 0.0
        %5453 = vmatprep.subr.mxu0 0.0
        %5454 = vmatpush1.xpose.msra.mxu0 0.0
        %5455 = vmatprep.subr.mxu0 0.0
        %5456 = vmatpush1.xpose.msra.mxu0 0.0
        %5457 = vmatprep.subr.mxu0 0.0
        %5458 = vmatpush1.xpose.msra.mxu0 0.0
        %5459 = vmatprep.subr.mxu0 0.0
        %5460 = vmatpush1.xpose.msra.mxu0 0.0
        %5461 = vmatprep.subr.mxu0 0.0
        %5462 = vmatpush1.xpose.msra.mxu0 0.0
        %5463 = vmatprep.subr.mxu0 0.0
        %5464 = vmatpush1.xpose.msra.mxu0 0.0
        %5465 = vmatprep.subr.mxu0 0.0
        %5466 = vmatpush1.xpose.msra.mxu0 0.0
        %5467 = vmatprep.subr.mxu0 0.0
        %5468 = vmatpush1.xpose.msra.mxu0 0.0
        %5469 = vmatprep.subr.mxu0 0.0
        %5470 = vmatpush1.xpose.msra.mxu0 %v5437
        %5471 = vmatprep.subr.mxu0 0.0
        %5472 = vmatpush2.xpose.msra.mxu0 0.0
        %5473 = vmatprep.subr.mxu0 0.0
        %5474 = vmatpush2.xpose.msra.mxu0 0.0
        %5475 = vmatprep.subr.mxu0 0.0
        %5476 = vmatpush2.xpose.msra.mxu0 0.0
        %5477 = vmatprep.subr.mxu0 0.0
        %5478 = vmatpush2.xpose.msra.mxu0 0.0
        %5479 = vmatprep.subr.mxu0 0.0
        %5480 = vmatpush2.xpose.msra.mxu0 0.0
        %5481 = vmatprep.subr.mxu0 0.0
        %5482 = vmatpush2.xpose.msra.mxu0 0.0
        %5483 = vmatprep.subr.mxu0 0.0
        %5484 = vmatpush2.xpose.msra.mxu0 0.0
        %5485 = vmatprep.subr.mxu0 0.0
        %5486 = vmatpush2.xpose.msra.mxu0 0.0
        %5487 = vmatprep.subr.mxu0 0.0
        %5488 = vmatpush2.xpose.msra.mxu0 0.0
        %5489 = vmatprep.subr.mxu0 0.0
        %5490 = vmatpush2.xpose.msra.mxu0 0.0
        %5491 = vmatprep.subr.mxu0 0.0
        %5492 = vmatpush2.xpose.msra.mxu0 0.0
        %5493 = vmatprep.subr.mxu0 0.0
        %5494 = vmatpush2.xpose.msra.mxu0 0.0
        %5495 = vmatprep.subr.mxu0 0.0
        %5496 = vmatpush2.xpose.msra.mxu0 0.0
        %5497 = vmatprep.subr.mxu0 0.0
        %5498 = vmatpush2.xpose.msra.mxu0 0.0
        %5499 = vmatprep.subr.mxu0 0.0
        %5500 = vmatpush2.xpose.msra.mxu0 0.0
        %5501 = vmatprep.subr.mxu0 0.0
        %5502 = vmatpush2.xpose.msra.mxu0 0.0
        %5503 = vmatprep.mubr.f32.mxu0 0.0
        %5504 = vmatmul.mubr.f32.gmra.mxu0 %v5435
        %v5505 = vpop.f32.mrf.mxu0
        %v5506 = vadd.f32 0.0, %v5505
        %v5507 = vpop.f32.mrf.mxu0
        %5508 = vdwg.mxu0
        %5509 = vrot.lane.b32.xlu0 %v5215, 112
        %v5510 = vpop.permute.xlu0 %5509
        %5511 = vrot.lane.b32.xlu0 %v5282, 112
        %v5512 = vpop.permute.xlu0 %5511
        %v5513 = vsel %vm2044, %v5510, 0
        %v5515 = vsel %vm2044, %v5512, 0
        %5517 = vmatprep.subr.mxu0 0.0
        %5518 = vmatpush1.xpose.msra.mxu0 0.0
        %5519 = vmatprep.subr.mxu0 0.0
        %5520 = vmatpush1.xpose.msra.mxu0 0.0
        %5521 = vmatprep.subr.mxu0 0.0
        %5522 = vmatpush1.xpose.msra.mxu0 0.0
        %5523 = vmatprep.subr.mxu0 0.0
        %5524 = vmatpush1.xpose.msra.mxu0 0.0
        %5525 = vmatprep.subr.mxu0 0.0
        %5526 = vmatpush1.xpose.msra.mxu0 0.0
        %5527 = vmatprep.subr.mxu0 0.0
        %5528 = vmatpush1.xpose.msra.mxu0 0.0
        %5529 = vmatprep.subr.mxu0 0.0
        %5530 = vmatpush1.xpose.msra.mxu0 0.0
        %5531 = vmatprep.subr.mxu0 0.0
        %5532 = vmatpush1.xpose.msra.mxu0 0.0
        %5533 = vmatprep.subr.mxu0 0.0
        %5534 = vmatpush1.xpose.msra.mxu0 0.0
        %5535 = vmatprep.subr.mxu0 0.0
        %5536 = vmatpush1.xpose.msra.mxu0 0.0
        %5537 = vmatprep.subr.mxu0 0.0
        %5538 = vmatpush1.xpose.msra.mxu0 0.0
        %5539 = vmatprep.subr.mxu0 0.0
        %5540 = vmatpush1.xpose.msra.mxu0 0.0
        %5541 = vmatprep.subr.mxu0 0.0
        %5542 = vmatpush1.xpose.msra.mxu0 0.0
        %5543 = vmatprep.subr.mxu0 0.0
        %5544 = vmatpush1.xpose.msra.mxu0 0.0
        %5545 = vmatprep.subr.mxu0 0.0
        %5546 = vmatpush1.xpose.msra.mxu0 0.0
        %5547 = vmatprep.subr.mxu0 0.0
        %5548 = vmatpush1.xpose.msra.mxu0 %v5515
        %5549 = vmatprep.subr.mxu0 0.0
        %5550 = vmatpush2.xpose.msra.mxu0 0.0
        %5551 = vmatprep.subr.mxu0 0.0
        %5552 = vmatpush2.xpose.msra.mxu0 0.0
        %5553 = vmatprep.subr.mxu0 0.0
        %5554 = vmatpush2.xpose.msra.mxu0 0.0
        %5555 = vmatprep.subr.mxu0 0.0
        %5556 = vmatpush2.xpose.msra.mxu0 0.0
        %5557 = vmatprep.subr.mxu0 0.0
        %5558 = vmatpush2.xpose.msra.mxu0 0.0
        %5559 = vmatprep.subr.mxu0 0.0
        %5560 = vmatpush2.xpose.msra.mxu0 0.0
        %5561 = vmatprep.subr.mxu0 0.0
        %5562 = vmatpush2.xpose.msra.mxu0 0.0
        %5563 = vmatprep.subr.mxu0 0.0
        %5564 = vmatpush2.xpose.msra.mxu0 0.0
        %5565 = vmatprep.subr.mxu0 0.0
        %5566 = vmatpush2.xpose.msra.mxu0 0.0
        %5567 = vmatprep.subr.mxu0 0.0
        %5568 = vmatpush2.xpose.msra.mxu0 0.0
        %5569 = vmatprep.subr.mxu0 0.0
        %5570 = vmatpush2.xpose.msra.mxu0 0.0
        %5571 = vmatprep.subr.mxu0 0.0
        %5572 = vmatpush2.xpose.msra.mxu0 0.0
        %5573 = vmatprep.subr.mxu0 0.0
        %5574 = vmatpush2.xpose.msra.mxu0 0.0
        %5575 = vmatprep.subr.mxu0 0.0
        %5576 = vmatpush2.xpose.msra.mxu0 0.0
        %5577 = vmatprep.subr.mxu0 0.0
        %5578 = vmatpush2.xpose.msra.mxu0 0.0
        %5579 = vmatprep.subr.mxu0 0.0
        %5580 = vmatpush2.xpose.msra.mxu0 0.0
        %5581 = vmatprep.mubr.f32.mxu0 0.0
        %5582 = vmatmul.mubr.f32.gmra.mxu0 %v5513
        %v5583 = vpop.f32.mrf.mxu0
        %v5584 = vadd.f32 0.0, %v5583
        %v5585 = vpop.f32.mrf.mxu0
        %5586 = vdwg.mxu0
        %5587 = vrot.lane.b32.xlu0 %v5215, 104
        %v5588 = vpop.permute.xlu0 %5587
        %5589 = vrot.lane.b32.xlu0 %v5282, 104
        %v5590 = vpop.permute.xlu0 %5589
        %v5591 = vsel %vm2044, %v5588, 0
        %v5593 = vsel %vm2044, %v5590, 0
        %5595 = vmatprep.subr.mxu0 0.0
        %5596 = vmatpush1.xpose.msra.mxu0 0.0
        %5597 = vmatprep.subr.mxu0 0.0
        %5598 = vmatpush1.xpose.msra.mxu0 0.0
        %5599 = vmatprep.subr.mxu0 0.0
        %5600 = vmatpush1.xpose.msra.mxu0 0.0
        %5601 = vmatprep.subr.mxu0 0.0
        %5602 = vmatpush1.xpose.msra.mxu0 0.0
        %5603 = vmatprep.subr.mxu0 0.0
        %5604 = vmatpush1.xpose.msra.mxu0 0.0
        %5605 = vmatprep.subr.mxu0 0.0
        %5606 = vmatpush1.xpose.msra.mxu0 0.0
        %5607 = vmatprep.subr.mxu0 0.0
        %5608 = vmatpush1.xpose.msra.mxu0 0.0
        %5609 = vmatprep.subr.mxu0 0.0
        %5610 = vmatpush1.xpose.msra.mxu0 0.0
        %5611 = vmatprep.subr.mxu0 0.0
        %5612 = vmatpush1.xpose.msra.mxu0 0.0
        %5613 = vmatprep.subr.mxu0 0.0
        %5614 = vmatpush1.xpose.msra.mxu0 0.0
        %5615 = vmatprep.subr.mxu0 0.0
        %5616 = vmatpush1.xpose.msra.mxu0 0.0
        %5617 = vmatprep.subr.mxu0 0.0
        %5618 = vmatpush1.xpose.msra.mxu0 0.0
        %5619 = vmatprep.subr.mxu0 0.0
        %5620 = vmatpush1.xpose.msra.mxu0 0.0
        %5621 = vmatprep.subr.mxu0 0.0
        %5622 = vmatpush1.xpose.msra.mxu0 0.0
        %5623 = vmatprep.subr.mxu0 0.0
        %5624 = vmatpush1.xpose.msra.mxu0 0.0
        %5625 = vmatprep.subr.mxu0 0.0
        %5626 = vmatpush1.xpose.msra.mxu0 %v5593
        %5627 = vmatprep.subr.mxu0 0.0
        %5628 = vmatpush2.xpose.msra.mxu0 0.0
        %5629 = vmatprep.subr.mxu0 0.0
        %5630 = vmatpush2.xpose.msra.mxu0 0.0
        %5631 = vmatprep.subr.mxu0 0.0
        %5632 = vmatpush2.xpose.msra.mxu0 0.0
        %5633 = vmatprep.subr.mxu0 0.0
        %5634 = vmatpush2.xpose.msra.mxu0 0.0
        %5635 = vmatprep.subr.mxu0 0.0
        %5636 = vmatpush2.xpose.msra.mxu0 0.0
        %5637 = vmatprep.subr.mxu0 0.0
        %5638 = vmatpush2.xpose.msra.mxu0 0.0
        %5639 = vmatprep.subr.mxu0 0.0
        %5640 = vmatpush2.xpose.msra.mxu0 0.0
        %5641 = vmatprep.subr.mxu0 0.0
        %5642 = vmatpush2.xpose.msra.mxu0 0.0
        %5643 = vmatprep.subr.mxu0 0.0
        %5644 = vmatpush2.xpose.msra.mxu0 0.0
        %5645 = vmatprep.subr.mxu0 0.0
        %5646 = vmatpush2.xpose.msra.mxu0 0.0
        %5647 = vmatprep.subr.mxu0 0.0
        %5648 = vmatpush2.xpose.msra.mxu0 0.0
        %5649 = vmatprep.subr.mxu0 0.0
        %5650 = vmatpush2.xpose.msra.mxu0 0.0
        %5651 = vmatprep.subr.mxu0 0.0
        %5652 = vmatpush2.xpose.msra.mxu0 0.0
        %5653 = vmatprep.subr.mxu0 0.0
        %5654 = vmatpush2.xpose.msra.mxu0 0.0
        %5655 = vmatprep.subr.mxu0 0.0
        %5656 = vmatpush2.xpose.msra.mxu0 0.0
        %5657 = vmatprep.subr.mxu0 0.0
        %5658 = vmatpush2.xpose.msra.mxu0 0.0
        %5659 = vmatprep.mubr.f32.mxu0 0.0
        %5660 = vmatmul.mubr.f32.gmra.mxu0 %v5591
        %v5661 = vpop.f32.mrf.mxu0
        %v5662 = vadd.f32 0.0, %v5661
        %v5663 = vpop.f32.mrf.mxu0
        %5664 = vdwg.mxu0
        %v5666 = vlaneseq
        %v5667 = vshrl.u32 %v5666, 7
        %v5668 = vsub.s32 0, %v5667
        %v5669 = vrot.slane %v1830, %v5668
        %v5671 = vadd.f32 %v5428, %v5669
        %v5672 = vadd.f32 %v5506, %v5669
        %v5673 = vadd.f32 %v5584, %v5669
        %v5674 = vadd.f32 %v5662, %v5669
        %v5675 = vsel %vm2044, %v5671, -inf
        %5676 = vmax.xlane.f32.xlu0 %v5675
        %v5677 = vpop.xlane.xlu0 %5676
        %v5678 = vsel %vm2044, %v5672, -inf
        %5679 = vmax.xlane.f32.xlu0 %v5678
        %v5680 = vpop.xlane.xlu0 %5679
        %v5681 = vsel %vm2044, %v5673, -inf
        %5682 = vmax.xlane.f32.xlu0 %v5681
        %v5683 = vpop.xlane.xlu0 %5682
        %v5684 = vsel %vm2044, %v5674, -inf
        %5685 = vmax.xlane.f32.xlu0 %v5684
        %v5686 = vpop.xlane.xlu0 %5685
        %v5687 = vsub.f32 %v5671, %v5677
        %v5688 = vsub.f32 %v5672, %v5680
        %v5689 = vsub.f32 %v5673, %v5683
        %v5690 = vsub.f32 %v5674, %v5686
        %v5691 = vmul.f32 %v5687, 1.442695
        %v5692 = vpow.pop %v5691
        %v5693 = vmul.f32 %v5688, 1.442695
        %v5694 = vpow.pop %v5693
        %v5695 = vmul.f32 %v5689, 1.442695
        %v5696 = vpow.pop %v5695
        %v5697 = vmul.f32 %v5690, 1.442695
        %v5698 = vpow.pop %v5697
        %v5699 = vsel %vm2044, %v5692, 0.0
        %5700 = vadd.xlane.f32.xlu0 %v5699
        %v5701 = vpop.xlane.xlu0 %5700
        %v5702 = vsel %vm2044, %v5694, 0.0
        %5703 = vadd.xlane.f32.xlu0 %v5702
        %v5704 = vpop.xlane.xlu0 %5703
        %v5705 = vsel %vm2044, %v5696, 0.0
        %5706 = vadd.xlane.f32.xlu0 %v5705
        %v5707 = vpop.xlane.xlu0 %5706
        %v5708 = vsel %vm2044, %v5698, 0.0
        %5709 = vadd.xlane.f32.xlu0 %v5708
        %v5710 = vpop.xlane.xlu0 %5709
        %v5711 = vrcp.pop %v5701
        %v5712 = vrcp.pop %v5704
        %v5713 = vrcp.pop %v5707
        %v5714 = vrcp.pop %v5710
        %v5715 = vmul.f32 %v5692, %v5711
        %v5716 = vmul.f32 %v5694, %v5712
        %v5717 = vmul.f32 %v5696, %v5713
        %v5718 = vmul.f32 %v5698, %v5714
        %v5720 = vsel %vm2044, %v5715, 0
        %5722 = vmatprep.subr.mxu0 0.0
        %5723 = vmatpush1.msra.mxu0 0.0
        %5724 = vmatprep.subr.mxu0 0.0
        %5725 = vmatpush1.msra.mxu0 0.0
        %5726 = vmatprep.subr.mxu0 0.0
        %5727 = vmatpush1.msra.mxu0 0.0
        %5728 = vmatprep.subr.mxu0 0.0
        %5729 = vmatpush1.msra.mxu0 0.0
        %5730 = vmatprep.subr.mxu0 0.0
        %5731 = vmatpush1.msra.mxu0 0.0
        %5732 = vmatprep.subr.mxu0 0.0
        %5733 = vmatpush1.msra.mxu0 0.0
        %5734 = vmatprep.subr.mxu0 0.0
        %5735 = vmatpush1.msra.mxu0 0.0
        %5736 = vmatprep.subr.mxu0 0.0
        %5737 = vmatpush1.msra.mxu0 0.0
        %5738 = vmatprep.subr.mxu0 0.0
        %5739 = vmatpush1.msra.mxu0 0.0
        %5740 = vmatprep.subr.mxu0 0.0
        %5741 = vmatpush1.msra.mxu0 0.0
        %5742 = vmatprep.subr.mxu0 0.0
        %5743 = vmatpush1.msra.mxu0 0.0
        %5744 = vmatprep.subr.mxu0 0.0
        %5745 = vmatpush1.msra.mxu0 0.0
        %5746 = vmatprep.subr.mxu0 0.0
        %5747 = vmatpush1.msra.mxu0 0.0
        %5748 = vmatprep.subr.mxu0 0.0
        %5749 = vmatpush1.msra.mxu0 0.0
        %5750 = vmatprep.subr.mxu0 0.0
        %5751 = vmatpush1.msra.mxu0 0.0
        %5752 = vmatprep.subr.mxu0 0.0
        %5753 = vmatpush1.msra.mxu0 %v5345
        %5754 = vmatprep.subr.mxu0 0.0
        %5755 = vmatpush2.msra.mxu0 0.0
        %5756 = vmatprep.subr.mxu0 0.0
        %5757 = vmatpush2.msra.mxu0 0.0
        %5758 = vmatprep.subr.mxu0 0.0
        %5759 = vmatpush2.msra.mxu0 0.0
        %5760 = vmatprep.subr.mxu0 0.0
        %5761 = vmatpush2.msra.mxu0 0.0
        %5762 = vmatprep.subr.mxu0 0.0
        %5763 = vmatpush2.msra.mxu0 0.0
        %5764 = vmatprep.subr.mxu0 0.0
        %5765 = vmatpush2.msra.mxu0 0.0
        %5766 = vmatprep.subr.mxu0 0.0
        %5767 = vmatpush2.msra.mxu0 0.0
        %5768 = vmatprep.subr.mxu0 0.0
        %5769 = vmatpush2.msra.mxu0 0.0
        %5770 = vmatprep.subr.mxu0 0.0
        %5771 = vmatpush2.msra.mxu0 0.0
        %5772 = vmatprep.subr.mxu0 0.0
        %5773 = vmatpush2.msra.mxu0 0.0
        %5774 = vmatprep.subr.mxu0 0.0
        %5775 = vmatpush2.msra.mxu0 0.0
        %5776 = vmatprep.subr.mxu0 0.0
        %5777 = vmatpush2.msra.mxu0 0.0
        %5778 = vmatprep.subr.mxu0 0.0
        %5779 = vmatpush2.msra.mxu0 0.0
        %5780 = vmatprep.subr.mxu0 0.0
        %5781 = vmatpush2.msra.mxu0 0.0
        %5782 = vmatprep.subr.mxu0 0.0
        %5783 = vmatpush2.msra.mxu0 0.0
        %5784 = vmatprep.subr.mxu0 0.0
        %5785 = vmatpush2.msra.mxu0 0.0
        %5786 = vmatprep.mubr.f32.mxu0 0.0
        %5787 = vmatmul.mubr.f32.gmra.mxu0 %v5720
        %v5788 = vpop.f32.mrf.mxu0
        %v5789 = vadd.f32 0.0, %v5788
        %v5790 = vpop.f32.mrf.mxu0
        %5791 = vdwg.mxu0
        %5793 = vrot.lane.b32.xlu0 %v5345, 120
        %v5794 = vpop.permute.xlu0 %5793
        %v5797 = vsel %vm2044, %v5716, 0
        %5799 = vmatprep.subr.mxu0 0.0
        %5800 = vmatpush1.msra.mxu0 0.0
        %5801 = vmatprep.subr.mxu0 0.0
        %5802 = vmatpush1.msra.mxu0 0.0
        %5803 = vmatprep.subr.mxu0 0.0
        %5804 = vmatpush1.msra.mxu0 0.0
        %5805 = vmatprep.subr.mxu0 0.0
        %5806 = vmatpush1.msra.mxu0 0.0
        %5807 = vmatprep.subr.mxu0 0.0
        %5808 = vmatpush1.msra.mxu0 0.0
        %5809 = vmatprep.subr.mxu0 0.0
        %5810 = vmatpush1.msra.mxu0 0.0
        %5811 = vmatprep.subr.mxu0 0.0
        %5812 = vmatpush1.msra.mxu0 0.0
        %5813 = vmatprep.subr.mxu0 0.0
        %5814 = vmatpush1.msra.mxu0 0.0
        %5815 = vmatprep.subr.mxu0 0.0
        %5816 = vmatpush1.msra.mxu0 0.0
        %5817 = vmatprep.subr.mxu0 0.0
        %5818 = vmatpush1.msra.mxu0 0.0
        %5819 = vmatprep.subr.mxu0 0.0
        %5820 = vmatpush1.msra.mxu0 0.0
        %5821 = vmatprep.subr.mxu0 0.0
        %5822 = vmatpush1.msra.mxu0 0.0
        %5823 = vmatprep.subr.mxu0 0.0
        %5824 = vmatpush1.msra.mxu0 0.0
        %5825 = vmatprep.subr.mxu0 0.0
        %5826 = vmatpush1.msra.mxu0 0.0
        %5827 = vmatprep.subr.mxu0 0.0
        %5828 = vmatpush1.msra.mxu0 0.0
        %5829 = vmatprep.subr.mxu0 0.0
        %5830 = vmatpush1.msra.mxu0 %v5794
        %5831 = vmatprep.subr.mxu0 0.0
        %5832 = vmatpush2.msra.mxu0 0.0
        %5833 = vmatprep.subr.mxu0 0.0
        %5834 = vmatpush2.msra.mxu0 0.0
        %5835 = vmatprep.subr.mxu0 0.0
        %5836 = vmatpush2.msra.mxu0 0.0
        %5837 = vmatprep.subr.mxu0 0.0
        %5838 = vmatpush2.msra.mxu0 0.0
        %5839 = vmatprep.subr.mxu0 0.0
        %5840 = vmatpush2.msra.mxu0 0.0
        %5841 = vmatprep.subr.mxu0 0.0
        %5842 = vmatpush2.msra.mxu0 0.0
        %5843 = vmatprep.subr.mxu0 0.0
        %5844 = vmatpush2.msra.mxu0 0.0
        %5845 = vmatprep.subr.mxu0 0.0
        %5846 = vmatpush2.msra.mxu0 0.0
        %5847 = vmatprep.subr.mxu0 0.0
        %5848 = vmatpush2.msra.mxu0 0.0
        %5849 = vmatprep.subr.mxu0 0.0
        %5850 = vmatpush2.msra.mxu0 0.0
        %5851 = vmatprep.subr.mxu0 0.0
        %5852 = vmatpush2.msra.mxu0 0.0
        %5853 = vmatprep.subr.mxu0 0.0
        %5854 = vmatpush2.msra.mxu0 0.0
        %5855 = vmatprep.subr.mxu0 0.0
        %5856 = vmatpush2.msra.mxu0 0.0
        %5857 = vmatprep.subr.mxu0 0.0
        %5858 = vmatpush2.msra.mxu0 0.0
        %5859 = vmatprep.subr.mxu0 0.0
        %5860 = vmatpush2.msra.mxu0 0.0
        %5861 = vmatprep.subr.mxu0 0.0
        %5862 = vmatpush2.msra.mxu0 0.0
        %5863 = vmatprep.mubr.f32.mxu0 0.0
        %5864 = vmatmul.mubr.f32.gmra.mxu0 %v5797
        %v5865 = vpop.f32.mrf.mxu0
        %v5866 = vadd.f32 0.0, %v5865
        %v5867 = vpop.f32.mrf.mxu0
        %5868 = vdwg.mxu0
        %5869 = vrot.lane.b32.xlu0 %v5345, 112
        %v5870 = vpop.permute.xlu0 %5869
        %v5873 = vsel %vm2044, %v5717, 0
        %5875 = vmatprep.subr.mxu0 0.0
        %5876 = vmatpush1.msra.mxu0 0.0
        %5877 = vmatprep.subr.mxu0 0.0
        %5878 = vmatpush1.msra.mxu0 0.0
        %5879 = vmatprep.subr.mxu0 0.0
        %5880 = vmatpush1.msra.mxu0 0.0
        %5881 = vmatprep.subr.mxu0 0.0
        %5882 = vmatpush1.msra.mxu0 0.0
        %5883 = vmatprep.subr.mxu0 0.0
        %5884 = vmatpush1.msra.mxu0 0.0
        %5885 = vmatprep.subr.mxu0 0.0
        %5886 = vmatpush1.msra.mxu0 0.0
        %5887 = vmatprep.subr.mxu0 0.0
        %5888 = vmatpush1.msra.mxu0 0.0
        %5889 = vmatprep.subr.mxu0 0.0
        %5890 = vmatpush1.msra.mxu0 0.0
        %5891 = vmatprep.subr.mxu0 0.0
        %5892 = vmatpush1.msra.mxu0 0.0
        %5893 = vmatprep.subr.mxu0 0.0
        %5894 = vmatpush1.msra.mxu0 0.0
        %5895 = vmatprep.subr.mxu0 0.0
        %5896 = vmatpush1.msra.mxu0 0.0
        %5897 = vmatprep.subr.mxu0 0.0
        %5898 = vmatpush1.msra.mxu0 0.0
        %5899 = vmatprep.subr.mxu0 0.0
        %5900 = vmatpush1.msra.mxu0 0.0
        %5901 = vmatprep.subr.mxu0 0.0
        %5902 = vmatpush1.msra.mxu0 0.0
        %5903 = vmatprep.subr.mxu0 0.0
        %5904 = vmatpush1.msra.mxu0 0.0
        %5905 = vmatprep.subr.mxu0 0.0
        %5906 = vmatpush1.msra.mxu0 %v5870
        %5907 = vmatprep.subr.mxu0 0.0
        %5908 = vmatpush2.msra.mxu0 0.0
        %5909 = vmatprep.subr.mxu0 0.0
        %5910 = vmatpush2.msra.mxu0 0.0
        %5911 = vmatprep.subr.mxu0 0.0
        %5912 = vmatpush2.msra.mxu0 0.0
        %5913 = vmatprep.subr.mxu0 0.0
        %5914 = vmatpush2.msra.mxu0 0.0
        %5915 = vmatprep.subr.mxu0 0.0
        %5916 = vmatpush2.msra.mxu0 0.0
        %5917 = vmatprep.subr.mxu0 0.0
        %5918 = vmatpush2.msra.mxu0 0.0
        %5919 = vmatprep.subr.mxu0 0.0
        %5920 = vmatpush2.msra.mxu0 0.0
        %5921 = vmatprep.subr.mxu0 0.0
        %5922 = vmatpush2.msra.mxu0 0.0
        %5923 = vmatprep.subr.mxu0 0.0
        %5924 = vmatpush2.msra.mxu0 0.0
        %5925 = vmatprep.subr.mxu0 0.0
        %5926 = vmatpush2.msra.mxu0 0.0
        %5927 = vmatprep.subr.mxu0 0.0
        %5928 = vmatpush2.msra.mxu0 0.0
        %5929 = vmatprep.subr.mxu0 0.0
        %5930 = vmatpush2.msra.mxu0 0.0
        %5931 = vmatprep.subr.mxu0 0.0
        %5932 = vmatpush2.msra.mxu0 0.0
        %5933 = vmatprep.subr.mxu0 0.0
        %5934 = vmatpush2.msra.mxu0 0.0
        %5935 = vmatprep.subr.mxu0 0.0
        %5936 = vmatpush2.msra.mxu0 0.0
        %5937 = vmatprep.subr.mxu0 0.0
        %5938 = vmatpush2.msra.mxu0 0.0
        %5939 = vmatprep.mubr.f32.mxu0 0.0
        %5940 = vmatmul.mubr.f32.gmra.mxu0 %v5873
        %v5941 = vpop.f32.mrf.mxu0
        %v5942 = vadd.f32 0.0, %v5941
        %v5943 = vpop.f32.mrf.mxu0
        %5944 = vdwg.mxu0
        %5945 = vrot.lane.b32.xlu0 %v5345, 104
        %v5946 = vpop.permute.xlu0 %5945
        %v5949 = vsel %vm2044, %v5718, 0
        %5951 = vmatprep.subr.mxu0 0.0
        %5952 = vmatpush1.msra.mxu0 0.0
        %5953 = vmatprep.subr.mxu0 0.0
        %5954 = vmatpush1.msra.mxu0 0.0
        %5955 = vmatprep.subr.mxu0 0.0
        %5956 = vmatpush1.msra.mxu0 0.0
        %5957 = vmatprep.subr.mxu0 0.0
        %5958 = vmatpush1.msra.mxu0 0.0
        %5959 = vmatprep.subr.mxu0 0.0
        %5960 = vmatpush1.msra.mxu0 0.0
        %5961 = vmatprep.subr.mxu0 0.0
        %5962 = vmatpush1.msra.mxu0 0.0
        %5963 = vmatprep.subr.mxu0 0.0
        %5964 = vmatpush1.msra.mxu0 0.0
        %5965 = vmatprep.subr.mxu0 0.0
        %5966 = vmatpush1.msra.mxu0 0.0
        %5967 = vmatprep.subr.mxu0 0.0
        %5968 = vmatpush1.msra.mxu0 0.0
        %5969 = vmatprep.subr.mxu0 0.0
        %5970 = vmatpush1.msra.mxu0 0.0
        %5971 = vmatprep.subr.mxu0 0.0
        %5972 = vmatpush1.msra.mxu0 0.0
        %5973 = vmatprep.subr.mxu0 0.0
        %5974 = vmatpush1.msra.mxu0 0.0
        %5975 = vmatprep.subr.mxu0 0.0
        %5976 = vmatpush1.msra.mxu0 0.0
        %5977 = vmatprep.subr.mxu0 0.0
        %5978 = vmatpush1.msra.mxu0 0.0
        %5979 = vmatprep.subr.mxu0 0.0
        %5980 = vmatpush1.msra.mxu0 0.0
        %5981 = vmatprep.subr.mxu0 0.0
        %5982 = vmatpush1.msra.mxu0 %v5946
        %5983 = vmatprep.subr.mxu0 0.0
        %5984 = vmatpush2.msra.mxu0 0.0
        %5985 = vmatprep.subr.mxu0 0.0
        %5986 = vmatpush2.msra.mxu0 0.0
        %5987 = vmatprep.subr.mxu0 0.0
        %5988 = vmatpush2.msra.mxu0 0.0
        %5989 = vmatprep.subr.mxu0 0.0
        %5990 = vmatpush2.msra.mxu0 0.0
        %5991 = vmatprep.subr.mxu0 0.0
        %5992 = vmatpush2.msra.mxu0 0.0
        %5993 = vmatprep.subr.mxu0 0.0
        %5994 = vmatpush2.msra.mxu0 0.0
        %5995 = vmatprep.subr.mxu0 0.0
        %5996 = vmatpush2.msra.mxu0 0.0
        %5997 = vmatprep.subr.mxu0 0.0
        %5998 = vmatpush2.msra.mxu0 0.0
        %5999 = vmatprep.subr.mxu0 0.0
        %6000 = vmatpush2.msra.mxu0 0.0
        %6001 = vmatprep.subr.mxu0 0.0
        %6002 = vmatpush2.msra.mxu0 0.0
        %6003 = vmatprep.subr.mxu0 0.0
        %6004 = vmatpush2.msra.mxu0 0.0
        %6005 = vmatprep.subr.mxu0 0.0
        %6006 = vmatpush2.msra.mxu0 0.0
        %6007 = vmatprep.subr.mxu0 0.0
        %6008 = vmatpush2.msra.mxu0 0.0
        %6009 = vmatprep.subr.mxu0 0.0
        %6010 = vmatpush2.msra.mxu0 0.0
        %6011 = vmatprep.subr.mxu0 0.0
        %6012 = vmatpush2.msra.mxu0 0.0
        %6013 = vmatprep.subr.mxu0 0.0
        %6014 = vmatpush2.msra.mxu0 0.0
        %6015 = vmatprep.mubr.f32.mxu0 0.0
        %6016 = vmatmul.mubr.f32.gmra.mxu0 %v5949
        %v6017 = vpop.f32.mrf.mxu0
        %v6018 = vadd.f32 0.0, %v6017
        %v6019 = vpop.f32.mrf.mxu0
        %6020 = vdwg.mxu0
        %6022 = vrot.lane.b32.xlu0 %v5866, 8
        %v6023 = vpop.permute.xlu0 %6022
        %6026 = vrot.lane.b32.xlu0 %v5942, 16
        %v6027 = vpop.permute.xlu0 %6026
        %6030 = vrot.lane.b32.xlu0 %v6018, 24
        %v6031 = vpop.permute.xlu0 %6030
        %v6033 = vsel %vm2044, %v5789, %v6023
        %v6034 = vsel %vm2718, %v6033, %v6027
        %v6035 = vsel %vm2720, %v6034, %v6031
        %v6036 = vpack.c.bf16 %v6035, %v6035
        %v6038 = vlaneseq
        %v6039 = vshrl.u32 %v6038, 7
        %v6040 = vsub.s32 0, %v6039
        %v6041 = vrot.slane %v5354, %v6040
        %v6047 = vunpack.c.l.b16 %v5350
        %v6048 = vunpack.c.l.b16 %v5351
        %v6049 = vunpack.c.l.b16 %v5352
        %v6050 = vunpack.c.l.b16 %v5353
        %v6051 = vpack.c.b16 %v6048, %v6047
        %v6052 = vpack.c.b16 %v6050, %v6049
        %v6056 = vsel %vm1869, %v6036, 0
        %6058 = vmatprep.subr.bf16.mxu0 0
        %6059 = vmatpush1.bf16.msra.mxu0 0
        %6060 = vmatprep.subr.bf16.mxu0 0
        %6061 = vmatpush1.bf16.msra.mxu0 0
        %6062 = vmatprep.subr.bf16.mxu0 0
        %6063 = vmatpush1.bf16.msra.mxu0 0
        %6064 = vmatprep.subr.bf16.mxu0 0
        %6065 = vmatpush1.bf16.msra.mxu0 0
        %6066 = vmatprep.subr.bf16.mxu0 0
        %6067 = vmatpush1.bf16.msra.mxu0 0
        %6068 = vmatprep.subr.bf16.mxu0 0
        %6069 = vmatpush1.bf16.msra.mxu0 0
        %6070 = vmatprep.subr.bf16.mxu0 0
        %6071 = vmatpush1.bf16.msra.mxu0 %v6052
        %6072 = vmatprep.subr.bf16.mxu0 0
        %6073 = vmatpush1.bf16.msra.mxu0 %v6051
        %6074 = vmatprep.subr.bf16.mxu0 0
        %6075 = vmatpush2.bf16.msra.mxu0 0
        %6076 = vmatprep.subr.bf16.mxu0 0
        %6077 = vmatpush2.bf16.msra.mxu0 0
        %6078 = vmatprep.subr.bf16.mxu0 0
        %6079 = vmatpush2.bf16.msra.mxu0 0
        %6080 = vmatprep.subr.bf16.mxu0 0
        %6081 = vmatpush2.bf16.msra.mxu0 0
        %6082 = vmatprep.subr.bf16.mxu0 0
        %6083 = vmatpush2.bf16.msra.mxu0 0
        %6084 = vmatprep.subr.bf16.mxu0 0
        %6085 = vmatpush2.bf16.msra.mxu0 0
        %6086 = vmatprep.subr.bf16.mxu0 0
        %6087 = vmatpush2.bf16.msra.mxu0 0
        %6088 = vmatprep.subr.bf16.mxu0 0
        %6089 = vmatpush2.bf16.msra.mxu0 0
        %6090 = vmatprep.mubr.bf16.mxu0 0
        %6091 = vmatmul.mubr.bf16.gmra.mxu0 %v6056
        %v6092 = vpop.f32.mrf.mxu0
        %v6093 = vadd.f32 %v6041, %v6092
        %v6094 = vpop.f32.mrf.mxu0
        %v6095 = vpop.f32.mrf.mxu0
        %v6096 = vpop.f32.mrf.mxu0
        %6097 = vdwg.mxu0
        %v6098 = vadd.f32 %v5152, %v6093
        %v6099 = vld [vmem:[#allocation6] sm:$0x1]
        %v6100 = vld [vmem:[#allocation7] sm:$0x1]
        %v6101 = vsel %vm1869, %v6098, 0.0
        %6102 = vadd.xlane.f32.xlu0 %v6101
        %v6103 = vpop.xlane.xlu0 %6102
        %v6104 = vmul.f32 %v6103, %v2790
        %v6105 = vsub.f32 %v6098, %v6104
        %v6106 = vmul.f32 %v6105, %v6105
        %v6107 = vsel %vm1869, %v6106, 0.0
        %6108 = vadd.xlane.f32.xlu0 %v6107
        %v6109 = vpop.xlane.xlu0 %6108
        %v6110 = vmul.f32 %v6109, %v2790
        %v6111 = vadd.f32 %v6110, 1e-05
        %v6112 = vrsqrt.pop %v6111
        %v6113 = vmul.f32 %v6105, %v6112
        %v6115 = vlaneseq
        %v6116 = vshrl.u32 %v6115, 7
        %v6117 = vsub.s32 0, %v6116
        %v6118 = vrot.slane %v6099, %v6117
        %v6120 = vmul.f32 %v6113, %v6118
        %v6122 = vlaneseq
        %v6123 = vshrl.u32 %v6122, 7
        %v6124 = vsub.s32 0, %v6123
        %v6125 = vrot.slane %v6100, %v6124
        %v6127 = vadd.f32 %v6120, %v6125
        %v6128 = vld [vmem:[%s79] sm:$0xf]
        %v6129 = vld [vmem:[%s79 + $0x4] sm:$0xf]
        %v6130 = vld [vmem:[%s79 + $0x8] sm:$0xf]
        %v6131 = vld [vmem:[%s79 + $0xc] sm:$0xf]
        %v6132 = vld [vmem:[%s81] sm:$0x1]
        %v6133 = vpack.c.bf16 %v6127, %v6127
        %v6135 = vlaneseq
        %v6136 = vshrl.u32 %v6135, 7
        %v6137 = vsub.s32 0, %v6136
        %v6138 = vrot.slane %v6132, %v6137
        %v6144 = vunpack.c.l.b16 %v6128
        %v6145 = vunpack.c.l.b16 %v6129
        %v6146 = vunpack.c.l.b16 %v6130
        %v6147 = vunpack.c.l.b16 %v6131
        %v6148 = vpack.c.b16 %v6145, %v6144
        %v6149 = vpack.c.b16 %v6147, %v6146
        %v6153 = vsel %vm1869, %v6133, 0
        %6155 = vmatprep.subr.bf16.mxu0 0
        %6156 = vmatpush1.bf16.msra.mxu0 0
        %6157 = vmatprep.subr.bf16.mxu0 0
        %6158 = vmatpush1.bf16.msra.mxu0 0
        %6159 = vmatprep.subr.bf16.mxu0 0
        %6160 = vmatpush1.bf16.msra.mxu0 0
        %6161 = vmatprep.subr.bf16.mxu0 0
        %6162 = vmatpush1.bf16.msra.mxu0 0
        %6163 = vmatprep.subr.bf16.mxu0 0
        %6164 = vmatpush1.bf16.msra.mxu0 0
        %6165 = vmatprep.subr.bf16.mxu0 0
        %6166 = vmatpush1.bf16.msra.mxu0 0
        %6167 = vmatprep.subr.bf16.mxu0 0
        %6168 = vmatpush1.bf16.msra.mxu0 %v6149
        %6169 = vmatprep.subr.bf16.mxu0 0
        %6170 = vmatpush1.bf16.msra.mxu0 %v6148
        %6171 = vmatprep.subr.bf16.mxu0 0
        %6172 = vmatpush2.bf16.msra.mxu0 0
        %6173 = vmatprep.subr.bf16.mxu0 0
        %6174 = vmatpush2.bf16.msra.mxu0 0
        %6175 = vmatprep.subr.bf16.mxu0 0
        %6176 = vmatpush2.bf16.msra.mxu0 0
        %6177 = vmatprep.subr.bf16.mxu0 0
        %6178 = vmatpush2.bf16.msra.mxu0 0
        %6179 = vmatprep.subr.bf16.mxu0 0
        %6180 = vmatpush2.bf16.msra.mxu0 0
        %6181 = vmatprep.subr.bf16.mxu0 0
        %6182 = vmatpush2.bf16.msra.mxu0 0
        %6183 = vmatprep.subr.bf16.mxu0 0
        %6184 = vmatpush2.bf16.msra.mxu0 0
        %6185 = vmatprep.subr.bf16.mxu0 0
        %6186 = vmatpush2.bf16.msra.mxu0 0
        %6187 = vmatprep.mubr.bf16.mxu0 0
        %6188 = vmatmul.mubr.bf16.gmra.mxu0 %v6153
        %v6189 = vpop.f32.mrf.mxu0
        %v6190 = vadd.f32 %v6138, %v6189
        %v6191 = vpop.f32.mrf.mxu0
        %v6192 = vpop.f32.mrf.mxu0
        %v6193 = vpop.f32.mrf.mxu0
        %6194 = vdwg.mxu0
        %v6195 = vmax.f32 %v6190, 0.0
        %v6196 = vld [vmem:[%s83] sm:$0xf]
        %v6197 = vld [vmem:[%s83 + $0x4] sm:$0xf]
        %v6198 = vld [vmem:[%s83 + $0x8] sm:$0xf]
        %v6199 = vld [vmem:[%s83 + $0xc] sm:$0xf]
        %v6200 = vld [vmem:[%s83 + $0x10] sm:$0xf]
        %v6201 = vld [vmem:[%s83 + $0x14] sm:$0xf]
        %v6202 = vld [vmem:[%s83 + $0x18] sm:$0xf]
        %v6203 = vld [vmem:[%s83 + $0x1c] sm:$0xf]
        %v6204 = vld [vmem:[%s85] sm:$0x1]
        %v6205 = vpack.c.bf16 %v6195, %v6195
        %v6207 = vlaneseq
        %v6208 = vshrl.u32 %v6207, 7
        %v6209 = vsub.s32 0, %v6208
        %v6210 = vrot.slane %v6204, %v6209
        %v6220 = vunpack.c.l.b16 %v6196
        %v6221 = vunpack.c.l.b16 %v6197
        %v6222 = vunpack.c.l.b16 %v6198
        %v6223 = vunpack.c.l.b16 %v6199
        %v6224 = vunpack.c.l.b16 %v6200
        %v6225 = vunpack.c.l.b16 %v6201
        %v6226 = vunpack.c.l.b16 %v6202
        %v6227 = vunpack.c.l.b16 %v6203
        %v6228 = vpack.c.b16 %v6221, %v6220
        %v6229 = vpack.c.b16 %v6223, %v6222
        %v6230 = vpack.c.b16 %v6225, %v6224
        %v6231 = vpack.c.b16 %v6227, %v6226
        %v6237 = vsel %vm2923, %v6205, 0
        %6239 = vmatprep.subr.bf16.mxu0 0
        %6240 = vmatpush1.bf16.msra.mxu0 0
        %6241 = vmatprep.subr.bf16.mxu0 0
        %6242 = vmatpush1.bf16.msra.mxu0 0
        %6243 = vmatprep.subr.bf16.mxu0 0
        %6244 = vmatpush1.bf16.msra.mxu0 0
        %6245 = vmatprep.subr.bf16.mxu0 0
        %6246 = vmatpush1.bf16.msra.mxu0 0
        %6247 = vmatprep.subr.bf16.mxu0 0
        %6248 = vmatpush1.bf16.msra.mxu0 %v6231
        %6249 = vmatprep.subr.bf16.mxu0 0
        %6250 = vmatpush1.bf16.msra.mxu0 %v6230
        %6251 = vmatprep.subr.bf16.mxu0 0
        %6252 = vmatpush1.bf16.msra.mxu0 %v6229
        %6253 = vmatprep.subr.bf16.mxu0 0
        %6254 = vmatpush1.bf16.msra.mxu0 %v6228
        %6255 = vmatprep.subr.bf16.mxu0 0
        %6256 = vmatpush2.bf16.msra.mxu0 0
        %6257 = vmatprep.subr.bf16.mxu0 0
        %6258 = vmatpush2.bf16.msra.mxu0 0
        %6259 = vmatprep.subr.bf16.mxu0 0
        %6260 = vmatpush2.bf16.msra.mxu0 0
        %6261 = vmatprep.subr.bf16.mxu0 0
        %6262 = vmatpush2.bf16.msra.mxu0 0
        %6263 = vmatprep.subr.bf16.mxu0 0
        %6264 = vmatpush2.bf16.msra.mxu0 0
        %6265 = vmatprep.subr.bf16.mxu0 0
        %6266 = vmatpush2.bf16.msra.mxu0 0
        %6267 = vmatprep.subr.bf16.mxu0 0
        %6268 = vmatpush2.bf16.msra.mxu0 0
        %6269 = vmatprep.subr.bf16.mxu0 0
        %6270 = vmatpush2.bf16.msra.mxu0 0
        %6271 = vmatprep.mubr.bf16.mxu0 0
        %6272 = vmatmul.mubr.bf16.gmra.mxu0 %v6237
        %v6273 = vpop.f32.mrf.mxu0
        %v6274 = vadd.f32 %v6210, %v6273
        %v6275 = vpop.f32.mrf.mxu0
        %v6276 = vpop.f32.mrf.mxu0
        %v6277 = vpop.f32.mrf.mxu0
        %6278 = vdwg.mxu0
        %v6279 = vadd.f32 %v6127, %v6274
        %v6280 = vld [vmem:[#allocation9] sm:$0x1]
        %v6281 = vld [vmem:[#allocation10] sm:$0x1]
        %v6282 = vsel %vm1869, %v6279, 0.0
        %6283 = vadd.xlane.f32.xlu0 %v6282
        %v6284 = vpop.xlane.xlu0 %6283
        %v6285 = vmul.f32 %v6284, %v2790
        %v6286 = vsub.f32 %v6279, %v6285
        %v6287 = vmul.f32 %v6286, %v6286
        %v6288 = vsel %vm1869, %v6287, 0.0
        %6289 = vadd.xlane.f32.xlu0 %v6288
        %v6290 = vpop.xlane.xlu0 %6289
        %v6291 = vmul.f32 %v6290, %v2790
        %v6292 = vadd.f32 %v6291, 1e-05
        %v6293 = vrsqrt.pop %v6292
        %v6294 = vmul.f32 %v6286, %v6293
        %v6296 = vlaneseq
        %v6297 = vshrl.u32 %v6296, 7
        %v6298 = vsub.s32 0, %v6297
        %v6299 = vrot.slane %v6280, %v6298
        %v6301 = vmul.f32 %v6294, %v6299
        %v6303 = vlaneseq
        %v6304 = vshrl.u32 %v6303, 7
        %v6305 = vsub.s32 0, %v6304
        %v6306 = vrot.slane %v6281, %v6305
        %v6308 = vadd.f32 %v6301, %v6306
        %s6309 = scalar_lea.vmem %s47, 16
        %v6310 = vld [vmem:[%s6309] sm:$0xf]
        %v6311 = vld [vmem:[%s6309 + $0x4] sm:$0xf]
        %v6312 = vld [vmem:[%s6309 + $0x8] sm:$0xf]
        %v6313 = vld [vmem:[%s6309 + $0xc] sm:$0xf]
        %s6314 = scalar_lea.vmem %s49, 1
        %v6315 = vld [vmem:[%s6314] sm:$0x1]
        %v6316 = vpack.c.bf16 %v6308, %v6308
        %v6318 = vlaneseq
        %v6319 = vshrl.u32 %v6318, 7
        %v6320 = vsub.s32 0, %v6319
        %v6321 = vrot.slane %v6315, %v6320
        %v6327 = vunpack.c.l.b16 %v6310
        %v6328 = vunpack.c.l.b16 %v6311
        %v6329 = vunpack.c.l.b16 %v6312
        %v6330 = vunpack.c.l.b16 %v6313
        %v6331 = vpack.c.b16 %v6328, %v6327
        %v6332 = vpack.c.b16 %v6330, %v6329
        %v6336 = vsel %vm1869, %v6316, 0
        %6338 = vmatprep.subr.bf16.mxu0 0
        %6339 = vmatpush1.bf16.msra.mxu0 0
        %6340 = vmatprep.subr.bf16.mxu0 0
        %6341 = vmatpush1.bf16.msra.mxu0 0
        %6342 = vmatprep.subr.bf16.mxu0 0
        %6343 = vmatpush1.bf16.msra.mxu0 0
        %6344 = vmatprep.subr.bf16.mxu0 0
        %6345 = vmatpush1.bf16.msra.mxu0 0
        %6346 = vmatprep.subr.bf16.mxu0 0
        %6347 = vmatpush1.bf16.msra.mxu0 0
        %6348 = vmatprep.subr.bf16.mxu0 0
        %6349 = vmatpush1.bf16.msra.mxu0 0
        %6350 = vmatprep.subr.bf16.mxu0 0
        %6351 = vmatpush1.bf16.msra.mxu0 %v6332
        %6352 = vmatprep.subr.bf16.mxu0 0
        %6353 = vmatpush1.bf16.msra.mxu0 %v6331
        %6354 = vmatprep.subr.bf16.mxu0 0
        %6355 = vmatpush2.bf16.msra.mxu0 0
        %6356 = vmatprep.subr.bf16.mxu0 0
        %6357 = vmatpush2.bf16.msra.mxu0 0
        %6358 = vmatprep.subr.bf16.mxu0 0
        %6359 = vmatpush2.bf16.msra.mxu0 0
        %6360 = vmatprep.subr.bf16.mxu0 0
        %6361 = vmatpush2.bf16.msra.mxu0 0
        %6362 = vmatprep.subr.bf16.mxu0 0
        %6363 = vmatpush2.bf16.msra.mxu0 0
        %6364 = vmatprep.subr.bf16.mxu0 0
        %6365 = vmatpush2.bf16.msra.mxu0 0
        %6366 = vmatprep.subr.bf16.mxu0 0
        %6367 = vmatpush2.bf16.msra.mxu0 0
        %6368 = vmatprep.subr.bf16.mxu0 0
        %6369 = vmatpush2.bf16.msra.mxu0 0
        %6370 = vmatprep.mubr.bf16.mxu0 0
        %6371 = vmatmul.mubr.bf16.gmra.mxu0 %v6336
        %v6372 = vpop.f32.mrf.mxu0
        %v6373 = vadd.f32 %v6321, %v6372
        %v6374 = vpop.f32.mrf.mxu0
        %v6375 = vpop.f32.mrf.mxu0
        %v6376 = vpop.f32.mrf.mxu0
        %6377 = vdwg.mxu0
        %s6378 = scalar_lea.vmem %s51, 16
        %v6379 = vld [vmem:[%s6378] sm:$0xf]
        %v6380 = vld [vmem:[%s6378 + $0x4] sm:$0xf]
        %v6381 = vld [vmem:[%s6378 + $0x8] sm:$0xf]
        %v6382 = vld [vmem:[%s6378 + $0xc] sm:$0xf]
        %s6383 = scalar_lea.vmem %s53, 1
        %v6384 = vld [vmem:[%s6383] sm:$0x1]
        %v6386 = vlaneseq
        %v6387 = vshrl.u32 %v6386, 7
        %v6388 = vsub.s32 0, %v6387
        %v6389 = vrot.slane %v6384, %v6388
        %v6395 = vunpack.c.l.b16 %v6379
        %v6396 = vunpack.c.l.b16 %v6380
        %v6397 = vunpack.c.l.b16 %v6381
        %v6398 = vunpack.c.l.b16 %v6382
        %v6399 = vpack.c.b16 %v6396, %v6395
        %v6400 = vpack.c.b16 %v6398, %v6397
        %6403 = vmatprep.subr.bf16.mxu0 0
        %6404 = vmatpush1.bf16.msra.mxu0 0
        %6405 = vmatprep.subr.bf16.mxu0 0
        %6406 = vmatpush1.bf16.msra.mxu0 0
        %6407 = vmatprep.subr.bf16.mxu0 0
        %6408 = vmatpush1.bf16.msra.mxu0 0
        %6409 = vmatprep.subr.bf16.mxu0 0
        %6410 = vmatpush1.bf16.msra.mxu0 0
        %6411 = vmatprep.subr.bf16.mxu0 0
        %6412 = vmatpush1.bf16.msra.mxu0 0
        %6413 = vmatprep.subr.bf16.mxu0 0
        %6414 = vmatpush1.bf16.msra.mxu0 0
        %6415 = vmatprep.subr.bf16.mxu0 0
        %6416 = vmatpush1.bf16.msra.mxu0 %v6400
        %6417 = vmatprep.subr.bf16.mxu0 0
        %6418 = vmatpush1.bf16.msra.mxu0 %v6399
        %6419 = vmatprep.subr.bf16.mxu0 0
        %6420 = vmatpush2.bf16.msra.mxu0 0
        %6421 = vmatprep.subr.bf16.mxu0 0
        %6422 = vmatpush2.bf16.msra.mxu0 0
        %6423 = vmatprep.subr.bf16.mxu0 0
        %6424 = vmatpush2.bf16.msra.mxu0 0
        %6425 = vmatprep.subr.bf16.mxu0 0
        %6426 = vmatpush2.bf16.msra.mxu0 0
        %6427 = vmatprep.subr.bf16.mxu0 0
        %6428 = vmatpush2.bf16.msra.mxu0 0
        %6429 = vmatprep.subr.bf16.mxu0 0
        %6430 = vmatpush2.bf16.msra.mxu0 0
        %6431 = vmatprep.subr.bf16.mxu0 0
        %6432 = vmatpush2.bf16.msra.mxu0 0
        %6433 = vmatprep.subr.bf16.mxu0 0
        %6434 = vmatpush2.bf16.msra.mxu0 0
        %6435 = vmatprep.mubr.bf16.mxu0 0
        %6436 = vmatmul.mubr.bf16.gmra.mxu0 %v6336
        %v6437 = vpop.f32.mrf.mxu0
        %v6438 = vadd.f32 %v6389, %v6437
        %v6439 = vpop.f32.mrf.mxu0
        %v6440 = vpop.f32.mrf.mxu0
        %v6441 = vpop.f32.mrf.mxu0
        %6442 = vdwg.mxu0
        %s6443 = scalar_lea.vmem %s55, 16
        %v6444 = vld [vmem:[%s6443] sm:$0xf]
        %v6445 = vld [vmem:[%s6443 + $0x4] sm:$0xf]
        %v6446 = vld [vmem:[%s6443 + $0x8] sm:$0xf]
        %v6447 = vld [vmem:[%s6443 + $0xc] sm:$0xf]
        %s6448 = scalar_lea.vmem %s57, 1
        %v6449 = vld [vmem:[%s6448] sm:$0x1]
        %v6451 = vlaneseq
        %v6452 = vshrl.u32 %v6451, 7
        %v6453 = vsub.s32 0, %v6452
        %v6454 = vrot.slane %v6449, %v6453
        %v6460 = vunpack.c.l.b16 %v6444
        %v6461 = vunpack.c.l.b16 %v6445
        %v6462 = vunpack.c.l.b16 %v6446
        %v6463 = vunpack.c.l.b16 %v6447
        %v6464 = vpack.c.b16 %v6461, %v6460
        %v6465 = vpack.c.b16 %v6463, %v6462
        %6468 = vmatprep.subr.bf16.mxu0 0
        %6469 = vmatpush1.bf16.msra.mxu0 0
        %6470 = vmatprep.subr.bf16.mxu0 0
        %6471 = vmatpush1.bf16.msra.mxu0 0
        %6472 = vmatprep.subr.bf16.mxu0 0
        %6473 = vmatpush1.bf16.msra.mxu0 0
        %6474 = vmatprep.subr.bf16.mxu0 0
        %6475 = vmatpush1.bf16.msra.mxu0 0
        %6476 = vmatprep.subr.bf16.mxu0 0
        %6477 = vmatpush1.bf16.msra.mxu0 0
        %6478 = vmatprep.subr.bf16.mxu0 0
        %6479 = vmatpush1.bf16.msra.mxu0 0
        %6480 = vmatprep.subr.bf16.mxu0 0
        %6481 = vmatpush1.bf16.msra.mxu0 %v6465
        %6482 = vmatprep.subr.bf16.mxu0 0
        %6483 = vmatpush1.bf16.msra.mxu0 %v6464
        %6484 = vmatprep.subr.bf16.mxu0 0
        %6485 = vmatpush2.bf16.msra.mxu0 0
        %6486 = vmatprep.subr.bf16.mxu0 0
        %6487 = vmatpush2.bf16.msra.mxu0 0
        %6488 = vmatprep.subr.bf16.mxu0 0
        %6489 = vmatpush2.bf16.msra.mxu0 0
        %6490 = vmatprep.subr.bf16.mxu0 0
        %6491 = vmatpush2.bf16.msra.mxu0 0
        %6492 = vmatprep.subr.bf16.mxu0 0
        %6493 = vmatpush2.bf16.msra.mxu0 0
        %6494 = vmatprep.subr.bf16.mxu0 0
        %6495 = vmatpush2.bf16.msra.mxu0 0
        %6496 = vmatprep.subr.bf16.mxu0 0
        %6497 = vmatpush2.bf16.msra.mxu0 0
        %6498 = vmatprep.subr.bf16.mxu0 0
        %6499 = vmatpush2.bf16.msra.mxu0 0
        %6500 = vmatprep.mubr.bf16.mxu0 0
        %6501 = vmatmul.mubr.bf16.gmra.mxu0 %v6336
        %v6502 = vpop.f32.mrf.mxu0
        %v6503 = vadd.f32 %v6454, %v6502
        %v6504 = vpop.f32.mrf.mxu0
        %v6505 = vpop.f32.mrf.mxu0
        %v6506 = vpop.f32.mrf.mxu0
        %6507 = vdwg.mxu0
        %s6508 = scalar_lea.vmem %s59, 16
        %v6509 = vld [vmem:[%s6508] sm:$0xf]
        %v6510 = vld [vmem:[%s6508 + $0x4] sm:$0xf]
        %v6511 = vld [vmem:[%s6508 + $0x8] sm:$0xf]
        %v6512 = vld [vmem:[%s6508 + $0xc] sm:$0xf]
        %s6513 = scalar_lea.vmem %s61, 1
        %v6514 = vld [vmem:[%s6513] sm:$0x1]
        %v6516 = vsel %vm2044, %v6373, 0
        %v6519 = vsel %vm2044, %v6438, 0
        %6521 = vmatprep.subr.mxu0 0.0
        %6522 = vmatpush1.xpose.msra.mxu0 0.0
        %6523 = vmatprep.subr.mxu0 0.0
        %6524 = vmatpush1.xpose.msra.mxu0 0.0
        %6525 = vmatprep.subr.mxu0 0.0
        %6526 = vmatpush1.xpose.msra.mxu0 0.0
        %6527 = vmatprep.subr.mxu0 0.0
        %6528 = vmatpush1.xpose.msra.mxu0 0.0
        %6529 = vmatprep.subr.mxu0 0.0
        %6530 = vmatpush1.xpose.msra.mxu0 0.0
        %6531 = vmatprep.subr.mxu0 0.0
        %6532 = vmatpush1.xpose.msra.mxu0 0.0
        %6533 = vmatprep.subr.mxu0 0.0
        %6534 = vmatpush1.xpose.msra.mxu0 0.0
        %6535 = vmatprep.subr.mxu0 0.0
        %6536 = vmatpush1.xpose.msra.mxu0 0.0
        %6537 = vmatprep.subr.mxu0 0.0
        %6538 = vmatpush1.xpose.msra.mxu0 0.0
        %6539 = vmatprep.subr.mxu0 0.0
        %6540 = vmatpush1.xpose.msra.mxu0 0.0
        %6541 = vmatprep.subr.mxu0 0.0
        %6542 = vmatpush1.xpose.msra.mxu0 0.0
        %6543 = vmatprep.subr.mxu0 0.0
        %6544 = vmatpush1.xpose.msra.mxu0 0.0
        %6545 = vmatprep.subr.mxu0 0.0
        %6546 = vmatpush1.xpose.msra.mxu0 0.0
        %6547 = vmatprep.subr.mxu0 0.0
        %6548 = vmatpush1.xpose.msra.mxu0 0.0
        %6549 = vmatprep.subr.mxu0 0.0
        %6550 = vmatpush1.xpose.msra.mxu0 0.0
        %6551 = vmatprep.subr.mxu0 0.0
        %6552 = vmatpush1.xpose.msra.mxu0 %v6519
        %6553 = vmatprep.subr.mxu0 0.0
        %6554 = vmatpush2.xpose.msra.mxu0 0.0
        %6555 = vmatprep.subr.mxu0 0.0
        %6556 = vmatpush2.xpose.msra.mxu0 0.0
        %6557 = vmatprep.subr.mxu0 0.0
        %6558 = vmatpush2.xpose.msra.mxu0 0.0
        %6559 = vmatprep.subr.mxu0 0.0
        %6560 = vmatpush2.xpose.msra.mxu0 0.0
        %6561 = vmatprep.subr.mxu0 0.0
        %6562 = vmatpush2.xpose.msra.mxu0 0.0
        %6563 = vmatprep.subr.mxu0 0.0
        %6564 = vmatpush2.xpose.msra.mxu0 0.0
        %6565 = vmatprep.subr.mxu0 0.0
        %6566 = vmatpush2.xpose.msra.mxu0 0.0
        %6567 = vmatprep.subr.mxu0 0.0
        %6568 = vmatpush2.xpose.msra.mxu0 0.0
        %6569 = vmatprep.subr.mxu0 0.0
        %6570 = vmatpush2.xpose.msra.mxu0 0.0
        %6571 = vmatprep.subr.mxu0 0.0
        %6572 = vmatpush2.xpose.msra.mxu0 0.0
        %6573 = vmatprep.subr.mxu0 0.0
        %6574 = vmatpush2.xpose.msra.mxu0 0.0
        %6575 = vmatprep.subr.mxu0 0.0
        %6576 = vmatpush2.xpose.msra.mxu0 0.0
        %6577 = vmatprep.subr.mxu0 0.0
        %6578 = vmatpush2.xpose.msra.mxu0 0.0
        %6579 = vmatprep.subr.mxu0 0.0
        %6580 = vmatpush2.xpose.msra.mxu0 0.0
        %6581 = vmatprep.subr.mxu0 0.0
        %6582 = vmatpush2.xpose.msra.mxu0 0.0
        %6583 = vmatprep.subr.mxu0 0.0
        %6584 = vmatpush2.xpose.msra.mxu0 0.0
        %6585 = vmatprep.mubr.f32.mxu0 0.0
        %6586 = vmatmul.mubr.f32.gmra.mxu0 %v6516
        %v6587 = vpop.f32.mrf.mxu0
        %v6588 = vadd.f32 0.0, %v6587
        %v6589 = vpop.f32.mrf.mxu0
        %6590 = vdwg.mxu0
        %6591 = vrot.lane.b32.xlu0 %v6373, 120
        %v6592 = vpop.permute.xlu0 %6591
        %6593 = vrot.lane.b32.xlu0 %v6438, 120
        %v6594 = vpop.permute.xlu0 %6593
        %v6595 = vsel %vm2044, %v6592, 0
        %v6597 = vsel %vm2044, %v6594, 0
        %6599 = vmatprep.subr.mxu0 0.0
        %6600 = vmatpush1.xpose.msra.mxu0 0.0
        %6601 = vmatprep.subr.mxu0 0.0
        %6602 = vmatpush1.xpose.msra.mxu0 0.0
        %6603 = vmatprep.subr.mxu0 0.0
        %6604 = vmatpush1.xpose.msra.mxu0 0.0
        %6605 = vmatprep.subr.mxu0 0.0
        %6606 = vmatpush1.xpose.msra.mxu0 0.0
        %6607 = vmatprep.subr.mxu0 0.0
        %6608 = vmatpush1.xpose.msra.mxu0 0.0
        %6609 = vmatprep.subr.mxu0 0.0
        %6610 = vmatpush1.xpose.msra.mxu0 0.0
        %6611 = vmatprep.subr.mxu0 0.0
        %6612 = vmatpush1.xpose.msra.mxu0 0.0
        %6613 = vmatprep.subr.mxu0 0.0
        %6614 = vmatpush1.xpose.msra.mxu0 0.0
        %6615 = vmatprep.subr.mxu0 0.0
        %6616 = vmatpush1.xpose.msra.mxu0 0.0
        %6617 = vmatprep.subr.mxu0 0.0
        %6618 = vmatpush1.xpose.msra.mxu0 0.0
        %6619 = vmatprep.subr.mxu0 0.0
        %6620 = vmatpush1.xpose.msra.mxu0 0.0
        %6621 = vmatprep.subr.mxu0 0.0
        %6622 = vmatpush1.xpose.msra.mxu0 0.0
        %6623 = vmatprep.subr.mxu0 0.0
        %6624 = vmatpush1.xpose.msra.mxu0 0.0
        %6625 = vmatprep.subr.mxu0 0.0
        %6626 = vmatpush1.xpose.msra.mxu0 0.0
        %6627 = vmatprep.subr.mxu0 0.0
        %6628 = vmatpush1.xpose.msra.mxu0 0.0
        %6629 = vmatprep.subr.mxu0 0.0
        %6630 = vmatpush1.xpose.msra.mxu0 %v6597
        %6631 = vmatprep.subr.mxu0 0.0
        %6632 = vmatpush2.xpose.msra.mxu0 0.0
        %6633 = vmatprep.subr.mxu0 0.0
        %6634 = vmatpush2.xpose.msra.mxu0 0.0
        %6635 = vmatprep.subr.mxu0 0.0
        %6636 = vmatpush2.xpose.msra.mxu0 0.0
        %6637 = vmatprep.subr.mxu0 0.0
        %6638 = vmatpush2.xpose.msra.mxu0 0.0
        %6639 = vmatprep.subr.mxu0 0.0
        %6640 = vmatpush2.xpose.msra.mxu0 0.0
        %6641 = vmatprep.subr.mxu0 0.0
        %6642 = vmatpush2.xpose.msra.mxu0 0.0
        %6643 = vmatprep.subr.mxu0 0.0
        %6644 = vmatpush2.xpose.msra.mxu0 0.0
        %6645 = vmatprep.subr.mxu0 0.0
        %6646 = vmatpush2.xpose.msra.mxu0 0.0
        %6647 = vmatprep.subr.mxu0 0.0
        %6648 = vmatpush2.xpose.msra.mxu0 0.0
        %6649 = vmatprep.subr.mxu0 0.0
        %6650 = vmatpush2.xpose.msra.mxu0 0.0
        %6651 = vmatprep.subr.mxu0 0.0
        %6652 = vmatpush2.xpose.msra.mxu0 0.0
        %6653 = vmatprep.subr.mxu0 0.0
        %6654 = vmatpush2.xpose.msra.mxu0 0.0
        %6655 = vmatprep.subr.mxu0 0.0
        %6656 = vmatpush2.xpose.msra.mxu0 0.0
        %6657 = vmatprep.subr.mxu0 0.0
        %6658 = vmatpush2.xpose.msra.mxu0 0.0
        %6659 = vmatprep.subr.mxu0 0.0
        %6660 = vmatpush2.xpose.msra.mxu0 0.0
        %6661 = vmatprep.subr.mxu0 0.0
        %6662 = vmatpush2.xpose.msra.mxu0 0.0
        %6663 = vmatprep.mubr.f32.mxu0 0.0
        %6664 = vmatmul.mubr.f32.gmra.mxu0 %v6595
        %v6665 = vpop.f32.mrf.mxu0
        %v6666 = vadd.f32 0.0, %v6665
        %v6667 = vpop.f32.mrf.mxu0
        %6668 = vdwg.mxu0
        %6669 = vrot.lane.b32.xlu0 %v6373, 112
        %v6670 = vpop.permute.xlu0 %6669
        %6671 = vrot.lane.b32.xlu0 %v6438, 112
        %v6672 = vpop.permute.xlu0 %6671
        %v6673 = vsel %vm2044, %v6670, 0
        %v6675 = vsel %vm2044, %v6672, 0
        %6677 = vmatprep.subr.mxu0 0.0
        %6678 = vmatpush1.xpose.msra.mxu0 0.0
        %6679 = vmatprep.subr.mxu0 0.0
        %6680 = vmatpush1.xpose.msra.mxu0 0.0
        %6681 = vmatprep.subr.mxu0 0.0
        %6682 = vmatpush1.xpose.msra.mxu0 0.0
        %6683 = vmatprep.subr.mxu0 0.0
        %6684 = vmatpush1.xpose.msra.mxu0 0.0
        %6685 = vmatprep.subr.mxu0 0.0
        %6686 = vmatpush1.xpose.msra.mxu0 0.0
        %6687 = vmatprep.subr.mxu0 0.0
        %6688 = vmatpush1.xpose.msra.mxu0 0.0
        %6689 = vmatprep.subr.mxu0 0.0
        %6690 = vmatpush1.xpose.msra.mxu0 0.0
        %6691 = vmatprep.subr.mxu0 0.0
        %6692 = vmatpush1.xpose.msra.mxu0 0.0
        %6693 = vmatprep.subr.mxu0 0.0
        %6694 = vmatpush1.xpose.msra.mxu0 0.0
        %6695 = vmatprep.subr.mxu0 0.0
        %6696 = vmatpush1.xpose.msra.mxu0 0.0
        %6697 = vmatprep.subr.mxu0 0.0
        %6698 = vmatpush1.xpose.msra.mxu0 0.0
        %6699 = vmatprep.subr.mxu0 0.0
        %6700 = vmatpush1.xpose.msra.mxu0 0.0
        %6701 = vmatprep.subr.mxu0 0.0
        %6702 = vmatpush1.xpose.msra.mxu0 0.0
        %6703 = vmatprep.subr.mxu0 0.0
        %6704 = vmatpush1.xpose.msra.mxu0 0.0
        %6705 = vmatprep.subr.mxu0 0.0
        %6706 = vmatpush1.xpose.msra.mxu0 0.0
        %6707 = vmatprep.subr.mxu0 0.0
        %6708 = vmatpush1.xpose.msra.mxu0 %v6675
        %6709 = vmatprep.subr.mxu0 0.0
        %6710 = vmatpush2.xpose.msra.mxu0 0.0
        %6711 = vmatprep.subr.mxu0 0.0
        %6712 = vmatpush2.xpose.msra.mxu0 0.0
        %6713 = vmatprep.subr.mxu0 0.0
        %6714 = vmatpush2.xpose.msra.mxu0 0.0
        %6715 = vmatprep.subr.mxu0 0.0
        %6716 = vmatpush2.xpose.msra.mxu0 0.0
        %6717 = vmatprep.subr.mxu0 0.0
        %6718 = vmatpush2.xpose.msra.mxu0 0.0
        %6719 = vmatprep.subr.mxu0 0.0
        %6720 = vmatpush2.xpose.msra.mxu0 0.0
        %6721 = vmatprep.subr.mxu0 0.0
        %6722 = vmatpush2.xpose.msra.mxu0 0.0
        %6723 = vmatprep.subr.mxu0 0.0
        %6724 = vmatpush2.xpose.msra.mxu0 0.0
        %6725 = vmatprep.subr.mxu0 0.0
        %6726 = vmatpush2.xpose.msra.mxu0 0.0
        %6727 = vmatprep.subr.mxu0 0.0
        %6728 = vmatpush2.xpose.msra.mxu0 0.0
        %6729 = vmatprep.subr.mxu0 0.0
        %6730 = vmatpush2.xpose.msra.mxu0 0.0
        %6731 = vmatprep.subr.mxu0 0.0
        %6732 = vmatpush2.xpose.msra.mxu0 0.0
        %6733 = vmatprep.subr.mxu0 0.0
        %6734 = vmatpush2.xpose.msra.mxu0 0.0
        %6735 = vmatprep.subr.mxu0 0.0
        %6736 = vmatpush2.xpose.msra.mxu0 0.0
        %6737 = vmatprep.subr.mxu0 0.0
        %6738 = vmatpush2.xpose.msra.mxu0 0.0
        %6739 = vmatprep.subr.mxu0 0.0
        %6740 = vmatpush2.xpose.msra.mxu0 0.0
        %6741 = vmatprep.mubr.f32.mxu0 0.0
        %6742 = vmatmul.mubr.f32.gmra.mxu0 %v6673
        %v6743 = vpop.f32.mrf.mxu0
        %v6744 = vadd.f32 0.0, %v6743
        %v6745 = vpop.f32.mrf.mxu0
        %6746 = vdwg.mxu0
        %6747 = vrot.lane.b32.xlu0 %v6373, 104
        %v6748 = vpop.permute.xlu0 %6747
        %6749 = vrot.lane.b32.xlu0 %v6438, 104
        %v6750 = vpop.permute.xlu0 %6749
        %v6751 = vsel %vm2044, %v6748, 0
        %v6753 = vsel %vm2044, %v6750, 0
        %6755 = vmatprep.subr.mxu0 0.0
        %6756 = vmatpush1.xpose.msra.mxu0 0.0
        %6757 = vmatprep.subr.mxu0 0.0
        %6758 = vmatpush1.xpose.msra.mxu0 0.0
        %6759 = vmatprep.subr.mxu0 0.0
        %6760 = vmatpush1.xpose.msra.mxu0 0.0
        %6761 = vmatprep.subr.mxu0 0.0
        %6762 = vmatpush1.xpose.msra.mxu0 0.0
        %6763 = vmatprep.subr.mxu0 0.0
        %6764 = vmatpush1.xpose.msra.mxu0 0.0
        %6765 = vmatprep.subr.mxu0 0.0
        %6766 = vmatpush1.xpose.msra.mxu0 0.0
        %6767 = vmatprep.subr.mxu0 0.0
        %6768 = vmatpush1.xpose.msra.mxu0 0.0
        %6769 = vmatprep.subr.mxu0 0.0
        %6770 = vmatpush1.xpose.msra.mxu0 0.0
        %6771 = vmatprep.subr.mxu0 0.0
        %6772 = vmatpush1.xpose.msra.mxu0 0.0
        %6773 = vmatprep.subr.mxu0 0.0
        %6774 = vmatpush1.xpose.msra.mxu0 0.0
        %6775 = vmatprep.subr.mxu0 0.0
        %6776 = vmatpush1.xpose.msra.mxu0 0.0
        %6777 = vmatprep.subr.mxu0 0.0
        %6778 = vmatpush1.xpose.msra.mxu0 0.0
        %6779 = vmatprep.subr.mxu0 0.0
        %6780 = vmatpush1.xpose.msra.mxu0 0.0
        %6781 = vmatprep.subr.mxu0 0.0
        %6782 = vmatpush1.xpose.msra.mxu0 0.0
        %6783 = vmatprep.subr.mxu0 0.0
        %6784 = vmatpush1.xpose.msra.mxu0 0.0
        %6785 = vmatprep.subr.mxu0 0.0
        %6786 = vmatpush1.xpose.msra.mxu0 %v6753
        %6787 = vmatprep.subr.mxu0 0.0
        %6788 = vmatpush2.xpose.msra.mxu0 0.0
        %6789 = vmatprep.subr.mxu0 0.0
        %6790 = vmatpush2.xpose.msra.mxu0 0.0
        %6791 = vmatprep.subr.mxu0 0.0
        %6792 = vmatpush2.xpose.msra.mxu0 0.0
        %6793 = vmatprep.subr.mxu0 0.0
        %6794 = vmatpush2.xpose.msra.mxu0 0.0
        %6795 = vmatprep.subr.mxu0 0.0
        %6796 = vmatpush2.xpose.msra.mxu0 0.0
        %6797 = vmatprep.subr.mxu0 0.0
        %6798 = vmatpush2.xpose.msra.mxu0 0.0
        %6799 = vmatprep.subr.mxu0 0.0
        %6800 = vmatpush2.xpose.msra.mxu0 0.0
        %6801 = vmatprep.subr.mxu0 0.0
        %6802 = vmatpush2.xpose.msra.mxu0 0.0
        %6803 = vmatprep.subr.mxu0 0.0
        %6804 = vmatpush2.xpose.msra.mxu0 0.0
        %6805 = vmatprep.subr.mxu0 0.0
        %6806 = vmatpush2.xpose.msra.mxu0 0.0
        %6807 = vmatprep.subr.mxu0 0.0
        %6808 = vmatpush2.xpose.msra.mxu0 0.0
        %6809 = vmatprep.subr.mxu0 0.0
        %6810 = vmatpush2.xpose.msra.mxu0 0.0
        %6811 = vmatprep.subr.mxu0 0.0
        %6812 = vmatpush2.xpose.msra.mxu0 0.0
        %6813 = vmatprep.subr.mxu0 0.0
        %6814 = vmatpush2.xpose.msra.mxu0 0.0
        %6815 = vmatprep.subr.mxu0 0.0
        %6816 = vmatpush2.xpose.msra.mxu0 0.0
        %6817 = vmatprep.subr.mxu0 0.0
        %6818 = vmatpush2.xpose.msra.mxu0 0.0
        %6819 = vmatprep.mubr.f32.mxu0 0.0
        %6820 = vmatmul.mubr.f32.gmra.mxu0 %v6751
        %v6821 = vpop.f32.mrf.mxu0
        %v6822 = vadd.f32 0.0, %v6821
        %v6823 = vpop.f32.mrf.mxu0
        %6824 = vdwg.mxu0
        %v6825 = vadd.f32 %v6588, %v1844
        %v6826 = vadd.f32 %v6666, %v1844
        %v6827 = vadd.f32 %v6744, %v1844
        %v6828 = vadd.f32 %v6822, %v1844
        %v6829 = vsel %vm2044, %v6825, -inf
        %6830 = vmax.xlane.f32.xlu0 %v6829
        %v6831 = vpop.xlane.xlu0 %6830
        %v6832 = vsel %vm2044, %v6826, -inf
        %6833 = vmax.xlane.f32.xlu0 %v6832
        %v6834 = vpop.xlane.xlu0 %6833
        %v6835 = vsel %vm2044, %v6827, -inf
        %6836 = vmax.xlane.f32.xlu0 %v6835
        %v6837 = vpop.xlane.xlu0 %6836
        %v6838 = vsel %vm2044, %v6828, -inf
        %6839 = vmax.xlane.f32.xlu0 %v6838
        %v6840 = vpop.xlane.xlu0 %6839
        %v6841 = vsub.f32 %v6825, %v6831
        %v6842 = vsub.f32 %v6826, %v6834
        %v6843 = vsub.f32 %v6827, %v6837
        %v6844 = vsub.f32 %v6828, %v6840
        %v6845 = vmul.f32 %v6841, 1.442695
        %v6846 = vpow.pop %v6845
        %v6847 = vmul.f32 %v6842, 1.442695
        %v6848 = vpow.pop %v6847
        %v6849 = vmul.f32 %v6843, 1.442695
        %v6850 = vpow.pop %v6849
        %v6851 = vmul.f32 %v6844, 1.442695
        %v6852 = vpow.pop %v6851
        %v6853 = vsel %vm2044, %v6846, 0.0
        %6854 = vadd.xlane.f32.xlu0 %v6853
        %v6855 = vpop.xlane.xlu0 %6854
        %v6856 = vsel %vm2044, %v6848, 0.0
        %6857 = vadd.xlane.f32.xlu0 %v6856
        %v6858 = vpop.xlane.xlu0 %6857
        %v6859 = vsel %vm2044, %v6850, 0.0
        %6860 = vadd.xlane.f32.xlu0 %v6859
        %v6861 = vpop.xlane.xlu0 %6860
        %v6862 = vsel %vm2044, %v6852, 0.0
        %6863 = vadd.xlane.f32.xlu0 %v6862
        %v6864 = vpop.xlane.xlu0 %6863
        %v6865 = vrcp.pop %v6855
        %v6866 = vrcp.pop %v6858
        %v6867 = vrcp.pop %v6861
        %v6868 = vrcp.pop %v6864
        %v6869 = vmul.f32 %v6846, %v6865
        %v6870 = vmul.f32 %v6848, %v6866
        %v6871 = vmul.f32 %v6850, %v6867
        %v6872 = vmul.f32 %v6852, %v6868
        %v6874 = vsel %vm2044, %v6869, 0
        %6876 = vmatprep.subr.mxu0 0.0
        %6877 = vmatpush1.msra.mxu0 0.0
        %6878 = vmatprep.subr.mxu0 0.0
        %6879 = vmatpush1.msra.mxu0 0.0
        %6880 = vmatprep.subr.mxu0 0.0
        %6881 = vmatpush1.msra.mxu0 0.0
        %6882 = vmatprep.subr.mxu0 0.0
        %6883 = vmatpush1.msra.mxu0 0.0
        %6884 = vmatprep.subr.mxu0 0.0
        %6885 = vmatpush1.msra.mxu0 0.0
        %6886 = vmatprep.subr.mxu0 0.0
        %6887 = vmatpush1.msra.mxu0 0.0
        %6888 = vmatprep.subr.mxu0 0.0
        %6889 = vmatpush1.msra.mxu0 0.0
        %6890 = vmatprep.subr.mxu0 0.0
        %6891 = vmatpush1.msra.mxu0 0.0
        %6892 = vmatprep.subr.mxu0 0.0
        %6893 = vmatpush1.msra.mxu0 0.0
        %6894 = vmatprep.subr.mxu0 0.0
        %6895 = vmatpush1.msra.mxu0 0.0
        %6896 = vmatprep.subr.mxu0 0.0
        %6897 = vmatpush1.msra.mxu0 0.0
        %6898 = vmatprep.subr.mxu0 0.0
        %6899 = vmatpush1.msra.mxu0 0.0
        %6900 = vmatprep.subr.mxu0 0.0
        %6901 = vmatpush1.msra.mxu0 0.0
        %6902 = vmatprep.subr.mxu0 0.0
        %6903 = vmatpush1.msra.mxu0 0.0
        %6904 = vmatprep.subr.mxu0 0.0
        %6905 = vmatpush1.msra.mxu0 0.0
        %6906 = vmatprep.subr.mxu0 0.0
        %6907 = vmatpush1.msra.mxu0 %v6503
        %6908 = vmatprep.subr.mxu0 0.0
        %6909 = vmatpush2.msra.mxu0 0.0
        %6910 = vmatprep.subr.mxu0 0.0
        %6911 = vmatpush2.msra.mxu0 0.0
        %6912 = vmatprep.subr.mxu0 0.0
        %6913 = vmatpush2.msra.mxu0 0.0
        %6914 = vmatprep.subr.mxu0 0.0
        %6915 = vmatpush2.msra.mxu0 0.0
        %6916 = vmatprep.subr.mxu0 0.0
        %6917 = vmatpush2.msra.mxu0 0.0
        %6918 = vmatprep.subr.mxu0 0.0
        %6919 = vmatpush2.msra.mxu0 0.0
        %6920 = vmatprep.subr.mxu0 0.0
        %6921 = vmatpush2.msra.mxu0 0.0
        %6922 = vmatprep.subr.mxu0 0.0
        %6923 = vmatpush2.msra.mxu0 0.0
        %6924 = vmatprep.subr.mxu0 0.0
        %6925 = vmatpush2.msra.mxu0 0.0
        %6926 = vmatprep.subr.mxu0 0.0
        %6927 = vmatpush2.msra.mxu0 0.0
        %6928 = vmatprep.subr.mxu0 0.0
        %6929 = vmatpush2.msra.mxu0 0.0
        %6930 = vmatprep.subr.mxu0 0.0
        %6931 = vmatpush2.msra.mxu0 0.0
        %6932 = vmatprep.subr.mxu0 0.0
        %6933 = vmatpush2.msra.mxu0 0.0
        %6934 = vmatprep.subr.mxu0 0.0
        %6935 = vmatpush2.msra.mxu0 0.0
        %6936 = vmatprep.subr.mxu0 0.0
        %6937 = vmatpush2.msra.mxu0 0.0
        %6938 = vmatprep.subr.mxu0 0.0
        %6939 = vmatpush2.msra.mxu0 0.0
        %6940 = vmatprep.mubr.f32.mxu0 0.0
        %6941 = vmatmul.mubr.f32.gmra.mxu0 %v6874
        %v6942 = vpop.f32.mrf.mxu0
        %v6943 = vadd.f32 0.0, %v6942
        %v6944 = vpop.f32.mrf.mxu0
        %6945 = vdwg.mxu0
        %6947 = vrot.lane.b32.xlu0 %v6503, 120
        %v6948 = vpop.permute.xlu0 %6947
        %v6951 = vsel %vm2044, %v6870, 0
        %6953 = vmatprep.subr.mxu0 0.0
        %6954 = vmatpush1.msra.mxu0 0.0
        %6955 = vmatprep.subr.mxu0 0.0
        %6956 = vmatpush1.msra.mxu0 0.0
        %6957 = vmatprep.subr.mxu0 0.0
        %6958 = vmatpush1.msra.mxu0 0.0
        %6959 = vmatprep.subr.mxu0 0.0
        %6960 = vmatpush1.msra.mxu0 0.0
        %6961 = vmatprep.subr.mxu0 0.0
        %6962 = vmatpush1.msra.mxu0 0.0
        %6963 = vmatprep.subr.mxu0 0.0
        %6964 = vmatpush1.msra.mxu0 0.0
        %6965 = vmatprep.subr.mxu0 0.0
        %6966 = vmatpush1.msra.mxu0 0.0
        %6967 = vmatprep.subr.mxu0 0.0
        %6968 = vmatpush1.msra.mxu0 0.0
        %6969 = vmatprep.subr.mxu0 0.0
        %6970 = vmatpush1.msra.mxu0 0.0
        %6971 = vmatprep.subr.mxu0 0.0
        %6972 = vmatpush1.msra.mxu0 0.0
        %6973 = vmatprep.subr.mxu0 0.0
        %6974 = vmatpush1.msra.mxu0 0.0
        %6975 = vmatprep.subr.mxu0 0.0
        %6976 = vmatpush1.msra.mxu0 0.0
        %6977 = vmatprep.subr.mxu0 0.0
        %6978 = vmatpush1.msra.mxu0 0.0
        %6979 = vmatprep.subr.mxu0 0.0
        %6980 = vmatpush1.msra.mxu0 0.0
        %6981 = vmatprep.subr.mxu0 0.0
        %6982 = vmatpush1.msra.mxu0 0.0
        %6983 = vmatprep.subr.mxu0 0.0
        %6984 = vmatpush1.msra.mxu0 %v6948
        %6985 = vmatprep.subr.mxu0 0.0
        %6986 = vmatpush2.msra.mxu0 0.0
        %6987 = vmatprep.subr.mxu0 0.0
        %6988 = vmatpush2.msra.mxu0 0.0
        %6989 = vmatprep.subr.mxu0 0.0
        %6990 = vmatpush2.msra.mxu0 0.0
        %6991 = vmatprep.subr.mxu0 0.0
        %6992 = vmatpush2.msra.mxu0 0.0
        %6993 = vmatprep.subr.mxu0 0.0
        %6994 = vmatpush2.msra.mxu0 0.0
        %6995 = vmatprep.subr.mxu0 0.0
        %6996 = vmatpush2.msra.mxu0 0.0
        %6997 = vmatprep.subr.mxu0 0.0
        %6998 = vmatpush2.msra.mxu0 0.0
        %6999 = vmatprep.subr.mxu0 0.0
        %7000 = vmatpush2.msra.mxu0 0.0
        %7001 = vmatprep.subr.mxu0 0.0
        %7002 = vmatpush2.msra.mxu0 0.0
        %7003 = vmatprep.subr.mxu0 0.0
        %7004 = vmatpush2.msra.mxu0 0.0
        %7005 = vmatprep.subr.mxu0 0.0
        %7006 = vmatpush2.msra.mxu0 0.0
        %7007 = vmatprep.subr.mxu0 0.0
        %7008 = vmatpush2.msra.mxu0 0.0
        %7009 = vmatprep.subr.mxu0 0.0
        %7010 = vmatpush2.msra.mxu0 0.0
        %7011 = vmatprep.subr.mxu0 0.0
        %7012 = vmatpush2.msra.mxu0 0.0
        %7013 = vmatprep.subr.mxu0 0.0
        %7014 = vmatpush2.msra.mxu0 0.0
        %7015 = vmatprep.subr.mxu0 0.0
        %7016 = vmatpush2.msra.mxu0 0.0
        %7017 = vmatprep.mubr.f32.mxu0 0.0
        %7018 = vmatmul.mubr.f32.gmra.mxu0 %v6951
        %v7019 = vpop.f32.mrf.mxu0
        %v7020 = vadd.f32 0.0, %v7019
        %v7021 = vpop.f32.mrf.mxu0
        %7022 = vdwg.mxu0
        %7023 = vrot.lane.b32.xlu0 %v6503, 112
        %v7024 = vpop.permute.xlu0 %7023
        %v7027 = vsel %vm2044, %v6871, 0
        %7029 = vmatprep.subr.mxu0 0.0
        %7030 = vmatpush1.msra.mxu0 0.0
        %7031 = vmatprep.subr.mxu0 0.0
        %7032 = vmatpush1.msra.mxu0 0.0
        %7033 = vmatprep.subr.mxu0 0.0
        %7034 = vmatpush1.msra.mxu0 0.0
        %7035 = vmatprep.subr.mxu0 0.0
        %7036 = vmatpush1.msra.mxu0 0.0
        %7037 = vmatprep.subr.mxu0 0.0
        %7038 = vmatpush1.msra.mxu0 0.0
        %7039 = vmatprep.subr.mxu0 0.0
        %7040 = vmatpush1.msra.mxu0 0.0
        %7041 = vmatprep.subr.mxu0 0.0
        %7042 = vmatpush1.msra.mxu0 0.0
        %7043 = vmatprep.subr.mxu0 0.0
        %7044 = vmatpush1.msra.mxu0 0.0
        %7045 = vmatprep.subr.mxu0 0.0
        %7046 = vmatpush1.msra.mxu0 0.0
        %7047 = vmatprep.subr.mxu0 0.0
        %7048 = vmatpush1.msra.mxu0 0.0
        %7049 = vmatprep.subr.mxu0 0.0
        %7050 = vmatpush1.msra.mxu0 0.0
        %7051 = vmatprep.subr.mxu0 0.0
        %7052 = vmatpush1.msra.mxu0 0.0
        %7053 = vmatprep.subr.mxu0 0.0
        %7054 = vmatpush1.msra.mxu0 0.0
        %7055 = vmatprep.subr.mxu0 0.0
        %7056 = vmatpush1.msra.mxu0 0.0
        %7057 = vmatprep.subr.mxu0 0.0
        %7058 = vmatpush1.msra.mxu0 0.0
        %7059 = vmatprep.subr.mxu0 0.0
        %7060 = vmatpush1.msra.mxu0 %v7024
        %7061 = vmatprep.subr.mxu0 0.0
        %7062 = vmatpush2.msra.mxu0 0.0
        %7063 = vmatprep.subr.mxu0 0.0
        %7064 = vmatpush2.msra.mxu0 0.0
        %7065 = vmatprep.subr.mxu0 0.0
        %7066 = vmatpush2.msra.mxu0 0.0
        %7067 = vmatprep.subr.mxu0 0.0
        %7068 = vmatpush2.msra.mxu0 0.0
        %7069 = vmatprep.subr.mxu0 0.0
        %7070 = vmatpush2.msra.mxu0 0.0
        %7071 = vmatprep.subr.mxu0 0.0
        %7072 = vmatpush2.msra.mxu0 0.0
        %7073 = vmatprep.subr.mxu0 0.0
        %7074 = vmatpush2.msra.mxu0 0.0
        %7075 = vmatprep.subr.mxu0 0.0
        %7076 = vmatpush2.msra.mxu0 0.0
        %7077 = vmatprep.subr.mxu0 0.0
        %7078 = vmatpush2.msra.mxu0 0.0
        %7079 = vmatprep.subr.mxu0 0.0
        %7080 = vmatpush2.msra.mxu0 0.0
        %7081 = vmatprep.subr.mxu0 0.0
        %7082 = vmatpush2.msra.mxu0 0.0
        %7083 = vmatprep.subr.mxu0 0.0
        %7084 = vmatpush2.msra.mxu0 0.0
        %7085 = vmatprep.subr.mxu0 0.0
        %7086 = vmatpush2.msra.mxu0 0.0
        %7087 = vmatprep.subr.mxu0 0.0
        %7088 = vmatpush2.msra.mxu0 0.0
        %7089 = vmatprep.subr.mxu0 0.0
        %7090 = vmatpush2.msra.mxu0 0.0
        %7091 = vmatprep.subr.mxu0 0.0
        %7092 = vmatpush2.msra.mxu0 0.0
        %7093 = vmatprep.mubr.f32.mxu0 0.0
        %7094 = vmatmul.mubr.f32.gmra.mxu0 %v7027
        %v7095 = vpop.f32.mrf.mxu0
        %v7096 = vadd.f32 0.0, %v7095
        %v7097 = vpop.f32.mrf.mxu0
        %7098 = vdwg.mxu0
        %7099 = vrot.lane.b32.xlu0 %v6503, 104
        %v7100 = vpop.permute.xlu0 %7099
        %v7103 = vsel %vm2044, %v6872, 0
        %7105 = vmatprep.subr.mxu0 0.0
        %7106 = vmatpush1.msra.mxu0 0.0
        %7107 = vmatprep.subr.mxu0 0.0
        %7108 = vmatpush1.msra.mxu0 0.0
        %7109 = vmatprep.subr.mxu0 0.0
        %7110 = vmatpush1.msra.mxu0 0.0
        %7111 = vmatprep.subr.mxu0 0.0
        %7112 = vmatpush1.msra.mxu0 0.0
        %7113 = vmatprep.subr.mxu0 0.0
        %7114 = vmatpush1.msra.mxu0 0.0
        %7115 = vmatprep.subr.mxu0 0.0
        %7116 = vmatpush1.msra.mxu0 0.0
        %7117 = vmatprep.subr.mxu0 0.0
        %7118 = vmatpush1.msra.mxu0 0.0
        %7119 = vmatprep.subr.mxu0 0.0
        %7120 = vmatpush1.msra.mxu0 0.0
        %7121 = vmatprep.subr.mxu0 0.0
        %7122 = vmatpush1.msra.mxu0 0.0
        %7123 = vmatprep.subr.mxu0 0.0
        %7124 = vmatpush1.msra.mxu0 0.0
        %7125 = vmatprep.subr.mxu0 0.0
        %7126 = vmatpush1.msra.mxu0 0.0
        %7127 = vmatprep.subr.mxu0 0.0
        %7128 = vmatpush1.msra.mxu0 0.0
        %7129 = vmatprep.subr.mxu0 0.0
        %7130 = vmatpush1.msra.mxu0 0.0
        %7131 = vmatprep.subr.mxu0 0.0
        %7132 = vmatpush1.msra.mxu0 0.0
        %7133 = vmatprep.subr.mxu0 0.0
        %7134 = vmatpush1.msra.mxu0 0.0
        %7135 = vmatprep.subr.mxu0 0.0
        %7136 = vmatpush1.msra.mxu0 %v7100
        %7137 = vmatprep.subr.mxu0 0.0
        %7138 = vmatpush2.msra.mxu0 0.0
        %7139 = vmatprep.subr.mxu0 0.0
        %7140 = vmatpush2.msra.mxu0 0.0
        %7141 = vmatprep.subr.mxu0 0.0
        %7142 = vmatpush2.msra.mxu0 0.0
        %7143 = vmatprep.subr.mxu0 0.0
        %7144 = vmatpush2.msra.mxu0 0.0
        %7145 = vmatprep.subr.mxu0 0.0
        %7146 = vmatpush2.msra.mxu0 0.0
        %7147 = vmatprep.subr.mxu0 0.0
        %7148 = vmatpush2.msra.mxu0 0.0
        %7149 = vmatprep.subr.mxu0 0.0
        %7150 = vmatpush2.msra.mxu0 0.0
        %7151 = vmatprep.subr.mxu0 0.0
        %7152 = vmatpush2.msra.mxu0 0.0
        %7153 = vmatprep.subr.mxu0 0.0
        %7154 = vmatpush2.msra.mxu0 0.0
        %7155 = vmatprep.subr.mxu0 0.0
        %7156 = vmatpush2.msra.mxu0 0.0
        %7157 = vmatprep.subr.mxu0 0.0
        %7158 = vmatpush2.msra.mxu0 0.0
        %7159 = vmatprep.subr.mxu0 0.0
        %7160 = vmatpush2.msra.mxu0 0.0
        %7161 = vmatprep.subr.mxu0 0.0
        %7162 = vmatpush2.msra.mxu0 0.0
        %7163 = vmatprep.subr.mxu0 0.0
        %7164 = vmatpush2.msra.mxu0 0.0
        %7165 = vmatprep.subr.mxu0 0.0
        %7166 = vmatpush2.msra.mxu0 0.0
        %7167 = vmatprep.subr.mxu0 0.0
        %7168 = vmatpush2.msra.mxu0 0.0
        %7169 = vmatprep.mubr.f32.mxu0 0.0
        %7170 = vmatmul.mubr.f32.gmra.mxu0 %v7103
        %v7171 = vpop.f32.mrf.mxu0
        %v7172 = vadd.f32 0.0, %v7171
        %v7173 = vpop.f32.mrf.mxu0
        %7174 = vdwg.mxu0
        %7176 = vrot.lane.b32.xlu0 %v7020, 8
        %v7177 = vpop.permute.xlu0 %7176
        %7180 = vrot.lane.b32.xlu0 %v7096, 16
        %v7181 = vpop.permute.xlu0 %7180
        %7184 = vrot.lane.b32.xlu0 %v7172, 24
        %v7185 = vpop.permute.xlu0 %7184
        %v7187 = vsel %vm2044, %v6943, %v7177
        %v7188 = vsel %vm2718, %v7187, %v7181
        %v7189 = vsel %vm2720, %v7188, %v7185
        %v7190 = vpack.c.bf16 %v7189, %v7189
        %v7192 = vlaneseq
        %v7193 = vshrl.u32 %v7192, 7
        %v7194 = vsub.s32 0, %v7193
        %v7195 = vrot.slane %v6514, %v7194
        %v7201 = vunpack.c.l.b16 %v6509
        %v7202 = vunpack.c.l.b16 %v6510
        %v7203 = vunpack.c.l.b16 %v6511
        %v7204 = vunpack.c.l.b16 %v6512
        %v7205 = vpack.c.b16 %v7202, %v7201
        %v7206 = vpack.c.b16 %v7204, %v7203
        %v7210 = vsel %vm1869, %v7190, 0
        %7212 = vmatprep.subr.bf16.mxu0 0
        %7213 = vmatpush1.bf16.msra.mxu0 0
        %7214 = vmatprep.subr.bf16.mxu0 0
        %7215 = vmatpush1.bf16.msra.mxu0 0
        %7216 = vmatprep.subr.bf16.mxu0 0
        %7217 = vmatpush1.bf16.msra.mxu0 0
        %7218 = vmatprep.subr.bf16.mxu0 0
        %7219 = vmatpush1.bf16.msra.mxu0 0
        %7220 = vmatprep.subr.bf16.mxu0 0
        %7221 = vmatpush1.bf16.msra.mxu0 0
        %7222 = vmatprep.subr.bf16.mxu0 0
        %7223 = vmatpush1.bf16.msra.mxu0 0
        %7224 = vmatprep.subr.bf16.mxu0 0
        %7225 = vmatpush1.bf16.msra.mxu0 %v7206
        %7226 = vmatprep.subr.bf16.mxu0 0
        %7227 = vmatpush1.bf16.msra.mxu0 %v7205
        %7228 = vmatprep.subr.bf16.mxu0 0
        %7229 = vmatpush2.bf16.msra.mxu0 0
        %7230 = vmatprep.subr.bf16.mxu0 0
        %7231 = vmatpush2.bf16.msra.mxu0 0
        %7232 = vmatprep.subr.bf16.mxu0 0
        %7233 = vmatpush2.bf16.msra.mxu0 0
        %7234 = vmatprep.subr.bf16.mxu0 0
        %7235 = vmatpush2.bf16.msra.mxu0 0
        %7236 = vmatprep.subr.bf16.mxu0 0
        %7237 = vmatpush2.bf16.msra.mxu0 0
        %7238 = vmatprep.subr.bf16.mxu0 0
        %7239 = vmatpush2.bf16.msra.mxu0 0
        %7240 = vmatprep.subr.bf16.mxu0 0
        %7241 = vmatpush2.bf16.msra.mxu0 0
        %7242 = vmatprep.subr.bf16.mxu0 0
        %7243 = vmatpush2.bf16.msra.mxu0 0
        %7244 = vmatprep.mubr.bf16.mxu0 0
        %7245 = vmatmul.mubr.bf16.gmra.mxu0 %v7210
        %v7246 = vpop.f32.mrf.mxu0
        %v7247 = vadd.f32 %v7195, %v7246
        %v7248 = vpop.f32.mrf.mxu0
        %v7249 = vpop.f32.mrf.mxu0
        %v7250 = vpop.f32.mrf.mxu0
        %7251 = vdwg.mxu0
        %v7252 = vadd.f32 %v6308, %v7247
        %s7253 = scalar_lea.vmem [#allocation2], 1
        %v7254 = vld [vmem:[%s7253] sm:$0x1]
        %s7255 = scalar_lea.vmem [#allocation4], 1
        %v7256 = vld [vmem:[%s7255] sm:$0x1]
        %v7257 = vsel %vm1869, %v7252, 0.0
        %7258 = vadd.xlane.f32.xlu0 %v7257
        %v7259 = vpop.xlane.xlu0 %7258
        %v7260 = vmul.f32 %v7259, %v2790
        %v7261 = vsub.f32 %v7252, %v7260
        %v7262 = vmul.f32 %v7261, %v7261
        %v7263 = vsel %vm1869, %v7262, 0.0
        %7264 = vadd.xlane.f32.xlu0 %v7263
        %v7265 = vpop.xlane.xlu0 %7264
        %v7266 = vmul.f32 %v7265, %v2790
        %v7267 = vadd.f32 %v7266, 1e-05
        %v7268 = vrsqrt.pop %v7267
        %v7269 = vmul.f32 %v7261, %v7268
        %v7271 = vlaneseq
        %v7272 = vshrl.u32 %v7271, 7
        %v7273 = vsub.s32 0, %v7272
        %v7274 = vrot.slane %v7254, %v7273
        %v7276 = vmul.f32 %v7269, %v7274
        %v7278 = vlaneseq
        %v7279 = vshrl.u32 %v7278, 7
        %v7280 = vsub.s32 0, %v7279
        %v7281 = vrot.slane %v7256, %v7280
        %v7283 = vadd.f32 %v7276, %v7281
        %s7284 = scalar_lea.vmem %s63, 16
        %v7285 = vld [vmem:[%s7284] sm:$0xf]
        %v7286 = vld [vmem:[%s7284 + $0x4] sm:$0xf]
        %v7287 = vld [vmem:[%s7284 + $0x8] sm:$0xf]
        %v7288 = vld [vmem:[%s7284 + $0xc] sm:$0xf]
        %s7289 = scalar_lea.vmem %s65, 1
        %v7290 = vld [vmem:[%s7289] sm:$0x1]
        %v7291 = vpack.c.bf16 %v7283, %v7283
        %v7293 = vlaneseq
        %v7294 = vshrl.u32 %v7293, 7
        %v7295 = vsub.s32 0, %v7294
        %v7296 = vrot.slane %v7290, %v7295
        %v7302 = vunpack.c.l.b16 %v7285
        %v7303 = vunpack.c.l.b16 %v7286
        %v7304 = vunpack.c.l.b16 %v7287
        %v7305 = vunpack.c.l.b16 %v7288
        %v7306 = vpack.c.b16 %v7303, %v7302
        %v7307 = vpack.c.b16 %v7305, %v7304
        %v7311 = vsel %vm1869, %v7291, 0
        %7313 = vmatprep.subr.bf16.mxu0 0
        %7314 = vmatpush1.bf16.msra.mxu0 0
        %7315 = vmatprep.subr.bf16.mxu0 0
        %7316 = vmatpush1.bf16.msra.mxu0 0
        %7317 = vmatprep.subr.bf16.mxu0 0
        %7318 = vmatpush1.bf16.msra.mxu0 0
        %7319 = vmatprep.subr.bf16.mxu0 0
        %7320 = vmatpush1.bf16.msra.mxu0 0
        %7321 = vmatprep.subr.bf16.mxu0 0
        %7322 = vmatpush1.bf16.msra.mxu0 0
        %7323 = vmatprep.subr.bf16.mxu0 0
        %7324 = vmatpush1.bf16.msra.mxu0 0
        %7325 = vmatprep.subr.bf16.mxu0 0
        %7326 = vmatpush1.bf16.msra.mxu0 %v7307
        %7327 = vmatprep.subr.bf16.mxu0 0
        %7328 = vmatpush1.bf16.msra.mxu0 %v7306
        %7329 = vmatprep.subr.bf16.mxu0 0
        %7330 = vmatpush2.bf16.msra.mxu0 0
        %7331 = vmatprep.subr.bf16.mxu0 0
        %7332 = vmatpush2.bf16.msra.mxu0 0
        %7333 = vmatprep.subr.bf16.mxu0 0
        %7334 = vmatpush2.bf16.msra.mxu0 0
        %7335 = vmatprep.subr.bf16.mxu0 0
        %7336 = vmatpush2.bf16.msra.mxu0 0
        %7337 = vmatprep.subr.bf16.mxu0 0
        %7338 = vmatpush2.bf16.msra.mxu0 0
        %7339 = vmatprep.subr.bf16.mxu0 0
        %7340 = vmatpush2.bf16.msra.mxu0 0
        %7341 = vmatprep.subr.bf16.mxu0 0
        %7342 = vmatpush2.bf16.msra.mxu0 0
        %7343 = vmatprep.subr.bf16.mxu0 0
        %7344 = vmatpush2.bf16.msra.mxu0 0
        %7345 = vmatprep.mubr.bf16.mxu0 0
        %7346 = vmatmul.mubr.bf16.gmra.mxu0 %v7311
        %v7347 = vpop.f32.mrf.mxu0
        %v7348 = vadd.f32 %v7296, %v7347
        %v7349 = vpop.f32.mrf.mxu0
        %v7350 = vpop.f32.mrf.mxu0
        %v7351 = vpop.f32.mrf.mxu0
        %7352 = vdwg.mxu0
        %s7353 = scalar_lea.vmem %s67, 16
        %v7354 = vld [vmem:[%s7353] sm:$0xf]
        %v7355 = vld [vmem:[%s7353 + $0x4] sm:$0xf]
        %v7356 = vld [vmem:[%s7353 + $0x8] sm:$0xf]
        %v7357 = vld [vmem:[%s7353 + $0xc] sm:$0xf]
        %s7358 = scalar_lea.vmem %s69, 1
        %v7359 = vld [vmem:[%s7358] sm:$0x1]
        %v7361 = vlaneseq
        %v7362 = vshrl.u32 %v7361, 7
        %v7363 = vsub.s32 0, %v7362
        %v7364 = vrot.slane %v7359, %v7363
        %v7370 = vunpack.c.l.b16 %v7354
        %v7371 = vunpack.c.l.b16 %v7355
        %v7372 = vunpack.c.l.b16 %v7356
        %v7373 = vunpack.c.l.b16 %v7357
        %v7374 = vpack.c.b16 %v7371, %v7370
        %v7375 = vpack.c.b16 %v7373, %v7372
        %7378 = vmatprep.subr.bf16.mxu0 0
        %7379 = vmatpush1.bf16.msra.mxu0 0
        %7380 = vmatprep.subr.bf16.mxu0 0
        %7381 = vmatpush1.bf16.msra.mxu0 0
        %7382 = vmatprep.subr.bf16.mxu0 0
        %7383 = vmatpush1.bf16.msra.mxu0 0
        %7384 = vmatprep.subr.bf16.mxu0 0
        %7385 = vmatpush1.bf16.msra.mxu0 0
        %7386 = vmatprep.subr.bf16.mxu0 0
        %7387 = vmatpush1.bf16.msra.mxu0 0
        %7388 = vmatprep.subr.bf16.mxu0 0
        %7389 = vmatpush1.bf16.msra.mxu0 0
        %7390 = vmatprep.subr.bf16.mxu0 0
        %7391 = vmatpush1.bf16.msra.mxu0 %v7375
        %7392 = vmatprep.subr.bf16.mxu0 0
        %7393 = vmatpush1.bf16.msra.mxu0 %v7374
        %7394 = vmatprep.subr.bf16.mxu0 0
        %7395 = vmatpush2.bf16.msra.mxu0 0
        %7396 = vmatprep.subr.bf16.mxu0 0
        %7397 = vmatpush2.bf16.msra.mxu0 0
        %7398 = vmatprep.subr.bf16.mxu0 0
        %7399 = vmatpush2.bf16.msra.mxu0 0
        %7400 = vmatprep.subr.bf16.mxu0 0
        %7401 = vmatpush2.bf16.msra.mxu0 0
        %7402 = vmatprep.subr.bf16.mxu0 0
        %7403 = vmatpush2.bf16.msra.mxu0 0
        %7404 = vmatprep.subr.bf16.mxu0 0
        %7405 = vmatpush2.bf16.msra.mxu0 0
        %7406 = vmatprep.subr.bf16.mxu0 0
        %7407 = vmatpush2.bf16.msra.mxu0 0
        %7408 = vmatprep.subr.bf16.mxu0 0
        %7409 = vmatpush2.bf16.msra.mxu0 0
        %7410 = vmatprep.mubr.bf16.mxu0 0
        %7411 = vmatmul.mubr.bf16.gmra.mxu0 %v5245
        %v7412 = vpop.f32.mrf.mxu0
        %v7413 = vadd.f32 %v7364, %v7412
        %v7414 = vpop.f32.mrf.mxu0
        %v7415 = vpop.f32.mrf.mxu0
        %v7416 = vpop.f32.mrf.mxu0
        %7417 = vdwg.mxu0
        %s7418 = scalar_lea.vmem %s71, 16
        %v7419 = vld [vmem:[%s7418] sm:$0xf]
        %v7420 = vld [vmem:[%s7418 + $0x4] sm:$0xf]
        %v7421 = vld [vmem:[%s7418 + $0x8] sm:$0xf]
        %v7422 = vld [vmem:[%s7418 + $0xc] sm:$0xf]
        %s7423 = scalar_lea.vmem %s73, 1
        %v7424 = vld [vmem:[%s7423] sm:$0x1]
        %v7426 = vlaneseq
        %v7427 = vshrl.u32 %v7426, 7
        %v7428 = vsub.s32 0, %v7427
        %v7429 = vrot.slane %v7424, %v7428
        %v7435 = vunpack.c.l.b16 %v7419
        %v7436 = vunpack.c.l.b16 %v7420
        %v7437 = vunpack.c.l.b16 %v7421
        %v7438 = vunpack.c.l.b16 %v7422
        %v7439 = vpack.c.b16 %v7436, %v7435
        %v7440 = vpack.c.b16 %v7438, %v7437
        %7443 = vmatprep.subr.bf16.mxu0 0
        %7444 = vmatpush1.bf16.msra.mxu0 0
        %7445 = vmatprep.subr.bf16.mxu0 0
        %7446 = vmatpush1.bf16.msra.mxu0 0
        %7447 = vmatprep.subr.bf16.mxu0 0
        %7448 = vmatpush1.bf16.msra.mxu0 0
        %7449 = vmatprep.subr.bf16.mxu0 0
        %7450 = vmatpush1.bf16.msra.mxu0 0
        %7451 = vmatprep.subr.bf16.mxu0 0
        %7452 = vmatpush1.bf16.msra.mxu0 0
        %7453 = vmatprep.subr.bf16.mxu0 0
        %7454 = vmatpush1.bf16.msra.mxu0 0
        %7455 = vmatprep.subr.bf16.mxu0 0
        %7456 = vmatpush1.bf16.msra.mxu0 %v7440
        %7457 = vmatprep.subr.bf16.mxu0 0
        %7458 = vmatpush1.bf16.msra.mxu0 %v7439
        %7459 = vmatprep.subr.bf16.mxu0 0
        %7460 = vmatpush2.bf16.msra.mxu0 0
        %7461 = vmatprep.subr.bf16.mxu0 0
        %7462 = vmatpush2.bf16.msra.mxu0 0
        %7463 = vmatprep.subr.bf16.mxu0 0
        %7464 = vmatpush2.bf16.msra.mxu0 0
        %7465 = vmatprep.subr.bf16.mxu0 0
        %7466 = vmatpush2.bf16.msra.mxu0 0
        %7467 = vmatprep.subr.bf16.mxu0 0
        %7468 = vmatpush2.bf16.msra.mxu0 0
        %7469 = vmatprep.subr.bf16.mxu0 0
        %7470 = vmatpush2.bf16.msra.mxu0 0
        %7471 = vmatprep.subr.bf16.mxu0 0
        %7472 = vmatpush2.bf16.msra.mxu0 0
        %7473 = vmatprep.subr.bf16.mxu0 0
        %7474 = vmatpush2.bf16.msra.mxu0 0
        %7475 = vmatprep.mubr.bf16.mxu0 0
        %7476 = vmatmul.mubr.bf16.gmra.mxu0 %v5245
        %v7477 = vpop.f32.mrf.mxu0
        %v7478 = vadd.f32 %v7429, %v7477
        %v7479 = vpop.f32.mrf.mxu0
        %v7480 = vpop.f32.mrf.mxu0
        %v7481 = vpop.f32.mrf.mxu0
        %7482 = vdwg.mxu0
        %s7483 = scalar_lea.vmem %s75, 16
        %v7484 = vld [vmem:[%s7483] sm:$0xf]
        %v7485 = vld [vmem:[%s7483 + $0x4] sm:$0xf]
        %v7486 = vld [vmem:[%s7483 + $0x8] sm:$0xf]
        %v7487 = vld [vmem:[%s7483 + $0xc] sm:$0xf]
        %s7488 = scalar_lea.vmem %s77, 1
        %v7489 = vld [vmem:[%s7488] sm:$0x1]
        %v7491 = vsel %vm2044, %v7348, 0
        %v7494 = vsel %vm2044, %v7413, 0
        %7496 = vmatprep.subr.mxu0 0.0
        %7497 = vmatpush1.xpose.msra.mxu0 0.0
        %7498 = vmatprep.subr.mxu0 0.0
        %7499 = vmatpush1.xpose.msra.mxu0 0.0
        %7500 = vmatprep.subr.mxu0 0.0
        %7501 = vmatpush1.xpose.msra.mxu0 0.0
        %7502 = vmatprep.subr.mxu0 0.0
        %7503 = vmatpush1.xpose.msra.mxu0 0.0
        %7504 = vmatprep.subr.mxu0 0.0
        %7505 = vmatpush1.xpose.msra.mxu0 0.0
        %7506 = vmatprep.subr.mxu0 0.0
        %7507 = vmatpush1.xpose.msra.mxu0 0.0
        %7508 = vmatprep.subr.mxu0 0.0
        %7509 = vmatpush1.xpose.msra.mxu0 0.0
        %7510 = vmatprep.subr.mxu0 0.0
        %7511 = vmatpush1.xpose.msra.mxu0 0.0
        %7512 = vmatprep.subr.mxu0 0.0
        %7513 = vmatpush1.xpose.msra.mxu0 0.0
        %7514 = vmatprep.subr.mxu0 0.0
        %7515 = vmatpush1.xpose.msra.mxu0 0.0
        %7516 = vmatprep.subr.mxu0 0.0
        %7517 = vmatpush1.xpose.msra.mxu0 0.0
        %7518 = vmatprep.subr.mxu0 0.0
        %7519 = vmatpush1.xpose.msra.mxu0 0.0
        %7520 = vmatprep.subr.mxu0 0.0
        %7521 = vmatpush1.xpose.msra.mxu0 0.0
        %7522 = vmatprep.subr.mxu0 0.0
        %7523 = vmatpush1.xpose.msra.mxu0 0.0
        %7524 = vmatprep.subr.mxu0 0.0
        %7525 = vmatpush1.xpose.msra.mxu0 0.0
        %7526 = vmatprep.subr.mxu0 0.0
        %7527 = vmatpush1.xpose.msra.mxu0 %v7494
        %7528 = vmatprep.subr.mxu0 0.0
        %7529 = vmatpush2.xpose.msra.mxu0 0.0
        %7530 = vmatprep.subr.mxu0 0.0
        %7531 = vmatpush2.xpose.msra.mxu0 0.0
        %7532 = vmatprep.subr.mxu0 0.0
        %7533 = vmatpush2.xpose.msra.mxu0 0.0
        %7534 = vmatprep.subr.mxu0 0.0
        %7535 = vmatpush2.xpose.msra.mxu0 0.0
        %7536 = vmatprep.subr.mxu0 0.0
        %7537 = vmatpush2.xpose.msra.mxu0 0.0
        %7538 = vmatprep.subr.mxu0 0.0
        %7539 = vmatpush2.xpose.msra.mxu0 0.0
        %7540 = vmatprep.subr.mxu0 0.0
        %7541 = vmatpush2.xpose.msra.mxu0 0.0
        %7542 = vmatprep.subr.mxu0 0.0
        %7543 = vmatpush2.xpose.msra.mxu0 0.0
        %7544 = vmatprep.subr.mxu0 0.0
        %7545 = vmatpush2.xpose.msra.mxu0 0.0
        %7546 = vmatprep.subr.mxu0 0.0
        %7547 = vmatpush2.xpose.msra.mxu0 0.0
        %7548 = vmatprep.subr.mxu0 0.0
        %7549 = vmatpush2.xpose.msra.mxu0 0.0
        %7550 = vmatprep.subr.mxu0 0.0
        %7551 = vmatpush2.xpose.msra.mxu0 0.0
        %7552 = vmatprep.subr.mxu0 0.0
        %7553 = vmatpush2.xpose.msra.mxu0 0.0
        %7554 = vmatprep.subr.mxu0 0.0
        %7555 = vmatpush2.xpose.msra.mxu0 0.0
        %7556 = vmatprep.subr.mxu0 0.0
        %7557 = vmatpush2.xpose.msra.mxu0 0.0
        %7558 = vmatprep.subr.mxu0 0.0
        %7559 = vmatpush2.xpose.msra.mxu0 0.0
        %7560 = vmatprep.mubr.f32.mxu0 0.0
        %7561 = vmatmul.mubr.f32.gmra.mxu0 %v7491
        %v7562 = vpop.f32.mrf.mxu0
        %v7563 = vadd.f32 0.0, %v7562
        %v7564 = vpop.f32.mrf.mxu0
        %7565 = vdwg.mxu0
        %7566 = vrot.lane.b32.xlu0 %v7348, 120
        %v7567 = vpop.permute.xlu0 %7566
        %7568 = vrot.lane.b32.xlu0 %v7413, 120
        %v7569 = vpop.permute.xlu0 %7568
        %v7570 = vsel %vm2044, %v7567, 0
        %v7572 = vsel %vm2044, %v7569, 0
        %7574 = vmatprep.subr.mxu0 0.0
        %7575 = vmatpush1.xpose.msra.mxu0 0.0
        %7576 = vmatprep.subr.mxu0 0.0
        %7577 = vmatpush1.xpose.msra.mxu0 0.0
        %7578 = vmatprep.subr.mxu0 0.0
        %7579 = vmatpush1.xpose.msra.mxu0 0.0
        %7580 = vmatprep.subr.mxu0 0.0
        %7581 = vmatpush1.xpose.msra.mxu0 0.0
        %7582 = vmatprep.subr.mxu0 0.0
        %7583 = vmatpush1.xpose.msra.mxu0 0.0
        %7584 = vmatprep.subr.mxu0 0.0
        %7585 = vmatpush1.xpose.msra.mxu0 0.0
        %7586 = vmatprep.subr.mxu0 0.0
        %7587 = vmatpush1.xpose.msra.mxu0 0.0
        %7588 = vmatprep.subr.mxu0 0.0
        %7589 = vmatpush1.xpose.msra.mxu0 0.0
        %7590 = vmatprep.subr.mxu0 0.0
        %7591 = vmatpush1.xpose.msra.mxu0 0.0
        %7592 = vmatprep.subr.mxu0 0.0
        %7593 = vmatpush1.xpose.msra.mxu0 0.0
        %7594 = vmatprep.subr.mxu0 0.0
        %7595 = vmatpush1.xpose.msra.mxu0 0.0
        %7596 = vmatprep.subr.mxu0 0.0
        %7597 = vmatpush1.xpose.msra.mxu0 0.0
        %7598 = vmatprep.subr.mxu0 0.0
        %7599 = vmatpush1.xpose.msra.mxu0 0.0
        %7600 = vmatprep.subr.mxu0 0.0
        %7601 = vmatpush1.xpose.msra.mxu0 0.0
        %7602 = vmatprep.subr.mxu0 0.0
        %7603 = vmatpush1.xpose.msra.mxu0 0.0
        %7604 = vmatprep.subr.mxu0 0.0
        %7605 = vmatpush1.xpose.msra.mxu0 %v7572
        %7606 = vmatprep.subr.mxu0 0.0
        %7607 = vmatpush2.xpose.msra.mxu0 0.0
        %7608 = vmatprep.subr.mxu0 0.0
        %7609 = vmatpush2.xpose.msra.mxu0 0.0
        %7610 = vmatprep.subr.mxu0 0.0
        %7611 = vmatpush2.xpose.msra.mxu0 0.0
        %7612 = vmatprep.subr.mxu0 0.0
        %7613 = vmatpush2.xpose.msra.mxu0 0.0
        %7614 = vmatprep.subr.mxu0 0.0
        %7615 = vmatpush2.xpose.msra.mxu0 0.0
        %7616 = vmatprep.subr.mxu0 0.0
        %7617 = vmatpush2.xpose.msra.mxu0 0.0
        %7618 = vmatprep.subr.mxu0 0.0
        %7619 = vmatpush2.xpose.msra.mxu0 0.0
        %7620 = vmatprep.subr.mxu0 0.0
        %7621 = vmatpush2.xpose.msra.mxu0 0.0
        %7622 = vmatprep.subr.mxu0 0.0
        %7623 = vmatpush2.xpose.msra.mxu0 0.0
        %7624 = vmatprep.subr.mxu0 0.0
        %7625 = vmatpush2.xpose.msra.mxu0 0.0
        %7626 = vmatprep.subr.mxu0 0.0
        %7627 = vmatpush2.xpose.msra.mxu0 0.0
        %7628 = vmatprep.subr.mxu0 0.0
        %7629 = vmatpush2.xpose.msra.mxu0 0.0
        %7630 = vmatprep.subr.mxu0 0.0
        %7631 = vmatpush2.xpose.msra.mxu0 0.0
        %7632 = vmatprep.subr.mxu0 0.0
        %7633 = vmatpush2.xpose.msra.mxu0 0.0
        %7634 = vmatprep.subr.mxu0 0.0
        %7635 = vmatpush2.xpose.msra.mxu0 0.0
        %7636 = vmatprep.subr.mxu0 0.0
        %7637 = vmatpush2.xpose.msra.mxu0 0.0
        %7638 = vmatprep.mubr.f32.mxu0 0.0
        %7639 = vmatmul.mubr.f32.gmra.mxu0 %v7570
        %v7640 = vpop.f32.mrf.mxu0
        %v7641 = vadd.f32 0.0, %v7640
        %v7642 = vpop.f32.mrf.mxu0
        %7643 = vdwg.mxu0
        %7644 = vrot.lane.b32.xlu0 %v7348, 112
        %v7645 = vpop.permute.xlu0 %7644
        %7646 = vrot.lane.b32.xlu0 %v7413, 112
        %v7647 = vpop.permute.xlu0 %7646
        %v7648 = vsel %vm2044, %v7645, 0
        %v7650 = vsel %vm2044, %v7647, 0
        %7652 = vmatprep.subr.mxu0 0.0
        %7653 = vmatpush1.xpose.msra.mxu0 0.0
        %7654 = vmatprep.subr.mxu0 0.0
        %7655 = vmatpush1.xpose.msra.mxu0 0.0
        %7656 = vmatprep.subr.mxu0 0.0
        %7657 = vmatpush1.xpose.msra.mxu0 0.0
        %7658 = vmatprep.subr.mxu0 0.0
        %7659 = vmatpush1.xpose.msra.mxu0 0.0
        %7660 = vmatprep.subr.mxu0 0.0
        %7661 = vmatpush1.xpose.msra.mxu0 0.0
        %7662 = vmatprep.subr.mxu0 0.0
        %7663 = vmatpush1.xpose.msra.mxu0 0.0
        %7664 = vmatprep.subr.mxu0 0.0
        %7665 = vmatpush1.xpose.msra.mxu0 0.0
        %7666 = vmatprep.subr.mxu0 0.0
        %7667 = vmatpush1.xpose.msra.mxu0 0.0
        %7668 = vmatprep.subr.mxu0 0.0
        %7669 = vmatpush1.xpose.msra.mxu0 0.0
        %7670 = vmatprep.subr.mxu0 0.0
        %7671 = vmatpush1.xpose.msra.mxu0 0.0
        %7672 = vmatprep.subr.mxu0 0.0
        %7673 = vmatpush1.xpose.msra.mxu0 0.0
        %7674 = vmatprep.subr.mxu0 0.0
        %7675 = vmatpush1.xpose.msra.mxu0 0.0
        %7676 = vmatprep.subr.mxu0 0.0
        %7677 = vmatpush1.xpose.msra.mxu0 0.0
        %7678 = vmatprep.subr.mxu0 0.0
        %7679 = vmatpush1.xpose.msra.mxu0 0.0
        %7680 = vmatprep.subr.mxu0 0.0
        %7681 = vmatpush1.xpose.msra.mxu0 0.0
        %7682 = vmatprep.subr.mxu0 0.0
        %7683 = vmatpush1.xpose.msra.mxu0 %v7650
        %7684 = vmatprep.subr.mxu0 0.0
        %7685 = vmatpush2.xpose.msra.mxu0 0.0
        %7686 = vmatprep.subr.mxu0 0.0
        %7687 = vmatpush2.xpose.msra.mxu0 0.0
        %7688 = vmatprep.subr.mxu0 0.0
        %7689 = vmatpush2.xpose.msra.mxu0 0.0
        %7690 = vmatprep.subr.mxu0 0.0
        %7691 = vmatpush2.xpose.msra.mxu0 0.0
        %7692 = vmatprep.subr.mxu0 0.0
        %7693 = vmatpush2.xpose.msra.mxu0 0.0
        %7694 = vmatprep.subr.mxu0 0.0
        %7695 = vmatpush2.xpose.msra.mxu0 0.0
        %7696 = vmatprep.subr.mxu0 0.0
        %7697 = vmatpush2.xpose.msra.mxu0 0.0
        %7698 = vmatprep.subr.mxu0 0.0
        %7699 = vmatpush2.xpose.msra.mxu0 0.0
        %7700 = vmatprep.subr.mxu0 0.0
        %7701 = vmatpush2.xpose.msra.mxu0 0.0
        %7702 = vmatprep.subr.mxu0 0.0
        %7703 = vmatpush2.xpose.msra.mxu0 0.0
        %7704 = vmatprep.subr.mxu0 0.0
        %7705 = vmatpush2.xpose.msra.mxu0 0.0
        %7706 = vmatprep.subr.mxu0 0.0
        %7707 = vmatpush2.xpose.msra.mxu0 0.0
        %7708 = vmatprep.subr.mxu0 0.0
        %7709 = vmatpush2.xpose.msra.mxu0 0.0
        %7710 = vmatprep.subr.mxu0 0.0
        %7711 = vmatpush2.xpose.msra.mxu0 0.0
        %7712 = vmatprep.subr.mxu0 0.0
        %7713 = vmatpush2.xpose.msra.mxu0 0.0
        %7714 = vmatprep.subr.mxu0 0.0
        %7715 = vmatpush2.xpose.msra.mxu0 0.0
        %7716 = vmatprep.mubr.f32.mxu0 0.0
        %7717 = vmatmul.mubr.f32.gmra.mxu0 %v7648
        %v7718 = vpop.f32.mrf.mxu0
        %v7719 = vadd.f32 0.0, %v7718
        %v7720 = vpop.f32.mrf.mxu0
        %7721 = vdwg.mxu0
        %7722 = vrot.lane.b32.xlu0 %v7348, 104
        %v7723 = vpop.permute.xlu0 %7722
        %7724 = vrot.lane.b32.xlu0 %v7413, 104
        %v7725 = vpop.permute.xlu0 %7724
        %v7726 = vsel %vm2044, %v7723, 0
        %v7728 = vsel %vm2044, %v7725, 0
        %7730 = vmatprep.subr.mxu0 0.0
        %7731 = vmatpush1.xpose.msra.mxu0 0.0
        %7732 = vmatprep.subr.mxu0 0.0
        %7733 = vmatpush1.xpose.msra.mxu0 0.0
        %7734 = vmatprep.subr.mxu0 0.0
        %7735 = vmatpush1.xpose.msra.mxu0 0.0
        %7736 = vmatprep.subr.mxu0 0.0
        %7737 = vmatpush1.xpose.msra.mxu0 0.0
        %7738 = vmatprep.subr.mxu0 0.0
        %7739 = vmatpush1.xpose.msra.mxu0 0.0
        %7740 = vmatprep.subr.mxu0 0.0
        %7741 = vmatpush1.xpose.msra.mxu0 0.0
        %7742 = vmatprep.subr.mxu0 0.0
        %7743 = vmatpush1.xpose.msra.mxu0 0.0
        %7744 = vmatprep.subr.mxu0 0.0
        %7745 = vmatpush1.xpose.msra.mxu0 0.0
        %7746 = vmatprep.subr.mxu0 0.0
        %7747 = vmatpush1.xpose.msra.mxu0 0.0
        %7748 = vmatprep.subr.mxu0 0.0
        %7749 = vmatpush1.xpose.msra.mxu0 0.0
        %7750 = vmatprep.subr.mxu0 0.0
        %7751 = vmatpush1.xpose.msra.mxu0 0.0
        %7752 = vmatprep.subr.mxu0 0.0
        %7753 = vmatpush1.xpose.msra.mxu0 0.0
        %7754 = vmatprep.subr.mxu0 0.0
        %7755 = vmatpush1.xpose.msra.mxu0 0.0
        %7756 = vmatprep.subr.mxu0 0.0
        %7757 = vmatpush1.xpose.msra.mxu0 0.0
        %7758 = vmatprep.subr.mxu0 0.0
        %7759 = vmatpush1.xpose.msra.mxu0 0.0
        %7760 = vmatprep.subr.mxu0 0.0
        %7761 = vmatpush1.xpose.msra.mxu0 %v7728
        %7762 = vmatprep.subr.mxu0 0.0
        %7763 = vmatpush2.xpose.msra.mxu0 0.0
        %7764 = vmatprep.subr.mxu0 0.0
        %7765 = vmatpush2.xpose.msra.mxu0 0.0
        %7766 = vmatprep.subr.mxu0 0.0
        %7767 = vmatpush2.xpose.msra.mxu0 0.0
        %7768 = vmatprep.subr.mxu0 0.0
        %7769 = vmatpush2.xpose.msra.mxu0 0.0
        %7770 = vmatprep.subr.mxu0 0.0
        %7771 = vmatpush2.xpose.msra.mxu0 0.0
        %7772 = vmatprep.subr.mxu0 0.0
        %7773 = vmatpush2.xpose.msra.mxu0 0.0
        %7774 = vmatprep.subr.mxu0 0.0
        %7775 = vmatpush2.xpose.msra.mxu0 0.0
        %7776 = vmatprep.subr.mxu0 0.0
        %7777 = vmatpush2.xpose.msra.mxu0 0.0
        %7778 = vmatprep.subr.mxu0 0.0
        %7779 = vmatpush2.xpose.msra.mxu0 0.0
        %7780 = vmatprep.subr.mxu0 0.0
        %7781 = vmatpush2.xpose.msra.mxu0 0.0
        %7782 = vmatprep.subr.mxu0 0.0
        %7783 = vmatpush2.xpose.msra.mxu0 0.0
        %7784 = vmatprep.subr.mxu0 0.0
        %7785 = vmatpush2.xpose.msra.mxu0 0.0
        %7786 = vmatprep.subr.mxu0 0.0
        %7787 = vmatpush2.xpose.msra.mxu0 0.0
        %7788 = vmatprep.subr.mxu0 0.0
        %7789 = vmatpush2.xpose.msra.mxu0 0.0
        %7790 = vmatprep.subr.mxu0 0.0
        %7791 = vmatpush2.xpose.msra.mxu0 0.0
        %7792 = vmatprep.subr.mxu0 0.0
        %7793 = vmatpush2.xpose.msra.mxu0 0.0
        %7794 = vmatprep.mubr.f32.mxu0 0.0
        %7795 = vmatmul.mubr.f32.gmra.mxu0 %v7726
        %v7796 = vpop.f32.mrf.mxu0
        %v7797 = vadd.f32 0.0, %v7796
        %v7798 = vpop.f32.mrf.mxu0
        %7799 = vdwg.mxu0
        %v7800 = vadd.f32 %v7563, %v5669
        %v7801 = vadd.f32 %v7641, %v5669
        %v7802 = vadd.f32 %v7719, %v5669
        %v7803 = vadd.f32 %v7797, %v5669
        %v7804 = vsel %vm2044, %v7800, -inf
        %7805 = vmax.xlane.f32.xlu0 %v7804
        %v7806 = vpop.xlane.xlu0 %7805
        %v7807 = vsel %vm2044, %v7801, -inf
        %7808 = vmax.xlane.f32.xlu0 %v7807
        %v7809 = vpop.xlane.xlu0 %7808
        %v7810 = vsel %vm2044, %v7802, -inf
        %7811 = vmax.xlane.f32.xlu0 %v7810
        %v7812 = vpop.xlane.xlu0 %7811
        %v7813 = vsel %vm2044, %v7803, -inf
        %7814 = vmax.xlane.f32.xlu0 %v7813
        %v7815 = vpop.xlane.xlu0 %7814
        %v7816 = vsub.f32 %v7800, %v7806
        %v7817 = vsub.f32 %v7801, %v7809
        %v7818 = vsub.f32 %v7802, %v7812
        %v7819 = vsub.f32 %v7803, %v7815
        %v7820 = vmul.f32 %v7816, 1.442695
        %v7821 = vpow.pop %v7820
        %v7822 = vmul.f32 %v7817, 1.442695
        %v7823 = vpow.pop %v7822
        %v7824 = vmul.f32 %v7818, 1.442695
        %v7825 = vpow.pop %v7824
        %v7826 = vmul.f32 %v7819, 1.442695
        %v7827 = vpow.pop %v7826
        %v7828 = vsel %vm2044, %v7821, 0.0
        %7829 = vadd.xlane.f32.xlu0 %v7828
        %v7830 = vpop.xlane.xlu0 %7829
        %v7831 = vsel %vm2044, %v7823, 0.0
        %7832 = vadd.xlane.f32.xlu0 %v7831
        %v7833 = vpop.xlane.xlu0 %7832
        %v7834 = vsel %vm2044, %v7825, 0.0
        %7835 = vadd.xlane.f32.xlu0 %v7834
        %v7836 = vpop.xlane.xlu0 %7835
        %v7837 = vsel %vm2044, %v7827, 0.0
        %7838 = vadd.xlane.f32.xlu0 %v7837
        %v7839 = vpop.xlane.xlu0 %7838
        %v7840 = vrcp.pop %v7830
        %v7841 = vrcp.pop %v7833
        %v7842 = vrcp.pop %v7836
        %v7843 = vrcp.pop %v7839
        %v7844 = vmul.f32 %v7821, %v7840
        %v7845 = vmul.f32 %v7823, %v7841
        %v7846 = vmul.f32 %v7825, %v7842
        %v7847 = vmul.f32 %v7827, %v7843
        %v7849 = vsel %vm2044, %v7844, 0
        %7851 = vmatprep.subr.mxu0 0.0
        %7852 = vmatpush1.msra.mxu0 0.0
        %7853 = vmatprep.subr.mxu0 0.0
        %7854 = vmatpush1.msra.mxu0 0.0
        %7855 = vmatprep.subr.mxu0 0.0
        %7856 = vmatpush1.msra.mxu0 0.0
        %7857 = vmatprep.subr.mxu0 0.0
        %7858 = vmatpush1.msra.mxu0 0.0
        %7859 = vmatprep.subr.mxu0 0.0
        %7860 = vmatpush1.msra.mxu0 0.0
        %7861 = vmatprep.subr.mxu0 0.0
        %7862 = vmatpush1.msra.mxu0 0.0
        %7863 = vmatprep.subr.mxu0 0.0
        %7864 = vmatpush1.msra.mxu0 0.0
        %7865 = vmatprep.subr.mxu0 0.0
        %7866 = vmatpush1.msra.mxu0 0.0
        %7867 = vmatprep.subr.mxu0 0.0
        %7868 = vmatpush1.msra.mxu0 0.0
        %7869 = vmatprep.subr.mxu0 0.0
        %7870 = vmatpush1.msra.mxu0 0.0
        %7871 = vmatprep.subr.mxu0 0.0
        %7872 = vmatpush1.msra.mxu0 0.0
        %7873 = vmatprep.subr.mxu0 0.0
        %7874 = vmatpush1.msra.mxu0 0.0
        %7875 = vmatprep.subr.mxu0 0.0
        %7876 = vmatpush1.msra.mxu0 0.0
        %7877 = vmatprep.subr.mxu0 0.0
        %7878 = vmatpush1.msra.mxu0 0.0
        %7879 = vmatprep.subr.mxu0 0.0
        %7880 = vmatpush1.msra.mxu0 0.0
        %7881 = vmatprep.subr.mxu0 0.0
        %7882 = vmatpush1.msra.mxu0 %v7478
        %7883 = vmatprep.subr.mxu0 0.0
        %7884 = vmatpush2.msra.mxu0 0.0
        %7885 = vmatprep.subr.mxu0 0.0
        %7886 = vmatpush2.msra.mxu0 0.0
        %7887 = vmatprep.subr.mxu0 0.0
        %7888 = vmatpush2.msra.mxu0 0.0
        %7889 = vmatprep.subr.mxu0 0.0
        %7890 = vmatpush2.msra.mxu0 0.0
        %7891 = vmatprep.subr.mxu0 0.0
        %7892 = vmatpush2.msra.mxu0 0.0
        %7893 = vmatprep.subr.mxu0 0.0
        %7894 = vmatpush2.msra.mxu0 0.0
        %7895 = vmatprep.subr.mxu0 0.0
        %7896 = vmatpush2.msra.mxu0 0.0
        %7897 = vmatprep.subr.mxu0 0.0
        %7898 = vmatpush2.msra.mxu0 0.0
        %7899 = vmatprep.subr.mxu0 0.0
        %7900 = vmatpush2.msra.mxu0 0.0
        %7901 = vmatprep.subr.mxu0 0.0
        %7902 = vmatpush2.msra.mxu0 0.0
        %7903 = vmatprep.subr.mxu0 0.0
        %7904 = vmatpush2.msra.mxu0 0.0
        %7905 = vmatprep.subr.mxu0 0.0
        %7906 = vmatpush2.msra.mxu0 0.0
        %7907 = vmatprep.subr.mxu0 0.0
        %7908 = vmatpush2.msra.mxu0 0.0
        %7909 = vmatprep.subr.mxu0 0.0
        %7910 = vmatpush2.msra.mxu0 0.0
        %7911 = vmatprep.subr.mxu0 0.0
        %7912 = vmatpush2.msra.mxu0 0.0
        %7913 = vmatprep.subr.mxu0 0.0
        %7914 = vmatpush2.msra.mxu0 0.0
        %7915 = vmatprep.mubr.f32.mxu0 0.0
        %7916 = vmatmul.mubr.f32.gmra.mxu0 %v7849
        %v7917 = vpop.f32.mrf.mxu0
        %v7918 = vadd.f32 0.0, %v7917
        %v7919 = vpop.f32.mrf.mxu0
        %7920 = vdwg.mxu0
        %7922 = vrot.lane.b32.xlu0 %v7478, 120
        %v7923 = vpop.permute.xlu0 %7922
        %v7926 = vsel %vm2044, %v7845, 0
        %7928 = vmatprep.subr.mxu0 0.0
        %7929 = vmatpush1.msra.mxu0 0.0
        %7930 = vmatprep.subr.mxu0 0.0
        %7931 = vmatpush1.msra.mxu0 0.0
        %7932 = vmatprep.subr.mxu0 0.0
        %7933 = vmatpush1.msra.mxu0 0.0
        %7934 = vmatprep.subr.mxu0 0.0
        %7935 = vmatpush1.msra.mxu0 0.0
        %7936 = vmatprep.subr.mxu0 0.0
        %7937 = vmatpush1.msra.mxu0 0.0
        %7938 = vmatprep.subr.mxu0 0.0
        %7939 = vmatpush1.msra.mxu0 0.0
        %7940 = vmatprep.subr.mxu0 0.0
        %7941 = vmatpush1.msra.mxu0 0.0
        %7942 = vmatprep.subr.mxu0 0.0
        %7943 = vmatpush1.msra.mxu0 0.0
        %7944 = vmatprep.subr.mxu0 0.0
        %7945 = vmatpush1.msra.mxu0 0.0
        %7946 = vmatprep.subr.mxu0 0.0
        %7947 = vmatpush1.msra.mxu0 0.0
        %7948 = vmatprep.subr.mxu0 0.0
        %7949 = vmatpush1.msra.mxu0 0.0
        %7950 = vmatprep.subr.mxu0 0.0
        %7951 = vmatpush1.msra.mxu0 0.0
        %7952 = vmatprep.subr.mxu0 0.0
        %7953 = vmatpush1.msra.mxu0 0.0
        %7954 = vmatprep.subr.mxu0 0.0
        %7955 = vmatpush1.msra.mxu0 0.0
        %7956 = vmatprep.subr.mxu0 0.0
        %7957 = vmatpush1.msra.mxu0 0.0
        %7958 = vmatprep.subr.mxu0 0.0
        %7959 = vmatpush1.msra.mxu0 %v7923
        %7960 = vmatprep.subr.mxu0 0.0
        %7961 = vmatpush2.msra.mxu0 0.0
        %7962 = vmatprep.subr.mxu0 0.0
        %7963 = vmatpush2.msra.mxu0 0.0
        %7964 = vmatprep.subr.mxu0 0.0
        %7965 = vmatpush2.msra.mxu0 0.0
        %7966 = vmatprep.subr.mxu0 0.0
        %7967 = vmatpush2.msra.mxu0 0.0
        %7968 = vmatprep.subr.mxu0 0.0
        %7969 = vmatpush2.msra.mxu0 0.0
        %7970 = vmatprep.subr.mxu0 0.0
        %7971 = vmatpush2.msra.mxu0 0.0
        %7972 = vmatprep.subr.mxu0 0.0
        %7973 = vmatpush2.msra.mxu0 0.0
        %7974 = vmatprep.subr.mxu0 0.0
        %7975 = vmatpush2.msra.mxu0 0.0
        %7976 = vmatprep.subr.mxu0 0.0
        %7977 = vmatpush2.msra.mxu0 0.0
        %7978 = vmatprep.subr.mxu0 0.0
        %7979 = vmatpush2.msra.mxu0 0.0
        %7980 = vmatprep.subr.mxu0 0.0
        %7981 = vmatpush2.msra.mxu0 0.0
        %7982 = vmatprep.subr.mxu0 0.0
        %7983 = vmatpush2.msra.mxu0 0.0
        %7984 = vmatprep.subr.mxu0 0.0
        %7985 = vmatpush2.msra.mxu0 0.0
        %7986 = vmatprep.subr.mxu0 0.0
        %7987 = vmatpush2.msra.mxu0 0.0
        %7988 = vmatprep.subr.mxu0 0.0
        %7989 = vmatpush2.msra.mxu0 0.0
        %7990 = vmatprep.subr.mxu0 0.0
        %7991 = vmatpush2.msra.mxu0 0.0
        %7992 = vmatprep.mubr.f32.mxu0 0.0
        %7993 = vmatmul.mubr.f32.gmra.mxu0 %v7926
        %v7994 = vpop.f32.mrf.mxu0
        %v7995 = vadd.f32 0.0, %v7994
        %v7996 = vpop.f32.mrf.mxu0
        %7997 = vdwg.mxu0
        %7998 = vrot.lane.b32.xlu0 %v7478, 112
        %v7999 = vpop.permute.xlu0 %7998
        %v8002 = vsel %vm2044, %v7846, 0
        %8004 = vmatprep.subr.mxu0 0.0
        %8005 = vmatpush1.msra.mxu0 0.0
        %8006 = vmatprep.subr.mxu0 0.0
        %8007 = vmatpush1.msra.mxu0 0.0
        %8008 = vmatprep.subr.mxu0 0.0
        %8009 = vmatpush1.msra.mxu0 0.0
        %8010 = vmatprep.subr.mxu0 0.0
        %8011 = vmatpush1.msra.mxu0 0.0
        %8012 = vmatprep.subr.mxu0 0.0
        %8013 = vmatpush1.msra.mxu0 0.0
        %8014 = vmatprep.subr.mxu0 0.0
        %8015 = vmatpush1.msra.mxu0 0.0
        %8016 = vmatprep.subr.mxu0 0.0
        %8017 = vmatpush1.msra.mxu0 0.0
        %8018 = vmatprep.subr.mxu0 0.0
        %8019 = vmatpush1.msra.mxu0 0.0
        %8020 = vmatprep.subr.mxu0 0.0
        %8021 = vmatpush1.msra.mxu0 0.0
        %8022 = vmatprep.subr.mxu0 0.0
        %8023 = vmatpush1.msra.mxu0 0.0
        %8024 = vmatprep.subr.mxu0 0.0
        %8025 = vmatpush1.msra.mxu0 0.0
        %8026 = vmatprep.subr.mxu0 0.0
        %8027 = vmatpush1.msra.mxu0 0.0
        %8028 = vmatprep.subr.mxu0 0.0
        %8029 = vmatpush1.msra.mxu0 0.0
        %8030 = vmatprep.subr.mxu0 0.0
        %8031 = vmatpush1.msra.mxu0 0.0
        %8032 = vmatprep.subr.mxu0 0.0
        %8033 = vmatpush1.msra.mxu0 0.0
        %8034 = vmatprep.subr.mxu0 0.0
        %8035 = vmatpush1.msra.mxu0 %v7999
        %8036 = vmatprep.subr.mxu0 0.0
        %8037 = vmatpush2.msra.mxu0 0.0
        %8038 = vmatprep.subr.mxu0 0.0
        %8039 = vmatpush2.msra.mxu0 0.0
        %8040 = vmatprep.subr.mxu0 0.0
        %8041 = vmatpush2.msra.mxu0 0.0
        %8042 = vmatprep.subr.mxu0 0.0
        %8043 = vmatpush2.msra.mxu0 0.0
        %8044 = vmatprep.subr.mxu0 0.0
        %8045 = vmatpush2.msra.mxu0 0.0
        %8046 = vmatprep.subr.mxu0 0.0
        %8047 = vmatpush2.msra.mxu0 0.0
        %8048 = vmatprep.subr.mxu0 0.0
        %8049 = vmatpush2.msra.mxu0 0.0
        %8050 = vmatprep.subr.mxu0 0.0
        %8051 = vmatpush2.msra.mxu0 0.0
        %8052 = vmatprep.subr.mxu0 0.0
        %8053 = vmatpush2.msra.mxu0 0.0
        %8054 = vmatprep.subr.mxu0 0.0
        %8055 = vmatpush2.msra.mxu0 0.0
        %8056 = vmatprep.subr.mxu0 0.0
        %8057 = vmatpush2.msra.mxu0 0.0
        %8058 = vmatprep.subr.mxu0 0.0
        %8059 = vmatpush2.msra.mxu0 0.0
        %8060 = vmatprep.subr.mxu0 0.0
        %8061 = vmatpush2.msra.mxu0 0.0
        %8062 = vmatprep.subr.mxu0 0.0
        %8063 = vmatpush2.msra.mxu0 0.0
        %8064 = vmatprep.subr.mxu0 0.0
        %8065 = vmatpush2.msra.mxu0 0.0
        %8066 = vmatprep.subr.mxu0 0.0
        %8067 = vmatpush2.msra.mxu0 0.0
        %8068 = vmatprep.mubr.f32.mxu0 0.0
        %8069 = vmatmul.mubr.f32.gmra.mxu0 %v8002
        %v8070 = vpop.f32.mrf.mxu0
        %v8071 = vadd.f32 0.0, %v8070
        %v8072 = vpop.f32.mrf.mxu0
        %8073 = vdwg.mxu0
        %8074 = vrot.lane.b32.xlu0 %v7478, 104
        %v8075 = vpop.permute.xlu0 %8074
        %v8078 = vsel %vm2044, %v7847, 0
        %8080 = vmatprep.subr.mxu0 0.0
        %8081 = vmatpush1.msra.mxu0 0.0
        %8082 = vmatprep.subr.mxu0 0.0
        %8083 = vmatpush1.msra.mxu0 0.0
        %8084 = vmatprep.subr.mxu0 0.0
        %8085 = vmatpush1.msra.mxu0 0.0
        %8086 = vmatprep.subr.mxu0 0.0
        %8087 = vmatpush1.msra.mxu0 0.0
        %8088 = vmatprep.subr.mxu0 0.0
        %8089 = vmatpush1.msra.mxu0 0.0
        %8090 = vmatprep.subr.mxu0 0.0
        %8091 = vmatpush1.msra.mxu0 0.0
        %8092 = vmatprep.subr.mxu0 0.0
        %8093 = vmatpush1.msra.mxu0 0.0
        %8094 = vmatprep.subr.mxu0 0.0
        %8095 = vmatpush1.msra.mxu0 0.0
        %8096 = vmatprep.subr.mxu0 0.0
        %8097 = vmatpush1.msra.mxu0 0.0
        %8098 = vmatprep.subr.mxu0 0.0
        %8099 = vmatpush1.msra.mxu0 0.0
        %8100 = vmatprep.subr.mxu0 0.0
        %8101 = vmatpush1.msra.mxu0 0.0
        %8102 = vmatprep.subr.mxu0 0.0
        %8103 = vmatpush1.msra.mxu0 0.0
        %8104 = vmatprep.subr.mxu0 0.0
        %8105 = vmatpush1.msra.mxu0 0.0
        %8106 = vmatprep.subr.mxu0 0.0
        %8107 = vmatpush1.msra.mxu0 0.0
        %8108 = vmatprep.subr.mxu0 0.0
        %8109 = vmatpush1.msra.mxu0 0.0
        %8110 = vmatprep.subr.mxu0 0.0
        %8111 = vmatpush1.msra.mxu0 %v8075
        %8112 = vmatprep.subr.mxu0 0.0
        %8113 = vmatpush2.msra.mxu0 0.0
        %8114 = vmatprep.subr.mxu0 0.0
        %8115 = vmatpush2.msra.mxu0 0.0
        %8116 = vmatprep.subr.mxu0 0.0
        %8117 = vmatpush2.msra.mxu0 0.0
        %8118 = vmatprep.subr.mxu0 0.0
        %8119 = vmatpush2.msra.mxu0 0.0
        %8120 = vmatprep.subr.mxu0 0.0
        %8121 = vmatpush2.msra.mxu0 0.0
        %8122 = vmatprep.subr.mxu0 0.0
        %8123 = vmatpush2.msra.mxu0 0.0
        %8124 = vmatprep.subr.mxu0 0.0
        %8125 = vmatpush2.msra.mxu0 0.0
        %8126 = vmatprep.subr.mxu0 0.0
        %8127 = vmatpush2.msra.mxu0 0.0
        %8128 = vmatprep.subr.mxu0 0.0
        %8129 = vmatpush2.msra.mxu0 0.0
        %8130 = vmatprep.subr.mxu0 0.0
        %8131 = vmatpush2.msra.mxu0 0.0
        %8132 = vmatprep.subr.mxu0 0.0
        %8133 = vmatpush2.msra.mxu0 0.0
        %8134 = vmatprep.subr.mxu0 0.0
        %8135 = vmatpush2.msra.mxu0 0.0
        %8136 = vmatprep.subr.mxu0 0.0
        %8137 = vmatpush2.msra.mxu0 0.0
        %8138 = vmatprep.subr.mxu0 0.0
        %8139 = vmatpush2.msra.mxu0 0.0
        %8140 = vmatprep.subr.mxu0 0.0
        %8141 = vmatpush2.msra.mxu0 0.0
        %8142 = vmatprep.subr.mxu0 0.0
        %8143 = vmatpush2.msra.mxu0 0.0
        %8144 = vmatprep.mubr.f32.mxu0 0.0
        %8145 = vmatmul.mubr.f32.gmra.mxu0 %v8078
        %v8146 = vpop.f32.mrf.mxu0
        %v8147 = vadd.f32 0.0, %v8146
        %v8148 = vpop.f32.mrf.mxu0
        %8149 = vdwg.mxu0
        %8151 = vrot.lane.b32.xlu0 %v7995, 8
        %v8152 = vpop.permute.xlu0 %8151
        %8155 = vrot.lane.b32.xlu0 %v8071, 16
        %v8156 = vpop.permute.xlu0 %8155
        %8159 = vrot.lane.b32.xlu0 %v8147, 24
        %v8160 = vpop.permute.xlu0 %8159
        %v8162 = vsel %vm2044, %v7918, %v8152
        %v8163 = vsel %vm2718, %v8162, %v8156
        %v8164 = vsel %vm2720, %v8163, %v8160
        %v8165 = vpack.c.bf16 %v8164, %v8164
        %v8167 = vlaneseq
        %v8168 = vshrl.u32 %v8167, 7
        %v8169 = vsub.s32 0, %v8168
        %v8170 = vrot.slane %v7489, %v8169
        %v8176 = vunpack.c.l.b16 %v7484
        %v8177 = vunpack.c.l.b16 %v7485
        %v8178 = vunpack.c.l.b16 %v7486
        %v8179 = vunpack.c.l.b16 %v7487
        %v8180 = vpack.c.b16 %v8177, %v8176
        %v8181 = vpack.c.b16 %v8179, %v8178
        %v8185 = vsel %vm1869, %v8165, 0
        %8187 = vmatprep.subr.bf16.mxu0 0
        %8188 = vmatpush1.bf16.msra.mxu0 0
        %8189 = vmatprep.subr.bf16.mxu0 0
        %8190 = vmatpush1.bf16.msra.mxu0 0
        %8191 = vmatprep.subr.bf16.mxu0 0
        %8192 = vmatpush1.bf16.msra.mxu0 0
        %8193 = vmatprep.subr.bf16.mxu0 0
        %8194 = vmatpush1.bf16.msra.mxu0 0
        %8195 = vmatprep.subr.bf16.mxu0 0
        %8196 = vmatpush1.bf16.msra.mxu0 0
        %8197 = vmatprep.subr.bf16.mxu0 0
        %8198 = vmatpush1.bf16.msra.mxu0 0
        %8199 = vmatprep.subr.bf16.mxu0 0
        %8200 = vmatpush1.bf16.msra.mxu0 %v8181
        %8201 = vmatprep.subr.bf16.mxu0 0
        %8202 = vmatpush1.bf16.msra.mxu0 %v8180
        %8203 = vmatprep.subr.bf16.mxu0 0
        %8204 = vmatpush2.bf16.msra.mxu0 0
        %8205 = vmatprep.subr.bf16.mxu0 0
        %8206 = vmatpush2.bf16.msra.mxu0 0
        %8207 = vmatprep.subr.bf16.mxu0 0
        %8208 = vmatpush2.bf16.msra.mxu0 0
        %8209 = vmatprep.subr.bf16.mxu0 0
        %8210 = vmatpush2.bf16.msra.mxu0 0
        %8211 = vmatprep.subr.bf16.mxu0 0
        %8212 = vmatpush2.bf16.msra.mxu0 0
        %8213 = vmatprep.subr.bf16.mxu0 0
        %8214 = vmatpush2.bf16.msra.mxu0 0
        %8215 = vmatprep.subr.bf16.mxu0 0
        %8216 = vmatpush2.bf16.msra.mxu0 0
        %8217 = vmatprep.subr.bf16.mxu0 0
        %8218 = vmatpush2.bf16.msra.mxu0 0
        %8219 = vmatprep.mubr.bf16.mxu0 0
        %8220 = vmatmul.mubr.bf16.gmra.mxu0 %v8185
        %v8221 = vpop.f32.mrf.mxu0
        %v8222 = vadd.f32 %v8170, %v8221
        %v8223 = vpop.f32.mrf.mxu0
        %v8224 = vpop.f32.mrf.mxu0
        %v8225 = vpop.f32.mrf.mxu0
        %8226 = vdwg.mxu0
        %v8227 = vadd.f32 %v7283, %v8222
        %s8228 = scalar_lea.vmem [#allocation6], 1
        %v8229 = vld [vmem:[%s8228] sm:$0x1]
        %s8230 = scalar_lea.vmem [#allocation7], 1
        %v8231 = vld [vmem:[%s8230] sm:$0x1]
        %v8232 = vsel %vm1869, %v8227, 0.0
        %8233 = vadd.xlane.f32.xlu0 %v8232
        %v8234 = vpop.xlane.xlu0 %8233
        %v8235 = vmul.f32 %v8234, %v2790
        %v8236 = vsub.f32 %v8227, %v8235
        %v8237 = vmul.f32 %v8236, %v8236
        %v8238 = vsel %vm1869, %v8237, 0.0
        %8239 = vadd.xlane.f32.xlu0 %v8238
        %v8240 = vpop.xlane.xlu0 %8239
        %v8241 = vmul.f32 %v8240, %v2790
        %v8242 = vadd.f32 %v8241, 1e-05
        %v8243 = vrsqrt.pop %v8242
        %v8244 = vmul.f32 %v8236, %v8243
        %v8246 = vlaneseq
        %v8247 = vshrl.u32 %v8246, 7
        %v8248 = vsub.s32 0, %v8247
        %v8249 = vrot.slane %v8229, %v8248
        %v8251 = vmul.f32 %v8244, %v8249
        %v8253 = vlaneseq
        %v8254 = vshrl.u32 %v8253, 7
        %v8255 = vsub.s32 0, %v8254
        %v8256 = vrot.slane %v8231, %v8255
        %v8258 = vadd.f32 %v8251, %v8256
        %s8259 = scalar_lea.vmem %s79, 16
        %v8260 = vld [vmem:[%s8259] sm:$0xf]
        %v8261 = vld [vmem:[%s8259 + $0x4] sm:$0xf]
        %v8262 = vld [vmem:[%s8259 + $0x8] sm:$0xf]
        %v8263 = vld [vmem:[%s8259 + $0xc] sm:$0xf]
        %s8264 = scalar_lea.vmem %s81, 1
        %v8265 = vld [vmem:[%s8264] sm:$0x1]
        %v8266 = vpack.c.bf16 %v8258, %v8258
        %v8268 = vlaneseq
        %v8269 = vshrl.u32 %v8268, 7
        %v8270 = vsub.s32 0, %v8269
        %v8271 = vrot.slane %v8265, %v8270
        %v8277 = vunpack.c.l.b16 %v8260
        %v8278 = vunpack.c.l.b16 %v8261
        %v8279 = vunpack.c.l.b16 %v8262
        %v8280 = vunpack.c.l.b16 %v8263
        %v8281 = vpack.c.b16 %v8278, %v8277
        %v8282 = vpack.c.b16 %v8280, %v8279
        %v8286 = vsel %vm1869, %v8266, 0
        %8288 = vmatprep.subr.bf16.mxu0 0
        %8289 = vmatpush1.bf16.msra.mxu0 0
        %8290 = vmatprep.subr.bf16.mxu0 0
        %8291 = vmatpush1.bf16.msra.mxu0 0
        %8292 = vmatprep.subr.bf16.mxu0 0
        %8293 = vmatpush1.bf16.msra.mxu0 0
        %8294 = vmatprep.subr.bf16.mxu0 0
        %8295 = vmatpush1.bf16.msra.mxu0 0
        %8296 = vmatprep.subr.bf16.mxu0 0
        %8297 = vmatpush1.bf16.msra.mxu0 0
        %8298 = vmatprep.subr.bf16.mxu0 0
        %8299 = vmatpush1.bf16.msra.mxu0 0
        %8300 = vmatprep.subr.bf16.mxu0 0
        %8301 = vmatpush1.bf16.msra.mxu0 %v8282
        %8302 = vmatprep.subr.bf16.mxu0 0
        %8303 = vmatpush1.bf16.msra.mxu0 %v8281
        %8304 = vmatprep.subr.bf16.mxu0 0
        %8305 = vmatpush2.bf16.msra.mxu0 0
        %8306 = vmatprep.subr.bf16.mxu0 0
        %8307 = vmatpush2.bf16.msra.mxu0 0
        %8308 = vmatprep.subr.bf16.mxu0 0
        %8309 = vmatpush2.bf16.msra.mxu0 0
        %8310 = vmatprep.subr.bf16.mxu0 0
        %8311 = vmatpush2.bf16.msra.mxu0 0
        %8312 = vmatprep.subr.bf16.mxu0 0
        %8313 = vmatpush2.bf16.msra.mxu0 0
        %8314 = vmatprep.subr.bf16.mxu0 0
        %8315 = vmatpush2.bf16.msra.mxu0 0
        %8316 = vmatprep.subr.bf16.mxu0 0
        %8317 = vmatpush2.bf16.msra.mxu0 0
        %8318 = vmatprep.subr.bf16.mxu0 0
        %8319 = vmatpush2.bf16.msra.mxu0 0
        %8320 = vmatprep.mubr.bf16.mxu0 0
        %8321 = vmatmul.mubr.bf16.gmra.mxu0 %v8286
        %v8322 = vpop.f32.mrf.mxu0
        %v8323 = vadd.f32 %v8271, %v8322
        %v8324 = vpop.f32.mrf.mxu0
        %v8325 = vpop.f32.mrf.mxu0
        %v8326 = vpop.f32.mrf.mxu0
        %8327 = vdwg.mxu0
        %v8328 = vmax.f32 %v8323, 0.0
        %s8329 = scalar_lea.vmem %s83, 32
        %v8330 = vld [vmem:[%s8329] sm:$0xf]
        %v8331 = vld [vmem:[%s8329 + $0x4] sm:$0xf]
        %v8332 = vld [vmem:[%s8329 + $0x8] sm:$0xf]
        %v8333 = vld [vmem:[%s8329 + $0xc] sm:$0xf]
        %v8334 = vld [vmem:[%s8329 + $0x10] sm:$0xf]
        %v8335 = vld [vmem:[%s8329 + $0x14] sm:$0xf]
        %v8336 = vld [vmem:[%s8329 + $0x18] sm:$0xf]
        %v8337 = vld [vmem:[%s8329 + $0x1c] sm:$0xf]
        %s8338 = scalar_lea.vmem %s85, 1
        %v8339 = vld [vmem:[%s8338] sm:$0x1]
        %v8340 = vpack.c.bf16 %v8328, %v8328
        %v8342 = vlaneseq
        %v8343 = vshrl.u32 %v8342, 7
        %v8344 = vsub.s32 0, %v8343
        %v8345 = vrot.slane %v8339, %v8344
        %v8355 = vunpack.c.l.b16 %v8330
        %v8356 = vunpack.c.l.b16 %v8331
        %v8357 = vunpack.c.l.b16 %v8332
        %v8358 = vunpack.c.l.b16 %v8333
        %v8359 = vunpack.c.l.b16 %v8334
        %v8360 = vunpack.c.l.b16 %v8335
        %v8361 = vunpack.c.l.b16 %v8336
        %v8362 = vunpack.c.l.b16 %v8337
        %v8363 = vpack.c.b16 %v8356, %v8355
        %v8364 = vpack.c.b16 %v8358, %v8357
        %v8365 = vpack.c.b16 %v8360, %v8359
        %v8366 = vpack.c.b16 %v8362, %v8361
        %v8372 = vsel %vm2923, %v8340, 0
        %8374 = vmatprep.subr.bf16.mxu0 0
        %8375 = vmatpush1.bf16.msra.mxu0 0
        %8376 = vmatprep.subr.bf16.mxu0 0
        %8377 = vmatpush1.bf16.msra.mxu0 0
        %8378 = vmatprep.subr.bf16.mxu0 0
        %8379 = vmatpush1.bf16.msra.mxu0 0
        %8380 = vmatprep.subr.bf16.mxu0 0
        %8381 = vmatpush1.bf16.msra.mxu0 0
        %8382 = vmatprep.subr.bf16.mxu0 0
        %8383 = vmatpush1.bf16.msra.mxu0 %v8366
        %8384 = vmatprep.subr.bf16.mxu0 0
        %8385 = vmatpush1.bf16.msra.mxu0 %v8365
        %8386 = vmatprep.subr.bf16.mxu0 0
        %8387 = vmatpush1.bf16.msra.mxu0 %v8364
        %8388 = vmatprep.subr.bf16.mxu0 0
        %8389 = vmatpush1.bf16.msra.mxu0 %v8363
        %8390 = vmatprep.subr.bf16.mxu0 0
        %8391 = vmatpush2.bf16.msra.mxu0 0
        %8392 = vmatprep.subr.bf16.mxu0 0
        %8393 = vmatpush2.bf16.msra.mxu0 0
        %8394 = vmatprep.subr.bf16.mxu0 0
        %8395 = vmatpush2.bf16.msra.mxu0 0
        %8396 = vmatprep.subr.bf16.mxu0 0
        %8397 = vmatpush2.bf16.msra.mxu0 0
        %8398 = vmatprep.subr.bf16.mxu0 0
        %8399 = vmatpush2.bf16.msra.mxu0 0
        %8400 = vmatprep.subr.bf16.mxu0 0
        %8401 = vmatpush2.bf16.msra.mxu0 0
        %8402 = vmatprep.subr.bf16.mxu0 0
        %8403 = vmatpush2.bf16.msra.mxu0 0
        %8404 = vmatprep.subr.bf16.mxu0 0
        %8405 = vmatpush2.bf16.msra.mxu0 0
        %8406 = vmatprep.mubr.bf16.mxu0 0
        %8407 = vmatmul.mubr.bf16.gmra.mxu0 %v8372
        %v8408 = vpop.f32.mrf.mxu0
        %v8409 = vadd.f32 %v8345, %v8408
        %v8410 = vpop.f32.mrf.mxu0
        %v8411 = vpop.f32.mrf.mxu0
        %v8412 = vpop.f32.mrf.mxu0
        %8413 = vdwg.mxu0
        %v8414 = vadd.f32 %v8258, %v8409
        %s8415 = scalar_lea.vmem [#allocation9], 1
        %v8416 = vld [vmem:[%s8415] sm:$0x1]
        %s8417 = scalar_lea.vmem [#allocation10], 1
        %v8418 = vld [vmem:[%s8417] sm:$0x1]
        %v8419 = vsel %vm1869, %v8414, 0.0
        %8420 = vadd.xlane.f32.xlu0 %v8419
        %v8421 = vpop.xlane.xlu0 %8420
        %v8422 = vmul.f32 %v8421, %v2790
        %v8423 = vsub.f32 %v8414, %v8422
        %v8424 = vmul.f32 %v8423, %v8423
        %v8425 = vsel %vm1869, %v8424, 0.0
        %8426 = vadd.xlane.f32.xlu0 %v8425
        %v8427 = vpop.xlane.xlu0 %8426
        %v8428 = vmul.f32 %v8427, %v2790
        %v8429 = vadd.f32 %v8428, 1e-05
        %v8430 = vrsqrt.pop %v8429
        %v8431 = vmul.f32 %v8423, %v8430
        %v8433 = vlaneseq
        %v8434 = vshrl.u32 %v8433, 7
        %v8435 = vsub.s32 0, %v8434
        %v8436 = vrot.slane %v8416, %v8435
        %v8438 = vmul.f32 %v8431, %v8436
        %v8440 = vlaneseq
        %v8441 = vshrl.u32 %v8440, 7
        %v8442 = vsub.s32 0, %v8441
        %v8443 = vrot.slane %v8418, %v8442
        %v8445 = vadd.f32 %v8438, %v8443
        %v8446 = vld [vmem:[#allocation13] sm:$0x1]
        %v8447 = vld [vmem:[#allocation15] sm:$0x1]
        %v8448 = vsel %vm1869, %v8445, 0.0
        %8449 = vadd.xlane.f32.xlu0 %v8448
        %v8450 = vpop.xlane.xlu0 %8449
        %v8451 = vmul.f32 %v8450, %v2790
        %v8452 = vsub.f32 %v8445, %v8451
        %v8453 = vmul.f32 %v8452, %v8452
        %v8454 = vsel %vm1869, %v8453, 0.0
        %8455 = vadd.xlane.f32.xlu0 %v8454
        %v8456 = vpop.xlane.xlu0 %8455
        %v8457 = vmul.f32 %v8456, %v2790
        %v8458 = vadd.f32 %v8457, 1e-05
        %v8459 = vrsqrt.pop %v8458
        %v8460 = vmul.f32 %v8452, %v8459
        %v8462 = vlaneseq
        %v8463 = vshrl.u32 %v8462, 7
        %v8464 = vsub.s32 0, %v8463
        %v8465 = vrot.slane %v8446, %v8464
        %v8467 = vmul.f32 %v8460, %v8465
        %v8469 = vlaneseq
        %v8470 = vshrl.u32 %v8469, 7
        %v8471 = vsub.s32 0, %v8470
        %v8472 = vrot.slane %v8447, %v8471
        %v8474 = vadd.f32 %v8467, %v8472
        %v8475 = vld [vmem:[%s107] sm:$0xf]
        %v8476 = vld [vmem:[%s107 + $0x4] sm:$0xf]
        %v8477 = vld [vmem:[%s107 + $0x8] sm:$0xf]
        %v8478 = vld [vmem:[%s107 + $0xc] sm:$0xf]
        %v8479 = vpack.c.bf16 %v8474, %v8474
        %v8480 = vld [vmem:[#allocation16] sm:$0x1]
        %v8482 = vlaneseq
        %v8483 = vshrl.u32 %v8482, 7
        %v8484 = vsub.s32 0, %v8483
        %v8485 = vrot.slane %v8480, %v8484
        %v8491 = vunpack.c.l.b16 %v8475
        %v8492 = vunpack.c.l.b16 %v8476
        %v8493 = vunpack.c.l.b16 %v8477
        %v8494 = vunpack.c.l.b16 %v8478
        %v8495 = vpack.c.b16 %v8492, %v8491
        %v8496 = vpack.c.b16 %v8494, %v8493
        %v8500 = vsel %vm1869, %v8479, 0
        %8502 = vmatprep.subr.bf16.mxu0 0
        %8503 = vmatpush1.bf16.msra.mxu0 0
        %8504 = vmatprep.subr.bf16.mxu0 0
        %8505 = vmatpush1.bf16.msra.mxu0 0
        %8506 = vmatprep.subr.bf16.mxu0 0
        %8507 = vmatpush1.bf16.msra.mxu0 0
        %8508 = vmatprep.subr.bf16.mxu0 0
        %8509 = vmatpush1.bf16.msra.mxu0 0
        %8510 = vmatprep.subr.bf16.mxu0 0
        %8511 = vmatpush1.bf16.msra.mxu0 0
        %8512 = vmatprep.subr.bf16.mxu0 0
        %8513 = vmatpush1.bf16.msra.mxu0 0
        %8514 = vmatprep.subr.bf16.mxu0 0
        %8515 = vmatpush1.bf16.msra.mxu0 %v8496
        %8516 = vmatprep.subr.bf16.mxu0 0
        %8517 = vmatpush1.bf16.msra.mxu0 %v8495
        %8518 = vmatprep.subr.bf16.mxu0 0
        %8519 = vmatpush2.bf16.msra.mxu0 0
        %8520 = vmatprep.subr.bf16.mxu0 0
        %8521 = vmatpush2.bf16.msra.mxu0 0
        %8522 = vmatprep.subr.bf16.mxu0 0
        %8523 = vmatpush2.bf16.msra.mxu0 0
        %8524 = vmatprep.subr.bf16.mxu0 0
        %8525 = vmatpush2.bf16.msra.mxu0 0
        %8526 = vmatprep.subr.bf16.mxu0 0
        %8527 = vmatpush2.bf16.msra.mxu0 0
        %8528 = vmatprep.subr.bf16.mxu0 0
        %8529 = vmatpush2.bf16.msra.mxu0 0
        %8530 = vmatprep.subr.bf16.mxu0 0
        %8531 = vmatpush2.bf16.msra.mxu0 0
        %8532 = vmatprep.subr.bf16.mxu0 0
        %8533 = vmatpush2.bf16.msra.mxu0 0
        %8534 = vmatprep.mubr.bf16.mxu0 0
        %8535 = vmatmul.mubr.bf16.gmra.mxu0 %v8500
        %v8536 = vpop.f32.mrf.mxu0
        %v8537 = vadd.f32 %v8485, %v8536
        %v8538 = vpop.f32.mrf.mxu0
        %v8539 = vpop.f32.mrf.mxu0
        %v8540 = vpop.f32.mrf.mxu0
        %8541 = vdwg.mxu0
        %8542 = vst [vmem:[%s1822] sm:$0xff] %v8537
        %p8543 = scmp.lt.s32.totalorder %s128, 1
        %s8544 = scalar_select %p8543, %s128, 1
        %s8545 = smul.addr %s8544, 8
        %s8546 = scalar_lea.vmem %s111, %s8545
        // Predicated region
        $region281: #{forward.1} parent=239 // pred_check
          %p8547 = pneg %p1326
        $region282: #{forward.1} parent=239 // pred_check_branch
          %8549 = sbr.rel (%p8547) target = $region284
        $region283: #{forward.1} parent=239 // pred_region
          _
        $region284: #{forward.1} parent=239 // pred_fallthru
          _
      $region240: #{forward.1} parent=5 // pred_fallthru
        _
      %p8550 = scmp.le.s32.totalorder 2, %s123
      // Predicated region
      $region285: #{forward.1} parent=5 // pred_check
        %p8551 = pneg %p8550
      $region286: #{forward.1} parent=5 // pred_check_branch
        %8553 = sbr.rel (%p8551) target = $region288
      $region287: #{forward.1} parent=5 // pred_region
        %s8554 = ssub.s32 %s123, 2
        // Predicated region
        $region289: #{forward.1} parent=287 // pred_check
          %p8555 = pneg %p1332
        $region290: #{forward.1} parent=287 // pred_check_branch
          %8557 = sbr.rel (%p8555) target = $region292
        $region291: #{forward.1} parent=287 // pred_region
          %p8558 = scmp.lt.s32.totalorder %s129, 1
          %s8559 = scalar_select %p8558, %s129, 1
          %s8560 = smul.addr %s8559, 8
          %s8561 = scalar_lea.vmem %s111, %s8560
        $region292: #{forward.1} parent=287 // pred_fallthru
          _
      $region288: #{forward.1} parent=5 // pred_fallthru
        _
    $region6: #{forward.1} parent=1 // loop_footer
      %s127 = sadd.s32 1, %s123
    $region7: #{forward.1} parent=1 // loop_footer_branch
      %122 = sbr.rel target = $region3
    $region8: #{forward.1} parent=1 // loop_exit
      _
    %8562 = vsyncpa [#allocation3], 1
    %s8563 = scalar_lea.sflag [#allocation3], 1
    %8564 = vsyncpa %s8563, 1
    %8565 = vsyncpa [#allocation5], 1
    %8566 = vsyncpa [#allocation8], 1
    %8567 = vsyncpa [#allocation11], 1
    %8568 = vsyncpa [#allocation14], 1
    %8569 = vsyncpa [#allocation17], 1

</llo_original>
